<compile_context>
chip_gen: v6e
topology: v6e:2x2x1
jax: 0.10.0
libtpu: 0.0.40
codegen_flags: <defaults>
</compile_context>

<pallas_src>
import functools

import jax
import jax.numpy as jnp
from jax.experimental import pallas as pl
from jax.experimental.pallas import tpu as pltpu


LANE = 128          # lane width: conv output channels are padded to 128
NEG_PAD = -1e9      # halo fill so the fused relu(y*scale + shift) == 0 there
BN_EPS = 1e-5
VMEM_LIMIT = 32 * 1024 * 1024


def _round_up(x, m):
    return (x + m - 1) // m * m


# ---------------------------------------------------------------------------
# Kernel 1: 3x3 conv over the flattened padded grid (9 sublane-offset slices,
#           each a bf16 MXU dot, f32 accumulation), + bias,
#           + optional hoisted input BatchNorm-apply + ReLU (previous layer),
#           + per-image per-channel sum / sum-of-squares for this layer's BN.
# ---------------------------------------------------------------------------
def conv3x3_bn_stats_kernel(x_ref, w_ref, b_ref, scale_ref, shift_ref,
                            mask_ref, y_ref, stats_ref, *scratch,
                            H, W, apply_input_act):
    # x_ref:     (1, Hp*Wp, Cin)   bf16  flat padded input, one image
    # w_ref:     (9, Cin, Cout_p)  bf16  tap-major (dy*3 + dx)
    # b_ref:     (1, Cout_p)       f32
    # scale_ref: (1, Cin)          f32   (used iff apply_input_act)
    # shift_ref: (1, Cin)          f32
    # mask_ref:  (M, 1)            f32   1.0 at interior output rows, 0.0 halo
    # y_ref:     (1, Hp*Wp, Cout_p) bf16 conv output (pre-BN), NEG_PAD halo
    # stats_ref: (1, 2, Cout_p)    f32   row0 = sum, row1 = sum of squares
    # scratch:   ((Hp*Wp, Cin) bf16,)    iff apply_input_act
    Hp, Wp = H + 2, W + 2
    A = Wp + 1                       # output window start (row 1, col 1)
    M = Hp * Wp - 2 * A              # output window rows
    cout = b_ref.shape[-1]

    if apply_input_act:
        act_ref = scratch[0]
        # Hoisted (single-pass) BN-apply + ReLU of the previous layer into a
        # bf16 VMEM scratch.  The NEG_PAD halo maps to exactly 0 here, which
        # reproduces the conv's zero padding.
        a = x_ref[0].astype(jnp.float32) * scale_ref[...] + shift_ref[...]
        act_ref[...] = jnp.maximum(a, 0.0).astype(act_ref.dtype)

        def tap(off):
            return act_ref[off:off + M, :]
    else:
        def tap(off):
            return x_ref[0, off:off + M, :]

    # 3x3 conv: output at flat padded position p (p = A + i) is
    #   sum_{dy,dx} in_flat[p + (dy-1)*Wp + (dx-1)] * w[dy,dx]
    # so each tap is the flat slice starting at dy*Wp + dx.  No im2col copy.
    acc = jnp.broadcast_to(b_ref[...], (M, cout))          # f32 accumulator
    for dy in range(3):
        for dx in range(3):
            acc = acc + jnp.dot(tap(dy * Wp + dx), w_ref[dy * 3 + dx],
                                preferred_element_type=jnp.float32)

    # Halo output rows (conv leakage) are excluded from the BN statistics and
    # overwritten with NEG_PAD so the next layer's fused relu zeroes them.
    interior = mask_ref[...] > 0.5                          # (M, 1) bool
    am = jnp.where(interior, acc, 0.0)
    stats_ref[0, 0:1, :] = jnp.sum(am, axis=0, keepdims=True)
    stats_ref[0, 1:2, :] = jnp.sum(am * am, axis=0, keepdims=True)

    y_ref[0, A:A + M, :] = jnp.where(interior, acc, NEG_PAD).astype(y_ref.dtype)
    halo_rows = jnp.full((A, cout), NEG_PAD, y_ref.dtype)
    y_ref[0, 0:A, :] = halo_rows
    y_ref[0, A + M:Hp * Wp, :] = halo_rows


def conv3x3_bn_stats(x_flat, w9, bias_row, scale_row, shift_row, mask,
                     *, H, W, apply_input_act):
    N = x_flat.shape[0]
    cin = x_flat.shape[-1]
    cout = w9.shape[-1]
    Hp, Wp = H + 2, W + 2
    M = Hp * Wp - 2 * (Wp + 1)

    kernel = functools.partial(conv3x3_bn_stats_kernel,
                               H=H, W=W, apply_input_act=apply_input_act)

    scratch = ([pltpu.VMEM((Hp * Wp, cin), jnp.bfloat16)]
               if apply_input_act else [])

    flops = 2 * N * M * 9 * cin * cout
    bytes_accessed = (x_flat.size * 2 + w9.size * 2 + mask.size * 4
                      + (bias_row.size + scale_row.size + shift_row.size) * 4
                      + N * Hp * Wp * cout * 2        # y (bf16)
                      + N * 2 * cout * 4)             # stats

    return pl.pallas_call(
        kernel,
        out_shape=(
            jax.ShapeDtypeStruct((N, Hp * Wp, cout), jnp.bfloat16),
            jax.ShapeDtypeStruct((N, 2, cout), jnp.float32),
        ),
        grid_spec=pltpu.PrefetchScalarGridSpec(
            num_scalar_prefetch=0,
            grid=(N,),
            in_specs=[
                pl.BlockSpec((1, Hp * Wp, cin), lambda n: (n, 0, 0)),
                pl.BlockSpec((9, cin, cout), lambda n: (0, 0, 0)),
                pl.BlockSpec((1, cout), lambda n: (0, 0)),
                pl.BlockSpec((1, cin), lambda n: (0, 0)),
                pl.BlockSpec((1, cin), lambda n: (0, 0)),
                pl.BlockSpec((M, 1), lambda n: (0, 0)),
            ],
            out_specs=[
                pl.BlockSpec((1, Hp * Wp, cout), lambda n: (n, 0, 0)),
                pl.BlockSpec((1, 2, cout), lambda n: (n, 0, 0)),
            ],
            scratch_shapes=scratch,
        ),
        compiler_params=pltpu.CompilerParams(
            dimension_semantics=("parallel",),
            vmem_limit_bytes=VMEM_LIMIT),
        cost_estimate=pl.CostEstimate(flops=flops, transcendentals=0,
                                      bytes_accessed=bytes_accessed),
    )(x_flat, w9, bias_row, scale_row, shift_row, mask)


# ---------------------------------------------------------------------------
# Kernel 2: final BatchNorm-apply + ReLU (no further conv to fuse into).
# ---------------------------------------------------------------------------
def bn_relu_kernel(y_ref, scale_ref, shift_ref, o_ref):
    o_ref[0] = jnp.maximum(
        y_ref[0].astype(jnp.float32) * scale_ref[...] + shift_ref[...], 0.0)


def bn_relu_apply(y, scale_row, shift_row):
    N, M, C = y.shape
    return pl.pallas_call(
        bn_relu_kernel,
        out_shape=jax.ShapeDtypeStruct((N, M, C), jnp.float32),
        grid_spec=pltpu.PrefetchScalarGridSpec(
            num_scalar_prefetch=0,
            grid=(N,),
            in_specs=[
                pl.BlockSpec((1, M, C), lambda n: (n, 0, 0)),
                pl.BlockSpec((1, C), lambda n: (0, 0)),
                pl.BlockSpec((1, C), lambda n: (0, 0)),
            ],
            out_specs=pl.BlockSpec((1, M, C), lambda n: (n, 0, 0)),
        ),
        compiler_params=pltpu.CompilerParams(
            dimension_semantics=("parallel",),
            vmem_limit_bytes=VMEM_LIMIT),
    )(y, scale_row, shift_row)


# ---------------------------------------------------------------------------
# Glue: parameter prep, BN affine from partial stats, layer composition.
# ---------------------------------------------------------------------------
def _pad_last(x, c_to):
    pad = c_to - x.shape[-1]
    if pad:
        x = jnp.pad(x, [(0, 0)] * (x.ndim - 1) + [(0, pad)])
    return x


def _bn_affine(stats, count, eps=BN_EPS):
    s = jnp.sum(stats[:, 0, :], axis=0)                    # (Cout_p,)
    ss = jnp.sum(stats[:, 1, :], axis=0)
    mean = s / count
    var = jnp.maximum(ss / count - mean * mean, 0.0)       # biased, clamped
    scale = jax.lax.rsqrt(var + eps)                       # gamma = 1
    shift = -mean * scale                                  # beta = 0
    return scale.reshape(1, -1), shift.reshape(1, -1)


def _prep_weights(w_hwio, ci_pad, co_pad):
    ci, co = w_hwio.shape[2], w_hwio.shape[3]
    t = w_hwio.reshape(9, ci, co)                          # tap-major: dy*3+dx
    t = jnp.pad(t, ((0, 0), (0, ci_pad - ci), (0, co_pad - co)))
    return t.astype(jnp.bfloat16)


@jax.jit
def convolution_block_forward(x_nchw, w1, b1, w2, b2):
    N, Cin, H, W = x_nchw.shape
    Cm, Co = w1.shape[-1], w2.shape[-1]
    cm_p, co_p = _round_up(Cm, LANE), _round_up(Co, LANE)
    Hp, Wp = H + 2, W + 2
    A = Wp + 1
    M = Hp * Wp - 2 * A
    count = jnp.float32(N * H * W)

    # NCHW -> flat padded NHWC (zero halo).  The first conv reads the real,
    # unpadded Cin from HBM; only conv *outputs* are lane-padded to 128.
    x = jnp.transpose(x_nchw, (0, 2, 3, 1))
    x = jnp.pad(x, ((0, 0), (1, 1), (1, 1), (0, 0)))
    x_flat = x.reshape(N, Hp * Wp, Cin).astype(jnp.bfloat16)

    # Interior mask over the kernel's output window (flat positions [A, Hp*Wp-A)).
    p = jnp.arange(A, A + M, dtype=jnp.int32)
    row, col = p // Wp, p % Wp
    interior = (row >= 1) & (row <= H) & (col >= 1) & (col <= W)
    mask = interior.astype(jnp.float32).reshape(M, 1)

    w1_t = _prep_weights(w1, Cin, cm_p)
    w2_t = _prep_weights(w2, cm_p, co_p)
    b1_r = _pad_last(b1.astype(jnp.float32), cm_p).reshape(1, cm_p)
    b2_r = _pad_last(b2.astype(jnp.float32), co_p).reshape(1, co_p)

    one_cin = jnp.ones((1, Cin), jnp.float32)      # unused by layer-1 kernel
    zero_cin = jnp.zeros((1, Cin), jnp.float32)

    # Layer 1: conv1 + bias + BN1 batch statistics (NEG_PAD halo written
    # directly by the kernel -> no XLA pad between the two convs).
    y1, st1 = conv3x3_bn_stats(x_flat, w1_t, b1_r, one_cin, zero_cin, mask,
                               H=H, W=W, apply_input_act=False)
    scale1, shift1 = _bn_affine(st1, count)

    # Layer 2: BN1-apply + ReLU hoisted into a single VMEM pass inside conv2's
    # kernel, + bias + BN2 statistics.
    y2, st2 = conv3x3_bn_stats(y1, w2_t, b2_r, scale1, shift1, mask,
                               H=H, W=W, apply_input_act=True)
    scale2, shift2 = _bn_affine(st2, count)

    # Final BN2-apply + ReLU (standalone streaming pass, lane-dense output).
    out = bn_relu_apply(y2, scale2, shift2)                # (N, Hp*Wp, co_p)

    # Drop halo + channel padding, NHWC -> NCHW (single fused XLA copy).
    out = out.reshape(N, Hp, Wp, co_p)[:, 1:1 + H, 1:1 + W, :Co]
    return jnp.transpose(out, (0, 3, 1, 2))


# ---------------------------------------------------------------------------
# Pure-JAX f32 reference (PyTorch semantics) for a sanity check.
# ---------------------------------------------------------------------------
@jax.jit
def reference_forward(x_nchw, w1, b1, w2, b2, eps=BN_EPS):
    def conv(x, w_hwio, b):
        y = jax.lax.conv_general_dilated(
            x, w_hwio, window_strides=(1, 1), padding="SAME",
            dimension_numbers=("NCHW", "HWIO", "NCHW"))
        return y + b[None, :, None, None]

    def bn_relu(y):
        mean = jnp.mean(y, axis=(0, 2, 3), keepdims=True)
        var = jnp.mean(y * y, axis=(0, 2, 3), keepdims=True) - mean * mean
        return jnp.maximum((y - mean) / jnp.sqrt(var + eps), 0.0)

    h = bn_relu(conv(x_nchw, w1, b1))
    h = bn_relu(conv(h, w2, b2))
    return h


if __name__ == "__main__":
    # Small shapes: batch=2, in_channels=4, mid_channels=8, out_channels=4,
    # spatial 16x16.
    N, Cin, Cm, Co, H, W = 2, 4, 8, 4, 16, 16

    key = jax.random.PRNGKey(0)
    k1, k2, kx = jax.random.split(key, 3)

    # He init (kaiming_normal_, mode='fan_out', nonlinearity='relu'):
    # std = sqrt(2 / (out_channels * kH * kW)); conv biases = 0.
    std1 = (2.0 / (Cm * 9)) ** 0.5
    std2 = (2.0 / (Co * 9)) ** 0.5
    w1 = jax.random.normal(k1, (3, 3, Cin, Cm), jnp.float32) * std1   # HWIO
    w2 = jax.random.normal(k2, (3, 3, Cm, Co), jnp.float32) * std2    # HWIO
    b1 = jnp.zeros((Cm,), jnp.float32)
    b2 = jnp.zeros((Co,), jnp.float32)

    x = jax.random.normal(kx, (N, Cin, H, W), jnp.float32)            # NCHW

    out = jax.block_until_ready(convolution_block_forward(x, w1, b1, w2, b2))
    ref = jax.block_until_ready(reference_forward(x, w1, b1, w2, b2))

    assert out.shape == (N, Co, H, W), out.shape
    # bf16 matmul operands / bf16 intermediates vs. an f32 reference:
    # norm-relative + max-abs tolerances appropriate for mixed precision.
    rel = jnp.linalg.norm(out - ref) / (jnp.linalg.norm(ref) + 1e-12)
    max_abs = jnp.max(jnp.abs(out - ref))
    assert (rel < 5e-2) and (max_abs < 0.2), (float(rel), float(max_abs))

    print("KERNEL_OK")
</pallas_src>

<mosaic_0001>
module attributes {stable_mosaic.version = 11 : i64} {
  func.func @conv3x3_bn_stats_kernel(%arg0: i32, %arg1: memref<1x324x4xbf16, #tpu.memory_space<vmem>>, %arg2: memref<9x4x128xbf16, #tpu.memory_space<vmem>>, %arg3: memref<1x128xf32, #tpu.memory_space<vmem>>, %arg4: memref<1x4xf32, #tpu.memory_space<vmem>>, %arg5: memref<1x4xf32, #tpu.memory_space<vmem>>, %arg6: memref<286x1xf32, #tpu.memory_space<vmem>>, %arg7: memref<1x324x128xbf16, #tpu.memory_space<vmem>>, %arg8: memref<1x2x128xf32, #tpu.memory_space<vmem>>) attributes {dimension_semantics = [#tpu.dimension_semantics<parallel>], iteration_bounds = array<i64: 2>, scalar_prefetch = 0 : i64, scratch_operands = 0 : i64, tpu.core_type = #tpu.core_type<tc>, window_params = [{transform_indices = @transform_0, window_bounds = array<i64: 1, 324, 4>}, {pipeline_mode = #tpu.pipeline_mode<synchronous>, transform_indices = @transform_1, window_bounds = array<i64: 9, 4, 128>}, {pipeline_mode = #tpu.pipeline_mode<synchronous>, transform_indices = @transform_2, window_bounds = array<i64: 1, 128>}, {pipeline_mode = #tpu.pipeline_mode<synchronous>, transform_indices = @transform_3, window_bounds = array<i64: 1, 4>}, {pipeline_mode = #tpu.pipeline_mode<synchronous>, transform_indices = @transform_4, window_bounds = array<i64: 1, 4>}, {pipeline_mode = #tpu.pipeline_mode<synchronous>, transform_indices = @transform_5, window_bounds = array<i64: 286, 1>}, {transform_indices = @transform_6, window_bounds = array<i64: 1, 324, 128>}, {transform_indices = @transform_7, window_bounds = array<i64: 1, 2, 128>}]} {
    %c0 = arith.constant 0 : index
    %c0_0 = arith.constant 0 : index
    %0 = vector.load %arg3[%c0, %c0_0] : memref<1x128xf32, #tpu.memory_space<vmem>>, vector<1x128xf32>
    %1 = vector.shape_cast %0 : vector<1x128xf32> to vector<1x128xf32>
    %2 = vector.broadcast %1 : vector<1x128xf32> to vector<286x128xf32>
    %c0_1 = arith.constant 0 : index
    %c0_2 = arith.constant 0 : index
    %c0_3 = arith.constant 0 : index
    %3 = vector.load %arg1[%c0_1, %c0_2, %c0_3] : memref<1x324x4xbf16, #tpu.memory_space<vmem>>, vector<1x286x4xbf16>
    %4 = vector.shape_cast %3 : vector<1x286x4xbf16> to vector<286x4xbf16>
    %c0_4 = arith.constant 0 : index
    %c0_5 = arith.constant 0 : index
    %c0_6 = arith.constant 0 : index
    %5 = vector.load %arg2[%c0_4, %c0_5, %c0_6] : memref<9x4x128xbf16, #tpu.memory_space<vmem>>, vector<1x4x128xbf16>
    %6 = vector.shape_cast %5 : vector<1x4x128xbf16> to vector<4x128xbf16>
    %cst = arith.constant dense<0.000000e+00> : vector<286x128xf32>
    %7 = tpu.matmul %4, %6, %cst {dimension_numbers = #tpu.dot_dimension_numbers<[1], [0], [0], [1], [0, 0, 1, 1], [], []>} : vector<286x4xbf16>, vector<4x128xbf16>, vector<286x128xf32> -> vector<286x128xf32>
    %8 = arith.addf %2, %7 : vector<286x128xf32>
    %c0_7 = arith.constant 0 : index
    %c1 = arith.constant 1 : index
    %c0_8 = arith.constant 0 : index
    %9 = vector.load %arg1[%c0_7, %c1, %c0_8] : memref<1x324x4xbf16, #tpu.memory_space<vmem>>, vector<1x286x4xbf16>
    %10 = vector.shape_cast %9 : vector<1x286x4xbf16> to vector<286x4xbf16>
    %c1_9 = arith.constant 1 : index
    %c0_10 = arith.constant 0 : index
    %c0_11 = arith.constant 0 : index
    %11 = vector.load %arg2[%c1_9, %c0_10, %c0_11] : memref<9x4x128xbf16, #tpu.memory_space<vmem>>, vector<1x4x128xbf16>
    %12 = vector.shape_cast %11 : vector<1x4x128xbf16> to vector<4x128xbf16>
    %cst_12 = arith.constant dense<0.000000e+00> : vector<286x128xf32>
    %13 = tpu.matmul %10, %12, %cst_12 {dimension_numbers = #tpu.dot_dimension_numbers<[1], [0], [0], [1], [0, 0, 1, 1], [], []>} : vector<286x4xbf16>, vector<4x128xbf16>, vector<286x128xf32> -> vector<286x128xf32>
    %14 = arith.addf %8, %13 : vector<286x128xf32>
    %c0_13 = arith.constant 0 : index
    %c2 = arith.constant 2 : index
    %c0_14 = arith.constant 0 : index
    %15 = vector.load %arg1[%c0_13, %c2, %c0_14] : memref<1x324x4xbf16, #tpu.memory_space<vmem>>, vector<1x286x4xbf16>
    %16 = vector.shape_cast %15 : vector<1x286x4xbf16> to vector<286x4xbf16>
    %c2_15 = arith.constant 2 : index
    %c0_16 = arith.constant 0 : index
    %c0_17 = arith.constant 0 : index
    %17 = vector.load %arg2[%c2_15, %c0_16, %c0_17] : memref<9x4x128xbf16, #tpu.memory_space<vmem>>, vector<1x4x128xbf16>
    %18 = vector.shape_cast %17 : vector<1x4x128xbf16> to vector<4x128xbf16>
    %cst_18 = arith.constant dense<0.000000e+00> : vector<286x128xf32>
    %19 = tpu.matmul %16, %18, %cst_18 {dimension_numbers = #tpu.dot_dimension_numbers<[1], [0], [0], [1], [0, 0, 1, 1], [], []>} : vector<286x4xbf16>, vector<4x128xbf16>, vector<286x128xf32> -> vector<286x128xf32>
    %20 = arith.addf %14, %19 : vector<286x128xf32>
    %c0_19 = arith.constant 0 : index
    %c18 = arith.constant 18 : index
    %c0_20 = arith.constant 0 : index
    %21 = vector.load %arg1[%c0_19, %c18, %c0_20] : memref<1x324x4xbf16, #tpu.memory_space<vmem>>, vector<1x286x4xbf16>
    %22 = vector.shape_cast %21 : vector<1x286x4xbf16> to vector<286x4xbf16>
    %c3 = arith.constant 3 : index
    %c0_21 = arith.constant 0 : index
    %c0_22 = arith.constant 0 : index
    %23 = vector.load %arg2[%c3, %c0_21, %c0_22] : memref<9x4x128xbf16, #tpu.memory_space<vmem>>, vector<1x4x128xbf16>
    %24 = vector.shape_cast %23 : vector<1x4x128xbf16> to vector<4x128xbf16>
    %cst_23 = arith.constant dense<0.000000e+00> : vector<286x128xf32>
    %25 = tpu.matmul %22, %24, %cst_23 {dimension_numbers = #tpu.dot_dimension_numbers<[1], [0], [0], [1], [0, 0, 1, 1], [], []>} : vector<286x4xbf16>, vector<4x128xbf16>, vector<286x128xf32> -> vector<286x128xf32>
    %26 = arith.addf %20, %25 : vector<286x128xf32>
    %c0_24 = arith.constant 0 : index
    %c19 = arith.constant 19 : index
    %c0_25 = arith.constant 0 : index
    %27 = vector.load %arg1[%c0_24, %c19, %c0_25] : memref<1x324x4xbf16, #tpu.memory_space<vmem>>, vector<1x286x4xbf16>
    %28 = vector.shape_cast %27 : vector<1x286x4xbf16> to vector<286x4xbf16>
    %c4 = arith.constant 4 : index
    %c0_26 = arith.constant 0 : index
    %c0_27 = arith.constant 0 : index
    %29 = vector.load %arg2[%c4, %c0_26, %c0_27] : memref<9x4x128xbf16, #tpu.memory_space<vmem>>, vector<1x4x128xbf16>
    %30 = vector.shape_cast %29 : vector<1x4x128xbf16> to vector<4x128xbf16>
    %cst_28 = arith.constant dense<0.000000e+00> : vector<286x128xf32>
    %31 = tpu.matmul %28, %30, %cst_28 {dimension_numbers = #tpu.dot_dimension_numbers<[1], [0], [0], [1], [0, 0, 1, 1], [], []>} : vector<286x4xbf16>, vector<4x128xbf16>, vector<286x128xf32> -> vector<286x128xf32>
    %32 = arith.addf %26, %31 : vector<286x128xf32>
    %c0_29 = arith.constant 0 : index
    %c20 = arith.constant 20 : index
    %c0_30 = arith.constant 0 : index
    %33 = vector.load %arg1[%c0_29, %c20, %c0_30] : memref<1x324x4xbf16, #tpu.memory_space<vmem>>, vector<1x286x4xbf16>
    %34 = vector.shape_cast %33 : vector<1x286x4xbf16> to vector<286x4xbf16>
    %c5 = arith.constant 5 : index
    %c0_31 = arith.constant 0 : index
    %c0_32 = arith.constant 0 : index
    %35 = vector.load %arg2[%c5, %c0_31, %c0_32] : memref<9x4x128xbf16, #tpu.memory_space<vmem>>, vector<1x4x128xbf16>
    %36 = vector.shape_cast %35 : vector<1x4x128xbf16> to vector<4x128xbf16>
    %cst_33 = arith.constant dense<0.000000e+00> : vector<286x128xf32>
    %37 = tpu.matmul %34, %36, %cst_33 {dimension_numbers = #tpu.dot_dimension_numbers<[1], [0], [0], [1], [0, 0, 1, 1], [], []>} : vector<286x4xbf16>, vector<4x128xbf16>, vector<286x128xf32> -> vector<286x128xf32>
    %38 = arith.addf %32, %37 : vector<286x128xf32>
    %c0_34 = arith.constant 0 : index
    %c36 = arith.constant 36 : index
    %c0_35 = arith.constant 0 : index
    %39 = vector.load %arg1[%c0_34, %c36, %c0_35] : memref<1x324x4xbf16, #tpu.memory_space<vmem>>, vector<1x286x4xbf16>
    %40 = vector.shape_cast %39 : vector<1x286x4xbf16> to vector<286x4xbf16>
    %c6 = arith.constant 6 : index
    %c0_36 = arith.constant 0 : index
    %c0_37 = arith.constant 0 : index
    %41 = vector.load %arg2[%c6, %c0_36, %c0_37] : memref<9x4x128xbf16, #tpu.memory_space<vmem>>, vector<1x4x128xbf16>
    %42 = vector.shape_cast %41 : vector<1x4x128xbf16> to vector<4x128xbf16>
    %cst_38 = arith.constant dense<0.000000e+00> : vector<286x128xf32>
    %43 = tpu.matmul %40, %42, %cst_38 {dimension_numbers = #tpu.dot_dimension_numbers<[1], [0], [0], [1], [0, 0, 1, 1], [], []>} : vector<286x4xbf16>, vector<4x128xbf16>, vector<286x128xf32> -> vector<286x128xf32>
    %44 = arith.addf %38, %43 : vector<286x128xf32>
    %c0_39 = arith.constant 0 : index
    %c37 = arith.constant 37 : index
    %c0_40 = arith.constant 0 : index
    %45 = vector.load %arg1[%c0_39, %c37, %c0_40] : memref<1x324x4xbf16, #tpu.memory_space<vmem>>, vector<1x286x4xbf16>
    %46 = vector.shape_cast %45 : vector<1x286x4xbf16> to vector<286x4xbf16>
    %c7 = arith.constant 7 : index
    %c0_41 = arith.constant 0 : index
    %c0_42 = arith.constant 0 : index
    %47 = vector.load %arg2[%c7, %c0_41, %c0_42] : memref<9x4x128xbf16, #tpu.memory_space<vmem>>, vector<1x4x128xbf16>
    %48 = vector.shape_cast %47 : vector<1x4x128xbf16> to vector<4x128xbf16>
    %cst_43 = arith.constant dense<0.000000e+00> : vector<286x128xf32>
    %49 = tpu.matmul %46, %48, %cst_43 {dimension_numbers = #tpu.dot_dimension_numbers<[1], [0], [0], [1], [0, 0, 1, 1], [], []>} : vector<286x4xbf16>, vector<4x128xbf16>, vector<286x128xf32> -> vector<286x128xf32>
    %50 = arith.addf %44, %49 : vector<286x128xf32>
    %c0_44 = arith.constant 0 : index
    %c38 = arith.constant 38 : index
    %c0_45 = arith.constant 0 : index
    %51 = vector.load %arg1[%c0_44, %c38, %c0_45] : memref<1x324x4xbf16, #tpu.memory_space<vmem>>, vector<1x286x4xbf16>
    %52 = vector.shape_cast %51 : vector<1x286x4xbf16> to vector<286x4xbf16>
    %c8 = arith.constant 8 : index
    %c0_46 = arith.constant 0 : index
    %c0_47 = arith.constant 0 : index
    %53 = vector.load %arg2[%c8, %c0_46, %c0_47] : memref<9x4x128xbf16, #tpu.memory_space<vmem>>, vector<1x4x128xbf16>
    %54 = vector.shape_cast %53 : vector<1x4x128xbf16> to vector<4x128xbf16>
    %cst_48 = arith.constant dense<0.000000e+00> : vector<286x128xf32>
    %55 = tpu.matmul %52, %54, %cst_48 {dimension_numbers = #tpu.dot_dimension_numbers<[1], [0], [0], [1], [0, 0, 1, 1], [], []>} : vector<286x4xbf16>, vector<4x128xbf16>, vector<286x128xf32> -> vector<286x128xf32>
    %56 = arith.addf %50, %55 : vector<286x128xf32>
    %c0_49 = arith.constant 0 : index
    %c0_50 = arith.constant 0 : index
    %57 = vector.load %arg6[%c0_49, %c0_50] : memref<286x1xf32, #tpu.memory_space<vmem>>, vector<286x1xf32>
    %cst_51 = arith.constant 5.000000e-01 : f32
    %58 = vector.broadcast %cst_51 : f32 to vector<286x1xf32>
    %59 = arith.cmpf ogt, %57, %58 : vector<286x1xf32>
    %cst_52 = arith.constant 0.000000e+00 : f32
    %60 = vector.shape_cast %59 : vector<286x1xi1> to vector<286x1xi1>
    %61 = vector.broadcast %60 : vector<286x1xi1> to vector<286x128xi1>
    %62 = vector.broadcast %cst_52 : f32 to vector<286x128xf32>
    %63 = arith.select %61, %56, %62 : vector<286x128xi1>, vector<286x128xf32>
    %cst_53 = arith.constant dense<0.000000e+00> : vector<128xf32>
    %64 = vector.multi_reduction <add>, %63, %cst_53 [0] : vector<286x128xf32> to vector<128xf32>
    %65 = vector.shape_cast %64 : vector<128xf32> to vector<1x128xf32>
    %c0_54 = arith.constant 0 : index
    %c0_55 = arith.constant 0 : index
    %c0_56 = arith.constant 0 : index
    %66 = vector.load %arg8[%c0_54, %c0_55, %c0_56] : memref<1x2x128xf32, #tpu.memory_space<vmem>>, vector<1x1x128xf32>
    %67 = vector.shape_cast %66 : vector<1x1x128xf32> to vector<1x128xf32>
    %68 = vector.shape_cast %65 : vector<1x128xf32> to vector<1x1x128xf32>
    tpu.vector_store %arg8[%c0_54, %c0_55, %c0_56], %68 {strides = array<i32>} : memref<1x2x128xf32, #tpu.memory_space<vmem>>, vector<1x1x128xf32>,
    %69 = arith.mulf %63, %63 : vector<286x128xf32>
    %cst_57 = arith.constant dense<0.000000e+00> : vector<128xf32>
    %70 = vector.multi_reduction <add>, %69, %cst_57 [0] : vector<286x128xf32> to vector<128xf32>
    %71 = vector.shape_cast %70 : vector<128xf32> to vector<1x128xf32>
    %c0_58 = arith.constant 0 : index
    %c1_59 = arith.constant 1 : index
    %c0_60 = arith.constant 0 : index
    %72 = vector.load %arg8[%c0_58, %c1_59, %c0_60] : memref<1x2x128xf32, #tpu.memory_space<vmem>>, vector<1x1x128xf32>
    %73 = vector.shape_cast %72 : vector<1x1x128xf32> to vector<1x128xf32>
    %74 = vector.shape_cast %71 : vector<1x128xf32> to vector<1x1x128xf32>
    tpu.vector_store %arg8[%c0_58, %c1_59, %c0_60], %74 {strides = array<i32>} : memref<1x2x128xf32, #tpu.memory_space<vmem>>, vector<1x1x128xf32>,
    %cst_61 = arith.constant -1.000000e+09 : f32
    %75 = vector.shape_cast %59 : vector<286x1xi1> to vector<286x1xi1>
    %76 = vector.broadcast %75 : vector<286x1xi1> to vector<286x128xi1>
    %77 = vector.broadcast %cst_61 : f32 to vector<286x128xf32>
    %78 = arith.select %76, %56, %77 : vector<286x128xi1>, vector<286x128xf32>
    %79 = arith.truncf %78 : vector<286x128xf32> to vector<286x128xbf16>
    %c0_62 = arith.constant 0 : index
    %c19_63 = arith.constant 19 : index
    %c0_64 = arith.constant 0 : index
    %80 = vector.load %arg7[%c0_62, %c19_63, %c0_64] : memref<1x324x128xbf16, #tpu.memory_space<vmem>>, vector<1x286x128xbf16>
    %81 = vector.shape_cast %80 : vector<1x286x128xbf16> to vector<286x128xbf16>
    %82 = vector.shape_cast %79 : vector<286x128xbf16> to vector<1x286x128xbf16>
    tpu.vector_store %arg7[%c0_62, %c19_63, %c0_64], %82 {strides = array<i32>} : memref<1x324x128xbf16, #tpu.memory_space<vmem>>, vector<1x286x128xbf16>,
    %cst_65 = arith.constant -9.982440e+08 : bf16
    %83 = vector.broadcast %cst_65 : bf16 to vector<19x128xbf16>
    %c0_66 = arith.constant 0 : index
    %c0_67 = arith.constant 0 : index
    %c0_68 = arith.constant 0 : index
    %84 = vector.load %arg7[%c0_66, %c0_67, %c0_68] : memref<1x324x128xbf16, #tpu.memory_space<vmem>>, vector<1x19x128xbf16>
    %85 = vector.shape_cast %84 : vector<1x19x128xbf16> to vector<19x128xbf16>
    %86 = vector.shape_cast %83 : vector<19x128xbf16> to vector<1x19x128xbf16>
    tpu.vector_store %arg7[%c0_66, %c0_67, %c0_68], %86 {strides = array<i32>} : memref<1x324x128xbf16, #tpu.memory_space<vmem>>, vector<1x19x128xbf16>,
    %c0_69 = arith.constant 0 : index
    %c305 = arith.constant 305 : index
    %c0_70 = arith.constant 0 : index
    %87 = vector.load %arg7[%c0_69, %c305, %c0_70] : memref<1x324x128xbf16, #tpu.memory_space<vmem>>, vector<1x19x128xbf16>
    %88 = vector.shape_cast %87 : vector<1x19x128xbf16> to vector<19x128xbf16>
    %89 = vector.shape_cast %83 : vector<19x128xbf16> to vector<1x19x128xbf16>
    tpu.vector_store %arg7[%c0_69, %c305, %c0_70], %89 {strides = array<i32>} : memref<1x324x128xbf16, #tpu.memory_space<vmem>>, vector<1x19x128xbf16>,
    return
  }
  func.func @transform_0(%arg0: i32) -> (i32, i32, i32) {
    %c0_i32 = arith.constant 0 : i32
    %c0_i32_0 = arith.constant 0 : i32
    %c0_i32_1 = arith.constant 0 : i32
    return %arg0, %c0_i32, %c0_i32_0 : i32, i32, i32
  }
  func.func @transform_1(%arg0: i32) -> (i32, i32, i32) {
    %c0_i32 = arith.constant 0 : i32
    %c0_i32_0 = arith.constant 0 : i32
    %c0_i32_1 = arith.constant 0 : i32
    %c0_i32_2 = arith.constant 0 : i32
    return %c0_i32, %c0_i32_0, %c0_i32_1 : i32, i32, i32
  }
  func.func @transform_2(%arg0: i32) -> (i32, i32) {
    %c0_i32 = arith.constant 0 : i32
    %c0_i32_0 = arith.constant 0 : i32
    %c0_i32_1 = arith.constant 0 : i32
    return %c0_i32, %c0_i32_0 : i32, i32
  }
  func.func @transform_3(%arg0: i32) -> (i32, i32) {
    %c0_i32 = arith.constant 0 : i32
    %c0_i32_0 = arith.constant 0 : i32
    %c0_i32_1 = arith.constant 0 : i32
    return %c0_i32, %c0_i32_0 : i32, i32
  }
  func.func @transform_4(%arg0: i32) -> (i32, i32) {
    %c0_i32 = arith.constant 0 : i32
    %c0_i32_0 = arith.constant 0 : i32
    %c0_i32_1 = arith.constant 0 : i32
    return %c0_i32, %c0_i32_0 : i32, i32
  }
  func.func @transform_5(%arg0: i32) -> (i32, i32) {
    %c0_i32 = arith.constant 0 : i32
    %c0_i32_0 = arith.constant 0 : i32
    %c0_i32_1 = arith.constant 0 : i32
    return %c0_i32, %c0_i32_0 : i32, i32
  }
  func.func @transform_6(%arg0: i32) -> (i32, i32, i32) {
    %c0_i32 = arith.constant 0 : i32
    %c0_i32_0 = arith.constant 0 : i32
    %c0_i32_1 = arith.constant 0 : i32
    return %arg0, %c0_i32, %c0_i32_0 : i32, i32, i32
  }
  func.func @transform_7(%arg0: i32) -> (i32, i32, i32) {
    %c0_i32 = arith.constant 0 : i32
    %c0_i32_0 = arith.constant 0 : i32
    %c0_i32_1 = arith.constant 0 : i32
    return %arg0, %c0_i32, %c0_i32_0 : i32, i32, i32
  }
}

module attributes {stable_mosaic.version = 11 : i64} {
  func.func @conv3x3_bn_stats_kernel(%arg0: i32, %arg1: memref<1x324x128xbf16, #tpu.memory_space<vmem>>, %arg2: memref<9x128x128xbf16, #tpu.memory_space<vmem>>, %arg3: memref<1x128xf32, #tpu.memory_space<vmem>>, %arg4: memref<1x128xf32, #tpu.memory_space<vmem>>, %arg5: memref<1x128xf32, #tpu.memory_space<vmem>>, %arg6: memref<286x1xf32, #tpu.memory_space<vmem>>, %arg7: memref<1x324x128xbf16, #tpu.memory_space<vmem>>, %arg8: memref<1x2x128xf32, #tpu.memory_space<vmem>>, %arg9: memref<324x128xbf16, #tpu.memory_space<vmem>>) attributes {dimension_semantics = [#tpu.dimension_semantics<parallel>], iteration_bounds = array<i64: 2>, scalar_prefetch = 0 : i64, scratch_operands = 1 : i64, tpu.core_type = #tpu.core_type<tc>, window_params = [{transform_indices = @transform_0, window_bounds = array<i64: 1, 324, 128>}, {pipeline_mode = #tpu.pipeline_mode<synchronous>, transform_indices = @transform_1, window_bounds = array<i64: 9, 128, 128>}, {pipeline_mode = #tpu.pipeline_mode<synchronous>, transform_indices = @transform_2, window_bounds = array<i64: 1, 128>}, {pipeline_mode = #tpu.pipeline_mode<synchronous>, transform_indices = @transform_3, window_bounds = array<i64: 1, 128>}, {pipeline_mode = #tpu.pipeline_mode<synchronous>, transform_indices = @transform_4, window_bounds = array<i64: 1, 128>}, {pipeline_mode = #tpu.pipeline_mode<synchronous>, transform_indices = @transform_5, window_bounds = array<i64: 286, 1>}, {transform_indices = @transform_6, window_bounds = array<i64: 1, 324, 128>}, {transform_indices = @transform_7, window_bounds = array<i64: 1, 2, 128>}]} {
    %c0 = arith.constant 0 : index
    %c0_0 = arith.constant 0 : index
    %c0_1 = arith.constant 0 : index
    %0 = vector.load %arg1[%c0, %c0_0, %c0_1] : memref<1x324x128xbf16, #tpu.memory_space<vmem>>, vector<1x324x128xbf16>
    %1 = vector.shape_cast %0 : vector<1x324x128xbf16> to vector<324x128xbf16>
    %2 = arith.extf %1 : vector<324x128xbf16> to vector<324x128xf32>
    %c0_2 = arith.constant 0 : index
    %c0_3 = arith.constant 0 : index
    %3 = vector.load %arg4[%c0_2, %c0_3] : memref<1x128xf32, #tpu.memory_space<vmem>>, vector<1x128xf32>
    %4 = vector.broadcast %3 : vector<1x128xf32> to vector<324x128xf32>
    %5 = arith.mulf %2, %4 : vector<324x128xf32>
    %c0_4 = arith.constant 0 : index
    %c0_5 = arith.constant 0 : index
    %6 = vector.load %arg5[%c0_4, %c0_5] : memref<1x128xf32, #tpu.memory_space<vmem>>, vector<1x128xf32>
    %7 = vector.broadcast %6 : vector<1x128xf32> to vector<324x128xf32>
    %8 = arith.addf %5, %7 : vector<324x128xf32>
    %cst = arith.constant 0.000000e+00 : f32
    %9 = vector.broadcast %cst : f32 to vector<324x128xf32>
    %10 = arith.maximumf %8, %9 : vector<324x128xf32>
    %11 = arith.truncf %10 : vector<324x128xf32> to vector<324x128xbf16>
    %c0_6 = arith.constant 0 : index
    %c0_7 = arith.constant 0 : index
    %12 = vector.load %arg9[%c0_6, %c0_7] : memref<324x128xbf16, #tpu.memory_space<vmem>>, vector<324x128xbf16>
    tpu.vector_store %arg9[%c0_6, %c0_7], %11 {strides = array<i32>} : memref<324x128xbf16, #tpu.memory_space<vmem>>, vector<324x128xbf16>,
    %c0_8 = arith.constant 0 : index
    %c0_9 = arith.constant 0 : index
    %13 = vector.load %arg3[%c0_8, %c0_9] : memref<1x128xf32, #tpu.memory_space<vmem>>, vector<1x128xf32>
    %14 = vector.shape_cast %13 : vector<1x128xf32> to vector<1x128xf32>
    %15 = vector.broadcast %14 : vector<1x128xf32> to vector<286x128xf32>
    %c0_10 = arith.constant 0 : index
    %c0_11 = arith.constant 0 : index
    %16 = vector.load %arg9[%c0_10, %c0_11] : memref<324x128xbf16, #tpu.memory_space<vmem>>, vector<286x128xbf16>
    %c0_12 = arith.constant 0 : index
    %c0_13 = arith.constant 0 : index
    %c0_14 = arith.constant 0 : index
    %17 = vector.load %arg2[%c0_12, %c0_13, %c0_14] : memref<9x128x128xbf16, #tpu.memory_space<vmem>>, vector<1x128x128xbf16>
    %18 = vector.shape_cast %17 : vector<1x128x128xbf16> to vector<128x128xbf16>
    %cst_15 = arith.constant dense<0.000000e+00> : vector<286x128xf32>
    %19 = tpu.matmul %16, %18, %cst_15 {dimension_numbers = #tpu.dot_dimension_numbers<[1], [0], [0], [1], [0, 0, 1, 1], [], []>} : vector<286x128xbf16>, vector<128x128xbf16>, vector<286x128xf32> -> vector<286x128xf32>
    %20 = arith.addf %15, %19 : vector<286x128xf32>
    %c1 = arith.constant 1 : index
    %c0_16 = arith.constant 0 : index
    %21 = vector.load %arg9[%c1, %c0_16] : memref<324x128xbf16, #tpu.memory_space<vmem>>, vector<286x128xbf16>
    %c1_17 = arith.constant 1 : index
    %c0_18 = arith.constant 0 : index
    %c0_19 = arith.constant 0 : index
    %22 = vector.load %arg2[%c1_17, %c0_18, %c0_19] : memref<9x128x128xbf16, #tpu.memory_space<vmem>>, vector<1x128x128xbf16>
    %23 = vector.shape_cast %22 : vector<1x128x128xbf16> to vector<128x128xbf16>
    %cst_20 = arith.constant dense<0.000000e+00> : vector<286x128xf32>
    %24 = tpu.matmul %21, %23, %cst_20 {dimension_numbers = #tpu.dot_dimension_numbers<[1], [0], [0], [1], [0, 0, 1, 1], [], []>} : vector<286x128xbf16>, vector<128x128xbf16>, vector<286x128xf32> -> vector<286x128xf32>
    %25 = arith.addf %20, %24 : vector<286x128xf32>
    %c2 = arith.constant 2 : index
    %c0_21 = arith.constant 0 : index
    %26 = vector.load %arg9[%c2, %c0_21] : memref<324x128xbf16, #tpu.memory_space<vmem>>, vector<286x128xbf16>
    %c2_22 = arith.constant 2 : index
    %c0_23 = arith.constant 0 : index
    %c0_24 = arith.constant 0 : index
    %27 = vector.load %arg2[%c2_22, %c0_23, %c0_24] : memref<9x128x128xbf16, #tpu.memory_space<vmem>>, vector<1x128x128xbf16>
    %28 = vector.shape_cast %27 : vector<1x128x128xbf16> to vector<128x128xbf16>
    %cst_25 = arith.constant dense<0.000000e+00> : vector<286x128xf32>
    %29 = tpu.matmul %26, %28, %cst_25 {dimension_numbers = #tpu.dot_dimension_numbers<[1], [0], [0], [1], [0, 0, 1, 1], [], []>} : vector<286x128xbf16>, vector<128x128xbf16>, vector<286x128xf32> -> vector<286x128xf32>
    %30 = arith.addf %25, %29 : vector<286x128xf32>
    %c18 = arith.constant 18 : index
    %c0_26 = arith.constant 0 : index
    %31 = vector.load %arg9[%c18, %c0_26] : memref<324x128xbf16, #tpu.memory_space<vmem>>, vector<286x128xbf16>
    %c3 = arith.constant 3 : index
    %c0_27 = arith.constant 0 : index
    %c0_28 = arith.constant 0 : index
    %32 = vector.load %arg2[%c3, %c0_27, %c0_28] : memref<9x128x128xbf16, #tpu.memory_space<vmem>>, vector<1x128x128xbf16>
    %33 = vector.shape_cast %32 : vector<1x128x128xbf16> to vector<128x128xbf16>
    %cst_29 = arith.constant dense<0.000000e+00> : vector<286x128xf32>
    %34 = tpu.matmul %31, %33, %cst_29 {dimension_numbers = #tpu.dot_dimension_numbers<[1], [0], [0], [1], [0, 0, 1, 1], [], []>} : vector<286x128xbf16>, vector<128x128xbf16>, vector<286x128xf32> -> vector<286x128xf32>
    %35 = arith.addf %30, %34 : vector<286x128xf32>
    %c19 = arith.constant 19 : index
    %c0_30 = arith.constant 0 : index
    %36 = vector.load %arg9[%c19, %c0_30] : memref<324x128xbf16, #tpu.memory_space<vmem>>, vector<286x128xbf16>
    %c4 = arith.constant 4 : index
    %c0_31 = arith.constant 0 : index
    %c0_32 = arith.constant 0 : index
    %37 = vector.load %arg2[%c4, %c0_31, %c0_32] : memref<9x128x128xbf16, #tpu.memory_space<vmem>>, vector<1x128x128xbf16>
    %38 = vector.shape_cast %37 : vector<1x128x128xbf16> to vector<128x128xbf16>
    %cst_33 = arith.constant dense<0.000000e+00> : vector<286x128xf32>
    %39 = tpu.matmul %36, %38, %cst_33 {dimension_numbers = #tpu.dot_dimension_numbers<[1], [0], [0], [1], [0, 0, 1, 1], [], []>} : vector<286x128xbf16>, vector<128x128xbf16>, vector<286x128xf32> -> vector<286x128xf32>
    %40 = arith.addf %35, %39 : vector<286x128xf32>
    %c20 = arith.constant 20 : index
    %c0_34 = arith.constant 0 : index
    %41 = vector.load %arg9[%c20, %c0_34] : memref<324x128xbf16, #tpu.memory_space<vmem>>, vector<286x128xbf16>
    %c5 = arith.constant 5 : index
    %c0_35 = arith.constant 0 : index
    %c0_36 = arith.constant 0 : index
    %42 = vector.load %arg2[%c5, %c0_35, %c0_36] : memref<9x128x128xbf16, #tpu.memory_space<vmem>>, vector<1x128x128xbf16>
    %43 = vector.shape_cast %42 : vector<1x128x128xbf16> to vector<128x128xbf16>
    %cst_37 = arith.constant dense<0.000000e+00> : vector<286x128xf32>
    %44 = tpu.matmul %41, %43, %cst_37 {dimension_numbers = #tpu.dot_dimension_numbers<[1], [0], [0], [1], [0, 0, 1, 1], [], []>} : vector<286x128xbf16>, vector<128x128xbf16>, vector<286x128xf32> -> vector<286x128xf32>
    %45 = arith.addf %40, %44 : vector<286x128xf32>
    %c36 = arith.constant 36 : index
    %c0_38 = arith.constant 0 : index
    %46 = vector.load %arg9[%c36, %c0_38] : memref<324x128xbf16, #tpu.memory_space<vmem>>, vector<286x128xbf16>
    %c6 = arith.constant 6 : index
    %c0_39 = arith.constant 0 : index
    %c0_40 = arith.constant 0 : index
    %47 = vector.load %arg2[%c6, %c0_39, %c0_40] : memref<9x128x128xbf16, #tpu.memory_space<vmem>>, vector<1x128x128xbf16>
    %48 = vector.shape_cast %47 : vector<1x128x128xbf16> to vector<128x128xbf16>
    %cst_41 = arith.constant dense<0.000000e+00> : vector<286x128xf32>
    %49 = tpu.matmul %46, %48, %cst_41 {dimension_numbers = #tpu.dot_dimension_numbers<[1], [0], [0], [1], [0, 0, 1, 1], [], []>} : vector<286x128xbf16>, vector<128x128xbf16>, vector<286x128xf32> -> vector<286x128xf32>
    %50 = arith.addf %45, %49 : vector<286x128xf32>
    %c37 = arith.constant 37 : index
    %c0_42 = arith.constant 0 : index
    %51 = vector.load %arg9[%c37, %c0_42] : memref<324x128xbf16, #tpu.memory_space<vmem>>, vector<286x128xbf16>
    %c7 = arith.constant 7 : index
    %c0_43 = arith.constant 0 : index
    %c0_44 = arith.constant 0 : index
    %52 = vector.load %arg2[%c7, %c0_43, %c0_44] : memref<9x128x128xbf16, #tpu.memory_space<vmem>>, vector<1x128x128xbf16>
    %53 = vector.shape_cast %52 : vector<1x128x128xbf16> to vector<128x128xbf16>
    %cst_45 = arith.constant dense<0.000000e+00> : vector<286x128xf32>
    %54 = tpu.matmul %51, %53, %cst_45 {dimension_numbers = #tpu.dot_dimension_numbers<[1], [0], [0], [1], [0, 0, 1, 1], [], []>} : vector<286x128xbf16>, vector<128x128xbf16>, vector<286x128xf32> -> vector<286x128xf32>
    %55 = arith.addf %50, %54 : vector<286x128xf32>
    %c38 = arith.constant 38 : index
    %c0_46 = arith.constant 0 : index
    %56 = vector.load %arg9[%c38, %c0_46] : memref<324x128xbf16, #tpu.memory_space<vmem>>, vector<286x128xbf16>
    %c8 = arith.constant 8 : index
    %c0_47 = arith.constant 0 : index
    %c0_48 = arith.constant 0 : index
    %57 = vector.load %arg2[%c8, %c0_47, %c0_48] : memref<9x128x128xbf16, #tpu.memory_space<vmem>>, vector<1x128x128xbf16>
    %58 = vector.shape_cast %57 : vector<1x128x128xbf16> to vector<128x128xbf16>
    %cst_49 = arith.constant dense<0.000000e+00> : vector<286x128xf32>
    %59 = tpu.matmul %56, %58, %cst_49 {dimension_numbers = #tpu.dot_dimension_numbers<[1], [0], [0], [1], [0, 0, 1, 1], [], []>} : vector<286x128xbf16>, vector<128x128xbf16>, vector<286x128xf32> -> vector<286x128xf32>
    %60 = arith.addf %55, %59 : vector<286x128xf32>
    %c0_50 = arith.constant 0 : index
    %c0_51 = arith.constant 0 : index
    %61 = vector.load %arg6[%c0_50, %c0_51] : memref<286x1xf32, #tpu.memory_space<vmem>>, vector<286x1xf32>
    %cst_52 = arith.constant 5.000000e-01 : f32
    %62 = vector.broadcast %cst_52 : f32 to vector<286x1xf32>
    %63 = arith.cmpf ogt, %61, %62 : vector<286x1xf32>
    %cst_53 = arith.constant 0.000000e+00 : f32
    %64 = vector.shape_cast %63 : vector<286x1xi1> to vector<286x1xi1>
    %65 = vector.broadcast %64 : vector<286x1xi1> to vector<286x128xi1>
    %66 = vector.broadcast %cst_53 : f32 to vector<286x128xf32>
    %67 = arith.select %65, %60, %66 : vector<286x128xi1>, vector<286x128xf32>
    %cst_54 = arith.constant dense<0.000000e+00> : vector<128xf32>
    %68 = vector.multi_reduction <add>, %67, %cst_54 [0] : vector<286x128xf32> to vector<128xf32>
    %69 = vector.shape_cast %68 : vector<128xf32> to vector<1x128xf32>
    %c0_55 = arith.constant 0 : index
    %c0_56 = arith.constant 0 : index
    %c0_57 = arith.constant 0 : index
    %70 = vector.load %arg8[%c0_55, %c0_56, %c0_57] : memref<1x2x128xf32, #tpu.memory_space<vmem>>, vector<1x1x128xf32>
    %71 = vector.shape_cast %70 : vector<1x1x128xf32> to vector<1x128xf32>
    %72 = vector.shape_cast %69 : vector<1x128xf32> to vector<1x1x128xf32>
    tpu.vector_store %arg8[%c0_55, %c0_56, %c0_57], %72 {strides = array<i32>} : memref<1x2x128xf32, #tpu.memory_space<vmem>>, vector<1x1x128xf32>,
    %73 = arith.mulf %67, %67 : vector<286x128xf32>
    %cst_58 = arith.constant dense<0.000000e+00> : vector<128xf32>
    %74 = vector.multi_reduction <add>, %73, %cst_58 [0] : vector<286x128xf32> to vector<128xf32>
    %75 = vector.shape_cast %74 : vector<128xf32> to vector<1x128xf32>
    %c0_59 = arith.constant 0 : index
    %c1_60 = arith.constant 1 : index
    %c0_61 = arith.constant 0 : index
    %76 = vector.load %arg8[%c0_59, %c1_60, %c0_61] : memref<1x2x128xf32, #tpu.memory_space<vmem>>, vector<1x1x128xf32>
    %77 = vector.shape_cast %76 : vector<1x1x128xf32> to vector<1x128xf32>
    %78 = vector.shape_cast %75 : vector<1x128xf32> to vector<1x1x128xf32>
    tpu.vector_store %arg8[%c0_59, %c1_60, %c0_61], %78 {strides = array<i32>} : memref<1x2x128xf32, #tpu.memory_space<vmem>>, vector<1x1x128xf32>,
    %cst_62 = arith.constant -1.000000e+09 : f32
    %79 = vector.shape_cast %63 : vector<286x1xi1> to vector<286x1xi1>
    %80 = vector.broadcast %79 : vector<286x1xi1> to vector<286x128xi1>
    %81 = vector.broadcast %cst_62 : f32 to vector<286x128xf32>
    %82 = arith.select %80, %60, %81 : vector<286x128xi1>, vector<286x128xf32>
    %83 = arith.truncf %82 : vector<286x128xf32> to vector<286x128xbf16>
    %c0_63 = arith.constant 0 : index
    %c19_64 = arith.constant 19 : index
    %c0_65 = arith.constant 0 : index
    %84 = vector.load %arg7[%c0_63, %c19_64, %c0_65] : memref<1x324x128xbf16, #tpu.memory_space<vmem>>, vector<1x286x128xbf16>
    %85 = vector.shape_cast %84 : vector<1x286x128xbf16> to vector<286x128xbf16>
    %86 = vector.shape_cast %83 : vector<286x128xbf16> to vector<1x286x128xbf16>
    tpu.vector_store %arg7[%c0_63, %c19_64, %c0_65], %86 {strides = array<i32>} : memref<1x324x128xbf16, #tpu.memory_space<vmem>>, vector<1x286x128xbf16>,
    %cst_66 = arith.constant -9.982440e+08 : bf16
    %87 = vector.broadcast %cst_66 : bf16 to vector<19x128xbf16>
    %c0_67 = arith.constant 0 : index
    %c0_68 = arith.constant 0 : index
    %c0_69 = arith.constant 0 : index
    %88 = vector.load %arg7[%c0_67, %c0_68, %c0_69] : memref<1x324x128xbf16, #tpu.memory_space<vmem>>, vector<1x19x128xbf16>
    %89 = vector.shape_cast %88 : vector<1x19x128xbf16> to vector<19x128xbf16>
    %90 = vector.shape_cast %87 : vector<19x128xbf16> to vector<1x19x128xbf16>
    tpu.vector_store %arg7[%c0_67, %c0_68, %c0_69], %90 {strides = array<i32>} : memref<1x324x128xbf16, #tpu.memory_space<vmem>>, vector<1x19x128xbf16>,
    %c0_70 = arith.constant 0 : index
    %c305 = arith.constant 305 : index
    %c0_71 = arith.constant 0 : index
    %91 = vector.load %arg7[%c0_70, %c305, %c0_71] : memref<1x324x128xbf16, #tpu.memory_space<vmem>>, vector<1x19x128xbf16>
    %92 = vector.shape_cast %91 : vector<1x19x128xbf16> to vector<19x128xbf16>
    %93 = vector.shape_cast %87 : vector<19x128xbf16> to vector<1x19x128xbf16>
    tpu.vector_store %arg7[%c0_70, %c305, %c0_71], %93 {strides = array<i32>} : memref<1x324x128xbf16, #tpu.memory_space<vmem>>, vector<1x19x128xbf16>,
    return
  }
  func.func @transform_0(%arg0: i32) -> (i32, i32, i32) {
    %c0_i32 = arith.constant 0 : i32
    %c0_i32_0 = arith.constant 0 : i32
    %c0_i32_1 = arith.constant 0 : i32
    return %arg0, %c0_i32, %c0_i32_0 : i32, i32, i32
  }
  func.func @transform_1(%arg0: i32) -> (i32, i32, i32) {
    %c0_i32 = arith.constant 0 : i32
    %c0_i32_0 = arith.constant 0 : i32
    %c0_i32_1 = arith.constant 0 : i32
    %c0_i32_2 = arith.constant 0 : i32
    return %c0_i32, %c0_i32_0, %c0_i32_1 : i32, i32, i32
  }
  func.func @transform_2(%arg0: i32) -> (i32, i32) {
    %c0_i32 = arith.constant 0 : i32
    %c0_i32_0 = arith.constant 0 : i32
    %c0_i32_1 = arith.constant 0 : i32
    return %c0_i32, %c0_i32_0 : i32, i32
  }
  func.func @transform_3(%arg0: i32) -> (i32, i32) {
    %c0_i32 = arith.constant 0 : i32
    %c0_i32_0 = arith.constant 0 : i32
    %c0_i32_1 = arith.constant 0 : i32
    return %c0_i32, %c0_i32_0 : i32, i32
  }
  func.func @transform_4(%arg0: i32) -> (i32, i32) {
    %c0_i32 = arith.constant 0 : i32
    %c0_i32_0 = arith.constant 0 : i32
    %c0_i32_1 = arith.constant 0 : i32
    return %c0_i32, %c0_i32_0 : i32, i32
  }
  func.func @transform_5(%arg0: i32) -> (i32, i32) {
    %c0_i32 = arith.constant 0 : i32
    %c0_i32_0 = arith.constant 0 : i32
    %c0_i32_1 = arith.constant 0 : i32
    return %c0_i32, %c0_i32_0 : i32, i32
  }
  func.func @transform_6(%arg0: i32) -> (i32, i32, i32) {
    %c0_i32 = arith.constant 0 : i32
    %c0_i32_0 = arith.constant 0 : i32
    %c0_i32_1 = arith.constant 0 : i32
    return %arg0, %c0_i32, %c0_i32_0 : i32, i32, i32
  }
  func.func @transform_7(%arg0: i32) -> (i32, i32, i32) {
    %c0_i32 = arith.constant 0 : i32
    %c0_i32_0 = arith.constant 0 : i32
    %c0_i32_1 = arith.constant 0 : i32
    return %arg0, %c0_i32, %c0_i32_0 : i32, i32, i32
  }
}

module attributes {stable_mosaic.version = 11 : i64} {
  func.func @bn_relu_kernel(%arg0: i32, %arg1: memref<1x324x128xbf16, #tpu.memory_space<vmem>>, %arg2: memref<1x128xf32, #tpu.memory_space<vmem>>, %arg3: memref<1x128xf32, #tpu.memory_space<vmem>>, %arg4: memref<1x324x128xf32, #tpu.memory_space<vmem>>) attributes {dimension_semantics = [#tpu.dimension_semantics<parallel>], iteration_bounds = array<i64: 2>, scalar_prefetch = 0 : i64, scratch_operands = 0 : i64, tpu.core_type = #tpu.core_type<tc>, window_params = [{transform_indices = @transform_0, window_bounds = array<i64: 1, 324, 128>}, {pipeline_mode = #tpu.pipeline_mode<synchronous>, transform_indices = @transform_1, window_bounds = array<i64: 1, 128>}, {pipeline_mode = #tpu.pipeline_mode<synchronous>, transform_indices = @transform_2, window_bounds = array<i64: 1, 128>}, {transform_indices = @transform_3, window_bounds = array<i64: 1, 324, 128>}]} {
    %c0 = arith.constant 0 : index
    %c0_0 = arith.constant 0 : index
    %c0_1 = arith.constant 0 : index
    %0 = vector.load %arg1[%c0, %c0_0, %c0_1] : memref<1x324x128xbf16, #tpu.memory_space<vmem>>, vector<1x324x128xbf16>
    %1 = vector.shape_cast %0 : vector<1x324x128xbf16> to vector<324x128xbf16>
    %2 = arith.extf %1 : vector<324x128xbf16> to vector<324x128xf32>
    %c0_2 = arith.constant 0 : index
    %c0_3 = arith.constant 0 : index
    %3 = vector.load %arg2[%c0_2, %c0_3] : memref<1x128xf32, #tpu.memory_space<vmem>>, vector<1x128xf32>
    %4 = vector.broadcast %3 : vector<1x128xf32> to vector<324x128xf32>
    %5 = arith.mulf %2, %4 : vector<324x128xf32>
    %c0_4 = arith.constant 0 : index
    %c0_5 = arith.constant 0 : index
    %6 = vector.load %arg3[%c0_4, %c0_5] : memref<1x128xf32, #tpu.memory_space<vmem>>, vector<1x128xf32>
    %7 = vector.broadcast %6 : vector<1x128xf32> to vector<324x128xf32>
    %8 = arith.addf %5, %7 : vector<324x128xf32>
    %cst = arith.constant 0.000000e+00 : f32
    %9 = vector.broadcast %cst : f32 to vector<324x128xf32>
    %10 = arith.maximumf %8, %9 : vector<324x128xf32>
    %c0_6 = arith.constant 0 : index
    %c0_7 = arith.constant 0 : index
    %c0_8 = arith.constant 0 : index
    %11 = vector.load %arg4[%c0_6, %c0_7, %c0_8] : memref<1x324x128xf32, #tpu.memory_space<vmem>>, vector<1x324x128xf32>
    %12 = vector.shape_cast %11 : vector<1x324x128xf32> to vector<324x128xf32>
    %13 = vector.shape_cast %10 : vector<324x128xf32> to vector<1x324x128xf32>
    tpu.vector_store %arg4[%c0_6, %c0_7, %c0_8], %13 {strides = array<i32>} : memref<1x324x128xf32, #tpu.memory_space<vmem>>, vector<1x324x128xf32>,
    return
  }
  func.func @transform_0(%arg0: i32) -> (i32, i32, i32) {
    %c0_i32 = arith.constant 0 : i32
    %c0_i32_0 = arith.constant 0 : i32
    %c0_i32_1 = arith.constant 0 : i32
    return %arg0, %c0_i32, %c0_i32_0 : i32, i32, i32
  }
  func.func @transform_1(%arg0: i32) -> (i32, i32) {
    %c0_i32 = arith.constant 0 : i32
    %c0_i32_0 = arith.constant 0 : i32
    %c0_i32_1 = arith.constant 0 : i32
    return %c0_i32, %c0_i32_0 : i32, i32
  }
  func.func @transform_2(%arg0: i32) -> (i32, i32) {
    %c0_i32 = arith.constant 0 : i32
    %c0_i32_0 = arith.constant 0 : i32
    %c0_i32_1 = arith.constant 0 : i32
    return %c0_i32, %c0_i32_0 : i32, i32
  }
  func.func @transform_3(%arg0: i32) -> (i32, i32, i32) {
    %c0_i32 = arith.constant 0 : i32
    %c0_i32_0 = arith.constant 0 : i32
    %c0_i32_1 = arith.constant 0 : i32
    return %arg0, %c0_i32, %c0_i32_0 : i32, i32, i32
  }
}

</mosaic_0001>

<llo_original>
// kernel: convolution_block_forward.5
$region0: #{convolution_block_forward.5}
  #allocation0 [shape = 'u32[]', space=smem, size = 0x4, offset = 0x4, fixed_abs, tag = 'smem constant byte address 0x4 - core index']
  #allocation1 [shape = 'u32[144,128]{1,0:T(1,128)}', space=vmem, size = 0x12000, scoped, tag = 'internal scratch']
  %s0 = inlined_call_operand.vmem [shape: bf16[2,324,128], index: 0, kind: input, shape index: {}]
  %s1 = inlined_call_operand.vmem [shape: f32[1,128], index: 1, kind: input, shape index: {}]
  %s2 = inlined_call_operand.vmem [shape: f32[1,128], index: 2, kind: input, shape index: {}]
  %s3 = inlined_call_operand.vmem [shape: f32[2,324,128], index: 3, kind: output, shape index: {}]
  %s4 = sld [smem:[#allocation0]]
  $region45: #{convolution_block_forward.5} parent=0
    _
  %s6 = ssub.s32 1, %s4
  %s7 = scalar_select 0, %s6, %s4
  loop: start=0, step=1, limit=4
  $region2: #{convolution_block_forward.5} parent=0 // loop_pre_header
    _
  $region3: #{convolution_block_forward.5} parent=0 // loop_header
    %s9 = sphi 0, %s13
    %p10 = scmp.ge.s32.totalorder %s9, 4
    %s19 = sphi 0, %s21
    %s22 = sphi 0, %s19
    %s23 = sphi 0, %s22
    %s39 = sphi 0, %s23
    %s43 = sphi 0, %s43
    %s45 = sphi 0, %s43
    %s46 = sphi 0, %s45
    %s60 = sphi 0, %s46
    %s64 = sphi 0, %s64
    %s66 = sphi 0, %s64
    %s67 = sphi 0, %s66
    %s81 = sphi 0, %s67
    %s87 = sphi 0, %s89
    %s90 = sphi 0, %s87
    %s91 = sphi 0, %s90
    %s107 = sphi 0, %s91
  $region4: #{convolution_block_forward.5} parent=0 // loop_header_branch
    %12 = sbr.rel (%p10) target = $region8
  $region5: #{convolution_block_forward.5} parent=0 // loop_body
    %s14 = ssub.s32 %s9, 1
    %s15 = ssub.s32 %s9, 2
    %s16 = sadd.s32 %s9, 1
    %s17 = ssub.s32 %s9, %s16
    %p18 = scmp.eq.s32.totalorder %s17, 0
    %s20 = sadd.s32 %s19, 1
    %s21 = scalar_select %p18, %s19, %s20
    %p24 = pneg %p18
    %p25 = scmp.eq.s32.totalorder %s9, 1
    %p26 = por %p24, %p25
    %p27 = scmp.ne.s32.totalorder %s19, %s22
    %p28 = scmp.eq.s32.totalorder %s9, 0
    %p29 = por %p27, %p28
    %p30 = scmp.ne.s32.totalorder %s19, %s22
    %p31 = scmp.eq.s32.totalorder %s14, 1
    %p32 = por %p30, %p31
    %p33 = scmp.ne.s32.totalorder %s22, %s23
    %p34 = scmp.eq.s32.totalorder %s14, 0
    %p35 = por %p33, %p34
    %p36 = scmp.ne.s32.totalorder %s22, %s23
    %p37 = scmp.eq.s32.totalorder %s15, 1
    %p38 = por %p36, %p37
    %p40 = scmp.ne.s32.totalorder %s23, %s39
    %p41 = scmp.eq.s32.totalorder %s15, 0
    %p42 = por %p40, %p41
    %s44 = sadd.s32 %s43, 1
    %p47 = scmp.eq.s32.totalorder %s9, 1
    %p48 = scmp.ne.s32.totalorder %s43, %s45
    %p49 = scmp.eq.s32.totalorder %s9, 0
    %p50 = por %p48, %p49
    %p51 = scmp.ne.s32.totalorder %s43, %s45
    %p52 = scmp.eq.s32.totalorder %s14, 1
    %p53 = por %p51, %p52
    %p54 = scmp.ne.s32.totalorder %s45, %s46
    %p55 = scmp.eq.s32.totalorder %s14, 0
    %p56 = por %p54, %p55
    %p57 = scmp.ne.s32.totalorder %s45, %s46
    %p58 = scmp.eq.s32.totalorder %s15, 1
    %p59 = por %p57, %p58
    %p61 = scmp.ne.s32.totalorder %s46, %s60
    %p62 = scmp.eq.s32.totalorder %s15, 0
    %p63 = por %p61, %p62
    %s65 = sadd.s32 %s64, 1
    %p68 = scmp.eq.s32.totalorder %s9, 1
    %p69 = scmp.ne.s32.totalorder %s64, %s66
    %p70 = scmp.eq.s32.totalorder %s9, 0
    %p71 = por %p69, %p70
    %p72 = scmp.ne.s32.totalorder %s64, %s66
    %p73 = scmp.eq.s32.totalorder %s14, 1
    %p74 = por %p72, %p73
    %p75 = scmp.ne.s32.totalorder %s66, %s67
    %p76 = scmp.eq.s32.totalorder %s14, 0
    %p77 = por %p75, %p76
    %p78 = scmp.ne.s32.totalorder %s66, %s67
    %p79 = scmp.eq.s32.totalorder %s15, 1
    %p80 = por %p78, %p79
    %p82 = scmp.ne.s32.totalorder %s67, %s81
    %p83 = scmp.eq.s32.totalorder %s15, 0
    %p84 = por %p82, %p83
    %s85 = ssub.s32 %s9, %s16
    %p86 = scmp.eq.s32.totalorder %s85, 0
    %s88 = sadd.s32 %s87, 1
    %s89 = scalar_select %p86, %s87, %s88
    %p92 = pneg %p86
    %p93 = scmp.eq.s32.totalorder %s9, 1
    %p94 = por %p92, %p93
    %p95 = scmp.ne.s32.totalorder %s87, %s90
    %p96 = scmp.eq.s32.totalorder %s9, 0
    %p97 = por %p95, %p96
    %p98 = scmp.ne.s32.totalorder %s87, %s90
    %p99 = scmp.eq.s32.totalorder %s14, 1
    %p100 = por %p98, %p99
    %p101 = scmp.ne.s32.totalorder %s90, %s91
    %p102 = scmp.eq.s32.totalorder %s14, 0
    %p103 = por %p101, %p102
    %p104 = scmp.ne.s32.totalorder %s90, %s91
    %p105 = scmp.eq.s32.totalorder %s15, 1
    %p106 = por %p104, %p105
    %p108 = scmp.ne.s32.totalorder %s91, %s107
    %p109 = scmp.eq.s32.totalorder %s15, 0
    %p110 = por %p108, %p109
    %p111 = scmp.le.s32.totalorder 1, %s9
    %p112 = scmp.lt.s32.totalorder %s9, 3
    %p113 = pnand %p111, %p112
    %p114 = pneg %p113
    // Predicated region
    $region9: #{convolution_block_forward.5} parent=5 // pred_check
      _
    $region10: #{convolution_block_forward.5} parent=5 // pred_check_branch
      %116 = sbr.rel (%p113) target = $region12
    $region11: #{convolution_block_forward.5} parent=5 // pred_region
      %s117 = ssub.s32 %s9, 1
      // Predicated region
      $region13: #{convolution_block_forward.5} parent=11 // pred_check
        %p118 = pneg %p56
      $region14: #{convolution_block_forward.5} parent=11 // pred_check_branch
        %120 = sbr.rel (%p118) target = $region16
      $region15: #{convolution_block_forward.5} parent=11 // pred_region
        _
      $region16: #{convolution_block_forward.5} parent=11 // pred_fallthru
        _
      // Predicated region
      $region17: #{convolution_block_forward.5} parent=11 // pred_check
        %p121 = pneg %p77
      $region18: #{convolution_block_forward.5} parent=11 // pred_check_branch
        %123 = sbr.rel (%p121) target = $region20
      $region19: #{convolution_block_forward.5} parent=11 // pred_region
        _
      $region20: #{convolution_block_forward.5} parent=11 // pred_fallthru
        _
    $region12: #{convolution_block_forward.5} parent=5 // pred_fallthru
      _
    %p124 = scmp.lt.s32.totalorder %s9, 2
    // Predicated region
    $region21: #{convolution_block_forward.5} parent=5 // pred_check
      %p125 = pneg %p124
    $region22: #{convolution_block_forward.5} parent=5 // pred_check_branch
      %127 = sbr.rel (%p125) target = $region24
    $region23: #{convolution_block_forward.5} parent=5 // pred_region
      // Predicated region
      $region25: #{convolution_block_forward.5} parent=23 // pred_check
        %p128 = pneg %p29
      $region26: #{convolution_block_forward.5} parent=23 // pred_check_branch
        %130 = sbr.rel (%p128) target = $region28
      $region27: #{convolution_block_forward.5} parent=23 // pred_region
        %p131 = scmp.lt.s32.totalorder %s9, 1
        %s132 = scalar_select %p131, %s9, 1
        %s133 = smul.addr %s132, 41
        %s134 = smul.addr %s133, 4
        %s135 = scalar_lea.vmem %s0, %s134
      $region28: #{convolution_block_forward.5} parent=23 // pred_fallthru
        _
    $region24: #{convolution_block_forward.5} parent=5 // pred_fallthru
      _
    %p136 = scmp.le.s32.totalorder 1, %s9
    %p137 = scmp.lt.s32.totalorder %s9, 3
    %p138 = pnand %p136, %p137
    %p139 = pneg %p138
    // Predicated region
    $region29: #{convolution_block_forward.5} parent=5 // pred_check
      _
    $region30: #{convolution_block_forward.5} parent=5 // pred_check_branch
      %141 = sbr.rel (%p138) target = $region32
    $region31: #{convolution_block_forward.5} parent=5 // pred_region
      %s142 = ssub.s32 %s9, 1
      %p143 = scmp.lt.s32.totalorder %s14, 1
      %s144 = scalar_select %p143, %s14, 1
      %s145 = smul.addr %s144, 41
      %s146 = smul.addr %s145, 4
      %s147 = scalar_lea.vmem %s0, %s146
      %p148 = pneg %p35
      %p149 = pneg %p32
      %p150 = pneg %p56
      %p151 = pneg %p53
      %p152 = pneg %p77
      %p153 = pneg %p74
      %p154 = pneg %p103
      %p155 = pneg %p100
      %p156 = scmp.lt.s32.totalorder %s14, 1
      %s157 = scalar_select %p156, %s14, 1
      %s158 = smul.addr %s157, 41
      %s159 = smul.addr %s158, 8
      %s160 = scalar_lea.vmem %s3, %s159
      %p161 = scmp.lt.s32.totalorder %s14, 1
      %s162 = scalar_select %p161, %s14, 1
      %s163 = smul.addr %s162, 41
      %s164 = smul.addr %s163, 4
      %s165 = scalar_lea.vmem %s0, %s164
      %p166 = scmp.lt.s32.totalorder %s14, 1
      %s167 = scalar_select %p166, %s14, 1
      %s168 = smul.addr %s167, 41
      %s169 = smul.addr %s168, 8
      %s170 = scalar_lea.vmem %s3, %s169
      %v171 = vld [vmem:[%s165] sm:$0xf]
      %v172 = vld [vmem:[%s165 + $0x4] sm:$0xf]
      %v173 = vld [vmem:[%s165 + $0x8] sm:$0xf]
      %v174 = vld [vmem:[%s165 + $0xc] sm:$0xf]
      %v175 = vld [vmem:[%s165 + $0x10] sm:$0xf]
      %v176 = vld [vmem:[%s165 + $0x14] sm:$0xf]
      %v177 = vld [vmem:[%s165 + $0x18] sm:$0xf]
      %v178 = vld [vmem:[%s165 + $0x1c] sm:$0xf]
      %v179 = vld [vmem:[%s165 + $0x20] sm:$0xf]
      %v180 = vld [vmem:[%s165 + $0x24] sm:$0xf]
      %v181 = vld [vmem:[%s165 + $0x28] sm:$0xf]
      %v182 = vld [vmem:[%s165 + $0x2c] sm:$0xf]
      %v183 = vld [vmem:[%s165 + $0x30] sm:$0xf]
      %v184 = vld [vmem:[%s165 + $0x34] sm:$0xf]
      %v185 = vld [vmem:[%s165 + $0x38] sm:$0xf]
      %v186 = vld [vmem:[%s165 + $0x3c] sm:$0xf]
      %v187 = vld [vmem:[%s165 + $0x40] sm:$0xf]
      %v188 = vld [vmem:[%s165 + $0x44] sm:$0xf]
      %v189 = vld [vmem:[%s165 + $0x48] sm:$0xf]
      %v190 = vld [vmem:[%s165 + $0x4c] sm:$0xf]
      %v191 = vld [vmem:[%s165 + $0x50] sm:$0xf]
      %v192 = vld [vmem:[%s165 + $0x54] sm:$0xf]
      %v193 = vld [vmem:[%s165 + $0x58] sm:$0xf]
      %v194 = vld [vmem:[%s165 + $0x5c] sm:$0xf]
      %v195 = vld [vmem:[%s165 + $0x60] sm:$0xf]
      %v196 = vld [vmem:[%s165 + $0x64] sm:$0xf]
      %v197 = vld [vmem:[%s165 + $0x68] sm:$0xf]
      %v198 = vld [vmem:[%s165 + $0x6c] sm:$0xf]
      %v199 = vld [vmem:[%s165 + $0x70] sm:$0xf]
      %v200 = vld [vmem:[%s165 + $0x74] sm:$0xf]
      %v201 = vld [vmem:[%s165 + $0x78] sm:$0xf]
      %v202 = vld [vmem:[%s165 + $0x7c] sm:$0xf]
      %v203 = vld [vmem:[%s165 + $0x80] sm:$0xf]
      %v204 = vld [vmem:[%s165 + $0x84] sm:$0xf]
      %v205 = vld [vmem:[%s165 + $0x88] sm:$0xf]
      %v206 = vld [vmem:[%s165 + $0x8c] sm:$0xf]
      %v207 = vld [vmem:[%s165 + $0x90] sm:$0xf]
      %v208 = vld [vmem:[%s165 + $0x94] sm:$0xf]
      %v209 = vld [vmem:[%s165 + $0x98] sm:$0xf]
      %v210 = vld [vmem:[%s165 + $0x9c] sm:$0xf]
      %v211 = vld [vmem:[%s165 + $0xa0] sm:$0x3]
      %v212 = vunpack.c.l.bf16 %v171
      %v213 = vunpack.c.l.bf16 %v172
      %v214 = vunpack.c.l.bf16 %v173
      %v215 = vunpack.c.l.bf16 %v174
      %v216 = vunpack.c.l.bf16 %v175
      %v217 = vunpack.c.l.bf16 %v176
      %v218 = vunpack.c.l.bf16 %v177
      %v219 = vunpack.c.l.bf16 %v178
      %v220 = vunpack.c.l.bf16 %v179
      %v221 = vunpack.c.l.bf16 %v180
      %v222 = vunpack.c.l.bf16 %v181
      %v223 = vunpack.c.l.bf16 %v182
      %v224 = vunpack.c.l.bf16 %v183
      %v225 = vunpack.c.l.bf16 %v184
      %v226 = vunpack.c.l.bf16 %v185
      %v227 = vunpack.c.l.bf16 %v186
      %v228 = vunpack.c.l.bf16 %v187
      %v229 = vunpack.c.l.bf16 %v188
      %v230 = vunpack.c.l.bf16 %v189
      %v231 = vunpack.c.l.bf16 %v190
      %v232 = vunpack.c.l.bf16 %v191
      %v233 = vunpack.c.l.bf16 %v192
      %v234 = vunpack.c.l.bf16 %v193
      %v235 = vunpack.c.l.bf16 %v194
      %v236 = vunpack.c.l.bf16 %v195
      %v237 = vunpack.c.l.bf16 %v196
      %v238 = vunpack.c.l.bf16 %v197
      %v239 = vunpack.c.l.bf16 %v198
      %v240 = vunpack.c.l.bf16 %v199
      %v241 = vunpack.c.l.bf16 %v200
      %v242 = vunpack.c.l.bf16 %v201
      %v243 = vunpack.c.l.bf16 %v202
      %v244 = vunpack.c.l.bf16 %v203
      %v245 = vunpack.c.l.bf16 %v204
      %v246 = vunpack.c.l.bf16 %v205
      %v247 = vunpack.c.l.bf16 %v206
      %v248 = vunpack.c.l.bf16 %v207
      %v249 = vunpack.c.l.bf16 %v208
      %v250 = vunpack.c.l.bf16 %v209
      %v251 = vunpack.c.l.bf16 %v210
      %v252 = vunpack.c.l.bf16 %v211
      %v253 = vld [vmem:[%s1] sm:$0x1]
      %v255 = vlaneseq
      %v256 = vshrl.u32 %v255, 7
      %v257 = vsub.s32 0, %v256
      %v258 = vrot.slane %v253, %v257
      %v260 = vmul.f32 %v212, %v258
      %v261 = vmul.f32 %v213, %v258
      %v262 = vmul.f32 %v214, %v258
      %v263 = vmul.f32 %v215, %v258
      %v264 = vmul.f32 %v216, %v258
      %v265 = vmul.f32 %v217, %v258
      %v266 = vmul.f32 %v218, %v258
      %v267 = vmul.f32 %v219, %v258
      %v268 = vmul.f32 %v220, %v258
      %v269 = vmul.f32 %v221, %v258
      %v270 = vmul.f32 %v222, %v258
      %v271 = vmul.f32 %v223, %v258
      %v272 = vmul.f32 %v224, %v258
      %v273 = vmul.f32 %v225, %v258
      %v274 = vmul.f32 %v226, %v258
      %v275 = vmul.f32 %v227, %v258
      %v276 = vmul.f32 %v228, %v258
      %v277 = vmul.f32 %v229, %v258
      %v278 = vmul.f32 %v230, %v258
      %v279 = vmul.f32 %v231, %v258
      %v280 = vmul.f32 %v232, %v258
      %v281 = vmul.f32 %v233, %v258
      %v282 = vmul.f32 %v234, %v258
      %v283 = vmul.f32 %v235, %v258
      %v284 = vmul.f32 %v236, %v258
      %v285 = vmul.f32 %v237, %v258
      %v286 = vmul.f32 %v238, %v258
      %v287 = vmul.f32 %v239, %v258
      %v288 = vmul.f32 %v240, %v258
      %v289 = vmul.f32 %v241, %v258
      %v290 = vmul.f32 %v242, %v258
      %v291 = vmul.f32 %v243, %v258
      %v292 = vmul.f32 %v244, %v258
      %v293 = vmul.f32 %v245, %v258
      %v294 = vmul.f32 %v246, %v258
      %v295 = vmul.f32 %v247, %v258
      %v296 = vmul.f32 %v248, %v258
      %v297 = vmul.f32 %v249, %v258
      %v298 = vmul.f32 %v250, %v258
      %v299 = vmul.f32 %v251, %v258
      %v300 = vmul.f32 %v252, %v258
      %v301 = vld [vmem:[%s2] sm:$0x1]
      %v303 = vlaneseq
      %v304 = vshrl.u32 %v303, 7
      %v305 = vsub.s32 0, %v304
      %v306 = vrot.slane %v301, %v305
      %v308 = vadd.f32 %v260, %v306
      %v309 = vadd.f32 %v261, %v306
      %v310 = vadd.f32 %v262, %v306
      %v311 = vadd.f32 %v263, %v306
      %v312 = vadd.f32 %v264, %v306
      %v313 = vadd.f32 %v265, %v306
      %v314 = vadd.f32 %v266, %v306
      %v315 = vadd.f32 %v267, %v306
      %v316 = vadd.f32 %v268, %v306
      %v317 = vadd.f32 %v269, %v306
      %v318 = vadd.f32 %v270, %v306
      %v319 = vadd.f32 %v271, %v306
      %v320 = vadd.f32 %v272, %v306
      %v321 = vadd.f32 %v273, %v306
      %v322 = vadd.f32 %v274, %v306
      %v323 = vadd.f32 %v275, %v306
      %v324 = vadd.f32 %v276, %v306
      %v325 = vadd.f32 %v277, %v306
      %v326 = vadd.f32 %v278, %v306
      %v327 = vadd.f32 %v279, %v306
      %v328 = vadd.f32 %v280, %v306
      %v329 = vadd.f32 %v281, %v306
      %v330 = vadd.f32 %v282, %v306
      %v331 = vadd.f32 %v283, %v306
      %v332 = vadd.f32 %v284, %v306
      %v333 = vadd.f32 %v285, %v306
      %v334 = vadd.f32 %v286, %v306
      %v335 = vadd.f32 %v287, %v306
      %v336 = vadd.f32 %v288, %v306
      %v337 = vadd.f32 %v289, %v306
      %v338 = vadd.f32 %v290, %v306
      %v339 = vadd.f32 %v291, %v306
      %v340 = vadd.f32 %v292, %v306
      %v341 = vadd.f32 %v293, %v306
      %v342 = vadd.f32 %v294, %v306
      %v343 = vadd.f32 %v295, %v306
      %v344 = vadd.f32 %v296, %v306
      %v345 = vadd.f32 %v297, %v306
      %v346 = vadd.f32 %v298, %v306
      %v347 = vadd.f32 %v299, %v306
      %v348 = vadd.f32 %v300, %v306
      %v349 = vmax.f32 %v308, 0.0
      %v350 = vmax.f32 %v309, 0.0
      %v351 = vmax.f32 %v310, 0.0
      %v352 = vmax.f32 %v311, 0.0
      %v353 = vmax.f32 %v312, 0.0
      %v354 = vmax.f32 %v313, 0.0
      %v355 = vmax.f32 %v314, 0.0
      %v356 = vmax.f32 %v315, 0.0
      %v357 = vmax.f32 %v316, 0.0
      %v358 = vmax.f32 %v317, 0.0
      %v359 = vmax.f32 %v318, 0.0
      %v360 = vmax.f32 %v319, 0.0
      %v361 = vmax.f32 %v320, 0.0
      %v362 = vmax.f32 %v321, 0.0
      %v363 = vmax.f32 %v322, 0.0
      %v364 = vmax.f32 %v323, 0.0
      %v365 = vmax.f32 %v324, 0.0
      %v366 = vmax.f32 %v325, 0.0
      %v367 = vmax.f32 %v326, 0.0
      %v368 = vmax.f32 %v327, 0.0
      %v369 = vmax.f32 %v328, 0.0
      %v370 = vmax.f32 %v329, 0.0
      %v371 = vmax.f32 %v330, 0.0
      %v372 = vmax.f32 %v331, 0.0
      %v373 = vmax.f32 %v332, 0.0
      %v374 = vmax.f32 %v333, 0.0
      %v375 = vmax.f32 %v334, 0.0
      %v376 = vmax.f32 %v335, 0.0
      %v377 = vmax.f32 %v336, 0.0
      %v378 = vmax.f32 %v337, 0.0
      %v379 = vmax.f32 %v338, 0.0
      %v380 = vmax.f32 %v339, 0.0
      %v381 = vmax.f32 %v340, 0.0
      %v382 = vmax.f32 %v341, 0.0
      %v383 = vmax.f32 %v342, 0.0
      %v384 = vmax.f32 %v343, 0.0
      %v385 = vmax.f32 %v344, 0.0
      %v386 = vmax.f32 %v345, 0.0
      %v387 = vmax.f32 %v346, 0.0
      %v388 = vmax.f32 %v347, 0.0
      %v389 = vmax.f32 %v348, 0.0
      %390 = vst [vmem:[%s170] sm:$0xff] %v349
      %391 = vst [vmem:[%s170 + $0x8] sm:$0xff] %v350
      %392 = vst [vmem:[%s170 + $0x10] sm:$0xff] %v351
      %393 = vst [vmem:[%s170 + $0x18] sm:$0xff] %v352
      %394 = vst [vmem:[%s170 + $0x20] sm:$0xff] %v353
      %395 = vst [vmem:[%s170 + $0x28] sm:$0xff] %v354
      %396 = vst [vmem:[%s170 + $0x30] sm:$0xff] %v355
      %397 = vst [vmem:[%s170 + $0x38] sm:$0xff] %v356
      %398 = vst [vmem:[%s170 + $0x40] sm:$0xff] %v357
      %399 = vst [vmem:[%s170 + $0x48] sm:$0xff] %v358
      %400 = vst [vmem:[%s170 + $0x50] sm:$0xff] %v359
      %401 = vst [vmem:[%s170 + $0x58] sm:$0xff] %v360
      %402 = vst [vmem:[%s170 + $0x60] sm:$0xff] %v361
      %403 = vst [vmem:[%s170 + $0x68] sm:$0xff] %v362
      %404 = vst [vmem:[%s170 + $0x70] sm:$0xff] %v363
      %405 = vst [vmem:[%s170 + $0x78] sm:$0xff] %v364
      %406 = vst [vmem:[%s170 + $0x80] sm:$0xff] %v365
      %407 = vst [vmem:[%s170 + $0x88] sm:$0xff] %v366
      %408 = vst [vmem:[%s170 + $0x90] sm:$0xff] %v367
      %409 = vst [vmem:[%s170 + $0x98] sm:$0xff] %v368
      %410 = vst [vmem:[%s170 + $0xa0] sm:$0xff] %v369
      %411 = vst [vmem:[%s170 + $0xa8] sm:$0xff] %v370
      %412 = vst [vmem:[%s170 + $0xb0] sm:$0xff] %v371
      %413 = vst [vmem:[%s170 + $0xb8] sm:$0xff] %v372
      %414 = vst [vmem:[%s170 + $0xc0] sm:$0xff] %v373
      %415 = vst [vmem:[%s170 + $0xc8] sm:$0xff] %v374
      %416 = vst [vmem:[%s170 + $0xd0] sm:$0xff] %v375
      %417 = vst [vmem:[%s170 + $0xd8] sm:$0xff] %v376
      %418 = vst [vmem:[%s170 + $0xe0] sm:$0xff] %v377
      %419 = vst [vmem:[%s170 + $0xe8] sm:$0xff] %v378
      %420 = vst [vmem:[%s170 + $0xf0] sm:$0xff] %v379
      %421 = vst [vmem:[%s170 + $0xf8] sm:$0xff] %v380
      %422 = vst [vmem:[%s170 + $0x100] sm:$0xff] %v381
      %423 = vst [vmem:[%s170 + $0x108] sm:$0xff] %v382
      %424 = vst [vmem:[%s170 + $0x110] sm:$0xff] %v383
      %425 = vst [vmem:[%s170 + $0x118] sm:$0xff] %v384
      %426 = vst [vmem:[%s170 + $0x120] sm:$0xff] %v385
      %427 = vst [vmem:[%s170 + $0x128] sm:$0xff] %v386
      %428 = vst [vmem:[%s170 + $0x130] sm:$0xff] %v387
      %429 = vst [vmem:[%s170 + $0x138] sm:$0xff] %v388
      %430 = vst [vmem:[%s170 + $0x140] sm:$0xf] %v389
      %p431 = scmp.lt.s32.totalorder %s14, 1
      %s432 = scalar_select %p431, %s14, 1
      %s433 = smul.addr %s432, 41
      %s434 = smul.addr %s433, 8
      %s435 = scalar_lea.vmem %s3, %s434
      // Predicated region
      $region33: #{convolution_block_forward.5} parent=31 // pred_check
        %p436 = pneg %p100
      $region34: #{convolution_block_forward.5} parent=31 // pred_check_branch
        %438 = sbr.rel (%p436) target = $region36
      $region35: #{convolution_block_forward.5} parent=31 // pred_region
        _
      $region36: #{convolution_block_forward.5} parent=31 // pred_fallthru
        _
    $region32: #{convolution_block_forward.5} parent=5 // pred_fallthru
      _
    %p439 = scmp.le.s32.totalorder 2, %s9
    // Predicated region
    $region37: #{convolution_block_forward.5} parent=5 // pred_check
      %p440 = pneg %p439
    $region38: #{convolution_block_forward.5} parent=5 // pred_check_branch
      %442 = sbr.rel (%p440) target = $region40
    $region39: #{convolution_block_forward.5} parent=5 // pred_region
      %s443 = ssub.s32 %s9, 2
      // Predicated region
      $region41: #{convolution_block_forward.5} parent=39 // pred_check
        %p444 = pneg %p106
      $region42: #{convolution_block_forward.5} parent=39 // pred_check_branch
        %446 = sbr.rel (%p444) target = $region44
      $region43: #{convolution_block_forward.5} parent=39 // pred_region
        %p447 = scmp.lt.s32.totalorder %s15, 1
        %s448 = scalar_select %p447, %s15, 1
        %s449 = smul.addr %s448, 41
        %s450 = smul.addr %s449, 8
        %s451 = scalar_lea.vmem %s3, %s450
      $region44: #{convolution_block_forward.5} parent=39 // pred_fallthru
        _
    $region40: #{convolution_block_forward.5} parent=5 // pred_fallthru
      _
  $region6: #{convolution_block_forward.5} parent=0 // loop_footer
    %s13 = sadd.s32 1, %s9
  $region7: #{convolution_block_forward.5} parent=0 // loop_footer_branch
    %8 = sbr.rel target = $region3
  $region8: #{convolution_block_forward.5} parent=0 // loop_exit
    _

// kernel: convolution_block_forward.3
$region0: #{convolution_block_forward.3}
  #allocation0 [shape = 'u32[]', space=smem, size = 0x4, offset = 0x4, fixed_abs, tag = 'smem constant byte address 0x4 - core index']
  #allocation1 [shape = 'u32[144,128]{1,0:T(1,128)}', space=vmem, size = 0x12000, scoped, tag = 'internal scratch']
  %s0 = inlined_call_operand.vmem [shape: bf16[2,324,4], index: 0, kind: input, shape index: {}]
  %s1 = inlined_call_operand.vmem [shape: bf16[9,4,128], index: 1, kind: input, shape index: {}]
  %s2 = inlined_call_operand.vmem [shape: f32[1,128], index: 2, kind: input, shape index: {}]
  %s3 = inlined_call_operand.vmem [shape: f32[1,4], index: 3, kind: input, shape index: {}]
  %s4 = inlined_call_operand.vmem [shape: f32[1,4], index: 4, kind: input, shape index: {}]
  %s5 = inlined_call_operand.vmem [shape: f32[286,1], index: 5, kind: input, shape index: {}]
  %s6 = inlined_call_operand.vmem [shape: bf16[2,324,128], index: 6, kind: output, shape index: {0}]
  %s7 = inlined_call_operand.vmem [shape: f32[2,2,128], index: 7, kind: output, shape index: {1}]
  %8 = xla_tuple %s6, %s7
  %s9 = sld [smem:[#allocation0]]
  $region65: #{convolution_block_forward.3} parent=0
    _
  %s11 = ssub.s32 1, %s9
  %s12 = scalar_select 0, %s11, %s9
  loop: start=0, step=1, limit=4
  $region2: #{convolution_block_forward.3} parent=0 // loop_pre_header
    _
  $region3: #{convolution_block_forward.3} parent=0 // loop_header
    %s14 = sphi 0, %s18
    %p15 = scmp.ge.s32.totalorder %s14, 4
    %s24 = sphi 0, %s26
    %s27 = sphi 0, %s24
    %s28 = sphi 0, %s27
    %s44 = sphi 0, %s28
    %s48 = sphi 0, %s48
    %s50 = sphi 0, %s48
    %s51 = sphi 0, %s50
    %s65 = sphi 0, %s51
    %s69 = sphi 0, %s69
    %s71 = sphi 0, %s69
    %s72 = sphi 0, %s71
    %s86 = sphi 0, %s72
    %s90 = sphi 0, %s90
    %s92 = sphi 0, %s90
    %s93 = sphi 0, %s92
    %s107 = sphi 0, %s93
    %s111 = sphi 0, %s111
    %s113 = sphi 0, %s111
    %s114 = sphi 0, %s113
    %s128 = sphi 0, %s114
    %s132 = sphi 0, %s132
    %s134 = sphi 0, %s132
    %s135 = sphi 0, %s134
    %s149 = sphi 0, %s135
    %s155 = sphi 0, %s157
    %s158 = sphi 0, %s155
    %s159 = sphi 0, %s158
    %s175 = sphi 0, %s159
    %s181 = sphi 0, %s183
    %s184 = sphi 0, %s181
    %s185 = sphi 0, %s184
    %s201 = sphi 0, %s185
  $region4: #{convolution_block_forward.3} parent=0 // loop_header_branch
    %17 = sbr.rel (%p15) target = $region8
  $region5: #{convolution_block_forward.3} parent=0 // loop_body
    %s19 = ssub.s32 %s14, 1
    %s20 = ssub.s32 %s14, 2
    %s21 = sadd.s32 %s14, 1
    %s22 = ssub.s32 %s14, %s21
    %p23 = scmp.eq.s32.totalorder %s22, 0
    %s25 = sadd.s32 %s24, 1
    %s26 = scalar_select %p23, %s24, %s25
    %p29 = pneg %p23
    %p30 = scmp.eq.s32.totalorder %s14, 1
    %p31 = por %p29, %p30
    %p32 = scmp.ne.s32.totalorder %s24, %s27
    %p33 = scmp.eq.s32.totalorder %s14, 0
    %p34 = por %p32, %p33
    %p35 = scmp.ne.s32.totalorder %s24, %s27
    %p36 = scmp.eq.s32.totalorder %s19, 1
    %p37 = por %p35, %p36
    %p38 = scmp.ne.s32.totalorder %s27, %s28
    %p39 = scmp.eq.s32.totalorder %s19, 0
    %p40 = por %p38, %p39
    %p41 = scmp.ne.s32.totalorder %s27, %s28
    %p42 = scmp.eq.s32.totalorder %s20, 1
    %p43 = por %p41, %p42
    %p45 = scmp.ne.s32.totalorder %s28, %s44
    %p46 = scmp.eq.s32.totalorder %s20, 0
    %p47 = por %p45, %p46
    %s49 = sadd.s32 %s48, 1
    %p52 = scmp.eq.s32.totalorder %s14, 1
    %p53 = scmp.ne.s32.totalorder %s48, %s50
    %p54 = scmp.eq.s32.totalorder %s14, 0
    %p55 = por %p53, %p54
    %p56 = scmp.ne.s32.totalorder %s48, %s50
    %p57 = scmp.eq.s32.totalorder %s19, 1
    %p58 = por %p56, %p57
    %p59 = scmp.ne.s32.totalorder %s50, %s51
    %p60 = scmp.eq.s32.totalorder %s19, 0
    %p61 = por %p59, %p60
    %p62 = scmp.ne.s32.totalorder %s50, %s51
    %p63 = scmp.eq.s32.totalorder %s20, 1
    %p64 = por %p62, %p63
    %p66 = scmp.ne.s32.totalorder %s51, %s65
    %p67 = scmp.eq.s32.totalorder %s20, 0
    %p68 = por %p66, %p67
    %s70 = sadd.s32 %s69, 1
    %p73 = scmp.eq.s32.totalorder %s14, 1
    %p74 = scmp.ne.s32.totalorder %s69, %s71
    %p75 = scmp.eq.s32.totalorder %s14, 0
    %p76 = por %p74, %p75
    %p77 = scmp.ne.s32.totalorder %s69, %s71
    %p78 = scmp.eq.s32.totalorder %s19, 1
    %p79 = por %p77, %p78
    %p80 = scmp.ne.s32.totalorder %s71, %s72
    %p81 = scmp.eq.s32.totalorder %s19, 0
    %p82 = por %p80, %p81
    %p83 = scmp.ne.s32.totalorder %s71, %s72
    %p84 = scmp.eq.s32.totalorder %s20, 1
    %p85 = por %p83, %p84
    %p87 = scmp.ne.s32.totalorder %s72, %s86
    %p88 = scmp.eq.s32.totalorder %s20, 0
    %p89 = por %p87, %p88
    %s91 = sadd.s32 %s90, 1
    %p94 = scmp.eq.s32.totalorder %s14, 1
    %p95 = scmp.ne.s32.totalorder %s90, %s92
    %p96 = scmp.eq.s32.totalorder %s14, 0
    %p97 = por %p95, %p96
    %p98 = scmp.ne.s32.totalorder %s90, %s92
    %p99 = scmp.eq.s32.totalorder %s19, 1
    %p100 = por %p98, %p99
    %p101 = scmp.ne.s32.totalorder %s92, %s93
    %p102 = scmp.eq.s32.totalorder %s19, 0
    %p103 = por %p101, %p102
    %p104 = scmp.ne.s32.totalorder %s92, %s93
    %p105 = scmp.eq.s32.totalorder %s20, 1
    %p106 = por %p104, %p105
    %p108 = scmp.ne.s32.totalorder %s93, %s107
    %p109 = scmp.eq.s32.totalorder %s20, 0
    %p110 = por %p108, %p109
    %s112 = sadd.s32 %s111, 1
    %p115 = scmp.eq.s32.totalorder %s14, 1
    %p116 = scmp.ne.s32.totalorder %s111, %s113
    %p117 = scmp.eq.s32.totalorder %s14, 0
    %p118 = por %p116, %p117
    %p119 = scmp.ne.s32.totalorder %s111, %s113
    %p120 = scmp.eq.s32.totalorder %s19, 1
    %p121 = por %p119, %p120
    %p122 = scmp.ne.s32.totalorder %s113, %s114
    %p123 = scmp.eq.s32.totalorder %s19, 0
    %p124 = por %p122, %p123
    %p125 = scmp.ne.s32.totalorder %s113, %s114
    %p126 = scmp.eq.s32.totalorder %s20, 1
    %p127 = por %p125, %p126
    %p129 = scmp.ne.s32.totalorder %s114, %s128
    %p130 = scmp.eq.s32.totalorder %s20, 0
    %p131 = por %p129, %p130
    %s133 = sadd.s32 %s132, 1
    %p136 = scmp.eq.s32.totalorder %s14, 1
    %p137 = scmp.ne.s32.totalorder %s132, %s134
    %p138 = scmp.eq.s32.totalorder %s14, 0
    %p139 = por %p137, %p138
    %p140 = scmp.ne.s32.totalorder %s132, %s134
    %p141 = scmp.eq.s32.totalorder %s19, 1
    %p142 = por %p140, %p141
    %p143 = scmp.ne.s32.totalorder %s134, %s135
    %p144 = scmp.eq.s32.totalorder %s19, 0
    %p145 = por %p143, %p144
    %p146 = scmp.ne.s32.totalorder %s134, %s135
    %p147 = scmp.eq.s32.totalorder %s20, 1
    %p148 = por %p146, %p147
    %p150 = scmp.ne.s32.totalorder %s135, %s149
    %p151 = scmp.eq.s32.totalorder %s20, 0
    %p152 = por %p150, %p151
    %s153 = ssub.s32 %s14, %s21
    %p154 = scmp.eq.s32.totalorder %s153, 0
    %s156 = sadd.s32 %s155, 1
    %s157 = scalar_select %p154, %s155, %s156
    %p160 = pneg %p154
    %p161 = scmp.eq.s32.totalorder %s14, 1
    %p162 = por %p160, %p161
    %p163 = scmp.ne.s32.totalorder %s155, %s158
    %p164 = scmp.eq.s32.totalorder %s14, 0
    %p165 = por %p163, %p164
    %p166 = scmp.ne.s32.totalorder %s155, %s158
    %p167 = scmp.eq.s32.totalorder %s19, 1
    %p168 = por %p166, %p167
    %p169 = scmp.ne.s32.totalorder %s158, %s159
    %p170 = scmp.eq.s32.totalorder %s19, 0
    %p171 = por %p169, %p170
    %p172 = scmp.ne.s32.totalorder %s158, %s159
    %p173 = scmp.eq.s32.totalorder %s20, 1
    %p174 = por %p172, %p173
    %p176 = scmp.ne.s32.totalorder %s159, %s175
    %p177 = scmp.eq.s32.totalorder %s20, 0
    %p178 = por %p176, %p177
    %s179 = ssub.s32 %s14, %s21
    %p180 = scmp.eq.s32.totalorder %s179, 0
    %s182 = sadd.s32 %s181, 1
    %s183 = scalar_select %p180, %s181, %s182
    %p186 = pneg %p180
    %p187 = scmp.eq.s32.totalorder %s14, 1
    %p188 = por %p186, %p187
    %p189 = scmp.ne.s32.totalorder %s181, %s184
    %p190 = scmp.eq.s32.totalorder %s14, 0
    %p191 = por %p189, %p190
    %p192 = scmp.ne.s32.totalorder %s181, %s184
    %p193 = scmp.eq.s32.totalorder %s19, 1
    %p194 = por %p192, %p193
    %p195 = scmp.ne.s32.totalorder %s184, %s185
    %p196 = scmp.eq.s32.totalorder %s19, 0
    %p197 = por %p195, %p196
    %p198 = scmp.ne.s32.totalorder %s184, %s185
    %p199 = scmp.eq.s32.totalorder %s20, 1
    %p200 = por %p198, %p199
    %p202 = scmp.ne.s32.totalorder %s185, %s201
    %p203 = scmp.eq.s32.totalorder %s20, 0
    %p204 = por %p202, %p203
    %p205 = scmp.le.s32.totalorder 1, %s14
    %p206 = scmp.lt.s32.totalorder %s14, 3
    %p207 = pnand %p205, %p206
    %p208 = pneg %p207
    // Predicated region
    $region9: #{convolution_block_forward.3} parent=5 // pred_check
      _
    $region10: #{convolution_block_forward.3} parent=5 // pred_check_branch
      %210 = sbr.rel (%p207) target = $region12
    $region11: #{convolution_block_forward.3} parent=5 // pred_region
      %s211 = ssub.s32 %s14, 1
      // Predicated region
      $region13: #{convolution_block_forward.3} parent=11 // pred_check
        %p212 = pneg %p61
      $region14: #{convolution_block_forward.3} parent=11 // pred_check_branch
        %214 = sbr.rel (%p212) target = $region16
      $region15: #{convolution_block_forward.3} parent=11 // pred_region
        _
      $region16: #{convolution_block_forward.3} parent=11 // pred_fallthru
        _
      // Predicated region
      $region17: #{convolution_block_forward.3} parent=11 // pred_check
        %p215 = pneg %p82
      $region18: #{convolution_block_forward.3} parent=11 // pred_check_branch
        %217 = sbr.rel (%p215) target = $region20
      $region19: #{convolution_block_forward.3} parent=11 // pred_region
        _
      $region20: #{convolution_block_forward.3} parent=11 // pred_fallthru
        _
      // Predicated region
      $region21: #{convolution_block_forward.3} parent=11 // pred_check
        %p218 = pneg %p103
      $region22: #{convolution_block_forward.3} parent=11 // pred_check_branch
        %220 = sbr.rel (%p218) target = $region24
      $region23: #{convolution_block_forward.3} parent=11 // pred_region
        _
      $region24: #{convolution_block_forward.3} parent=11 // pred_fallthru
        _
      // Predicated region
      $region25: #{convolution_block_forward.3} parent=11 // pred_check
        %p221 = pneg %p124
      $region26: #{convolution_block_forward.3} parent=11 // pred_check_branch
        %223 = sbr.rel (%p221) target = $region28
      $region27: #{convolution_block_forward.3} parent=11 // pred_region
        _
      $region28: #{convolution_block_forward.3} parent=11 // pred_fallthru
        _
      // Predicated region
      $region29: #{convolution_block_forward.3} parent=11 // pred_check
        %p224 = pneg %p145
      $region30: #{convolution_block_forward.3} parent=11 // pred_check_branch
        %226 = sbr.rel (%p224) target = $region32
      $region31: #{convolution_block_forward.3} parent=11 // pred_region
        _
      $region32: #{convolution_block_forward.3} parent=11 // pred_fallthru
        _
    $region12: #{convolution_block_forward.3} parent=5 // pred_fallthru
      _
    %p227 = scmp.lt.s32.totalorder %s14, 2
    // Predicated region
    $region33: #{convolution_block_forward.3} parent=5 // pred_check
      %p228 = pneg %p227
    $region34: #{convolution_block_forward.3} parent=5 // pred_check_branch
      %230 = sbr.rel (%p228) target = $region36
    $region35: #{convolution_block_forward.3} parent=5 // pred_region
      // Predicated region
      $region37: #{convolution_block_forward.3} parent=35 // pred_check
        %p231 = pneg %p34
      $region38: #{convolution_block_forward.3} parent=35 // pred_check_branch
        %233 = sbr.rel (%p231) target = $region40
      $region39: #{convolution_block_forward.3} parent=35 // pred_region
        %p234 = scmp.lt.s32.totalorder %s14, 1
        %s235 = scalar_select %p234, %s14, 1
        %s236 = smul.addr %s235, 41
        %s237 = smul.addr %s236, 4
        %s238 = scalar_lea.vmem %s0, %s237
      $region40: #{convolution_block_forward.3} parent=35 // pred_fallthru
        _
    $region36: #{convolution_block_forward.3} parent=5 // pred_fallthru
      _
    %p239 = scmp.le.s32.totalorder 1, %s14
    %p240 = scmp.lt.s32.totalorder %s14, 3
    %p241 = pnand %p239, %p240
    %p242 = pneg %p241
    // Predicated region
    $region41: #{convolution_block_forward.3} parent=5 // pred_check
      _
    $region42: #{convolution_block_forward.3} parent=5 // pred_check_branch
      %244 = sbr.rel (%p241) target = $region44
    $region43: #{convolution_block_forward.3} parent=5 // pred_region
      %s245 = ssub.s32 %s14, 1
      %p246 = scmp.lt.s32.totalorder %s19, 1
      %s247 = scalar_select %p246, %s19, 1
      %s248 = smul.addr %s247, 41
      %s249 = smul.addr %s248, 4
      %s250 = scalar_lea.vmem %s0, %s249
      %p251 = pneg %p40
      %p252 = pneg %p37
      %p253 = pneg %p61
      %p254 = pneg %p58
      %p255 = pneg %p82
      %p256 = pneg %p79
      %p257 = pneg %p103
      %p258 = pneg %p100
      %p259 = pneg %p124
      %p260 = pneg %p121
      %p261 = pneg %p145
      %p262 = pneg %p142
      %p263 = pneg %p171
      %p264 = pneg %p168
      %p265 = scmp.lt.s32.totalorder %s19, 1
      %s266 = scalar_select %p265, %s19, 1
      %s267 = smul.addr %s266, 41
      %s268 = smul.addr %s267, 4
      %s269 = scalar_lea.vmem %s6, %s268
      %p270 = pneg %p197
      %p271 = pneg %p194
      %p272 = scmp.lt.s32.totalorder %s19, 1
      %s273 = scalar_select %p272, %s19, 1
      %s274 = smul.addr %s273, 2
      %s275 = scalar_lea.vmem %s7, %s274
      %p276 = scmp.lt.s32.totalorder %s19, 1
      %s277 = scalar_select %p276, %s19, 1
      %s278 = smul.addr %s277, 41
      %s279 = smul.addr %s278, 4
      %s280 = scalar_lea.vmem %s0, %s279
      %p281 = scmp.lt.s32.totalorder %s19, 1
      %s282 = scalar_select %p281, %s19, 1
      %s283 = smul.addr %s282, 41
      %s284 = smul.addr %s283, 4
      %s285 = scalar_lea.vmem %s6, %s284
      %p286 = scmp.lt.s32.totalorder %s19, 1
      %s287 = scalar_select %p286, %s19, 1
      %s288 = smul.addr %s287, 2
      %s289 = scalar_lea.vmem %s7, %s288
      %v292 = vld [vmem:[%s2] sm:$0x1]
      %v294 = vlaneseq
      %v295 = vshrl.u32 %v294, 7
      %v296 = vsub.s32 0, %v295
      %v297 = vrot.slane %v292, %v296
      %v299 = vld [vmem:[%s280] sm:$0xf]
      %v300 = vld [vmem:[%s280 + $0x4] sm:$0xf]
      %v301 = vld [vmem:[%s280 + $0x8] sm:$0xf]
      %v302 = vld [vmem:[%s280 + $0xc] sm:$0xf]
      %v303 = vld [vmem:[%s280 + $0x10] sm:$0xf]
      %v304 = vld [vmem:[%s280 + $0x14] sm:$0xf]
      %v305 = vld [vmem:[%s280 + $0x18] sm:$0xf]
      %v306 = vld [vmem:[%s280 + $0x1c] sm:$0xf]
      %v307 = vld [vmem:[%s280 + $0x20] sm:$0xf]
      %v308 = vld [vmem:[%s280 + $0x24] sm:$0xf]
      %v309 = vld [vmem:[%s280 + $0x28] sm:$0xf]
      %v310 = vld [vmem:[%s280 + $0x2c] sm:$0xf]
      %v311 = vld [vmem:[%s280 + $0x30] sm:$0xf]
      %v312 = vld [vmem:[%s280 + $0x34] sm:$0xf]
      %v313 = vld [vmem:[%s280 + $0x38] sm:$0xf]
      %v314 = vld [vmem:[%s280 + $0x3c] sm:$0xf]
      %v315 = vld [vmem:[%s280 + $0x40] sm:$0xf]
      %v316 = vld [vmem:[%s280 + $0x44] sm:$0xf]
      %v317 = vld [vmem:[%s280 + $0x48] sm:$0xf]
      %v318 = vld [vmem:[%s280 + $0x4c] sm:$0xf]
      %v319 = vld [vmem:[%s280 + $0x50] sm:$0xf]
      %v320 = vld [vmem:[%s280 + $0x54] sm:$0xf]
      %v321 = vld [vmem:[%s280 + $0x58] sm:$0xf]
      %v322 = vld [vmem:[%s280 + $0x5c] sm:$0xf]
      %v323 = vld [vmem:[%s280 + $0x60] sm:$0xf]
      %v324 = vld [vmem:[%s280 + $0x64] sm:$0xf]
      %v325 = vld [vmem:[%s280 + $0x68] sm:$0xf]
      %v326 = vld [vmem:[%s280 + $0x6c] sm:$0xf]
      %v327 = vld [vmem:[%s280 + $0x70] sm:$0xf]
      %v328 = vld [vmem:[%s280 + $0x74] sm:$0xf]
      %v329 = vld [vmem:[%s280 + $0x78] sm:$0xf]
      %v330 = vld [vmem:[%s280 + $0x7c] sm:$0xf]
      %v331 = vld [vmem:[%s280 + $0x80] sm:$0xf]
      %v332 = vld [vmem:[%s280 + $0x84] sm:$0xf]
      %v333 = vld [vmem:[%s280 + $0x88] sm:$0xf]
      %v334 = vld [vmem:[%s280 + $0x8c] sm:$0x7]
      %v335 = vld [vmem:[%s1] sm:$0x3]
      %v372 = vunpack.c.l.b16 %v299
      %v373 = vunpack.c.l.b16 %v300
      %v374 = vunpack.c.l.b16 %v301
      %v375 = vunpack.c.l.b16 %v302
      %v376 = vunpack.c.l.b16 %v303
      %v377 = vunpack.c.l.b16 %v304
      %v378 = vunpack.c.l.b16 %v305
      %v379 = vunpack.c.l.b16 %v306
      %v380 = vunpack.c.l.b16 %v307
      %v381 = vunpack.c.l.b16 %v308
      %v382 = vunpack.c.l.b16 %v309
      %v383 = vunpack.c.l.b16 %v310
      %v384 = vunpack.c.l.b16 %v311
      %v385 = vunpack.c.l.b16 %v312
      %v386 = vunpack.c.l.b16 %v313
      %v387 = vunpack.c.l.b16 %v314
      %v388 = vunpack.c.l.b16 %v315
      %v389 = vunpack.c.l.b16 %v316
      %v390 = vunpack.c.l.b16 %v317
      %v391 = vunpack.c.l.b16 %v318
      %v392 = vunpack.c.l.b16 %v319
      %v393 = vunpack.c.l.b16 %v320
      %v394 = vunpack.c.l.b16 %v321
      %v395 = vunpack.c.l.b16 %v322
      %v396 = vunpack.c.l.b16 %v323
      %v397 = vunpack.c.l.b16 %v324
      %v398 = vunpack.c.l.b16 %v325
      %v399 = vunpack.c.l.b16 %v326
      %v400 = vunpack.c.l.b16 %v327
      %v401 = vunpack.c.l.b16 %v328
      %v402 = vunpack.c.l.b16 %v329
      %v403 = vunpack.c.l.b16 %v330
      %v404 = vunpack.c.l.b16 %v331
      %v405 = vunpack.c.l.b16 %v332
      %v406 = vunpack.c.l.b16 %v333
      %v407 = vunpack.c.l.b16 %v334
      %v408 = vpack.c.b16 %v373, %v372
      %v409 = vpack.c.b16 %v375, %v374
      %v410 = vpack.c.b16 %v377, %v376
      %v411 = vpack.c.b16 %v379, %v378
      %v412 = vpack.c.b16 %v381, %v380
      %v413 = vpack.c.b16 %v383, %v382
      %v414 = vpack.c.b16 %v385, %v384
      %v415 = vpack.c.b16 %v387, %v386
      %v416 = vpack.c.b16 %v389, %v388
      %v417 = vpack.c.b16 %v391, %v390
      %v418 = vpack.c.b16 %v393, %v392
      %v419 = vpack.c.b16 %v395, %v394
      %v420 = vpack.c.b16 %v397, %v396
      %v421 = vpack.c.b16 %v399, %v398
      %v422 = vpack.c.b16 %v401, %v400
      %v423 = vpack.c.b16 %v403, %v402
      %v424 = vpack.c.b16 %v405, %v404
      %v425 = vpack.c.b16 %v407, %v406
      %vm426 = vcmask 31744
      %v428 = vsel %vm426, %v408, 0
      %v431 = vsel %vm426, %v409, 0
      %v434 = vsel %vm426, %v410, 0
      %v437 = vsel %vm426, %v411, 0
      %v440 = vsel %vm426, %v412, 0
      %v443 = vsel %vm426, %v413, 0
      %v446 = vsel %vm426, %v414, 0
      %v449 = vsel %vm426, %v415, 0
      %v452 = vsel %vm426, %v416, 0
      %v455 = vsel %vm426, %v417, 0
      %v458 = vsel %vm426, %v418, 0
      %v461 = vsel %vm426, %v419, 0
      %v464 = vsel %vm426, %v420, 0
      %v467 = vsel %vm426, %v421, 0
      %v470 = vsel %vm426, %v422, 0
      %v473 = vsel %vm426, %v423, 0
      %v476 = vsel %vm426, %v424, 0
      %v479 = vsel %vm426, %v425, 0
      %vm481 = vcmask 1041408
      %v483 = vsel %vm481, %v335, 0
      %485 = vmatprep.subr.bf16.mxu0 0
      %486 = vmatpush1.bf16.msra.mxu0 0
      %487 = vmatprep.subr.bf16.mxu0 0
      %488 = vmatpush1.bf16.msra.mxu0 0
      %489 = vmatprep.subr.bf16.mxu0 0
      %490 = vmatpush1.bf16.msra.mxu0 0
      %491 = vmatprep.subr.bf16.mxu0 0
      %492 = vmatpush1.bf16.msra.mxu0 0
      %493 = vmatprep.subr.bf16.mxu0 0
      %494 = vmatpush1.bf16.msra.mxu0 0
      %495 = vmatprep.subr.bf16.mxu0 0
      %496 = vmatpush1.bf16.msra.mxu0 0
      %497 = vmatprep.subr.bf16.mxu0 0
      %498 = vmatpush1.bf16.msra.mxu0 0
      %499 = vmatprep.subr.bf16.mxu0 0
      %500 = vmatpush1.bf16.msra.mxu0 %v483
      %501 = vmatprep.subr.bf16.mxu0 0
      %502 = vmatpush2.bf16.msra.mxu0 0
      %503 = vmatprep.subr.bf16.mxu0 0
      %504 = vmatpush2.bf16.msra.mxu0 0
      %505 = vmatprep.subr.bf16.mxu0 0
      %506 = vmatpush2.bf16.msra.mxu0 0
      %507 = vmatprep.subr.bf16.mxu0 0
      %508 = vmatpush2.bf16.msra.mxu0 0
      %509 = vmatprep.subr.bf16.mxu0 0
      %510 = vmatpush2.bf16.msra.mxu0 0
      %511 = vmatprep.subr.bf16.mxu0 0
      %512 = vmatpush2.bf16.msra.mxu0 0
      %513 = vmatprep.subr.bf16.mxu0 0
      %514 = vmatpush2.bf16.msra.mxu0 0
      %515 = vmatprep.subr.bf16.mxu0 0
      %516 = vmatpush2.bf16.msra.mxu0 0
      %517 = vmatprep.mubr.bf16.mxu0 0
      %518 = vmatmul.mubr.bf16.gmra.mxu0 %v428
      %v519 = vpop.f32.mrf.mxu0
      %v520 = vadd.f32 0.0, %v519
      %v521 = vpop.f32.mrf.mxu0
      %v522 = vpop.f32.mrf.mxu0
      %v523 = vadd.f32 0.0, %v522
      %v524 = vpop.f32.mrf.mxu0
      %525 = vmatprep.mubr.bf16.mxu0 0
      %526 = vmatmul.mubr.bf16.gmra.mxu0 %v431
      %v527 = vpop.f32.mrf.mxu0
      %v528 = vadd.f32 0.0, %v527
      %v529 = vpop.f32.mrf.mxu0
      %v530 = vpop.f32.mrf.mxu0
      %v531 = vadd.f32 0.0, %v530
      %v532 = vpop.f32.mrf.mxu0
      %533 = vmatprep.mubr.bf16.mxu0 0
      %534 = vmatmul.mubr.bf16.gmra.mxu0 %v434
      %v535 = vpop.f32.mrf.mxu0
      %v536 = vadd.f32 0.0, %v535
      %v537 = vpop.f32.mrf.mxu0
      %v538 = vpop.f32.mrf.mxu0
      %v539 = vadd.f32 0.0, %v538
      %v540 = vpop.f32.mrf.mxu0
      %541 = vmatprep.mubr.bf16.mxu0 0
      %542 = vmatmul.mubr.bf16.gmra.mxu0 %v437
      %v543 = vpop.f32.mrf.mxu0
      %v544 = vadd.f32 0.0, %v543
      %v545 = vpop.f32.mrf.mxu0
      %v546 = vpop.f32.mrf.mxu0
      %v547 = vadd.f32 0.0, %v546
      %v548 = vpop.f32.mrf.mxu0
      %549 = vmatprep.mubr.bf16.mxu0 0
      %550 = vmatmul.mubr.bf16.gmra.mxu0 %v440
      %v551 = vpop.f32.mrf.mxu0
      %v552 = vadd.f32 0.0, %v551
      %v553 = vpop.f32.mrf.mxu0
      %v554 = vpop.f32.mrf.mxu0
      %v555 = vadd.f32 0.0, %v554
      %v556 = vpop.f32.mrf.mxu0
      %557 = vmatprep.mubr.bf16.mxu0 0
      %558 = vmatmul.mubr.bf16.gmra.mxu0 %v443
      %v559 = vpop.f32.mrf.mxu0
      %v560 = vadd.f32 0.0, %v559
      %v561 = vpop.f32.mrf.mxu0
      %v562 = vpop.f32.mrf.mxu0
      %v563 = vadd.f32 0.0, %v562
      %v564 = vpop.f32.mrf.mxu0
      %565 = vmatprep.mubr.bf16.mxu0 0
      %566 = vmatmul.mubr.bf16.gmra.mxu0 %v446
      %v567 = vpop.f32.mrf.mxu0
      %v568 = vadd.f32 0.0, %v567
      %v569 = vpop.f32.mrf.mxu0
      %v570 = vpop.f32.mrf.mxu0
      %v571 = vadd.f32 0.0, %v570
      %v572 = vpop.f32.mrf.mxu0
      %573 = vmatprep.mubr.bf16.mxu0 0
      %574 = vmatmul.mubr.bf16.gmra.mxu0 %v449
      %v575 = vpop.f32.mrf.mxu0
      %v576 = vadd.f32 0.0, %v575
      %v577 = vpop.f32.mrf.mxu0
      %v578 = vpop.f32.mrf.mxu0
      %v579 = vadd.f32 0.0, %v578
      %v580 = vpop.f32.mrf.mxu0
      %581 = vmatprep.mubr.bf16.mxu0 0
      %582 = vmatmul.mubr.bf16.gmra.mxu0 %v452
      %v583 = vpop.f32.mrf.mxu0
      %v584 = vadd.f32 0.0, %v583
      %v585 = vpop.f32.mrf.mxu0
      %v586 = vpop.f32.mrf.mxu0
      %v587 = vadd.f32 0.0, %v586
      %v588 = vpop.f32.mrf.mxu0
      %589 = vmatprep.mubr.bf16.mxu0 0
      %590 = vmatmul.mubr.bf16.gmra.mxu0 %v455
      %v591 = vpop.f32.mrf.mxu0
      %v592 = vadd.f32 0.0, %v591
      %v593 = vpop.f32.mrf.mxu0
      %v594 = vpop.f32.mrf.mxu0
      %v595 = vadd.f32 0.0, %v594
      %v596 = vpop.f32.mrf.mxu0
      %597 = vmatprep.mubr.bf16.mxu0 0
      %598 = vmatmul.mubr.bf16.gmra.mxu0 %v458
      %v599 = vpop.f32.mrf.mxu0
      %v600 = vadd.f32 0.0, %v599
      %v601 = vpop.f32.mrf.mxu0
      %v602 = vpop.f32.mrf.mxu0
      %v603 = vadd.f32 0.0, %v602
      %v604 = vpop.f32.mrf.mxu0
      %605 = vmatprep.mubr.bf16.mxu0 0
      %606 = vmatmul.mubr.bf16.gmra.mxu0 %v461
      %v607 = vpop.f32.mrf.mxu0
      %v608 = vadd.f32 0.0, %v607
      %v609 = vpop.f32.mrf.mxu0
      %v610 = vpop.f32.mrf.mxu0
      %v611 = vadd.f32 0.0, %v610
      %v612 = vpop.f32.mrf.mxu0
      %613 = vmatprep.mubr.bf16.mxu0 0
      %614 = vmatmul.mubr.bf16.gmra.mxu0 %v464
      %v615 = vpop.f32.mrf.mxu0
      %v616 = vadd.f32 0.0, %v615
      %v617 = vpop.f32.mrf.mxu0
      %v618 = vpop.f32.mrf.mxu0
      %v619 = vadd.f32 0.0, %v618
      %v620 = vpop.f32.mrf.mxu0
      %621 = vmatprep.mubr.bf16.mxu0 0
      %622 = vmatmul.mubr.bf16.gmra.mxu0 %v467
      %v623 = vpop.f32.mrf.mxu0
      %v624 = vadd.f32 0.0, %v623
      %v625 = vpop.f32.mrf.mxu0
      %v626 = vpop.f32.mrf.mxu0
      %v627 = vadd.f32 0.0, %v626
      %v628 = vpop.f32.mrf.mxu0
      %629 = vmatprep.mubr.bf16.mxu0 0
      %630 = vmatmul.mubr.bf16.gmra.mxu0 %v470
      %v631 = vpop.f32.mrf.mxu0
      %v632 = vadd.f32 0.0, %v631
      %v633 = vpop.f32.mrf.mxu0
      %v634 = vpop.f32.mrf.mxu0
      %v635 = vadd.f32 0.0, %v634
      %v636 = vpop.f32.mrf.mxu0
      %637 = vmatprep.mubr.bf16.mxu0 0
      %638 = vmatmul.mubr.bf16.gmra.mxu0 %v473
      %v639 = vpop.f32.mrf.mxu0
      %v640 = vadd.f32 0.0, %v639
      %v641 = vpop.f32.mrf.mxu0
      %v642 = vpop.f32.mrf.mxu0
      %v643 = vadd.f32 0.0, %v642
      %v644 = vpop.f32.mrf.mxu0
      %645 = vmatprep.mubr.bf16.mxu0 0
      %646 = vmatmul.mubr.bf16.gmra.mxu0 %v476
      %v647 = vpop.f32.mrf.mxu0
      %v648 = vadd.f32 0.0, %v647
      %v649 = vpop.f32.mrf.mxu0
      %v650 = vpop.f32.mrf.mxu0
      %v651 = vadd.f32 0.0, %v650
      %v652 = vpop.f32.mrf.mxu0
      %653 = vmatprep.mubr.bf16.mxu0 0
      %654 = vmatmul.mubr.bf16.gmra.mxu0 %v479
      %v655 = vpop.f32.mrf.mxu0
      %v656 = vadd.f32 0.0, %v655
      %v657 = vpop.f32.mrf.mxu0
      %v658 = vpop.f32.mrf.mxu0
      %v659 = vadd.f32 0.0, %v658
      %v660 = vpop.f32.mrf.mxu0
      %661 = vdwg.mxu0
      %v662 = vadd.f32 %v297, %v520
      %v663 = vadd.f32 %v297, %v523
      %v664 = vadd.f32 %v297, %v528
      %v665 = vadd.f32 %v297, %v531
      %v666 = vadd.f32 %v297, %v536
      %v667 = vadd.f32 %v297, %v539
      %v668 = vadd.f32 %v297, %v544
      %v669 = vadd.f32 %v297, %v547
      %v670 = vadd.f32 %v297, %v552
      %v671 = vadd.f32 %v297, %v555
      %v672 = vadd.f32 %v297, %v560
      %v673 = vadd.f32 %v297, %v563
      %v674 = vadd.f32 %v297, %v568
      %v675 = vadd.f32 %v297, %v571
      %v676 = vadd.f32 %v297, %v576
      %v677 = vadd.f32 %v297, %v579
      %v678 = vadd.f32 %v297, %v584
      %v679 = vadd.f32 %v297, %v587
      %v680 = vadd.f32 %v297, %v592
      %v681 = vadd.f32 %v297, %v595
      %v682 = vadd.f32 %v297, %v600
      %v683 = vadd.f32 %v297, %v603
      %v684 = vadd.f32 %v297, %v608
      %v685 = vadd.f32 %v297, %v611
      %v686 = vadd.f32 %v297, %v616
      %v687 = vadd.f32 %v297, %v619
      %v688 = vadd.f32 %v297, %v624
      %v689 = vadd.f32 %v297, %v627
      %v690 = vadd.f32 %v297, %v632
      %v691 = vadd.f32 %v297, %v635
      %v692 = vadd.f32 %v297, %v640
      %v693 = vadd.f32 %v297, %v643
      %v694 = vadd.f32 %v297, %v648
      %v695 = vadd.f32 %v297, %v651
      %v696 = vadd.f32 %v297, %v656
      %v697 = vadd.f32 %v297, %v659
      %v698 = vld [vmem:[%s280 + $0x8c] sm:$0xf]
      %s699 = scalar_lea.vmem %s1, 2
      %v700 = vld [vmem:[%s699] sm:$0x3]
      %v702 = vunpack.c.l.b16 %v698
      %v703 = vpack.c.b16 %v702, %v406
      %vm704 = vsmask.f32 7424
      %v705 = vshrl.u32 %v408, 16
      %v707 = vshll.u32 %v408, 16
      %v709 = vrot.slane %v707, 1
      %v710 = vor.u32 %v705, %v709
      %v711 = vshll.u32 %v409, 16
      %v713 = vrot.slane %v711, 1
      %v714 = vsel %vm704, %v710, %v713
      %v715 = vshrl.u32 %v409, 16
      %v717 = vor.u32 %v715, %v713
      %v718 = vshll.u32 %v410, 16
      %v720 = vrot.slane %v718, 1
      %v721 = vsel %vm704, %v717, %v720
      %v722 = vshrl.u32 %v410, 16
      %v724 = vor.u32 %v722, %v720
      %v725 = vshll.u32 %v411, 16
      %v727 = vrot.slane %v725, 1
      %v728 = vsel %vm704, %v724, %v727
      %v729 = vshrl.u32 %v411, 16
      %v731 = vor.u32 %v729, %v727
      %v732 = vshll.u32 %v412, 16
      %v734 = vrot.slane %v732, 1
      %v735 = vsel %vm704, %v731, %v734
      %v736 = vshrl.u32 %v412, 16
      %v738 = vor.u32 %v736, %v734
      %v739 = vshll.u32 %v413, 16
      %v741 = vrot.slane %v739, 1
      %v742 = vsel %vm704, %v738, %v741
      %v743 = vshrl.u32 %v413, 16
      %v745 = vor.u32 %v743, %v741
      %v746 = vshll.u32 %v414, 16
      %v748 = vrot.slane %v746, 1
      %v749 = vsel %vm704, %v745, %v748
      %v750 = vshrl.u32 %v414, 16
      %v752 = vor.u32 %v750, %v748
      %v753 = vshll.u32 %v415, 16
      %v755 = vrot.slane %v753, 1
      %v756 = vsel %vm704, %v752, %v755
      %v757 = vshrl.u32 %v415, 16
      %v759 = vor.u32 %v757, %v755
      %v760 = vshll.u32 %v416, 16
      %v762 = vrot.slane %v760, 1
      %v763 = vsel %vm704, %v759, %v762
      %v764 = vshrl.u32 %v416, 16
      %v766 = vor.u32 %v764, %v762
      %v767 = vshll.u32 %v417, 16
      %v769 = vrot.slane %v767, 1
      %v770 = vsel %vm704, %v766, %v769
      %v771 = vshrl.u32 %v417, 16
      %v773 = vor.u32 %v771, %v769
      %v774 = vshll.u32 %v418, 16
      %v776 = vrot.slane %v774, 1
      %v777 = vsel %vm704, %v773, %v776
      %v778 = vshrl.u32 %v418, 16
      %v780 = vor.u32 %v778, %v776
      %v781 = vshll.u32 %v419, 16
      %v783 = vrot.slane %v781, 1
      %v784 = vsel %vm704, %v780, %v783
      %v785 = vshrl.u32 %v419, 16
      %v787 = vor.u32 %v785, %v783
      %v788 = vshll.u32 %v420, 16
      %v790 = vrot.slane %v788, 1
      %v791 = vsel %vm704, %v787, %v790
      %v792 = vshrl.u32 %v420, 16
      %v794 = vor.u32 %v792, %v790
      %v795 = vshll.u32 %v421, 16
      %v797 = vrot.slane %v795, 1
      %v798 = vsel %vm704, %v794, %v797
      %v799 = vshrl.u32 %v421, 16
      %v801 = vor.u32 %v799, %v797
      %v802 = vshll.u32 %v422, 16
      %v804 = vrot.slane %v802, 1
      %v805 = vsel %vm704, %v801, %v804
      %v806 = vshrl.u32 %v422, 16
      %v808 = vor.u32 %v806, %v804
      %v809 = vshll.u32 %v423, 16
      %v811 = vrot.slane %v809, 1
      %v812 = vsel %vm704, %v808, %v811
      %v813 = vshrl.u32 %v423, 16
      %v815 = vor.u32 %v813, %v811
      %v816 = vshll.u32 %v424, 16
      %v818 = vrot.slane %v816, 1
      %v819 = vsel %vm704, %v815, %v818
      %v820 = vshrl.u32 %v424, 16
      %v822 = vor.u32 %v820, %v818
      %v824 = vshll.u32 %v703, 16
      %v826 = vrot.slane %v824, 1
      %v827 = vsel %vm704, %v822, %v826
      %v828 = vshrl.u32 %v703, 16
      %v830 = vor.u32 %v828, %v826
      %v832 = vsel %vm426, %v714, 0
      %v835 = vsel %vm426, %v721, 0
      %v838 = vsel %vm426, %v728, 0
      %v841 = vsel %vm426, %v735, 0
      %v844 = vsel %vm426, %v742, 0
      %v847 = vsel %vm426, %v749, 0
      %v850 = vsel %vm426, %v756, 0
      %v853 = vsel %vm426, %v763, 0
      %v856 = vsel %vm426, %v770, 0
      %v859 = vsel %vm426, %v777, 0
      %v862 = vsel %vm426, %v784, 0
      %v865 = vsel %vm426, %v791, 0
      %v868 = vsel %vm426, %v798, 0
      %v871 = vsel %vm426, %v805, 0
      %v874 = vsel %vm426, %v812, 0
      %v877 = vsel %vm426, %v819, 0
      %v880 = vsel %vm426, %v827, 0
      %v883 = vsel %vm426, %v830, 0
      %v886 = vsel %vm481, %v700, 0
      %888 = vmatprep.subr.bf16.mxu0 0
      %889 = vmatpush1.bf16.msra.mxu0 0
      %890 = vmatprep.subr.bf16.mxu0 0
      %891 = vmatpush1.bf16.msra.mxu0 0
      %892 = vmatprep.subr.bf16.mxu0 0
      %893 = vmatpush1.bf16.msra.mxu0 0
      %894 = vmatprep.subr.bf16.mxu0 0
      %895 = vmatpush1.bf16.msra.mxu0 0
      %896 = vmatprep.subr.bf16.mxu0 0
      %897 = vmatpush1.bf16.msra.mxu0 0
      %898 = vmatprep.subr.bf16.mxu0 0
      %899 = vmatpush1.bf16.msra.mxu0 0
      %900 = vmatprep.subr.bf16.mxu0 0
      %901 = vmatpush1.bf16.msra.mxu0 0
      %902 = vmatprep.subr.bf16.mxu0 0
      %903 = vmatpush1.bf16.msra.mxu0 %v886
      %904 = vmatprep.subr.bf16.mxu0 0
      %905 = vmatpush2.bf16.msra.mxu0 0
      %906 = vmatprep.subr.bf16.mxu0 0
      %907 = vmatpush2.bf16.msra.mxu0 0
      %908 = vmatprep.subr.bf16.mxu0 0
      %909 = vmatpush2.bf16.msra.mxu0 0
      %910 = vmatprep.subr.bf16.mxu0 0
      %911 = vmatpush2.bf16.msra.mxu0 0
      %912 = vmatprep.subr.bf16.mxu0 0
      %913 = vmatpush2.bf16.msra.mxu0 0
      %914 = vmatprep.subr.bf16.mxu0 0
      %915 = vmatpush2.bf16.msra.mxu0 0
      %916 = vmatprep.subr.bf16.mxu0 0
      %917 = vmatpush2.bf16.msra.mxu0 0
      %918 = vmatprep.subr.bf16.mxu0 0
      %919 = vmatpush2.bf16.msra.mxu0 0
      %920 = vmatprep.mubr.bf16.mxu0 0
      %921 = vmatmul.mubr.bf16.gmra.mxu0 %v832
      %v922 = vpop.f32.mrf.mxu0
      %v923 = vadd.f32 0.0, %v922
      %v924 = vpop.f32.mrf.mxu0
      %v925 = vpop.f32.mrf.mxu0
      %v926 = vadd.f32 0.0, %v925
      %v927 = vpop.f32.mrf.mxu0
      %928 = vmatprep.mubr.bf16.mxu0 0
      %929 = vmatmul.mubr.bf16.gmra.mxu0 %v835
      %v930 = vpop.f32.mrf.mxu0
      %v931 = vadd.f32 0.0, %v930
      %v932 = vpop.f32.mrf.mxu0
      %v933 = vpop.f32.mrf.mxu0
      %v934 = vadd.f32 0.0, %v933
      %v935 = vpop.f32.mrf.mxu0
      %936 = vmatprep.mubr.bf16.mxu0 0
      %937 = vmatmul.mubr.bf16.gmra.mxu0 %v838
      %v938 = vpop.f32.mrf.mxu0
      %v939 = vadd.f32 0.0, %v938
      %v940 = vpop.f32.mrf.mxu0
      %v941 = vpop.f32.mrf.mxu0
      %v942 = vadd.f32 0.0, %v941
      %v943 = vpop.f32.mrf.mxu0
      %944 = vmatprep.mubr.bf16.mxu0 0
      %945 = vmatmul.mubr.bf16.gmra.mxu0 %v841
      %v946 = vpop.f32.mrf.mxu0
      %v947 = vadd.f32 0.0, %v946
      %v948 = vpop.f32.mrf.mxu0
      %v949 = vpop.f32.mrf.mxu0
      %v950 = vadd.f32 0.0, %v949
      %v951 = vpop.f32.mrf.mxu0
      %952 = vmatprep.mubr.bf16.mxu0 0
      %953 = vmatmul.mubr.bf16.gmra.mxu0 %v844
      %v954 = vpop.f32.mrf.mxu0
      %v955 = vadd.f32 0.0, %v954
      %v956 = vpop.f32.mrf.mxu0
      %v957 = vpop.f32.mrf.mxu0
      %v958 = vadd.f32 0.0, %v957
      %v959 = vpop.f32.mrf.mxu0
      %960 = vmatprep.mubr.bf16.mxu0 0
      %961 = vmatmul.mubr.bf16.gmra.mxu0 %v847
      %v962 = vpop.f32.mrf.mxu0
      %v963 = vadd.f32 0.0, %v962
      %v964 = vpop.f32.mrf.mxu0
      %v965 = vpop.f32.mrf.mxu0
      %v966 = vadd.f32 0.0, %v965
      %v967 = vpop.f32.mrf.mxu0
      %968 = vmatprep.mubr.bf16.mxu0 0
      %969 = vmatmul.mubr.bf16.gmra.mxu0 %v850
      %v970 = vpop.f32.mrf.mxu0
      %v971 = vadd.f32 0.0, %v970
      %v972 = vpop.f32.mrf.mxu0
      %v973 = vpop.f32.mrf.mxu0
      %v974 = vadd.f32 0.0, %v973
      %v975 = vpop.f32.mrf.mxu0
      %976 = vmatprep.mubr.bf16.mxu0 0
      %977 = vmatmul.mubr.bf16.gmra.mxu0 %v853
      %v978 = vpop.f32.mrf.mxu0
      %v979 = vadd.f32 0.0, %v978
      %v980 = vpop.f32.mrf.mxu0
      %v981 = vpop.f32.mrf.mxu0
      %v982 = vadd.f32 0.0, %v981
      %v983 = vpop.f32.mrf.mxu0
      %984 = vmatprep.mubr.bf16.mxu0 0
      %985 = vmatmul.mubr.bf16.gmra.mxu0 %v856
      %v986 = vpop.f32.mrf.mxu0
      %v987 = vadd.f32 0.0, %v986
      %v988 = vpop.f32.mrf.mxu0
      %v989 = vpop.f32.mrf.mxu0
      %v990 = vadd.f32 0.0, %v989
      %v991 = vpop.f32.mrf.mxu0
      %992 = vmatprep.mubr.bf16.mxu0 0
      %993 = vmatmul.mubr.bf16.gmra.mxu0 %v859
      %v994 = vpop.f32.mrf.mxu0
      %v995 = vadd.f32 0.0, %v994
      %v996 = vpop.f32.mrf.mxu0
      %v997 = vpop.f32.mrf.mxu0
      %v998 = vadd.f32 0.0, %v997
      %v999 = vpop.f32.mrf.mxu0
      %1000 = vmatprep.mubr.bf16.mxu0 0
      %1001 = vmatmul.mubr.bf16.gmra.mxu0 %v862
      %v1002 = vpop.f32.mrf.mxu0
      %v1003 = vadd.f32 0.0, %v1002
      %v1004 = vpop.f32.mrf.mxu0
      %v1005 = vpop.f32.mrf.mxu0
      %v1006 = vadd.f32 0.0, %v1005
      %v1007 = vpop.f32.mrf.mxu0
      %1008 = vmatprep.mubr.bf16.mxu0 0
      %1009 = vmatmul.mubr.bf16.gmra.mxu0 %v865
      %v1010 = vpop.f32.mrf.mxu0
      %v1011 = vadd.f32 0.0, %v1010
      %v1012 = vpop.f32.mrf.mxu0
      %v1013 = vpop.f32.mrf.mxu0
      %v1014 = vadd.f32 0.0, %v1013
      %v1015 = vpop.f32.mrf.mxu0
      %1016 = vmatprep.mubr.bf16.mxu0 0
      %1017 = vmatmul.mubr.bf16.gmra.mxu0 %v868
      %v1018 = vpop.f32.mrf.mxu0
      %v1019 = vadd.f32 0.0, %v1018
      %v1020 = vpop.f32.mrf.mxu0
      %v1021 = vpop.f32.mrf.mxu0
      %v1022 = vadd.f32 0.0, %v1021
      %v1023 = vpop.f32.mrf.mxu0
      %1024 = vmatprep.mubr.bf16.mxu0 0
      %1025 = vmatmul.mubr.bf16.gmra.mxu0 %v871
      %v1026 = vpop.f32.mrf.mxu0
      %v1027 = vadd.f32 0.0, %v1026
      %v1028 = vpop.f32.mrf.mxu0
      %v1029 = vpop.f32.mrf.mxu0
      %v1030 = vadd.f32 0.0, %v1029
      %v1031 = vpop.f32.mrf.mxu0
      %1032 = vmatprep.mubr.bf16.mxu0 0
      %1033 = vmatmul.mubr.bf16.gmra.mxu0 %v874
      %v1034 = vpop.f32.mrf.mxu0
      %v1035 = vadd.f32 0.0, %v1034
      %v1036 = vpop.f32.mrf.mxu0
      %v1037 = vpop.f32.mrf.mxu0
      %v1038 = vadd.f32 0.0, %v1037
      %v1039 = vpop.f32.mrf.mxu0
      %1040 = vmatprep.mubr.bf16.mxu0 0
      %1041 = vmatmul.mubr.bf16.gmra.mxu0 %v877
      %v1042 = vpop.f32.mrf.mxu0
      %v1043 = vadd.f32 0.0, %v1042
      %v1044 = vpop.f32.mrf.mxu0
      %v1045 = vpop.f32.mrf.mxu0
      %v1046 = vadd.f32 0.0, %v1045
      %v1047 = vpop.f32.mrf.mxu0
      %1048 = vmatprep.mubr.bf16.mxu0 0
      %1049 = vmatmul.mubr.bf16.gmra.mxu0 %v880
      %v1050 = vpop.f32.mrf.mxu0
      %v1051 = vadd.f32 0.0, %v1050
      %v1052 = vpop.f32.mrf.mxu0
      %v1053 = vpop.f32.mrf.mxu0
      %v1054 = vadd.f32 0.0, %v1053
      %v1055 = vpop.f32.mrf.mxu0
      %1056 = vmatprep.mubr.bf16.mxu0 0
      %1057 = vmatmul.mubr.bf16.gmra.mxu0 %v883
      %v1058 = vpop.f32.mrf.mxu0
      %v1059 = vadd.f32 0.0, %v1058
      %v1060 = vpop.f32.mrf.mxu0
      %v1061 = vpop.f32.mrf.mxu0
      %v1062 = vadd.f32 0.0, %v1061
      %v1063 = vpop.f32.mrf.mxu0
      %1064 = vdwg.mxu0
      %v1065 = vadd.f32 %v662, %v923
      %v1066 = vadd.f32 %v663, %v926
      %v1067 = vadd.f32 %v664, %v931
      %v1068 = vadd.f32 %v665, %v934
      %v1069 = vadd.f32 %v666, %v939
      %v1070 = vadd.f32 %v667, %v942
      %v1071 = vadd.f32 %v668, %v947
      %v1072 = vadd.f32 %v669, %v950
      %v1073 = vadd.f32 %v670, %v955
      %v1074 = vadd.f32 %v671, %v958
      %v1075 = vadd.f32 %v672, %v963
      %v1076 = vadd.f32 %v673, %v966
      %v1077 = vadd.f32 %v674, %v971
      %v1078 = vadd.f32 %v675, %v974
      %v1079 = vadd.f32 %v676, %v979
      %v1080 = vadd.f32 %v677, %v982
      %v1081 = vadd.f32 %v678, %v987
      %v1082 = vadd.f32 %v679, %v990
      %v1083 = vadd.f32 %v680, %v995
      %v1084 = vadd.f32 %v681, %v998
      %v1085 = vadd.f32 %v682, %v1003
      %v1086 = vadd.f32 %v683, %v1006
      %v1087 = vadd.f32 %v684, %v1011
      %v1088 = vadd.f32 %v685, %v1014
      %v1089 = vadd.f32 %v686, %v1019
      %v1090 = vadd.f32 %v687, %v1022
      %v1091 = vadd.f32 %v688, %v1027
      %v1092 = vadd.f32 %v689, %v1030
      %v1093 = vadd.f32 %v690, %v1035
      %v1094 = vadd.f32 %v691, %v1038
      %v1095 = vadd.f32 %v692, %v1043
      %v1096 = vadd.f32 %v693, %v1046
      %v1097 = vadd.f32 %v694, %v1051
      %v1098 = vadd.f32 %v695, %v1054
      %v1099 = vadd.f32 %v696, %v1059
      %v1100 = vadd.f32 %v697, %v1062
      %v1101 = vld [vmem:[%s280] sm:$0xe]
      %s1102 = scalar_lea.vmem %s1, 4
      %v1103 = vld [vmem:[%s1102] sm:$0x3]
      %v1105 = vunpack.c.l.b16 %v1101
      %v1106 = vpack.c.b16 %v373, %v1105
      %vm1107 = vcmask 1046528
      %v1108 = vrot.slane %v1106, 1
      %v1109 = vrot.slane %v409, 1
      %v1110 = vsel %vm1107, %v1108, %v1109
      %v1111 = vrot.slane %v410, 1
      %v1112 = vsel %vm1107, %v1109, %v1111
      %v1113 = vrot.slane %v411, 1
      %v1114 = vsel %vm1107, %v1111, %v1113
      %v1115 = vrot.slane %v412, 1
      %v1116 = vsel %vm1107, %v1113, %v1115
      %v1117 = vrot.slane %v413, 1
      %v1118 = vsel %vm1107, %v1115, %v1117
      %v1119 = vrot.slane %v414, 1
      %v1120 = vsel %vm1107, %v1117, %v1119
      %v1121 = vrot.slane %v415, 1
      %v1122 = vsel %vm1107, %v1119, %v1121
      %v1123 = vrot.slane %v416, 1
      %v1124 = vsel %vm1107, %v1121, %v1123
      %v1125 = vrot.slane %v417, 1
      %v1126 = vsel %vm1107, %v1123, %v1125
      %v1127 = vrot.slane %v418, 1
      %v1128 = vsel %vm1107, %v1125, %v1127
      %v1129 = vrot.slane %v419, 1
      %v1130 = vsel %vm1107, %v1127, %v1129
      %v1131 = vrot.slane %v420, 1
      %v1132 = vsel %vm1107, %v1129, %v1131
      %v1133 = vrot.slane %v421, 1
      %v1134 = vsel %vm1107, %v1131, %v1133
      %v1135 = vrot.slane %v422, 1
      %v1136 = vsel %vm1107, %v1133, %v1135
      %v1137 = vrot.slane %v423, 1
      %v1138 = vsel %vm1107, %v1135, %v1137
      %v1139 = vrot.slane %v424, 1
      %v1140 = vsel %vm1107, %v1137, %v1139
      %v1141 = vrot.slane %v703, 1
      %v1142 = vsel %vm1107, %v1139, %v1141
      %v1144 = vsel %vm426, %v1110, 0
      %v1147 = vsel %vm426, %v1112, 0
      %v1150 = vsel %vm426, %v1114, 0
      %v1153 = vsel %vm426, %v1116, 0
      %v1156 = vsel %vm426, %v1118, 0
      %v1159 = vsel %vm426, %v1120, 0
      %v1162 = vsel %vm426, %v1122, 0
      %v1165 = vsel %vm426, %v1124, 0
      %v1168 = vsel %vm426, %v1126, 0
      %v1171 = vsel %vm426, %v1128, 0
      %v1174 = vsel %vm426, %v1130, 0
      %v1177 = vsel %vm426, %v1132, 0
      %v1180 = vsel %vm426, %v1134, 0
      %v1183 = vsel %vm426, %v1136, 0
      %v1186 = vsel %vm426, %v1138, 0
      %v1189 = vsel %vm426, %v1140, 0
      %v1192 = vsel %vm426, %v1142, 0
      %v1195 = vsel %vm426, %v1141, 0
      %v1198 = vsel %vm481, %v1103, 0
      %1200 = vmatprep.subr.bf16.mxu0 0
      %1201 = vmatpush1.bf16.msra.mxu0 0
      %1202 = vmatprep.subr.bf16.mxu0 0
      %1203 = vmatpush1.bf16.msra.mxu0 0
      %1204 = vmatprep.subr.bf16.mxu0 0
      %1205 = vmatpush1.bf16.msra.mxu0 0
      %1206 = vmatprep.subr.bf16.mxu0 0
      %1207 = vmatpush1.bf16.msra.mxu0 0
      %1208 = vmatprep.subr.bf16.mxu0 0
      %1209 = vmatpush1.bf16.msra.mxu0 0
      %1210 = vmatprep.subr.bf16.mxu0 0
      %1211 = vmatpush1.bf16.msra.mxu0 0
      %1212 = vmatprep.subr.bf16.mxu0 0
      %1213 = vmatpush1.bf16.msra.mxu0 0
      %1214 = vmatprep.subr.bf16.mxu0 0
      %1215 = vmatpush1.bf16.msra.mxu0 %v1198
      %1216 = vmatprep.subr.bf16.mxu0 0
      %1217 = vmatpush2.bf16.msra.mxu0 0
      %1218 = vmatprep.subr.bf16.mxu0 0
      %1219 = vmatpush2.bf16.msra.mxu0 0
      %1220 = vmatprep.subr.bf16.mxu0 0
      %1221 = vmatpush2.bf16.msra.mxu0 0
      %1222 = vmatprep.subr.bf16.mxu0 0
      %1223 = vmatpush2.bf16.msra.mxu0 0
      %1224 = vmatprep.subr.bf16.mxu0 0
      %1225 = vmatpush2.bf16.msra.mxu0 0
      %1226 = vmatprep.subr.bf16.mxu0 0
      %1227 = vmatpush2.bf16.msra.mxu0 0
      %1228 = vmatprep.subr.bf16.mxu0 0
      %1229 = vmatpush2.bf16.msra.mxu0 0
      %1230 = vmatprep.subr.bf16.mxu0 0
      %1231 = vmatpush2.bf16.msra.mxu0 0
      %1232 = vmatprep.mubr.bf16.mxu0 0
      %1233 = vmatmul.mubr.bf16.gmra.mxu0 %v1144
      %v1234 = vpop.f32.mrf.mxu0
      %v1235 = vadd.f32 0.0, %v1234
      %v1236 = vpop.f32.mrf.mxu0
      %v1237 = vpop.f32.mrf.mxu0
      %v1238 = vadd.f32 0.0, %v1237
      %v1239 = vpop.f32.mrf.mxu0
      %1240 = vmatprep.mubr.bf16.mxu0 0
      %1241 = vmatmul.mubr.bf16.gmra.mxu0 %v1147
      %v1242 = vpop.f32.mrf.mxu0
      %v1243 = vadd.f32 0.0, %v1242
      %v1244 = vpop.f32.mrf.mxu0
      %v1245 = vpop.f32.mrf.mxu0
      %v1246 = vadd.f32 0.0, %v1245
      %v1247 = vpop.f32.mrf.mxu0
      %1248 = vmatprep.mubr.bf16.mxu0 0
      %1249 = vmatmul.mubr.bf16.gmra.mxu0 %v1150
      %v1250 = vpop.f32.mrf.mxu0
      %v1251 = vadd.f32 0.0, %v1250
      %v1252 = vpop.f32.mrf.mxu0
      %v1253 = vpop.f32.mrf.mxu0
      %v1254 = vadd.f32 0.0, %v1253
      %v1255 = vpop.f32.mrf.mxu0
      %1256 = vmatprep.mubr.bf16.mxu0 0
      %1257 = vmatmul.mubr.bf16.gmra.mxu0 %v1153
      %v1258 = vpop.f32.mrf.mxu0
      %v1259 = vadd.f32 0.0, %v1258
      %v1260 = vpop.f32.mrf.mxu0
      %v1261 = vpop.f32.mrf.mxu0
      %v1262 = vadd.f32 0.0, %v1261
      %v1263 = vpop.f32.mrf.mxu0
      %1264 = vmatprep.mubr.bf16.mxu0 0
      %1265 = vmatmul.mubr.bf16.gmra.mxu0 %v1156
      %v1266 = vpop.f32.mrf.mxu0
      %v1267 = vadd.f32 0.0, %v1266
      %v1268 = vpop.f32.mrf.mxu0
      %v1269 = vpop.f32.mrf.mxu0
      %v1270 = vadd.f32 0.0, %v1269
      %v1271 = vpop.f32.mrf.mxu0
      %1272 = vmatprep.mubr.bf16.mxu0 0
      %1273 = vmatmul.mubr.bf16.gmra.mxu0 %v1159
      %v1274 = vpop.f32.mrf.mxu0
      %v1275 = vadd.f32 0.0, %v1274
      %v1276 = vpop.f32.mrf.mxu0
      %v1277 = vpop.f32.mrf.mxu0
      %v1278 = vadd.f32 0.0, %v1277
      %v1279 = vpop.f32.mrf.mxu0
      %1280 = vmatprep.mubr.bf16.mxu0 0
      %1281 = vmatmul.mubr.bf16.gmra.mxu0 %v1162
      %v1282 = vpop.f32.mrf.mxu0
      %v1283 = vadd.f32 0.0, %v1282
      %v1284 = vpop.f32.mrf.mxu0
      %v1285 = vpop.f32.mrf.mxu0
      %v1286 = vadd.f32 0.0, %v1285
      %v1287 = vpop.f32.mrf.mxu0
      %1288 = vmatprep.mubr.bf16.mxu0 0
      %1289 = vmatmul.mubr.bf16.gmra.mxu0 %v1165
      %v1290 = vpop.f32.mrf.mxu0
      %v1291 = vadd.f32 0.0, %v1290
      %v1292 = vpop.f32.mrf.mxu0
      %v1293 = vpop.f32.mrf.mxu0
      %v1294 = vadd.f32 0.0, %v1293
      %v1295 = vpop.f32.mrf.mxu0
      %1296 = vmatprep.mubr.bf16.mxu0 0
      %1297 = vmatmul.mubr.bf16.gmra.mxu0 %v1168
      %v1298 = vpop.f32.mrf.mxu0
      %v1299 = vadd.f32 0.0, %v1298
      %v1300 = vpop.f32.mrf.mxu0
      %v1301 = vpop.f32.mrf.mxu0
      %v1302 = vadd.f32 0.0, %v1301
      %v1303 = vpop.f32.mrf.mxu0
      %1304 = vmatprep.mubr.bf16.mxu0 0
      %1305 = vmatmul.mubr.bf16.gmra.mxu0 %v1171
      %v1306 = vpop.f32.mrf.mxu0
      %v1307 = vadd.f32 0.0, %v1306
      %v1308 = vpop.f32.mrf.mxu0
      %v1309 = vpop.f32.mrf.mxu0
      %v1310 = vadd.f32 0.0, %v1309
      %v1311 = vpop.f32.mrf.mxu0
      %1312 = vmatprep.mubr.bf16.mxu0 0
      %1313 = vmatmul.mubr.bf16.gmra.mxu0 %v1174
      %v1314 = vpop.f32.mrf.mxu0
      %v1315 = vadd.f32 0.0, %v1314
      %v1316 = vpop.f32.mrf.mxu0
      %v1317 = vpop.f32.mrf.mxu0
      %v1318 = vadd.f32 0.0, %v1317
      %v1319 = vpop.f32.mrf.mxu0
      %1320 = vmatprep.mubr.bf16.mxu0 0
      %1321 = vmatmul.mubr.bf16.gmra.mxu0 %v1177
      %v1322 = vpop.f32.mrf.mxu0
      %v1323 = vadd.f32 0.0, %v1322
      %v1324 = vpop.f32.mrf.mxu0
      %v1325 = vpop.f32.mrf.mxu0
      %v1326 = vadd.f32 0.0, %v1325
      %v1327 = vpop.f32.mrf.mxu0
      %1328 = vmatprep.mubr.bf16.mxu0 0
      %1329 = vmatmul.mubr.bf16.gmra.mxu0 %v1180
      %v1330 = vpop.f32.mrf.mxu0
      %v1331 = vadd.f32 0.0, %v1330
      %v1332 = vpop.f32.mrf.mxu0
      %v1333 = vpop.f32.mrf.mxu0
      %v1334 = vadd.f32 0.0, %v1333
      %v1335 = vpop.f32.mrf.mxu0
      %1336 = vmatprep.mubr.bf16.mxu0 0
      %1337 = vmatmul.mubr.bf16.gmra.mxu0 %v1183
      %v1338 = vpop.f32.mrf.mxu0
      %v1339 = vadd.f32 0.0, %v1338
      %v1340 = vpop.f32.mrf.mxu0
      %v1341 = vpop.f32.mrf.mxu0
      %v1342 = vadd.f32 0.0, %v1341
      %v1343 = vpop.f32.mrf.mxu0
      %1344 = vmatprep.mubr.bf16.mxu0 0
      %1345 = vmatmul.mubr.bf16.gmra.mxu0 %v1186
      %v1346 = vpop.f32.mrf.mxu0
      %v1347 = vadd.f32 0.0, %v1346
      %v1348 = vpop.f32.mrf.mxu0
      %v1349 = vpop.f32.mrf.mxu0
      %v1350 = vadd.f32 0.0, %v1349
      %v1351 = vpop.f32.mrf.mxu0
      %1352 = vmatprep.mubr.bf16.mxu0 0
      %1353 = vmatmul.mubr.bf16.gmra.mxu0 %v1189
      %v1354 = vpop.f32.mrf.mxu0
      %v1355 = vadd.f32 0.0, %v1354
      %v1356 = vpop.f32.mrf.mxu0
      %v1357 = vpop.f32.mrf.mxu0
      %v1358 = vadd.f32 0.0, %v1357
      %v1359 = vpop.f32.mrf.mxu0
      %1360 = vmatprep.mubr.bf16.mxu0 0
      %1361 = vmatmul.mubr.bf16.gmra.mxu0 %v1192
      %v1362 = vpop.f32.mrf.mxu0
      %v1363 = vadd.f32 0.0, %v1362
      %v1364 = vpop.f32.mrf.mxu0
      %v1365 = vpop.f32.mrf.mxu0
      %v1366 = vadd.f32 0.0, %v1365
      %v1367 = vpop.f32.mrf.mxu0
      %1368 = vmatprep.mubr.bf16.mxu0 0
      %1369 = vmatmul.mubr.bf16.gmra.mxu0 %v1195
      %v1370 = vpop.f32.mrf.mxu0
      %v1371 = vadd.f32 0.0, %v1370
      %v1372 = vpop.f32.mrf.mxu0
      %v1373 = vpop.f32.mrf.mxu0
      %v1374 = vadd.f32 0.0, %v1373
      %v1375 = vpop.f32.mrf.mxu0
      %1376 = vdwg.mxu0
      %v1377 = vadd.f32 %v1065, %v1235
      %v1378 = vadd.f32 %v1066, %v1238
      %v1379 = vadd.f32 %v1067, %v1243
      %v1380 = vadd.f32 %v1068, %v1246
      %v1381 = vadd.f32 %v1069, %v1251
      %v1382 = vadd.f32 %v1070, %v1254
      %v1383 = vadd.f32 %v1071, %v1259
      %v1384 = vadd.f32 %v1072, %v1262
      %v1385 = vadd.f32 %v1073, %v1267
      %v1386 = vadd.f32 %v1074, %v1270
      %v1387 = vadd.f32 %v1075, %v1275
      %v1388 = vadd.f32 %v1076, %v1278
      %v1389 = vadd.f32 %v1077, %v1283
      %v1390 = vadd.f32 %v1078, %v1286
      %v1391 = vadd.f32 %v1079, %v1291
      %v1392 = vadd.f32 %v1080, %v1294
      %v1393 = vadd.f32 %v1081, %v1299
      %v1394 = vadd.f32 %v1082, %v1302
      %v1395 = vadd.f32 %v1083, %v1307
      %v1396 = vadd.f32 %v1084, %v1310
      %v1397 = vadd.f32 %v1085, %v1315
      %v1398 = vadd.f32 %v1086, %v1318
      %v1399 = vadd.f32 %v1087, %v1323
      %v1400 = vadd.f32 %v1088, %v1326
      %v1401 = vadd.f32 %v1089, %v1331
      %v1402 = vadd.f32 %v1090, %v1334
      %v1403 = vadd.f32 %v1091, %v1339
      %v1404 = vadd.f32 %v1092, %v1342
      %v1405 = vadd.f32 %v1093, %v1347
      %v1406 = vadd.f32 %v1094, %v1350
      %v1407 = vadd.f32 %v1095, %v1355
      %v1408 = vadd.f32 %v1096, %v1358
      %v1409 = vadd.f32 %v1097, %v1363
      %v1410 = vadd.f32 %v1098, %v1366
      %v1411 = vadd.f32 %v1099, %v1371
      %v1412 = vadd.f32 %v1100, %v1374
      %v1413 = vld [vmem:[%s280 + $0x8] sm:$0xe]
      %v1414 = vld [vmem:[%s280 + $0xc] sm:$0xf]
      %v1415 = vld [vmem:[%s280 + $0x10] sm:$0xf]
      %v1416 = vld [vmem:[%s280 + $0x14] sm:$0xf]
      %v1417 = vld [vmem:[%s280 + $0x18] sm:$0xf]
      %v1418 = vld [vmem:[%s280 + $0x1c] sm:$0xf]
      %v1419 = vld [vmem:[%s280 + $0x20] sm:$0xf]
      %v1420 = vld [vmem:[%s280 + $0x24] sm:$0xf]
      %v1421 = vld [vmem:[%s280 + $0x28] sm:$0xf]
      %v1422 = vld [vmem:[%s280 + $0x2c] sm:$0xf]
      %v1423 = vld [vmem:[%s280 + $0x30] sm:$0xf]
      %v1424 = vld [vmem:[%s280 + $0x34] sm:$0xf]
      %v1425 = vld [vmem:[%s280 + $0x38] sm:$0xf]
      %v1426 = vld [vmem:[%s280 + $0x3c] sm:$0xf]
      %v1427 = vld [vmem:[%s280 + $0x40] sm:$0xf]
      %v1428 = vld [vmem:[%s280 + $0x44] sm:$0xf]
      %v1429 = vld [vmem:[%s280 + $0x48] sm:$0xf]
      %v1430 = vld [vmem:[%s280 + $0x4c] sm:$0xf]
      %v1431 = vld [vmem:[%s280 + $0x50] sm:$0xf]
      %v1432 = vld [vmem:[%s280 + $0x54] sm:$0xf]
      %v1433 = vld [vmem:[%s280 + $0x58] sm:$0xf]
      %v1434 = vld [vmem:[%s280 + $0x5c] sm:$0xf]
      %v1435 = vld [vmem:[%s280 + $0x60] sm:$0xf]
      %v1436 = vld [vmem:[%s280 + $0x64] sm:$0xf]
      %v1437 = vld [vmem:[%s280 + $0x68] sm:$0xf]
      %v1438 = vld [vmem:[%s280 + $0x6c] sm:$0xf]
      %v1439 = vld [vmem:[%s280 + $0x70] sm:$0xf]
      %v1440 = vld [vmem:[%s280 + $0x74] sm:$0xf]
      %v1441 = vld [vmem:[%s280 + $0x78] sm:$0xf]
      %v1442 = vld [vmem:[%s280 + $0x7c] sm:$0xf]
      %v1443 = vld [vmem:[%s280 + $0x80] sm:$0xf]
      %v1444 = vld [vmem:[%s280 + $0x84] sm:$0xf]
      %v1445 = vld [vmem:[%s280 + $0x88] sm:$0xf]
      %v1446 = vld [vmem:[%s280 + $0x8c] sm:$0xf]
      %v1447 = vld [vmem:[%s280 + $0x90] sm:$0xf]
      %v1448 = vld [vmem:[%s280 + $0x94] sm:$0xf]
      %s1449 = scalar_lea.vmem %s1, 6
      %v1450 = vld [vmem:[%s1449] sm:$0x3]
      %v1487 = vunpack.c.l.b16 %v1413
      %v1488 = vunpack.c.l.b16 %v1414
      %v1489 = vunpack.c.l.b16 %v1415
      %v1490 = vunpack.c.l.b16 %v1416
      %v1491 = vunpack.c.l.b16 %v1417
      %v1492 = vunpack.c.l.b16 %v1418
      %v1493 = vunpack.c.l.b16 %v1419
      %v1494 = vunpack.c.l.b16 %v1420
      %v1495 = vunpack.c.l.b16 %v1421
      %v1496 = vunpack.c.l.b16 %v1422
      %v1497 = vunpack.c.l.b16 %v1423
      %v1498 = vunpack.c.l.b16 %v1424
      %v1499 = vunpack.c.l.b16 %v1425
      %v1500 = vunpack.c.l.b16 %v1426
      %v1501 = vunpack.c.l.b16 %v1427
      %v1502 = vunpack.c.l.b16 %v1428
      %v1503 = vunpack.c.l.b16 %v1429
      %v1504 = vunpack.c.l.b16 %v1430
      %v1505 = vunpack.c.l.b16 %v1431
      %v1506 = vunpack.c.l.b16 %v1432
      %v1507 = vunpack.c.l.b16 %v1433
      %v1508 = vunpack.c.l.b16 %v1434
      %v1509 = vunpack.c.l.b16 %v1435
      %v1510 = vunpack.c.l.b16 %v1436
      %v1511 = vunpack.c.l.b16 %v1437
      %v1512 = vunpack.c.l.b16 %v1438
      %v1513 = vunpack.c.l.b16 %v1439
      %v1514 = vunpack.c.l.b16 %v1440
      %v1515 = vunpack.c.l.b16 %v1441
      %v1516 = vunpack.c.l.b16 %v1442
      %v1517 = vunpack.c.l.b16 %v1443
      %v1518 = vunpack.c.l.b16 %v1444
      %v1519 = vunpack.c.l.b16 %v1445
      %v1520 = vunpack.c.l.b16 %v1446
      %v1521 = vunpack.c.l.b16 %v1447
      %v1522 = vunpack.c.l.b16 %v1448
      %v1523 = vpack.c.b16 %v1488, %v1487
      %v1524 = vpack.c.b16 %v1490, %v1489
      %v1525 = vpack.c.b16 %v1492, %v1491
      %v1526 = vpack.c.b16 %v1494, %v1493
      %v1527 = vpack.c.b16 %v1496, %v1495
      %v1528 = vpack.c.b16 %v1498, %v1497
      %v1529 = vpack.c.b16 %v1500, %v1499
      %v1530 = vpack.c.b16 %v1502, %v1501
      %v1531 = vpack.c.b16 %v1504, %v1503
      %v1532 = vpack.c.b16 %v1506, %v1505
      %v1533 = vpack.c.b16 %v1508, %v1507
      %v1534 = vpack.c.b16 %v1510, %v1509
      %v1535 = vpack.c.b16 %v1512, %v1511
      %v1536 = vpack.c.b16 %v1514, %v1513
      %v1537 = vpack.c.b16 %v1516, %v1515
      %v1538 = vpack.c.b16 %v1518, %v1517
      %v1539 = vpack.c.b16 %v1520, %v1519
      %v1540 = vpack.c.b16 %v1522, %v1521
      %v1541 = vrot.slane %v1523, 1
      %v1542 = vrot.slane %v1524, 1
      %v1543 = vsel %vm1107, %v1541, %v1542
      %v1544 = vrot.slane %v1525, 1
      %v1545 = vsel %vm1107, %v1542, %v1544
      %v1546 = vrot.slane %v1526, 1
      %v1547 = vsel %vm1107, %v1544, %v1546
      %v1548 = vrot.slane %v1527, 1
      %v1549 = vsel %vm1107, %v1546, %v1548
      %v1550 = vrot.slane %v1528, 1
      %v1551 = vsel %vm1107, %v1548, %v1550
      %v1552 = vrot.slane %v1529, 1
      %v1553 = vsel %vm1107, %v1550, %v1552
      %v1554 = vrot.slane %v1530, 1
      %v1555 = vsel %vm1107, %v1552, %v1554
      %v1556 = vrot.slane %v1531, 1
      %v1557 = vsel %vm1107, %v1554, %v1556
      %v1558 = vrot.slane %v1532, 1
      %v1559 = vsel %vm1107, %v1556, %v1558
      %v1560 = vrot.slane %v1533, 1
      %v1561 = vsel %vm1107, %v1558, %v1560
      %v1562 = vrot.slane %v1534, 1
      %v1563 = vsel %vm1107, %v1560, %v1562
      %v1564 = vrot.slane %v1535, 1
      %v1565 = vsel %vm1107, %v1562, %v1564
      %v1566 = vrot.slane %v1536, 1
      %v1567 = vsel %vm1107, %v1564, %v1566
      %v1568 = vrot.slane %v1537, 1
      %v1569 = vsel %vm1107, %v1566, %v1568
      %v1570 = vrot.slane %v1538, 1
      %v1571 = vsel %vm1107, %v1568, %v1570
      %v1572 = vrot.slane %v1539, 1
      %v1573 = vsel %vm1107, %v1570, %v1572
      %v1574 = vrot.slane %v1540, 1
      %v1575 = vsel %vm1107, %v1572, %v1574
      %v1577 = vsel %vm426, %v1543, 0
      %v1580 = vsel %vm426, %v1545, 0
      %v1583 = vsel %vm426, %v1547, 0
      %v1586 = vsel %vm426, %v1549, 0
      %v1589 = vsel %vm426, %v1551, 0
      %v1592 = vsel %vm426, %v1553, 0
      %v1595 = vsel %vm426, %v1555, 0
      %v1598 = vsel %vm426, %v1557, 0
      %v1601 = vsel %vm426, %v1559, 0
      %v1604 = vsel %vm426, %v1561, 0
      %v1607 = vsel %vm426, %v1563, 0
      %v1610 = vsel %vm426, %v1565, 0
      %v1613 = vsel %vm426, %v1567, 0
      %v1616 = vsel %vm426, %v1569, 0
      %v1619 = vsel %vm426, %v1571, 0
      %v1622 = vsel %vm426, %v1573, 0
      %v1625 = vsel %vm426, %v1575, 0
      %v1628 = vsel %vm426, %v1574, 0
      %v1631 = vsel %vm481, %v1450, 0
      %1633 = vmatprep.subr.bf16.mxu0 0
      %1634 = vmatpush1.bf16.msra.mxu0 0
      %1635 = vmatprep.subr.bf16.mxu0 0
      %1636 = vmatpush1.bf16.msra.mxu0 0
      %1637 = vmatprep.subr.bf16.mxu0 0
      %1638 = vmatpush1.bf16.msra.mxu0 0
      %1639 = vmatprep.subr.bf16.mxu0 0
      %1640 = vmatpush1.bf16.msra.mxu0 0
      %1641 = vmatprep.subr.bf16.mxu0 0
      %1642 = vmatpush1.bf16.msra.mxu0 0
      %1643 = vmatprep.subr.bf16.mxu0 0
      %1644 = vmatpush1.bf16.msra.mxu0 0
      %1645 = vmatprep.subr.bf16.mxu0 0
      %1646 = vmatpush1.bf16.msra.mxu0 0
      %1647 = vmatprep.subr.bf16.mxu0 0
      %1648 = vmatpush1.bf16.msra.mxu0 %v1631
      %1649 = vmatprep.subr.bf16.mxu0 0
      %1650 = vmatpush2.bf16.msra.mxu0 0
      %1651 = vmatprep.subr.bf16.mxu0 0
      %1652 = vmatpush2.bf16.msra.mxu0 0
      %1653 = vmatprep.subr.bf16.mxu0 0
      %1654 = vmatpush2.bf16.msra.mxu0 0
      %1655 = vmatprep.subr.bf16.mxu0 0
      %1656 = vmatpush2.bf16.msra.mxu0 0
      %1657 = vmatprep.subr.bf16.mxu0 0
      %1658 = vmatpush2.bf16.msra.mxu0 0
      %1659 = vmatprep.subr.bf16.mxu0 0
      %1660 = vmatpush2.bf16.msra.mxu0 0
      %1661 = vmatprep.subr.bf16.mxu0 0
      %1662 = vmatpush2.bf16.msra.mxu0 0
      %1663 = vmatprep.subr.bf16.mxu0 0
      %1664 = vmatpush2.bf16.msra.mxu0 0
      %1665 = vmatprep.mubr.bf16.mxu0 0
      %1666 = vmatmul.mubr.bf16.gmra.mxu0 %v1577
      %v1667 = vpop.f32.mrf.mxu0
      %v1668 = vadd.f32 0.0, %v1667
      %v1669 = vpop.f32.mrf.mxu0
      %v1670 = vpop.f32.mrf.mxu0
      %v1671 = vadd.f32 0.0, %v1670
      %v1672 = vpop.f32.mrf.mxu0
      %1673 = vmatprep.mubr.bf16.mxu0 0
      %1674 = vmatmul.mubr.bf16.gmra.mxu0 %v1580
      %v1675 = vpop.f32.mrf.mxu0
      %v1676 = vadd.f32 0.0, %v1675
      %v1677 = vpop.f32.mrf.mxu0
      %v1678 = vpop.f32.mrf.mxu0
      %v1679 = vadd.f32 0.0, %v1678
      %v1680 = vpop.f32.mrf.mxu0
      %1681 = vmatprep.mubr.bf16.mxu0 0
      %1682 = vmatmul.mubr.bf16.gmra.mxu0 %v1583
      %v1683 = vpop.f32.mrf.mxu0
      %v1684 = vadd.f32 0.0, %v1683
      %v1685 = vpop.f32.mrf.mxu0
      %v1686 = vpop.f32.mrf.mxu0
      %v1687 = vadd.f32 0.0, %v1686
      %v1688 = vpop.f32.mrf.mxu0
      %1689 = vmatprep.mubr.bf16.mxu0 0
      %1690 = vmatmul.mubr.bf16.gmra.mxu0 %v1586
      %v1691 = vpop.f32.mrf.mxu0
      %v1692 = vadd.f32 0.0, %v1691
      %v1693 = vpop.f32.mrf.mxu0
      %v1694 = vpop.f32.mrf.mxu0
      %v1695 = vadd.f32 0.0, %v1694
      %v1696 = vpop.f32.mrf.mxu0
      %1697 = vmatprep.mubr.bf16.mxu0 0
      %1698 = vmatmul.mubr.bf16.gmra.mxu0 %v1589
      %v1699 = vpop.f32.mrf.mxu0
      %v1700 = vadd.f32 0.0, %v1699
      %v1701 = vpop.f32.mrf.mxu0
      %v1702 = vpop.f32.mrf.mxu0
      %v1703 = vadd.f32 0.0, %v1702
      %v1704 = vpop.f32.mrf.mxu0
      %1705 = vmatprep.mubr.bf16.mxu0 0
      %1706 = vmatmul.mubr.bf16.gmra.mxu0 %v1592
      %v1707 = vpop.f32.mrf.mxu0
      %v1708 = vadd.f32 0.0, %v1707
      %v1709 = vpop.f32.mrf.mxu0
      %v1710 = vpop.f32.mrf.mxu0
      %v1711 = vadd.f32 0.0, %v1710
      %v1712 = vpop.f32.mrf.mxu0
      %1713 = vmatprep.mubr.bf16.mxu0 0
      %1714 = vmatmul.mubr.bf16.gmra.mxu0 %v1595
      %v1715 = vpop.f32.mrf.mxu0
      %v1716 = vadd.f32 0.0, %v1715
      %v1717 = vpop.f32.mrf.mxu0
      %v1718 = vpop.f32.mrf.mxu0
      %v1719 = vadd.f32 0.0, %v1718
      %v1720 = vpop.f32.mrf.mxu0
      %1721 = vmatprep.mubr.bf16.mxu0 0
      %1722 = vmatmul.mubr.bf16.gmra.mxu0 %v1598
      %v1723 = vpop.f32.mrf.mxu0
      %v1724 = vadd.f32 0.0, %v1723
      %v1725 = vpop.f32.mrf.mxu0
      %v1726 = vpop.f32.mrf.mxu0
      %v1727 = vadd.f32 0.0, %v1726
      %v1728 = vpop.f32.mrf.mxu0
      %1729 = vmatprep.mubr.bf16.mxu0 0
      %1730 = vmatmul.mubr.bf16.gmra.mxu0 %v1601
      %v1731 = vpop.f32.mrf.mxu0
      %v1732 = vadd.f32 0.0, %v1731
      %v1733 = vpop.f32.mrf.mxu0
      %v1734 = vpop.f32.mrf.mxu0
      %v1735 = vadd.f32 0.0, %v1734
      %v1736 = vpop.f32.mrf.mxu0
      %1737 = vmatprep.mubr.bf16.mxu0 0
      %1738 = vmatmul.mubr.bf16.gmra.mxu0 %v1604
      %v1739 = vpop.f32.mrf.mxu0
      %v1740 = vadd.f32 0.0, %v1739
      %v1741 = vpop.f32.mrf.mxu0
      %v1742 = vpop.f32.mrf.mxu0
      %v1743 = vadd.f32 0.0, %v1742
      %v1744 = vpop.f32.mrf.mxu0
      %1745 = vmatprep.mubr.bf16.mxu0 0
      %1746 = vmatmul.mubr.bf16.gmra.mxu0 %v1607
      %v1747 = vpop.f32.mrf.mxu0
      %v1748 = vadd.f32 0.0, %v1747
      %v1749 = vpop.f32.mrf.mxu0
      %v1750 = vpop.f32.mrf.mxu0
      %v1751 = vadd.f32 0.0, %v1750
      %v1752 = vpop.f32.mrf.mxu0
      %1753 = vmatprep.mubr.bf16.mxu0 0
      %1754 = vmatmul.mubr.bf16.gmra.mxu0 %v1610
      %v1755 = vpop.f32.mrf.mxu0
      %v1756 = vadd.f32 0.0, %v1755
      %v1757 = vpop.f32.mrf.mxu0
      %v1758 = vpop.f32.mrf.mxu0
      %v1759 = vadd.f32 0.0, %v1758
      %v1760 = vpop.f32.mrf.mxu0
      %1761 = vmatprep.mubr.bf16.mxu0 0
      %1762 = vmatmul.mubr.bf16.gmra.mxu0 %v1613
      %v1763 = vpop.f32.mrf.mxu0
      %v1764 = vadd.f32 0.0, %v1763
      %v1765 = vpop.f32.mrf.mxu0
      %v1766 = vpop.f32.mrf.mxu0
      %v1767 = vadd.f32 0.0, %v1766
      %v1768 = vpop.f32.mrf.mxu0
      %1769 = vmatprep.mubr.bf16.mxu0 0
      %1770 = vmatmul.mubr.bf16.gmra.mxu0 %v1616
      %v1771 = vpop.f32.mrf.mxu0
      %v1772 = vadd.f32 0.0, %v1771
      %v1773 = vpop.f32.mrf.mxu0
      %v1774 = vpop.f32.mrf.mxu0
      %v1775 = vadd.f32 0.0, %v1774
      %v1776 = vpop.f32.mrf.mxu0
      %1777 = vmatprep.mubr.bf16.mxu0 0
      %1778 = vmatmul.mubr.bf16.gmra.mxu0 %v1619
      %v1779 = vpop.f32.mrf.mxu0
      %v1780 = vadd.f32 0.0, %v1779
      %v1781 = vpop.f32.mrf.mxu0
      %v1782 = vpop.f32.mrf.mxu0
      %v1783 = vadd.f32 0.0, %v1782
      %v1784 = vpop.f32.mrf.mxu0
      %1785 = vmatprep.mubr.bf16.mxu0 0
      %1786 = vmatmul.mubr.bf16.gmra.mxu0 %v1622
      %v1787 = vpop.f32.mrf.mxu0
      %v1788 = vadd.f32 0.0, %v1787
      %v1789 = vpop.f32.mrf.mxu0
      %v1790 = vpop.f32.mrf.mxu0
      %v1791 = vadd.f32 0.0, %v1790
      %v1792 = vpop.f32.mrf.mxu0
      %1793 = vmatprep.mubr.bf16.mxu0 0
      %1794 = vmatmul.mubr.bf16.gmra.mxu0 %v1625
      %v1795 = vpop.f32.mrf.mxu0
      %v1796 = vadd.f32 0.0, %v1795
      %v1797 = vpop.f32.mrf.mxu0
      %v1798 = vpop.f32.mrf.mxu0
      %v1799 = vadd.f32 0.0, %v1798
      %v1800 = vpop.f32.mrf.mxu0
      %1801 = vmatprep.mubr.bf16.mxu0 0
      %1802 = vmatmul.mubr.bf16.gmra.mxu0 %v1628
      %v1803 = vpop.f32.mrf.mxu0
      %v1804 = vadd.f32 0.0, %v1803
      %v1805 = vpop.f32.mrf.mxu0
      %v1806 = vpop.f32.mrf.mxu0
      %v1807 = vadd.f32 0.0, %v1806
      %v1808 = vpop.f32.mrf.mxu0
      %1809 = vdwg.mxu0
      %v1810 = vadd.f32 %v1377, %v1668
      %v1811 = vadd.f32 %v1378, %v1671
      %v1812 = vadd.f32 %v1379, %v1676
      %v1813 = vadd.f32 %v1380, %v1679
      %v1814 = vadd.f32 %v1381, %v1684
      %v1815 = vadd.f32 %v1382, %v1687
      %v1816 = vadd.f32 %v1383, %v1692
      %v1817 = vadd.f32 %v1384, %v1695
      %v1818 = vadd.f32 %v1385, %v1700
      %v1819 = vadd.f32 %v1386, %v1703
      %v1820 = vadd.f32 %v1387, %v1708
      %v1821 = vadd.f32 %v1388, %v1711
      %v1822 = vadd.f32 %v1389, %v1716
      %v1823 = vadd.f32 %v1390, %v1719
      %v1824 = vadd.f32 %v1391, %v1724
      %v1825 = vadd.f32 %v1392, %v1727
      %v1826 = vadd.f32 %v1393, %v1732
      %v1827 = vadd.f32 %v1394, %v1735
      %v1828 = vadd.f32 %v1395, %v1740
      %v1829 = vadd.f32 %v1396, %v1743
      %v1830 = vadd.f32 %v1397, %v1748
      %v1831 = vadd.f32 %v1398, %v1751
      %v1832 = vadd.f32 %v1399, %v1756
      %v1833 = vadd.f32 %v1400, %v1759
      %v1834 = vadd.f32 %v1401, %v1764
      %v1835 = vadd.f32 %v1402, %v1767
      %v1836 = vadd.f32 %v1403, %v1772
      %v1837 = vadd.f32 %v1404, %v1775
      %v1838 = vadd.f32 %v1405, %v1780
      %v1839 = vadd.f32 %v1406, %v1783
      %v1840 = vadd.f32 %v1407, %v1788
      %v1841 = vadd.f32 %v1408, %v1791
      %v1842 = vadd.f32 %v1409, %v1796
      %v1843 = vadd.f32 %v1410, %v1799
      %v1844 = vadd.f32 %v1411, %v1804
      %v1845 = vadd.f32 %v1412, %v1807
      %v1846 = vld [vmem:[%s280 + $0x8] sm:$0xe]
      %v1847 = vld [vmem:[%s280 + $0xc] sm:$0xf]
      %v1848 = vld [vmem:[%s280 + $0x10] sm:$0xf]
      %v1849 = vld [vmem:[%s280 + $0x14] sm:$0xf]
      %v1850 = vld [vmem:[%s280 + $0x18] sm:$0xf]
      %v1851 = vld [vmem:[%s280 + $0x1c] sm:$0xf]
      %v1852 = vld [vmem:[%s280 + $0x20] sm:$0xf]
      %v1853 = vld [vmem:[%s280 + $0x24] sm:$0xf]
      %v1854 = vld [vmem:[%s280 + $0x28] sm:$0xf]
      %v1855 = vld [vmem:[%s280 + $0x2c] sm:$0xf]
      %v1856 = vld [vmem:[%s280 + $0x30] sm:$0xf]
      %v1857 = vld [vmem:[%s280 + $0x34] sm:$0xf]
      %v1858 = vld [vmem:[%s280 + $0x38] sm:$0xf]
      %v1859 = vld [vmem:[%s280 + $0x3c] sm:$0xf]
      %v1860 = vld [vmem:[%s280 + $0x40] sm:$0xf]
      %v1861 = vld [vmem:[%s280 + $0x44] sm:$0xf]
      %v1862 = vld [vmem:[%s280 + $0x48] sm:$0xf]
      %v1863 = vld [vmem:[%s280 + $0x4c] sm:$0xf]
      %v1864 = vld [vmem:[%s280 + $0x50] sm:$0xf]
      %v1865 = vld [vmem:[%s280 + $0x54] sm:$0xf]
      %v1866 = vld [vmem:[%s280 + $0x58] sm:$0xf]
      %v1867 = vld [vmem:[%s280 + $0x5c] sm:$0xf]
      %v1868 = vld [vmem:[%s280 + $0x60] sm:$0xf]
      %v1869 = vld [vmem:[%s280 + $0x64] sm:$0xf]
      %v1870 = vld [vmem:[%s280 + $0x68] sm:$0xf]
      %v1871 = vld [vmem:[%s280 + $0x6c] sm:$0xf]
      %v1872 = vld [vmem:[%s280 + $0x70] sm:$0xf]
      %v1873 = vld [vmem:[%s280 + $0x74] sm:$0xf]
      %v1874 = vld [vmem:[%s280 + $0x78] sm:$0xf]
      %v1875 = vld [vmem:[%s280 + $0x7c] sm:$0xf]
      %v1876 = vld [vmem:[%s280 + $0x80] sm:$0xf]
      %v1877 = vld [vmem:[%s280 + $0x84] sm:$0xf]
      %v1878 = vld [vmem:[%s280 + $0x88] sm:$0xf]
      %v1879 = vld [vmem:[%s280 + $0x8c] sm:$0xf]
      %v1880 = vld [vmem:[%s280 + $0x90] sm:$0xf]
      %v1881 = vld [vmem:[%s280 + $0x94] sm:$0xf]
      %v1882 = vld [vmem:[%s280 + $0x98] sm:$0x1]
      %s1883 = scalar_lea.vmem %s1, 8
      %v1884 = vld [vmem:[%s1883] sm:$0x3]
      %v1922 = vunpack.c.l.b16 %v1846
      %v1923 = vunpack.c.l.b16 %v1847
      %v1924 = vunpack.c.l.b16 %v1848
      %v1925 = vunpack.c.l.b16 %v1849
      %v1926 = vunpack.c.l.b16 %v1850
      %v1927 = vunpack.c.l.b16 %v1851
      %v1928 = vunpack.c.l.b16 %v1852
      %v1929 = vunpack.c.l.b16 %v1853
      %v1930 = vunpack.c.l.b16 %v1854
      %v1931 = vunpack.c.l.b16 %v1855
      %v1932 = vunpack.c.l.b16 %v1856
      %v1933 = vunpack.c.l.b16 %v1857
      %v1934 = vunpack.c.l.b16 %v1858
      %v1935 = vunpack.c.l.b16 %v1859
      %v1936 = vunpack.c.l.b16 %v1860
      %v1937 = vunpack.c.l.b16 %v1861
      %v1938 = vunpack.c.l.b16 %v1862
      %v1939 = vunpack.c.l.b16 %v1863
      %v1940 = vunpack.c.l.b16 %v1864
      %v1941 = vunpack.c.l.b16 %v1865
      %v1942 = vunpack.c.l.b16 %v1866
      %v1943 = vunpack.c.l.b16 %v1867
      %v1944 = vunpack.c.l.b16 %v1868
      %v1945 = vunpack.c.l.b16 %v1869
      %v1946 = vunpack.c.l.b16 %v1870
      %v1947 = vunpack.c.l.b16 %v1871
      %v1948 = vunpack.c.l.b16 %v1872
      %v1949 = vunpack.c.l.b16 %v1873
      %v1950 = vunpack.c.l.b16 %v1874
      %v1951 = vunpack.c.l.b16 %v1875
      %v1952 = vunpack.c.l.b16 %v1876
      %v1953 = vunpack.c.l.b16 %v1877
      %v1954 = vunpack.c.l.b16 %v1878
      %v1955 = vunpack.c.l.b16 %v1879
      %v1956 = vunpack.c.l.b16 %v1880
      %v1957 = vunpack.c.l.b16 %v1881
      %v1958 = vunpack.c.l.b16 %v1882
      %v1959 = vpack.c.b16 %v1923, %v1922
      %v1960 = vpack.c.b16 %v1925, %v1924
      %v1961 = vpack.c.b16 %v1927, %v1926
      %v1962 = vpack.c.b16 %v1929, %v1928
      %v1963 = vpack.c.b16 %v1931, %v1930
      %v1964 = vpack.c.b16 %v1933, %v1932
      %v1965 = vpack.c.b16 %v1935, %v1934
      %v1966 = vpack.c.b16 %v1937, %v1936
      %v1967 = vpack.c.b16 %v1939, %v1938
      %v1968 = vpack.c.b16 %v1941, %v1940
      %v1969 = vpack.c.b16 %v1943, %v1942
      %v1970 = vpack.c.b16 %v1945, %v1944
      %v1971 = vpack.c.b16 %v1947, %v1946
      %v1972 = vpack.c.b16 %v1949, %v1948
      %v1973 = vpack.c.b16 %v1951, %v1950
      %v1974 = vpack.c.b16 %v1953, %v1952
      %v1975 = vpack.c.b16 %v1955, %v1954
      %v1976 = vpack.c.b16 %v1957, %v1956
      %v1977 = vpack.c.b16 %v1958, %v1958
      %vm1978 = vsmask.f32 6400
      %v1980 = vshrl.u32 %v1959, 16
      %v1982 = vrot.slane %v1980, 1
      %v1983 = vshll.u32 %v1959, 16
      %v1985 = vrot.slane %v1983, 2
      %v1986 = vor.u32 %v1982, %v1985
      %v1988 = vshrl.u32 %v1960, 16
      %v1990 = vrot.slane %v1988, 1
      %v1991 = vshll.u32 %v1960, 16
      %v1993 = vrot.slane %v1991, 2
      %v1994 = vor.u32 %v1990, %v1993
      %v1995 = vsel %vm1978, %v1986, %v1994
      %v1997 = vshrl.u32 %v1961, 16
      %v1999 = vrot.slane %v1997, 1
      %v2000 = vshll.u32 %v1961, 16
      %v2002 = vrot.slane %v2000, 2
      %v2003 = vor.u32 %v1999, %v2002
      %v2004 = vsel %vm1978, %v1994, %v2003
      %v2006 = vshrl.u32 %v1962, 16
      %v2008 = vrot.slane %v2006, 1
      %v2009 = vshll.u32 %v1962, 16
      %v2011 = vrot.slane %v2009, 2
      %v2012 = vor.u32 %v2008, %v2011
      %v2013 = vsel %vm1978, %v2003, %v2012
      %v2015 = vshrl.u32 %v1963, 16
      %v2017 = vrot.slane %v2015, 1
      %v2018 = vshll.u32 %v1963, 16
      %v2020 = vrot.slane %v2018, 2
      %v2021 = vor.u32 %v2017, %v2020
      %v2022 = vsel %vm1978, %v2012, %v2021
      %v2024 = vshrl.u32 %v1964, 16
      %v2026 = vrot.slane %v2024, 1
      %v2027 = vshll.u32 %v1964, 16
      %v2029 = vrot.slane %v2027, 2
      %v2030 = vor.u32 %v2026, %v2029
      %v2031 = vsel %vm1978, %v2021, %v2030
      %v2033 = vshrl.u32 %v1965, 16
      %v2035 = vrot.slane %v2033, 1
      %v2036 = vshll.u32 %v1965, 16
      %v2038 = vrot.slane %v2036, 2
      %v2039 = vor.u32 %v2035, %v2038
      %v2040 = vsel %vm1978, %v2030, %v2039
      %v2042 = vshrl.u32 %v1966, 16
      %v2044 = vrot.slane %v2042, 1
      %v2045 = vshll.u32 %v1966, 16
      %v2047 = vrot.slane %v2045, 2
      %v2048 = vor.u32 %v2044, %v2047
      %v2049 = vsel %vm1978, %v2039, %v2048
      %v2051 = vshrl.u32 %v1967, 16
      %v2053 = vrot.slane %v2051, 1
      %v2054 = vshll.u32 %v1967, 16
      %v2056 = vrot.slane %v2054, 2
      %v2057 = vor.u32 %v2053, %v2056
      %v2058 = vsel %vm1978, %v2048, %v2057
      %v2060 = vshrl.u32 %v1968, 16
      %v2062 = vrot.slane %v2060, 1
      %v2063 = vshll.u32 %v1968, 16
      %v2065 = vrot.slane %v2063, 2
      %v2066 = vor.u32 %v2062, %v2065
      %v2067 = vsel %vm1978, %v2057, %v2066
      %v2069 = vshrl.u32 %v1969, 16
      %v2071 = vrot.slane %v2069, 1
      %v2072 = vshll.u32 %v1969, 16
      %v2074 = vrot.slane %v2072, 2
      %v2075 = vor.u32 %v2071, %v2074
      %v2076 = vsel %vm1978, %v2066, %v2075
      %v2078 = vshrl.u32 %v1970, 16
      %v2080 = vrot.slane %v2078, 1
      %v2081 = vshll.u32 %v1970, 16
      %v2083 = vrot.slane %v2081, 2
      %v2084 = vor.u32 %v2080, %v2083
      %v2085 = vsel %vm1978, %v2075, %v2084
      %v2087 = vshrl.u32 %v1971, 16
      %v2089 = vrot.slane %v2087, 1
      %v2090 = vshll.u32 %v1971, 16
      %v2092 = vrot.slane %v2090, 2
      %v2093 = vor.u32 %v2089, %v2092
      %v2094 = vsel %vm1978, %v2084, %v2093
      %v2096 = vshrl.u32 %v1972, 16
      %v2098 = vrot.slane %v2096, 1
      %v2099 = vshll.u32 %v1972, 16
      %v2101 = vrot.slane %v2099, 2
      %v2102 = vor.u32 %v2098, %v2101
      %v2103 = vsel %vm1978, %v2093, %v2102
      %v2105 = vshrl.u32 %v1973, 16
      %v2107 = vrot.slane %v2105, 1
      %v2108 = vshll.u32 %v1973, 16
      %v2110 = vrot.slane %v2108, 2
      %v2111 = vor.u32 %v2107, %v2110
      %v2112 = vsel %vm1978, %v2102, %v2111
      %v2114 = vshrl.u32 %v1974, 16
      %v2116 = vrot.slane %v2114, 1
      %v2117 = vshll.u32 %v1974, 16
      %v2119 = vrot.slane %v2117, 2
      %v2120 = vor.u32 %v2116, %v2119
      %v2121 = vsel %vm1978, %v2111, %v2120
      %v2123 = vshrl.u32 %v1975, 16
      %v2125 = vrot.slane %v2123, 1
      %v2126 = vshll.u32 %v1975, 16
      %v2128 = vrot.slane %v2126, 2
      %v2129 = vor.u32 %v2125, %v2128
      %v2130 = vsel %vm1978, %v2120, %v2129
      %v2132 = vshrl.u32 %v1976, 16
      %v2134 = vrot.slane %v2132, 1
      %v2135 = vshll.u32 %v1976, 16
      %v2137 = vrot.slane %v2135, 2
      %v2138 = vor.u32 %v2134, %v2137
      %v2139 = vsel %vm1978, %v2129, %v2138
      %v2141 = vshll.u32 %v1977, 16
      %v2143 = vrot.slane %v2141, 2
      %v2144 = vsel %vm1978, %v2138, %v2143
      %v2146 = vsel %vm426, %v1995, 0
      %v2149 = vsel %vm426, %v2004, 0
      %v2152 = vsel %vm426, %v2013, 0
      %v2155 = vsel %vm426, %v2022, 0
      %v2158 = vsel %vm426, %v2031, 0
      %v2161 = vsel %vm426, %v2040, 0
      %v2164 = vsel %vm426, %v2049, 0
      %v2167 = vsel %vm426, %v2058, 0
      %v2170 = vsel %vm426, %v2067, 0
      %v2173 = vsel %vm426, %v2076, 0
      %v2176 = vsel %vm426, %v2085, 0
      %v2179 = vsel %vm426, %v2094, 0
      %v2182 = vsel %vm426, %v2103, 0
      %v2185 = vsel %vm426, %v2112, 0
      %v2188 = vsel %vm426, %v2121, 0
      %v2191 = vsel %vm426, %v2130, 0
      %v2194 = vsel %vm426, %v2139, 0
      %v2197 = vsel %vm426, %v2144, 0
      %v2200 = vsel %vm481, %v1884, 0
      %2202 = vmatprep.subr.bf16.mxu0 0
      %2203 = vmatpush1.bf16.msra.mxu0 0
      %2204 = vmatprep.subr.bf16.mxu0 0
      %2205 = vmatpush1.bf16.msra.mxu0 0
      %2206 = vmatprep.subr.bf16.mxu0 0
      %2207 = vmatpush1.bf16.msra.mxu0 0
      %2208 = vmatprep.subr.bf16.mxu0 0
      %2209 = vmatpush1.bf16.msra.mxu0 0
      %2210 = vmatprep.subr.bf16.mxu0 0
      %2211 = vmatpush1.bf16.msra.mxu0 0
      %2212 = vmatprep.subr.bf16.mxu0 0
      %2213 = vmatpush1.bf16.msra.mxu0 0
      %2214 = vmatprep.subr.bf16.mxu0 0
      %2215 = vmatpush1.bf16.msra.mxu0 0
      %2216 = vmatprep.subr.bf16.mxu0 0
      %2217 = vmatpush1.bf16.msra.mxu0 %v2200
      %2218 = vmatprep.subr.bf16.mxu0 0
      %2219 = vmatpush2.bf16.msra.mxu0 0
      %2220 = vmatprep.subr.bf16.mxu0 0
      %2221 = vmatpush2.bf16.msra.mxu0 0
      %2222 = vmatprep.subr.bf16.mxu0 0
      %2223 = vmatpush2.bf16.msra.mxu0 0
      %2224 = vmatprep.subr.bf16.mxu0 0
      %2225 = vmatpush2.bf16.msra.mxu0 0
      %2226 = vmatprep.subr.bf16.mxu0 0
      %2227 = vmatpush2.bf16.msra.mxu0 0
      %2228 = vmatprep.subr.bf16.mxu0 0
      %2229 = vmatpush2.bf16.msra.mxu0 0
      %2230 = vmatprep.subr.bf16.mxu0 0
      %2231 = vmatpush2.bf16.msra.mxu0 0
      %2232 = vmatprep.subr.bf16.mxu0 0
      %2233 = vmatpush2.bf16.msra.mxu0 0
      %2234 = vmatprep.mubr.bf16.mxu0 0
      %2235 = vmatmul.mubr.bf16.gmra.mxu0 %v2146
      %v2236 = vpop.f32.mrf.mxu0
      %v2237 = vadd.f32 0.0, %v2236
      %v2238 = vpop.f32.mrf.mxu0
      %v2239 = vpop.f32.mrf.mxu0
      %v2240 = vadd.f32 0.0, %v2239
      %v2241 = vpop.f32.mrf.mxu0
      %2242 = vmatprep.mubr.bf16.mxu0 0
      %2243 = vmatmul.mubr.bf16.gmra.mxu0 %v2149
      %v2244 = vpop.f32.mrf.mxu0
      %v2245 = vadd.f32 0.0, %v2244
      %v2246 = vpop.f32.mrf.mxu0
      %v2247 = vpop.f32.mrf.mxu0
      %v2248 = vadd.f32 0.0, %v2247
      %v2249 = vpop.f32.mrf.mxu0
      %2250 = vmatprep.mubr.bf16.mxu0 0
      %2251 = vmatmul.mubr.bf16.gmra.mxu0 %v2152
      %v2252 = vpop.f32.mrf.mxu0
      %v2253 = vadd.f32 0.0, %v2252
      %v2254 = vpop.f32.mrf.mxu0
      %v2255 = vpop.f32.mrf.mxu0
      %v2256 = vadd.f32 0.0, %v2255
      %v2257 = vpop.f32.mrf.mxu0
      %2258 = vmatprep.mubr.bf16.mxu0 0
      %2259 = vmatmul.mubr.bf16.gmra.mxu0 %v2155
      %v2260 = vpop.f32.mrf.mxu0
      %v2261 = vadd.f32 0.0, %v2260
      %v2262 = vpop.f32.mrf.mxu0
      %v2263 = vpop.f32.mrf.mxu0
      %v2264 = vadd.f32 0.0, %v2263
      %v2265 = vpop.f32.mrf.mxu0
      %2266 = vmatprep.mubr.bf16.mxu0 0
      %2267 = vmatmul.mubr.bf16.gmra.mxu0 %v2158
      %v2268 = vpop.f32.mrf.mxu0
      %v2269 = vadd.f32 0.0, %v2268
      %v2270 = vpop.f32.mrf.mxu0
      %v2271 = vpop.f32.mrf.mxu0
      %v2272 = vadd.f32 0.0, %v2271
      %v2273 = vpop.f32.mrf.mxu0
      %2274 = vmatprep.mubr.bf16.mxu0 0
      %2275 = vmatmul.mubr.bf16.gmra.mxu0 %v2161
      %v2276 = vpop.f32.mrf.mxu0
      %v2277 = vadd.f32 0.0, %v2276
      %v2278 = vpop.f32.mrf.mxu0
      %v2279 = vpop.f32.mrf.mxu0
      %v2280 = vadd.f32 0.0, %v2279
      %v2281 = vpop.f32.mrf.mxu0
      %2282 = vmatprep.mubr.bf16.mxu0 0
      %2283 = vmatmul.mubr.bf16.gmra.mxu0 %v2164
      %v2284 = vpop.f32.mrf.mxu0
      %v2285 = vadd.f32 0.0, %v2284
      %v2286 = vpop.f32.mrf.mxu0
      %v2287 = vpop.f32.mrf.mxu0
      %v2288 = vadd.f32 0.0, %v2287
      %v2289 = vpop.f32.mrf.mxu0
      %2290 = vmatprep.mubr.bf16.mxu0 0
      %2291 = vmatmul.mubr.bf16.gmra.mxu0 %v2167
      %v2292 = vpop.f32.mrf.mxu0
      %v2293 = vadd.f32 0.0, %v2292
      %v2294 = vpop.f32.mrf.mxu0
      %v2295 = vpop.f32.mrf.mxu0
      %v2296 = vadd.f32 0.0, %v2295
      %v2297 = vpop.f32.mrf.mxu0
      %2298 = vmatprep.mubr.bf16.mxu0 0
      %2299 = vmatmul.mubr.bf16.gmra.mxu0 %v2170
      %v2300 = vpop.f32.mrf.mxu0
      %v2301 = vadd.f32 0.0, %v2300
      %v2302 = vpop.f32.mrf.mxu0
      %v2303 = vpop.f32.mrf.mxu0
      %v2304 = vadd.f32 0.0, %v2303
      %v2305 = vpop.f32.mrf.mxu0
      %2306 = vmatprep.mubr.bf16.mxu0 0
      %2307 = vmatmul.mubr.bf16.gmra.mxu0 %v2173
      %v2308 = vpop.f32.mrf.mxu0
      %v2309 = vadd.f32 0.0, %v2308
      %v2310 = vpop.f32.mrf.mxu0
      %v2311 = vpop.f32.mrf.mxu0
      %v2312 = vadd.f32 0.0, %v2311
      %v2313 = vpop.f32.mrf.mxu0
      %2314 = vmatprep.mubr.bf16.mxu0 0
      %2315 = vmatmul.mubr.bf16.gmra.mxu0 %v2176
      %v2316 = vpop.f32.mrf.mxu0
      %v2317 = vadd.f32 0.0, %v2316
      %v2318 = vpop.f32.mrf.mxu0
      %v2319 = vpop.f32.mrf.mxu0
      %v2320 = vadd.f32 0.0, %v2319
      %v2321 = vpop.f32.mrf.mxu0
      %2322 = vmatprep.mubr.bf16.mxu0 0
      %2323 = vmatmul.mubr.bf16.gmra.mxu0 %v2179
      %v2324 = vpop.f32.mrf.mxu0
      %v2325 = vadd.f32 0.0, %v2324
      %v2326 = vpop.f32.mrf.mxu0
      %v2327 = vpop.f32.mrf.mxu0
      %v2328 = vadd.f32 0.0, %v2327
      %v2329 = vpop.f32.mrf.mxu0
      %2330 = vmatprep.mubr.bf16.mxu0 0
      %2331 = vmatmul.mubr.bf16.gmra.mxu0 %v2182
      %v2332 = vpop.f32.mrf.mxu0
      %v2333 = vadd.f32 0.0, %v2332
      %v2334 = vpop.f32.mrf.mxu0
      %v2335 = vpop.f32.mrf.mxu0
      %v2336 = vadd.f32 0.0, %v2335
      %v2337 = vpop.f32.mrf.mxu0
      %2338 = vmatprep.mubr.bf16.mxu0 0
      %2339 = vmatmul.mubr.bf16.gmra.mxu0 %v2185
      %v2340 = vpop.f32.mrf.mxu0
      %v2341 = vadd.f32 0.0, %v2340
      %v2342 = vpop.f32.mrf.mxu0
      %v2343 = vpop.f32.mrf.mxu0
      %v2344 = vadd.f32 0.0, %v2343
      %v2345 = vpop.f32.mrf.mxu0
      %2346 = vmatprep.mubr.bf16.mxu0 0
      %2347 = vmatmul.mubr.bf16.gmra.mxu0 %v2188
      %v2348 = vpop.f32.mrf.mxu0
      %v2349 = vadd.f32 0.0, %v2348
      %v2350 = vpop.f32.mrf.mxu0
      %v2351 = vpop.f32.mrf.mxu0
      %v2352 = vadd.f32 0.0, %v2351
      %v2353 = vpop.f32.mrf.mxu0
      %2354 = vmatprep.mubr.bf16.mxu0 0
      %2355 = vmatmul.mubr.bf16.gmra.mxu0 %v2191
      %v2356 = vpop.f32.mrf.mxu0
      %v2357 = vadd.f32 0.0, %v2356
      %v2358 = vpop.f32.mrf.mxu0
      %v2359 = vpop.f32.mrf.mxu0
      %v2360 = vadd.f32 0.0, %v2359
      %v2361 = vpop.f32.mrf.mxu0
      %2362 = vmatprep.mubr.bf16.mxu0 0
      %2363 = vmatmul.mubr.bf16.gmra.mxu0 %v2194
      %v2364 = vpop.f32.mrf.mxu0
      %v2365 = vadd.f32 0.0, %v2364
      %v2366 = vpop.f32.mrf.mxu0
      %v2367 = vpop.f32.mrf.mxu0
      %v2368 = vadd.f32 0.0, %v2367
      %v2369 = vpop.f32.mrf.mxu0
      %2370 = vmatprep.mubr.bf16.mxu0 0
      %2371 = vmatmul.mubr.bf16.gmra.mxu0 %v2197
      %v2372 = vpop.f32.mrf.mxu0
      %v2373 = vadd.f32 0.0, %v2372
      %v2374 = vpop.f32.mrf.mxu0
      %v2375 = vpop.f32.mrf.mxu0
      %v2376 = vadd.f32 0.0, %v2375
      %v2377 = vpop.f32.mrf.mxu0
      %2378 = vdwg.mxu0
      %v2379 = vadd.f32 %v1810, %v2237
      %v2380 = vadd.f32 %v1811, %v2240
      %v2381 = vadd.f32 %v1812, %v2245
      %v2382 = vadd.f32 %v1813, %v2248
      %v2383 = vadd.f32 %v1814, %v2253
      %v2384 = vadd.f32 %v1815, %v2256
      %v2385 = vadd.f32 %v1816, %v2261
      %v2386 = vadd.f32 %v1817, %v2264
      %v2387 = vadd.f32 %v1818, %v2269
      %v2388 = vadd.f32 %v1819, %v2272
      %v2389 = vadd.f32 %v1820, %v2277
      %v2390 = vadd.f32 %v1821, %v2280
      %v2391 = vadd.f32 %v1822, %v2285
      %v2392 = vadd.f32 %v1823, %v2288
      %v2393 = vadd.f32 %v1824, %v2293
      %v2394 = vadd.f32 %v1825, %v2296
      %v2395 = vadd.f32 %v1826, %v2301
      %v2396 = vadd.f32 %v1827, %v2304
      %v2397 = vadd.f32 %v1828, %v2309
      %v2398 = vadd.f32 %v1829, %v2312
      %v2399 = vadd.f32 %v1830, %v2317
      %v2400 = vadd.f32 %v1831, %v2320
      %v2401 = vadd.f32 %v1832, %v2325
      %v2402 = vadd.f32 %v1833, %v2328
      %v2403 = vadd.f32 %v1834, %v2333
      %v2404 = vadd.f32 %v1835, %v2336
      %v2405 = vadd.f32 %v1836, %v2341
      %v2406 = vadd.f32 %v1837, %v2344
      %v2407 = vadd.f32 %v1838, %v2349
      %v2408 = vadd.f32 %v1839, %v2352
      %v2409 = vadd.f32 %v1840, %v2357
      %v2410 = vadd.f32 %v1841, %v2360
      %v2411 = vadd.f32 %v1842, %v2365
      %v2412 = vadd.f32 %v1843, %v2368
      %v2413 = vadd.f32 %v1844, %v2373
      %v2414 = vadd.f32 %v1845, %v2376
      %v2415 = vld [vmem:[%s280 + $0x8] sm:$0xc]
      %s2416 = scalar_lea.vmem %s1, 10
      %v2417 = vld [vmem:[%s2416] sm:$0x3]
      %v2419 = vunpack.c.l.b16 %v2415
      %v2420 = vpack.c.b16 %v1923, %v2419
      %vm2421 = vcmask 1045504
      %v2422 = vrot.slane %v2420, 2
      %v2423 = vrot.slane %v1960, 2
      %v2424 = vsel %vm2421, %v2422, %v2423
      %v2425 = vrot.slane %v1961, 2
      %v2426 = vsel %vm2421, %v2423, %v2425
      %v2427 = vrot.slane %v1962, 2
      %v2428 = vsel %vm2421, %v2425, %v2427
      %v2429 = vrot.slane %v1963, 2
      %v2430 = vsel %vm2421, %v2427, %v2429
      %v2431 = vrot.slane %v1964, 2
      %v2432 = vsel %vm2421, %v2429, %v2431
      %v2433 = vrot.slane %v1965, 2
      %v2434 = vsel %vm2421, %v2431, %v2433
      %v2435 = vrot.slane %v1966, 2
      %v2436 = vsel %vm2421, %v2433, %v2435
      %v2437 = vrot.slane %v1967, 2
      %v2438 = vsel %vm2421, %v2435, %v2437
      %v2439 = vrot.slane %v1968, 2
      %v2440 = vsel %vm2421, %v2437, %v2439
      %v2441 = vrot.slane %v1969, 2
      %v2442 = vsel %vm2421, %v2439, %v2441
      %v2443 = vrot.slane %v1970, 2
      %v2444 = vsel %vm2421, %v2441, %v2443
      %v2445 = vrot.slane %v1971, 2
      %v2446 = vsel %vm2421, %v2443, %v2445
      %v2447 = vrot.slane %v1972, 2
      %v2448 = vsel %vm2421, %v2445, %v2447
      %v2449 = vrot.slane %v1973, 2
      %v2450 = vsel %vm2421, %v2447, %v2449
      %v2451 = vrot.slane %v1974, 2
      %v2452 = vsel %vm2421, %v2449, %v2451
      %v2453 = vrot.slane %v1975, 2
      %v2454 = vsel %vm2421, %v2451, %v2453
      %v2455 = vrot.slane %v1976, 2
      %v2456 = vsel %vm2421, %v2453, %v2455
      %v2457 = vrot.slane %v1977, 2
      %v2458 = vsel %vm2421, %v2455, %v2457
      %v2460 = vsel %vm426, %v2424, 0
      %v2463 = vsel %vm426, %v2426, 0
      %v2466 = vsel %vm426, %v2428, 0
      %v2469 = vsel %vm426, %v2430, 0
      %v2472 = vsel %vm426, %v2432, 0
      %v2475 = vsel %vm426, %v2434, 0
      %v2478 = vsel %vm426, %v2436, 0
      %v2481 = vsel %vm426, %v2438, 0
      %v2484 = vsel %vm426, %v2440, 0
      %v2487 = vsel %vm426, %v2442, 0
      %v2490 = vsel %vm426, %v2444, 0
      %v2493 = vsel %vm426, %v2446, 0
      %v2496 = vsel %vm426, %v2448, 0
      %v2499 = vsel %vm426, %v2450, 0
      %v2502 = vsel %vm426, %v2452, 0
      %v2505 = vsel %vm426, %v2454, 0
      %v2508 = vsel %vm426, %v2456, 0
      %v2511 = vsel %vm426, %v2458, 0
      %v2514 = vsel %vm481, %v2417, 0
      %2516 = vmatprep.subr.bf16.mxu0 0
      %2517 = vmatpush1.bf16.msra.mxu0 0
      %2518 = vmatprep.subr.bf16.mxu0 0
      %2519 = vmatpush1.bf16.msra.mxu0 0
      %2520 = vmatprep.subr.bf16.mxu0 0
      %2521 = vmatpush1.bf16.msra.mxu0 0
      %2522 = vmatprep.subr.bf16.mxu0 0
      %2523 = vmatpush1.bf16.msra.mxu0 0
      %2524 = vmatprep.subr.bf16.mxu0 0
      %2525 = vmatpush1.bf16.msra.mxu0 0
      %2526 = vmatprep.subr.bf16.mxu0 0
      %2527 = vmatpush1.bf16.msra.mxu0 0
      %2528 = vmatprep.subr.bf16.mxu0 0
      %2529 = vmatpush1.bf16.msra.mxu0 0
      %2530 = vmatprep.subr.bf16.mxu0 0
      %2531 = vmatpush1.bf16.msra.mxu0 %v2514
      %2532 = vmatprep.subr.bf16.mxu0 0
      %2533 = vmatpush2.bf16.msra.mxu0 0
      %2534 = vmatprep.subr.bf16.mxu0 0
      %2535 = vmatpush2.bf16.msra.mxu0 0
      %2536 = vmatprep.subr.bf16.mxu0 0
      %2537 = vmatpush2.bf16.msra.mxu0 0
      %2538 = vmatprep.subr.bf16.mxu0 0
      %2539 = vmatpush2.bf16.msra.mxu0 0
      %2540 = vmatprep.subr.bf16.mxu0 0
      %2541 = vmatpush2.bf16.msra.mxu0 0
      %2542 = vmatprep.subr.bf16.mxu0 0
      %2543 = vmatpush2.bf16.msra.mxu0 0
      %2544 = vmatprep.subr.bf16.mxu0 0
      %2545 = vmatpush2.bf16.msra.mxu0 0
      %2546 = vmatprep.subr.bf16.mxu0 0
      %2547 = vmatpush2.bf16.msra.mxu0 0
      %2548 = vmatprep.mubr.bf16.mxu0 0
      %2549 = vmatmul.mubr.bf16.gmra.mxu0 %v2460
      %v2550 = vpop.f32.mrf.mxu0
      %v2551 = vadd.f32 0.0, %v2550
      %v2552 = vpop.f32.mrf.mxu0
      %v2553 = vpop.f32.mrf.mxu0
      %v2554 = vadd.f32 0.0, %v2553
      %v2555 = vpop.f32.mrf.mxu0
      %2556 = vmatprep.mubr.bf16.mxu0 0
      %2557 = vmatmul.mubr.bf16.gmra.mxu0 %v2463
      %v2558 = vpop.f32.mrf.mxu0
      %v2559 = vadd.f32 0.0, %v2558
      %v2560 = vpop.f32.mrf.mxu0
      %v2561 = vpop.f32.mrf.mxu0
      %v2562 = vadd.f32 0.0, %v2561
      %v2563 = vpop.f32.mrf.mxu0
      %2564 = vmatprep.mubr.bf16.mxu0 0
      %2565 = vmatmul.mubr.bf16.gmra.mxu0 %v2466
      %v2566 = vpop.f32.mrf.mxu0
      %v2567 = vadd.f32 0.0, %v2566
      %v2568 = vpop.f32.mrf.mxu0
      %v2569 = vpop.f32.mrf.mxu0
      %v2570 = vadd.f32 0.0, %v2569
      %v2571 = vpop.f32.mrf.mxu0
      %2572 = vmatprep.mubr.bf16.mxu0 0
      %2573 = vmatmul.mubr.bf16.gmra.mxu0 %v2469
      %v2574 = vpop.f32.mrf.mxu0
      %v2575 = vadd.f32 0.0, %v2574
      %v2576 = vpop.f32.mrf.mxu0
      %v2577 = vpop.f32.mrf.mxu0
      %v2578 = vadd.f32 0.0, %v2577
      %v2579 = vpop.f32.mrf.mxu0
      %2580 = vmatprep.mubr.bf16.mxu0 0
      %2581 = vmatmul.mubr.bf16.gmra.mxu0 %v2472
      %v2582 = vpop.f32.mrf.mxu0
      %v2583 = vadd.f32 0.0, %v2582
      %v2584 = vpop.f32.mrf.mxu0
      %v2585 = vpop.f32.mrf.mxu0
      %v2586 = vadd.f32 0.0, %v2585
      %v2587 = vpop.f32.mrf.mxu0
      %2588 = vmatprep.mubr.bf16.mxu0 0
      %2589 = vmatmul.mubr.bf16.gmra.mxu0 %v2475
      %v2590 = vpop.f32.mrf.mxu0
      %v2591 = vadd.f32 0.0, %v2590
      %v2592 = vpop.f32.mrf.mxu0
      %v2593 = vpop.f32.mrf.mxu0
      %v2594 = vadd.f32 0.0, %v2593
      %v2595 = vpop.f32.mrf.mxu0
      %2596 = vmatprep.mubr.bf16.mxu0 0
      %2597 = vmatmul.mubr.bf16.gmra.mxu0 %v2478
      %v2598 = vpop.f32.mrf.mxu0
      %v2599 = vadd.f32 0.0, %v2598
      %v2600 = vpop.f32.mrf.mxu0
      %v2601 = vpop.f32.mrf.mxu0
      %v2602 = vadd.f32 0.0, %v2601
      %v2603 = vpop.f32.mrf.mxu0
      %2604 = vmatprep.mubr.bf16.mxu0 0
      %2605 = vmatmul.mubr.bf16.gmra.mxu0 %v2481
      %v2606 = vpop.f32.mrf.mxu0
      %v2607 = vadd.f32 0.0, %v2606
      %v2608 = vpop.f32.mrf.mxu0
      %v2609 = vpop.f32.mrf.mxu0
      %v2610 = vadd.f32 0.0, %v2609
      %v2611 = vpop.f32.mrf.mxu0
      %2612 = vmatprep.mubr.bf16.mxu0 0
      %2613 = vmatmul.mubr.bf16.gmra.mxu0 %v2484
      %v2614 = vpop.f32.mrf.mxu0
      %v2615 = vadd.f32 0.0, %v2614
      %v2616 = vpop.f32.mrf.mxu0
      %v2617 = vpop.f32.mrf.mxu0
      %v2618 = vadd.f32 0.0, %v2617
      %v2619 = vpop.f32.mrf.mxu0
      %2620 = vmatprep.mubr.bf16.mxu0 0
      %2621 = vmatmul.mubr.bf16.gmra.mxu0 %v2487
      %v2622 = vpop.f32.mrf.mxu0
      %v2623 = vadd.f32 0.0, %v2622
      %v2624 = vpop.f32.mrf.mxu0
      %v2625 = vpop.f32.mrf.mxu0
      %v2626 = vadd.f32 0.0, %v2625
      %v2627 = vpop.f32.mrf.mxu0
      %2628 = vmatprep.mubr.bf16.mxu0 0
      %2629 = vmatmul.mubr.bf16.gmra.mxu0 %v2490
      %v2630 = vpop.f32.mrf.mxu0
      %v2631 = vadd.f32 0.0, %v2630
      %v2632 = vpop.f32.mrf.mxu0
      %v2633 = vpop.f32.mrf.mxu0
      %v2634 = vadd.f32 0.0, %v2633
      %v2635 = vpop.f32.mrf.mxu0
      %2636 = vmatprep.mubr.bf16.mxu0 0
      %2637 = vmatmul.mubr.bf16.gmra.mxu0 %v2493
      %v2638 = vpop.f32.mrf.mxu0
      %v2639 = vadd.f32 0.0, %v2638
      %v2640 = vpop.f32.mrf.mxu0
      %v2641 = vpop.f32.mrf.mxu0
      %v2642 = vadd.f32 0.0, %v2641
      %v2643 = vpop.f32.mrf.mxu0
      %2644 = vmatprep.mubr.bf16.mxu0 0
      %2645 = vmatmul.mubr.bf16.gmra.mxu0 %v2496
      %v2646 = vpop.f32.mrf.mxu0
      %v2647 = vadd.f32 0.0, %v2646
      %v2648 = vpop.f32.mrf.mxu0
      %v2649 = vpop.f32.mrf.mxu0
      %v2650 = vadd.f32 0.0, %v2649
      %v2651 = vpop.f32.mrf.mxu0
      %2652 = vmatprep.mubr.bf16.mxu0 0
      %2653 = vmatmul.mubr.bf16.gmra.mxu0 %v2499
      %v2654 = vpop.f32.mrf.mxu0
      %v2655 = vadd.f32 0.0, %v2654
      %v2656 = vpop.f32.mrf.mxu0
      %v2657 = vpop.f32.mrf.mxu0
      %v2658 = vadd.f32 0.0, %v2657
      %v2659 = vpop.f32.mrf.mxu0
      %2660 = vmatprep.mubr.bf16.mxu0 0
      %2661 = vmatmul.mubr.bf16.gmra.mxu0 %v2502
      %v2662 = vpop.f32.mrf.mxu0
      %v2663 = vadd.f32 0.0, %v2662
      %v2664 = vpop.f32.mrf.mxu0
      %v2665 = vpop.f32.mrf.mxu0
      %v2666 = vadd.f32 0.0, %v2665
      %v2667 = vpop.f32.mrf.mxu0
      %2668 = vmatprep.mubr.bf16.mxu0 0
      %2669 = vmatmul.mubr.bf16.gmra.mxu0 %v2505
      %v2670 = vpop.f32.mrf.mxu0
      %v2671 = vadd.f32 0.0, %v2670
      %v2672 = vpop.f32.mrf.mxu0
      %v2673 = vpop.f32.mrf.mxu0
      %v2674 = vadd.f32 0.0, %v2673
      %v2675 = vpop.f32.mrf.mxu0
      %2676 = vmatprep.mubr.bf16.mxu0 0
      %2677 = vmatmul.mubr.bf16.gmra.mxu0 %v2508
      %v2678 = vpop.f32.mrf.mxu0
      %v2679 = vadd.f32 0.0, %v2678
      %v2680 = vpop.f32.mrf.mxu0
      %v2681 = vpop.f32.mrf.mxu0
      %v2682 = vadd.f32 0.0, %v2681
      %v2683 = vpop.f32.mrf.mxu0
      %2684 = vmatprep.mubr.bf16.mxu0 0
      %2685 = vmatmul.mubr.bf16.gmra.mxu0 %v2511
      %v2686 = vpop.f32.mrf.mxu0
      %v2687 = vadd.f32 0.0, %v2686
      %v2688 = vpop.f32.mrf.mxu0
      %v2689 = vpop.f32.mrf.mxu0
      %v2690 = vadd.f32 0.0, %v2689
      %v2691 = vpop.f32.mrf.mxu0
      %2692 = vdwg.mxu0
      %v2693 = vadd.f32 %v2379, %v2551
      %v2694 = vadd.f32 %v2380, %v2554
      %v2695 = vadd.f32 %v2381, %v2559
      %v2696 = vadd.f32 %v2382, %v2562
      %v2697 = vadd.f32 %v2383, %v2567
      %v2698 = vadd.f32 %v2384, %v2570
      %v2699 = vadd.f32 %v2385, %v2575
      %v2700 = vadd.f32 %v2386, %v2578
      %v2701 = vadd.f32 %v2387, %v2583
      %v2702 = vadd.f32 %v2388, %v2586
      %v2703 = vadd.f32 %v2389, %v2591
      %v2704 = vadd.f32 %v2390, %v2594
      %v2705 = vadd.f32 %v2391, %v2599
      %v2706 = vadd.f32 %v2392, %v2602
      %v2707 = vadd.f32 %v2393, %v2607
      %v2708 = vadd.f32 %v2394, %v2610
      %v2709 = vadd.f32 %v2395, %v2615
      %v2710 = vadd.f32 %v2396, %v2618
      %v2711 = vadd.f32 %v2397, %v2623
      %v2712 = vadd.f32 %v2398, %v2626
      %v2713 = vadd.f32 %v2399, %v2631
      %v2714 = vadd.f32 %v2400, %v2634
      %v2715 = vadd.f32 %v2401, %v2639
      %v2716 = vadd.f32 %v2402, %v2642
      %v2717 = vadd.f32 %v2403, %v2647
      %v2718 = vadd.f32 %v2404, %v2650
      %v2719 = vadd.f32 %v2405, %v2655
      %v2720 = vadd.f32 %v2406, %v2658
      %v2721 = vadd.f32 %v2407, %v2663
      %v2722 = vadd.f32 %v2408, %v2666
      %v2723 = vadd.f32 %v2409, %v2671
      %v2724 = vadd.f32 %v2410, %v2674
      %v2725 = vadd.f32 %v2411, %v2679
      %v2726 = vadd.f32 %v2412, %v2682
      %v2727 = vadd.f32 %v2413, %v2687
      %v2728 = vadd.f32 %v2414, %v2690
      %v2729 = vld [vmem:[%s280 + $0x10] sm:$0xc]
      %v2730 = vld [vmem:[%s280 + $0x14] sm:$0xf]
      %v2731 = vld [vmem:[%s280 + $0x18] sm:$0xf]
      %v2732 = vld [vmem:[%s280 + $0x1c] sm:$0xf]
      %v2733 = vld [vmem:[%s280 + $0x20] sm:$0xf]
      %v2734 = vld [vmem:[%s280 + $0x24] sm:$0xf]
      %v2735 = vld [vmem:[%s280 + $0x28] sm:$0xf]
      %v2736 = vld [vmem:[%s280 + $0x2c] sm:$0xf]
      %v2737 = vld [vmem:[%s280 + $0x30] sm:$0xf]
      %v2738 = vld [vmem:[%s280 + $0x34] sm:$0xf]
      %v2739 = vld [vmem:[%s280 + $0x38] sm:$0xf]
      %v2740 = vld [vmem:[%s280 + $0x3c] sm:$0xf]
      %v2741 = vld [vmem:[%s280 + $0x40] sm:$0xf]
      %v2742 = vld [vmem:[%s280 + $0x44] sm:$0xf]
      %v2743 = vld [vmem:[%s280 + $0x48] sm:$0xf]
      %v2744 = vld [vmem:[%s280 + $0x4c] sm:$0xf]
      %v2745 = vld [vmem:[%s280 + $0x50] sm:$0xf]
      %v2746 = vld [vmem:[%s280 + $0x54] sm:$0xf]
      %v2747 = vld [vmem:[%s280 + $0x58] sm:$0xf]
      %v2748 = vld [vmem:[%s280 + $0x5c] sm:$0xf]
      %v2749 = vld [vmem:[%s280 + $0x60] sm:$0xf]
      %v2750 = vld [vmem:[%s280 + $0x64] sm:$0xf]
      %v2751 = vld [vmem:[%s280 + $0x68] sm:$0xf]
      %v2752 = vld [vmem:[%s280 + $0x6c] sm:$0xf]
      %v2753 = vld [vmem:[%s280 + $0x70] sm:$0xf]
      %v2754 = vld [vmem:[%s280 + $0x74] sm:$0xf]
      %v2755 = vld [vmem:[%s280 + $0x78] sm:$0xf]
      %v2756 = vld [vmem:[%s280 + $0x7c] sm:$0xf]
      %v2757 = vld [vmem:[%s280 + $0x80] sm:$0xf]
      %v2758 = vld [vmem:[%s280 + $0x84] sm:$0xf]
      %v2759 = vld [vmem:[%s280 + $0x88] sm:$0xf]
      %v2760 = vld [vmem:[%s280 + $0x8c] sm:$0xf]
      %v2761 = vld [vmem:[%s280 + $0x90] sm:$0xf]
      %v2762 = vld [vmem:[%s280 + $0x94] sm:$0xf]
      %v2763 = vld [vmem:[%s280 + $0x98] sm:$0xf]
      %v2764 = vld [vmem:[%s280 + $0x9c] sm:$0xf]
      %v2765 = vld [vmem:[%s280 + $0xa0] sm:$0x1]
      %s2766 = scalar_lea.vmem %s1, 12
      %v2767 = vld [vmem:[%s2766] sm:$0x3]
      %v2805 = vunpack.c.l.b16 %v2729
      %v2806 = vunpack.c.l.b16 %v2730
      %v2807 = vunpack.c.l.b16 %v2731
      %v2808 = vunpack.c.l.b16 %v2732
      %v2809 = vunpack.c.l.b16 %v2733
      %v2810 = vunpack.c.l.b16 %v2734
      %v2811 = vunpack.c.l.b16 %v2735
      %v2812 = vunpack.c.l.b16 %v2736
      %v2813 = vunpack.c.l.b16 %v2737
      %v2814 = vunpack.c.l.b16 %v2738
      %v2815 = vunpack.c.l.b16 %v2739
      %v2816 = vunpack.c.l.b16 %v2740
      %v2817 = vunpack.c.l.b16 %v2741
      %v2818 = vunpack.c.l.b16 %v2742
      %v2819 = vunpack.c.l.b16 %v2743
      %v2820 = vunpack.c.l.b16 %v2744
      %v2821 = vunpack.c.l.b16 %v2745
      %v2822 = vunpack.c.l.b16 %v2746
      %v2823 = vunpack.c.l.b16 %v2747
      %v2824 = vunpack.c.l.b16 %v2748
      %v2825 = vunpack.c.l.b16 %v2749
      %v2826 = vunpack.c.l.b16 %v2750
      %v2827 = vunpack.c.l.b16 %v2751
      %v2828 = vunpack.c.l.b16 %v2752
      %v2829 = vunpack.c.l.b16 %v2753
      %v2830 = vunpack.c.l.b16 %v2754
      %v2831 = vunpack.c.l.b16 %v2755
      %v2832 = vunpack.c.l.b16 %v2756
      %v2833 = vunpack.c.l.b16 %v2757
      %v2834 = vunpack.c.l.b16 %v2758
      %v2835 = vunpack.c.l.b16 %v2759
      %v2836 = vunpack.c.l.b16 %v2760
      %v2837 = vunpack.c.l.b16 %v2761
      %v2838 = vunpack.c.l.b16 %v2762
      %v2839 = vunpack.c.l.b16 %v2763
      %v2840 = vunpack.c.l.b16 %v2764
      %v2841 = vunpack.c.l.b16 %v2765
      %v2842 = vpack.c.b16 %v2806, %v2805
      %v2843 = vpack.c.b16 %v2808, %v2807
      %v2844 = vpack.c.b16 %v2810, %v2809
      %v2845 = vpack.c.b16 %v2812, %v2811
      %v2846 = vpack.c.b16 %v2814, %v2813
      %v2847 = vpack.c.b16 %v2816, %v2815
      %v2848 = vpack.c.b16 %v2818, %v2817
      %v2849 = vpack.c.b16 %v2820, %v2819
      %v2850 = vpack.c.b16 %v2822, %v2821
      %v2851 = vpack.c.b16 %v2824, %v2823
      %v2852 = vpack.c.b16 %v2826, %v2825
      %v2853 = vpack.c.b16 %v2828, %v2827
      %v2854 = vpack.c.b16 %v2830, %v2829
      %v2855 = vpack.c.b16 %v2832, %v2831
      %v2856 = vpack.c.b16 %v2834, %v2833
      %v2857 = vpack.c.b16 %v2836, %v2835
      %v2858 = vpack.c.b16 %v2838, %v2837
      %v2859 = vpack.c.b16 %v2840, %v2839
      %v2860 = vpack.c.b16 %v2841, %v2841
      %v2861 = vrot.slane %v2842, 2
      %v2862 = vrot.slane %v2843, 2
      %v2863 = vsel %vm2421, %v2861, %v2862
      %v2864 = vrot.slane %v2844, 2
      %v2865 = vsel %vm2421, %v2862, %v2864
      %v2866 = vrot.slane %v2845, 2
      %v2867 = vsel %vm2421, %v2864, %v2866
      %v2868 = vrot.slane %v2846, 2
      %v2869 = vsel %vm2421, %v2866, %v2868
      %v2870 = vrot.slane %v2847, 2
      %v2871 = vsel %vm2421, %v2868, %v2870
      %v2872 = vrot.slane %v2848, 2
      %v2873 = vsel %vm2421, %v2870, %v2872
      %v2874 = vrot.slane %v2849, 2
      %v2875 = vsel %vm2421, %v2872, %v2874
      %v2876 = vrot.slane %v2850, 2
      %v2877 = vsel %vm2421, %v2874, %v2876
      %v2878 = vrot.slane %v2851, 2
      %v2879 = vsel %vm2421, %v2876, %v2878
      %v2880 = vrot.slane %v2852, 2
      %v2881 = vsel %vm2421, %v2878, %v2880
      %v2882 = vrot.slane %v2853, 2
      %v2883 = vsel %vm2421, %v2880, %v2882
      %v2884 = vrot.slane %v2854, 2
      %v2885 = vsel %vm2421, %v2882, %v2884
      %v2886 = vrot.slane %v2855, 2
      %v2887 = vsel %vm2421, %v2884, %v2886
      %v2888 = vrot.slane %v2856, 2
      %v2889 = vsel %vm2421, %v2886, %v2888
      %v2890 = vrot.slane %v2857, 2
      %v2891 = vsel %vm2421, %v2888, %v2890
      %v2892 = vrot.slane %v2858, 2
      %v2893 = vsel %vm2421, %v2890, %v2892
      %v2894 = vrot.slane %v2859, 2
      %v2895 = vsel %vm2421, %v2892, %v2894
      %v2896 = vrot.slane %v2860, 2
      %v2897 = vsel %vm2421, %v2894, %v2896
      %v2899 = vsel %vm426, %v2863, 0
      %v2902 = vsel %vm426, %v2865, 0
      %v2905 = vsel %vm426, %v2867, 0
      %v2908 = vsel %vm426, %v2869, 0
      %v2911 = vsel %vm426, %v2871, 0
      %v2914 = vsel %vm426, %v2873, 0
      %v2917 = vsel %vm426, %v2875, 0
      %v2920 = vsel %vm426, %v2877, 0
      %v2923 = vsel %vm426, %v2879, 0
      %v2926 = vsel %vm426, %v2881, 0
      %v2929 = vsel %vm426, %v2883, 0
      %v2932 = vsel %vm426, %v2885, 0
      %v2935 = vsel %vm426, %v2887, 0
      %v2938 = vsel %vm426, %v2889, 0
      %v2941 = vsel %vm426, %v2891, 0
      %v2944 = vsel %vm426, %v2893, 0
      %v2947 = vsel %vm426, %v2895, 0
      %v2950 = vsel %vm426, %v2897, 0
      %v2953 = vsel %vm481, %v2767, 0
      %2955 = vmatprep.subr.bf16.mxu0 0
      %2956 = vmatpush1.bf16.msra.mxu0 0
      %2957 = vmatprep.subr.bf16.mxu0 0
      %2958 = vmatpush1.bf16.msra.mxu0 0
      %2959 = vmatprep.subr.bf16.mxu0 0
      %2960 = vmatpush1.bf16.msra.mxu0 0
      %2961 = vmatprep.subr.bf16.mxu0 0
      %2962 = vmatpush1.bf16.msra.mxu0 0
      %2963 = vmatprep.subr.bf16.mxu0 0
      %2964 = vmatpush1.bf16.msra.mxu0 0
      %2965 = vmatprep.subr.bf16.mxu0 0
      %2966 = vmatpush1.bf16.msra.mxu0 0
      %2967 = vmatprep.subr.bf16.mxu0 0
      %2968 = vmatpush1.bf16.msra.mxu0 0
      %2969 = vmatprep.subr.bf16.mxu0 0
      %2970 = vmatpush1.bf16.msra.mxu0 %v2953
      %2971 = vmatprep.subr.bf16.mxu0 0
      %2972 = vmatpush2.bf16.msra.mxu0 0
      %2973 = vmatprep.subr.bf16.mxu0 0
      %2974 = vmatpush2.bf16.msra.mxu0 0
      %2975 = vmatprep.subr.bf16.mxu0 0
      %2976 = vmatpush2.bf16.msra.mxu0 0
      %2977 = vmatprep.subr.bf16.mxu0 0
      %2978 = vmatpush2.bf16.msra.mxu0 0
      %2979 = vmatprep.subr.bf16.mxu0 0
      %2980 = vmatpush2.bf16.msra.mxu0 0
      %2981 = vmatprep.subr.bf16.mxu0 0
      %2982 = vmatpush2.bf16.msra.mxu0 0
      %2983 = vmatprep.subr.bf16.mxu0 0
      %2984 = vmatpush2.bf16.msra.mxu0 0
      %2985 = vmatprep.subr.bf16.mxu0 0
      %2986 = vmatpush2.bf16.msra.mxu0 0
      %2987 = vmatprep.mubr.bf16.mxu0 0
      %2988 = vmatmul.mubr.bf16.gmra.mxu0 %v2899
      %v2989 = vpop.f32.mrf.mxu0
      %v2990 = vadd.f32 0.0, %v2989
      %v2991 = vpop.f32.mrf.mxu0
      %v2992 = vpop.f32.mrf.mxu0
      %v2993 = vadd.f32 0.0, %v2992
      %v2994 = vpop.f32.mrf.mxu0
      %2995 = vmatprep.mubr.bf16.mxu0 0
      %2996 = vmatmul.mubr.bf16.gmra.mxu0 %v2902
      %v2997 = vpop.f32.mrf.mxu0
      %v2998 = vadd.f32 0.0, %v2997
      %v2999 = vpop.f32.mrf.mxu0
      %v3000 = vpop.f32.mrf.mxu0
      %v3001 = vadd.f32 0.0, %v3000
      %v3002 = vpop.f32.mrf.mxu0
      %3003 = vmatprep.mubr.bf16.mxu0 0
      %3004 = vmatmul.mubr.bf16.gmra.mxu0 %v2905
      %v3005 = vpop.f32.mrf.mxu0
      %v3006 = vadd.f32 0.0, %v3005
      %v3007 = vpop.f32.mrf.mxu0
      %v3008 = vpop.f32.mrf.mxu0
      %v3009 = vadd.f32 0.0, %v3008
      %v3010 = vpop.f32.mrf.mxu0
      %3011 = vmatprep.mubr.bf16.mxu0 0
      %3012 = vmatmul.mubr.bf16.gmra.mxu0 %v2908
      %v3013 = vpop.f32.mrf.mxu0
      %v3014 = vadd.f32 0.0, %v3013
      %v3015 = vpop.f32.mrf.mxu0
      %v3016 = vpop.f32.mrf.mxu0
      %v3017 = vadd.f32 0.0, %v3016
      %v3018 = vpop.f32.mrf.mxu0
      %3019 = vmatprep.mubr.bf16.mxu0 0
      %3020 = vmatmul.mubr.bf16.gmra.mxu0 %v2911
      %v3021 = vpop.f32.mrf.mxu0
      %v3022 = vadd.f32 0.0, %v3021
      %v3023 = vpop.f32.mrf.mxu0
      %v3024 = vpop.f32.mrf.mxu0
      %v3025 = vadd.f32 0.0, %v3024
      %v3026 = vpop.f32.mrf.mxu0
      %3027 = vmatprep.mubr.bf16.mxu0 0
      %3028 = vmatmul.mubr.bf16.gmra.mxu0 %v2914
      %v3029 = vpop.f32.mrf.mxu0
      %v3030 = vadd.f32 0.0, %v3029
      %v3031 = vpop.f32.mrf.mxu0
      %v3032 = vpop.f32.mrf.mxu0
      %v3033 = vadd.f32 0.0, %v3032
      %v3034 = vpop.f32.mrf.mxu0
      %3035 = vmatprep.mubr.bf16.mxu0 0
      %3036 = vmatmul.mubr.bf16.gmra.mxu0 %v2917
      %v3037 = vpop.f32.mrf.mxu0
      %v3038 = vadd.f32 0.0, %v3037
      %v3039 = vpop.f32.mrf.mxu0
      %v3040 = vpop.f32.mrf.mxu0
      %v3041 = vadd.f32 0.0, %v3040
      %v3042 = vpop.f32.mrf.mxu0
      %3043 = vmatprep.mubr.bf16.mxu0 0
      %3044 = vmatmul.mubr.bf16.gmra.mxu0 %v2920
      %v3045 = vpop.f32.mrf.mxu0
      %v3046 = vadd.f32 0.0, %v3045
      %v3047 = vpop.f32.mrf.mxu0
      %v3048 = vpop.f32.mrf.mxu0
      %v3049 = vadd.f32 0.0, %v3048
      %v3050 = vpop.f32.mrf.mxu0
      %3051 = vmatprep.mubr.bf16.mxu0 0
      %3052 = vmatmul.mubr.bf16.gmra.mxu0 %v2923
      %v3053 = vpop.f32.mrf.mxu0
      %v3054 = vadd.f32 0.0, %v3053
      %v3055 = vpop.f32.mrf.mxu0
      %v3056 = vpop.f32.mrf.mxu0
      %v3057 = vadd.f32 0.0, %v3056
      %v3058 = vpop.f32.mrf.mxu0
      %3059 = vmatprep.mubr.bf16.mxu0 0
      %3060 = vmatmul.mubr.bf16.gmra.mxu0 %v2926
      %v3061 = vpop.f32.mrf.mxu0
      %v3062 = vadd.f32 0.0, %v3061
      %v3063 = vpop.f32.mrf.mxu0
      %v3064 = vpop.f32.mrf.mxu0
      %v3065 = vadd.f32 0.0, %v3064
      %v3066 = vpop.f32.mrf.mxu0
      %3067 = vmatprep.mubr.bf16.mxu0 0
      %3068 = vmatmul.mubr.bf16.gmra.mxu0 %v2929
      %v3069 = vpop.f32.mrf.mxu0
      %v3070 = vadd.f32 0.0, %v3069
      %v3071 = vpop.f32.mrf.mxu0
      %v3072 = vpop.f32.mrf.mxu0
      %v3073 = vadd.f32 0.0, %v3072
      %v3074 = vpop.f32.mrf.mxu0
      %3075 = vmatprep.mubr.bf16.mxu0 0
      %3076 = vmatmul.mubr.bf16.gmra.mxu0 %v2932
      %v3077 = vpop.f32.mrf.mxu0
      %v3078 = vadd.f32 0.0, %v3077
      %v3079 = vpop.f32.mrf.mxu0
      %v3080 = vpop.f32.mrf.mxu0
      %v3081 = vadd.f32 0.0, %v3080
      %v3082 = vpop.f32.mrf.mxu0
      %3083 = vmatprep.mubr.bf16.mxu0 0
      %3084 = vmatmul.mubr.bf16.gmra.mxu0 %v2935
      %v3085 = vpop.f32.mrf.mxu0
      %v3086 = vadd.f32 0.0, %v3085
      %v3087 = vpop.f32.mrf.mxu0
      %v3088 = vpop.f32.mrf.mxu0
      %v3089 = vadd.f32 0.0, %v3088
      %v3090 = vpop.f32.mrf.mxu0
      %3091 = vmatprep.mubr.bf16.mxu0 0
      %3092 = vmatmul.mubr.bf16.gmra.mxu0 %v2938
      %v3093 = vpop.f32.mrf.mxu0
      %v3094 = vadd.f32 0.0, %v3093
      %v3095 = vpop.f32.mrf.mxu0
      %v3096 = vpop.f32.mrf.mxu0
      %v3097 = vadd.f32 0.0, %v3096
      %v3098 = vpop.f32.mrf.mxu0
      %3099 = vmatprep.mubr.bf16.mxu0 0
      %3100 = vmatmul.mubr.bf16.gmra.mxu0 %v2941
      %v3101 = vpop.f32.mrf.mxu0
      %v3102 = vadd.f32 0.0, %v3101
      %v3103 = vpop.f32.mrf.mxu0
      %v3104 = vpop.f32.mrf.mxu0
      %v3105 = vadd.f32 0.0, %v3104
      %v3106 = vpop.f32.mrf.mxu0
      %3107 = vmatprep.mubr.bf16.mxu0 0
      %3108 = vmatmul.mubr.bf16.gmra.mxu0 %v2944
      %v3109 = vpop.f32.mrf.mxu0
      %v3110 = vadd.f32 0.0, %v3109
      %v3111 = vpop.f32.mrf.mxu0
      %v3112 = vpop.f32.mrf.mxu0
      %v3113 = vadd.f32 0.0, %v3112
      %v3114 = vpop.f32.mrf.mxu0
      %3115 = vmatprep.mubr.bf16.mxu0 0
      %3116 = vmatmul.mubr.bf16.gmra.mxu0 %v2947
      %v3117 = vpop.f32.mrf.mxu0
      %v3118 = vadd.f32 0.0, %v3117
      %v3119 = vpop.f32.mrf.mxu0
      %v3120 = vpop.f32.mrf.mxu0
      %v3121 = vadd.f32 0.0, %v3120
      %v3122 = vpop.f32.mrf.mxu0
      %3123 = vmatprep.mubr.bf16.mxu0 0
      %3124 = vmatmul.mubr.bf16.gmra.mxu0 %v2950
      %v3125 = vpop.f32.mrf.mxu0
      %v3126 = vadd.f32 0.0, %v3125
      %v3127 = vpop.f32.mrf.mxu0
      %v3128 = vpop.f32.mrf.mxu0
      %v3129 = vadd.f32 0.0, %v3128
      %v3130 = vpop.f32.mrf.mxu0
      %3131 = vdwg.mxu0
      %v3132 = vadd.f32 %v2693, %v2990
      %v3133 = vadd.f32 %v2694, %v2993
      %v3134 = vadd.f32 %v2695, %v2998
      %v3135 = vadd.f32 %v2696, %v3001
      %v3136 = vadd.f32 %v2697, %v3006
      %v3137 = vadd.f32 %v2698, %v3009
      %v3138 = vadd.f32 %v2699, %v3014
      %v3139 = vadd.f32 %v2700, %v3017
      %v3140 = vadd.f32 %v2701, %v3022
      %v3141 = vadd.f32 %v2702, %v3025
      %v3142 = vadd.f32 %v2703, %v3030
      %v3143 = vadd.f32 %v2704, %v3033
      %v3144 = vadd.f32 %v2705, %v3038
      %v3145 = vadd.f32 %v2706, %v3041
      %v3146 = vadd.f32 %v2707, %v3046
      %v3147 = vadd.f32 %v2708, %v3049
      %v3148 = vadd.f32 %v2709, %v3054
      %v3149 = vadd.f32 %v2710, %v3057
      %v3150 = vadd.f32 %v2711, %v3062
      %v3151 = vadd.f32 %v2712, %v3065
      %v3152 = vadd.f32 %v2713, %v3070
      %v3153 = vadd.f32 %v2714, %v3073
      %v3154 = vadd.f32 %v2715, %v3078
      %v3155 = vadd.f32 %v2716, %v3081
      %v3156 = vadd.f32 %v2717, %v3086
      %v3157 = vadd.f32 %v2718, %v3089
      %v3158 = vadd.f32 %v2719, %v3094
      %v3159 = vadd.f32 %v2720, %v3097
      %v3160 = vadd.f32 %v2721, %v3102
      %v3161 = vadd.f32 %v2722, %v3105
      %v3162 = vadd.f32 %v2723, %v3110
      %v3163 = vadd.f32 %v2724, %v3113
      %v3164 = vadd.f32 %v2725, %v3118
      %v3165 = vadd.f32 %v2726, %v3121
      %v3166 = vadd.f32 %v2727, %v3126
      %v3167 = vadd.f32 %v2728, %v3129
      %v3168 = vld [vmem:[%s280 + $0xa0] sm:$0x3]
      %s3169 = scalar_lea.vmem %s1, 14
      %v3170 = vld [vmem:[%s3169] sm:$0x3]
      %v3172 = vunpack.c.l.b16 %v3168
      %v3173 = vpack.c.b16 %v3172, %v3172
      %vm3174 = vsmask.f32 5376
      %v3176 = vshrl.u32 %v2842, 16
      %v3178 = vrot.slane %v3176, 2
      %v3179 = vshll.u32 %v2842, 16
      %v3181 = vrot.slane %v3179, 3
      %v3182 = vor.u32 %v3178, %v3181
      %v3184 = vshrl.u32 %v2843, 16
      %v3186 = vrot.slane %v3184, 2
      %v3187 = vshll.u32 %v2843, 16
      %v3189 = vrot.slane %v3187, 3
      %v3190 = vor.u32 %v3186, %v3189
      %v3191 = vsel %vm3174, %v3182, %v3190
      %v3193 = vshrl.u32 %v2844, 16
      %v3195 = vrot.slane %v3193, 2
      %v3196 = vshll.u32 %v2844, 16
      %v3198 = vrot.slane %v3196, 3
      %v3199 = vor.u32 %v3195, %v3198
      %v3200 = vsel %vm3174, %v3190, %v3199
      %v3202 = vshrl.u32 %v2845, 16
      %v3204 = vrot.slane %v3202, 2
      %v3205 = vshll.u32 %v2845, 16
      %v3207 = vrot.slane %v3205, 3
      %v3208 = vor.u32 %v3204, %v3207
      %v3209 = vsel %vm3174, %v3199, %v3208
      %v3211 = vshrl.u32 %v2846, 16
      %v3213 = vrot.slane %v3211, 2
      %v3214 = vshll.u32 %v2846, 16
      %v3216 = vrot.slane %v3214, 3
      %v3217 = vor.u32 %v3213, %v3216
      %v3218 = vsel %vm3174, %v3208, %v3217
      %v3220 = vshrl.u32 %v2847, 16
      %v3222 = vrot.slane %v3220, 2
      %v3223 = vshll.u32 %v2847, 16
      %v3225 = vrot.slane %v3223, 3
      %v3226 = vor.u32 %v3222, %v3225
      %v3227 = vsel %vm3174, %v3217, %v3226
      %v3229 = vshrl.u32 %v2848, 16
      %v3231 = vrot.slane %v3229, 2
      %v3232 = vshll.u32 %v2848, 16
      %v3234 = vrot.slane %v3232, 3
      %v3235 = vor.u32 %v3231, %v3234
      %v3236 = vsel %vm3174, %v3226, %v3235
      %v3238 = vshrl.u32 %v2849, 16
      %v3240 = vrot.slane %v3238, 2
      %v3241 = vshll.u32 %v2849, 16
      %v3243 = vrot.slane %v3241, 3
      %v3244 = vor.u32 %v3240, %v3243
      %v3245 = vsel %vm3174, %v3235, %v3244
      %v3247 = vshrl.u32 %v2850, 16
      %v3249 = vrot.slane %v3247, 2
      %v3250 = vshll.u32 %v2850, 16
      %v3252 = vrot.slane %v3250, 3
      %v3253 = vor.u32 %v3249, %v3252
      %v3254 = vsel %vm3174, %v3244, %v3253
      %v3256 = vshrl.u32 %v2851, 16
      %v3258 = vrot.slane %v3256, 2
      %v3259 = vshll.u32 %v2851, 16
      %v3261 = vrot.slane %v3259, 3
      %v3262 = vor.u32 %v3258, %v3261
      %v3263 = vsel %vm3174, %v3253, %v3262
      %v3265 = vshrl.u32 %v2852, 16
      %v3267 = vrot.slane %v3265, 2
      %v3268 = vshll.u32 %v2852, 16
      %v3270 = vrot.slane %v3268, 3
      %v3271 = vor.u32 %v3267, %v3270
      %v3272 = vsel %vm3174, %v3262, %v3271
      %v3274 = vshrl.u32 %v2853, 16
      %v3276 = vrot.slane %v3274, 2
      %v3277 = vshll.u32 %v2853, 16
      %v3279 = vrot.slane %v3277, 3
      %v3280 = vor.u32 %v3276, %v3279
      %v3281 = vsel %vm3174, %v3271, %v3280
      %v3283 = vshrl.u32 %v2854, 16
      %v3285 = vrot.slane %v3283, 2
      %v3286 = vshll.u32 %v2854, 16
      %v3288 = vrot.slane %v3286, 3
      %v3289 = vor.u32 %v3285, %v3288
      %v3290 = vsel %vm3174, %v3280, %v3289
      %v3292 = vshrl.u32 %v2855, 16
      %v3294 = vrot.slane %v3292, 2
      %v3295 = vshll.u32 %v2855, 16
      %v3297 = vrot.slane %v3295, 3
      %v3298 = vor.u32 %v3294, %v3297
      %v3299 = vsel %vm3174, %v3289, %v3298
      %v3301 = vshrl.u32 %v2856, 16
      %v3303 = vrot.slane %v3301, 2
      %v3304 = vshll.u32 %v2856, 16
      %v3306 = vrot.slane %v3304, 3
      %v3307 = vor.u32 %v3303, %v3306
      %v3308 = vsel %vm3174, %v3298, %v3307
      %v3310 = vshrl.u32 %v2857, 16
      %v3312 = vrot.slane %v3310, 2
      %v3313 = vshll.u32 %v2857, 16
      %v3315 = vrot.slane %v3313, 3
      %v3316 = vor.u32 %v3312, %v3315
      %v3317 = vsel %vm3174, %v3307, %v3316
      %v3319 = vshrl.u32 %v2858, 16
      %v3321 = vrot.slane %v3319, 2
      %v3322 = vshll.u32 %v2858, 16
      %v3324 = vrot.slane %v3322, 3
      %v3325 = vor.u32 %v3321, %v3324
      %v3326 = vsel %vm3174, %v3316, %v3325
      %v3328 = vshrl.u32 %v2859, 16
      %v3330 = vrot.slane %v3328, 2
      %v3331 = vshll.u32 %v2859, 16
      %v3333 = vrot.slane %v3331, 3
      %v3334 = vor.u32 %v3330, %v3333
      %v3335 = vsel %vm3174, %v3325, %v3334
      %v3337 = vshrl.u32 %v3173, 16
      %v3339 = vrot.slane %v3337, 2
      %v3340 = vshll.u32 %v3173, 16
      %v3342 = vrot.slane %v3340, 3
      %v3343 = vor.u32 %v3339, %v3342
      %v3344 = vsel %vm3174, %v3334, %v3343
      %v3346 = vsel %vm426, %v3191, 0
      %v3349 = vsel %vm426, %v3200, 0
      %v3352 = vsel %vm426, %v3209, 0
      %v3355 = vsel %vm426, %v3218, 0
      %v3358 = vsel %vm426, %v3227, 0
      %v3361 = vsel %vm426, %v3236, 0
      %v3364 = vsel %vm426, %v3245, 0
      %v3367 = vsel %vm426, %v3254, 0
      %v3370 = vsel %vm426, %v3263, 0
      %v3373 = vsel %vm426, %v3272, 0
      %v3376 = vsel %vm426, %v3281, 0
      %v3379 = vsel %vm426, %v3290, 0
      %v3382 = vsel %vm426, %v3299, 0
      %v3385 = vsel %vm426, %v3308, 0
      %v3388 = vsel %vm426, %v3317, 0
      %v3391 = vsel %vm426, %v3326, 0
      %v3394 = vsel %vm426, %v3335, 0
      %v3397 = vsel %vm426, %v3344, 0
      %v3400 = vsel %vm481, %v3170, 0
      %3402 = vmatprep.subr.bf16.mxu0 0
      %3403 = vmatpush1.bf16.msra.mxu0 0
      %3404 = vmatprep.subr.bf16.mxu0 0
      %3405 = vmatpush1.bf16.msra.mxu0 0
      %3406 = vmatprep.subr.bf16.mxu0 0
      %3407 = vmatpush1.bf16.msra.mxu0 0
      %3408 = vmatprep.subr.bf16.mxu0 0
      %3409 = vmatpush1.bf16.msra.mxu0 0
      %3410 = vmatprep.subr.bf16.mxu0 0
      %3411 = vmatpush1.bf16.msra.mxu0 0
      %3412 = vmatprep.subr.bf16.mxu0 0
      %3413 = vmatpush1.bf16.msra.mxu0 0
      %3414 = vmatprep.subr.bf16.mxu0 0
      %3415 = vmatpush1.bf16.msra.mxu0 0
      %3416 = vmatprep.subr.bf16.mxu0 0
      %3417 = vmatpush1.bf16.msra.mxu0 %v3400
      %3418 = vmatprep.subr.bf16.mxu0 0
      %3419 = vmatpush2.bf16.msra.mxu0 0
      %3420 = vmatprep.subr.bf16.mxu0 0
      %3421 = vmatpush2.bf16.msra.mxu0 0
      %3422 = vmatprep.subr.bf16.mxu0 0
      %3423 = vmatpush2.bf16.msra.mxu0 0
      %3424 = vmatprep.subr.bf16.mxu0 0
      %3425 = vmatpush2.bf16.msra.mxu0 0
      %3426 = vmatprep.subr.bf16.mxu0 0
      %3427 = vmatpush2.bf16.msra.mxu0 0
      %3428 = vmatprep.subr.bf16.mxu0 0
      %3429 = vmatpush2.bf16.msra.mxu0 0
      %3430 = vmatprep.subr.bf16.mxu0 0
      %3431 = vmatpush2.bf16.msra.mxu0 0
      %3432 = vmatprep.subr.bf16.mxu0 0
      %3433 = vmatpush2.bf16.msra.mxu0 0
      %3434 = vmatprep.mubr.bf16.mxu0 0
      %3435 = vmatmul.mubr.bf16.gmra.mxu0 %v3346
      %v3436 = vpop.f32.mrf.mxu0
      %v3437 = vadd.f32 0.0, %v3436
      %v3438 = vpop.f32.mrf.mxu0
      %v3439 = vpop.f32.mrf.mxu0
      %v3440 = vadd.f32 0.0, %v3439
      %v3441 = vpop.f32.mrf.mxu0
      %3442 = vmatprep.mubr.bf16.mxu0 0
      %3443 = vmatmul.mubr.bf16.gmra.mxu0 %v3349
      %v3444 = vpop.f32.mrf.mxu0
      %v3445 = vadd.f32 0.0, %v3444
      %v3446 = vpop.f32.mrf.mxu0
      %v3447 = vpop.f32.mrf.mxu0
      %v3448 = vadd.f32 0.0, %v3447
      %v3449 = vpop.f32.mrf.mxu0
      %3450 = vmatprep.mubr.bf16.mxu0 0
      %3451 = vmatmul.mubr.bf16.gmra.mxu0 %v3352
      %v3452 = vpop.f32.mrf.mxu0
      %v3453 = vadd.f32 0.0, %v3452
      %v3454 = vpop.f32.mrf.mxu0
      %v3455 = vpop.f32.mrf.mxu0
      %v3456 = vadd.f32 0.0, %v3455
      %v3457 = vpop.f32.mrf.mxu0
      %3458 = vmatprep.mubr.bf16.mxu0 0
      %3459 = vmatmul.mubr.bf16.gmra.mxu0 %v3355
      %v3460 = vpop.f32.mrf.mxu0
      %v3461 = vadd.f32 0.0, %v3460
      %v3462 = vpop.f32.mrf.mxu0
      %v3463 = vpop.f32.mrf.mxu0
      %v3464 = vadd.f32 0.0, %v3463
      %v3465 = vpop.f32.mrf.mxu0
      %3466 = vmatprep.mubr.bf16.mxu0 0
      %3467 = vmatmul.mubr.bf16.gmra.mxu0 %v3358
      %v3468 = vpop.f32.mrf.mxu0
      %v3469 = vadd.f32 0.0, %v3468
      %v3470 = vpop.f32.mrf.mxu0
      %v3471 = vpop.f32.mrf.mxu0
      %v3472 = vadd.f32 0.0, %v3471
      %v3473 = vpop.f32.mrf.mxu0
      %3474 = vmatprep.mubr.bf16.mxu0 0
      %3475 = vmatmul.mubr.bf16.gmra.mxu0 %v3361
      %v3476 = vpop.f32.mrf.mxu0
      %v3477 = vadd.f32 0.0, %v3476
      %v3478 = vpop.f32.mrf.mxu0
      %v3479 = vpop.f32.mrf.mxu0
      %v3480 = vadd.f32 0.0, %v3479
      %v3481 = vpop.f32.mrf.mxu0
      %3482 = vmatprep.mubr.bf16.mxu0 0
      %3483 = vmatmul.mubr.bf16.gmra.mxu0 %v3364
      %v3484 = vpop.f32.mrf.mxu0
      %v3485 = vadd.f32 0.0, %v3484
      %v3486 = vpop.f32.mrf.mxu0
      %v3487 = vpop.f32.mrf.mxu0
      %v3488 = vadd.f32 0.0, %v3487
      %v3489 = vpop.f32.mrf.mxu0
      %3490 = vmatprep.mubr.bf16.mxu0 0
      %3491 = vmatmul.mubr.bf16.gmra.mxu0 %v3367
      %v3492 = vpop.f32.mrf.mxu0
      %v3493 = vadd.f32 0.0, %v3492
      %v3494 = vpop.f32.mrf.mxu0
      %v3495 = vpop.f32.mrf.mxu0
      %v3496 = vadd.f32 0.0, %v3495
      %v3497 = vpop.f32.mrf.mxu0
      %3498 = vmatprep.mubr.bf16.mxu0 0
      %3499 = vmatmul.mubr.bf16.gmra.mxu0 %v3370
      %v3500 = vpop.f32.mrf.mxu0
      %v3501 = vadd.f32 0.0, %v3500
      %v3502 = vpop.f32.mrf.mxu0
      %v3503 = vpop.f32.mrf.mxu0
      %v3504 = vadd.f32 0.0, %v3503
      %v3505 = vpop.f32.mrf.mxu0
      %3506 = vmatprep.mubr.bf16.mxu0 0
      %3507 = vmatmul.mubr.bf16.gmra.mxu0 %v3373
      %v3508 = vpop.f32.mrf.mxu0
      %v3509 = vadd.f32 0.0, %v3508
      %v3510 = vpop.f32.mrf.mxu0
      %v3511 = vpop.f32.mrf.mxu0
      %v3512 = vadd.f32 0.0, %v3511
      %v3513 = vpop.f32.mrf.mxu0
      %3514 = vmatprep.mubr.bf16.mxu0 0
      %3515 = vmatmul.mubr.bf16.gmra.mxu0 %v3376
      %v3516 = vpop.f32.mrf.mxu0
      %v3517 = vadd.f32 0.0, %v3516
      %v3518 = vpop.f32.mrf.mxu0
      %v3519 = vpop.f32.mrf.mxu0
      %v3520 = vadd.f32 0.0, %v3519
      %v3521 = vpop.f32.mrf.mxu0
      %3522 = vmatprep.mubr.bf16.mxu0 0
      %3523 = vmatmul.mubr.bf16.gmra.mxu0 %v3379
      %v3524 = vpop.f32.mrf.mxu0
      %v3525 = vadd.f32 0.0, %v3524
      %v3526 = vpop.f32.mrf.mxu0
      %v3527 = vpop.f32.mrf.mxu0
      %v3528 = vadd.f32 0.0, %v3527
      %v3529 = vpop.f32.mrf.mxu0
      %3530 = vmatprep.mubr.bf16.mxu0 0
      %3531 = vmatmul.mubr.bf16.gmra.mxu0 %v3382
      %v3532 = vpop.f32.mrf.mxu0
      %v3533 = vadd.f32 0.0, %v3532
      %v3534 = vpop.f32.mrf.mxu0
      %v3535 = vpop.f32.mrf.mxu0
      %v3536 = vadd.f32 0.0, %v3535
      %v3537 = vpop.f32.mrf.mxu0
      %3538 = vmatprep.mubr.bf16.mxu0 0
      %3539 = vmatmul.mubr.bf16.gmra.mxu0 %v3385
      %v3540 = vpop.f32.mrf.mxu0
      %v3541 = vadd.f32 0.0, %v3540
      %v3542 = vpop.f32.mrf.mxu0
      %v3543 = vpop.f32.mrf.mxu0
      %v3544 = vadd.f32 0.0, %v3543
      %v3545 = vpop.f32.mrf.mxu0
      %3546 = vmatprep.mubr.bf16.mxu0 0
      %3547 = vmatmul.mubr.bf16.gmra.mxu0 %v3388
      %v3548 = vpop.f32.mrf.mxu0
      %v3549 = vadd.f32 0.0, %v3548
      %v3550 = vpop.f32.mrf.mxu0
      %v3551 = vpop.f32.mrf.mxu0
      %v3552 = vadd.f32 0.0, %v3551
      %v3553 = vpop.f32.mrf.mxu0
      %3554 = vmatprep.mubr.bf16.mxu0 0
      %3555 = vmatmul.mubr.bf16.gmra.mxu0 %v3391
      %v3556 = vpop.f32.mrf.mxu0
      %v3557 = vadd.f32 0.0, %v3556
      %v3558 = vpop.f32.mrf.mxu0
      %v3559 = vpop.f32.mrf.mxu0
      %v3560 = vadd.f32 0.0, %v3559
      %v3561 = vpop.f32.mrf.mxu0
      %3562 = vmatprep.mubr.bf16.mxu0 0
      %3563 = vmatmul.mubr.bf16.gmra.mxu0 %v3394
      %v3564 = vpop.f32.mrf.mxu0
      %v3565 = vadd.f32 0.0, %v3564
      %v3566 = vpop.f32.mrf.mxu0
      %v3567 = vpop.f32.mrf.mxu0
      %v3568 = vadd.f32 0.0, %v3567
      %v3569 = vpop.f32.mrf.mxu0
      %3570 = vmatprep.mubr.bf16.mxu0 0
      %3571 = vmatmul.mubr.bf16.gmra.mxu0 %v3397
      %v3572 = vpop.f32.mrf.mxu0
      %v3573 = vadd.f32 0.0, %v3572
      %v3574 = vpop.f32.mrf.mxu0
      %v3575 = vpop.f32.mrf.mxu0
      %v3576 = vadd.f32 0.0, %v3575
      %v3577 = vpop.f32.mrf.mxu0
      %3578 = vdwg.mxu0
      %v3579 = vadd.f32 %v3132, %v3437
      %v3580 = vadd.f32 %v3133, %v3440
      %v3581 = vadd.f32 %v3134, %v3445
      %v3582 = vadd.f32 %v3135, %v3448
      %v3583 = vadd.f32 %v3136, %v3453
      %v3584 = vadd.f32 %v3137, %v3456
      %v3585 = vadd.f32 %v3138, %v3461
      %v3586 = vadd.f32 %v3139, %v3464
      %v3587 = vadd.f32 %v3140, %v3469
      %v3588 = vadd.f32 %v3141, %v3472
      %v3589 = vadd.f32 %v3142, %v3477
      %v3590 = vadd.f32 %v3143, %v3480
      %v3591 = vadd.f32 %v3144, %v3485
      %v3592 = vadd.f32 %v3145, %v3488
      %v3593 = vadd.f32 %v3146, %v3493
      %v3594 = vadd.f32 %v3147, %v3496
      %v3595 = vadd.f32 %v3148, %v3501
      %v3596 = vadd.f32 %v3149, %v3504
      %v3597 = vadd.f32 %v3150, %v3509
      %v3598 = vadd.f32 %v3151, %v3512
      %v3599 = vadd.f32 %v3152, %v3517
      %v3600 = vadd.f32 %v3153, %v3520
      %v3601 = vadd.f32 %v3154, %v3525
      %v3602 = vadd.f32 %v3155, %v3528
      %v3603 = vadd.f32 %v3156, %v3533
      %v3604 = vadd.f32 %v3157, %v3536
      %v3605 = vadd.f32 %v3158, %v3541
      %v3606 = vadd.f32 %v3159, %v3544
      %v3607 = vadd.f32 %v3160, %v3549
      %v3608 = vadd.f32 %v3161, %v3552
      %v3609 = vadd.f32 %v3162, %v3557
      %v3610 = vadd.f32 %v3163, %v3560
      %v3611 = vadd.f32 %v3164, %v3565
      %v3612 = vadd.f32 %v3165, %v3568
      %v3613 = vadd.f32 %v3166, %v3573
      %v3614 = vadd.f32 %v3167, %v3576
      %v3615 = vld [vmem:[%s280 + $0x10] sm:$0x8]
      %s3616 = scalar_lea.vmem %s1, 16
      %v3617 = vld [vmem:[%s3616] sm:$0x3]
      %v3619 = vunpack.c.l.b16 %v3615
      %v3620 = vpack.c.b16 %v2806, %v3619
      %vm3621 = vcmask 1044480
      %v3622 = vrot.slane %v3620, 3
      %v3623 = vrot.slane %v2843, 3
      %v3624 = vsel %vm3621, %v3622, %v3623
      %v3625 = vrot.slane %v2844, 3
      %v3626 = vsel %vm3621, %v3623, %v3625
      %v3627 = vrot.slane %v2845, 3
      %v3628 = vsel %vm3621, %v3625, %v3627
      %v3629 = vrot.slane %v2846, 3
      %v3630 = vsel %vm3621, %v3627, %v3629
      %v3631 = vrot.slane %v2847, 3
      %v3632 = vsel %vm3621, %v3629, %v3631
      %v3633 = vrot.slane %v2848, 3
      %v3634 = vsel %vm3621, %v3631, %v3633
      %v3635 = vrot.slane %v2849, 3
      %v3636 = vsel %vm3621, %v3633, %v3635
      %v3637 = vrot.slane %v2850, 3
      %v3638 = vsel %vm3621, %v3635, %v3637
      %v3639 = vrot.slane %v2851, 3
      %v3640 = vsel %vm3621, %v3637, %v3639
      %v3641 = vrot.slane %v2852, 3
      %v3642 = vsel %vm3621, %v3639, %v3641
      %v3643 = vrot.slane %v2853, 3
      %v3644 = vsel %vm3621, %v3641, %v3643
      %v3645 = vrot.slane %v2854, 3
      %v3646 = vsel %vm3621, %v3643, %v3645
      %v3647 = vrot.slane %v2855, 3
      %v3648 = vsel %vm3621, %v3645, %v3647
      %v3649 = vrot.slane %v2856, 3
      %v3650 = vsel %vm3621, %v3647, %v3649
      %v3651 = vrot.slane %v2857, 3
      %v3652 = vsel %vm3621, %v3649, %v3651
      %v3653 = vrot.slane %v2858, 3
      %v3654 = vsel %vm3621, %v3651, %v3653
      %v3655 = vrot.slane %v2859, 3
      %v3656 = vsel %vm3621, %v3653, %v3655
      %v3657 = vrot.slane %v3173, 3
      %v3658 = vsel %vm3621, %v3655, %v3657
      %v3660 = vsel %vm426, %v3624, 0
      %v3663 = vsel %vm426, %v3626, 0
      %v3666 = vsel %vm426, %v3628, 0
      %v3669 = vsel %vm426, %v3630, 0
      %v3672 = vsel %vm426, %v3632, 0
      %v3675 = vsel %vm426, %v3634, 0
      %v3678 = vsel %vm426, %v3636, 0
      %v3681 = vsel %vm426, %v3638, 0
      %v3684 = vsel %vm426, %v3640, 0
      %v3687 = vsel %vm426, %v3642, 0
      %v3690 = vsel %vm426, %v3644, 0
      %v3693 = vsel %vm426, %v3646, 0
      %v3696 = vsel %vm426, %v3648, 0
      %v3699 = vsel %vm426, %v3650, 0
      %v3702 = vsel %vm426, %v3652, 0
      %v3705 = vsel %vm426, %v3654, 0
      %v3708 = vsel %vm426, %v3656, 0
      %v3711 = vsel %vm426, %v3658, 0
      %v3714 = vsel %vm481, %v3617, 0
      %3716 = vmatprep.subr.bf16.mxu0 0
      %3717 = vmatpush1.bf16.msra.mxu0 0
      %3718 = vmatprep.subr.bf16.mxu0 0
      %3719 = vmatpush1.bf16.msra.mxu0 0
      %3720 = vmatprep.subr.bf16.mxu0 0
      %3721 = vmatpush1.bf16.msra.mxu0 0
      %3722 = vmatprep.subr.bf16.mxu0 0
      %3723 = vmatpush1.bf16.msra.mxu0 0
      %3724 = vmatprep.subr.bf16.mxu0 0
      %3725 = vmatpush1.bf16.msra.mxu0 0
      %3726 = vmatprep.subr.bf16.mxu0 0
      %3727 = vmatpush1.bf16.msra.mxu0 0
      %3728 = vmatprep.subr.bf16.mxu0 0
      %3729 = vmatpush1.bf16.msra.mxu0 0
      %3730 = vmatprep.subr.bf16.mxu0 0
      %3731 = vmatpush1.bf16.msra.mxu0 %v3714
      %3732 = vmatprep.subr.bf16.mxu0 0
      %3733 = vmatpush2.bf16.msra.mxu0 0
      %3734 = vmatprep.subr.bf16.mxu0 0
      %3735 = vmatpush2.bf16.msra.mxu0 0
      %3736 = vmatprep.subr.bf16.mxu0 0
      %3737 = vmatpush2.bf16.msra.mxu0 0
      %3738 = vmatprep.subr.bf16.mxu0 0
      %3739 = vmatpush2.bf16.msra.mxu0 0
      %3740 = vmatprep.subr.bf16.mxu0 0
      %3741 = vmatpush2.bf16.msra.mxu0 0
      %3742 = vmatprep.subr.bf16.mxu0 0
      %3743 = vmatpush2.bf16.msra.mxu0 0
      %3744 = vmatprep.subr.bf16.mxu0 0
      %3745 = vmatpush2.bf16.msra.mxu0 0
      %3746 = vmatprep.subr.bf16.mxu0 0
      %3747 = vmatpush2.bf16.msra.mxu0 0
      %3748 = vmatprep.mubr.bf16.mxu0 0
      %3749 = vmatmul.mubr.bf16.gmra.mxu0 %v3660
      %v3750 = vpop.f32.mrf.mxu0
      %v3751 = vadd.f32 0.0, %v3750
      %v3752 = vpop.f32.mrf.mxu0
      %v3753 = vpop.f32.mrf.mxu0
      %v3754 = vadd.f32 0.0, %v3753
      %v3755 = vpop.f32.mrf.mxu0
      %3756 = vmatprep.mubr.bf16.mxu0 0
      %3757 = vmatmul.mubr.bf16.gmra.mxu0 %v3663
      %v3758 = vpop.f32.mrf.mxu0
      %v3759 = vadd.f32 0.0, %v3758
      %v3760 = vpop.f32.mrf.mxu0
      %v3761 = vpop.f32.mrf.mxu0
      %v3762 = vadd.f32 0.0, %v3761
      %v3763 = vpop.f32.mrf.mxu0
      %3764 = vmatprep.mubr.bf16.mxu0 0
      %3765 = vmatmul.mubr.bf16.gmra.mxu0 %v3666
      %v3766 = vpop.f32.mrf.mxu0
      %v3767 = vadd.f32 0.0, %v3766
      %v3768 = vpop.f32.mrf.mxu0
      %v3769 = vpop.f32.mrf.mxu0
      %v3770 = vadd.f32 0.0, %v3769
      %v3771 = vpop.f32.mrf.mxu0
      %3772 = vmatprep.mubr.bf16.mxu0 0
      %3773 = vmatmul.mubr.bf16.gmra.mxu0 %v3669
      %v3774 = vpop.f32.mrf.mxu0
      %v3775 = vadd.f32 0.0, %v3774
      %v3776 = vpop.f32.mrf.mxu0
      %v3777 = vpop.f32.mrf.mxu0
      %v3778 = vadd.f32 0.0, %v3777
      %v3779 = vpop.f32.mrf.mxu0
      %3780 = vmatprep.mubr.bf16.mxu0 0
      %3781 = vmatmul.mubr.bf16.gmra.mxu0 %v3672
      %v3782 = vpop.f32.mrf.mxu0
      %v3783 = vadd.f32 0.0, %v3782
      %v3784 = vpop.f32.mrf.mxu0
      %v3785 = vpop.f32.mrf.mxu0
      %v3786 = vadd.f32 0.0, %v3785
      %v3787 = vpop.f32.mrf.mxu0
      %3788 = vmatprep.mubr.bf16.mxu0 0
      %3789 = vmatmul.mubr.bf16.gmra.mxu0 %v3675
      %v3790 = vpop.f32.mrf.mxu0
      %v3791 = vadd.f32 0.0, %v3790
      %v3792 = vpop.f32.mrf.mxu0
      %v3793 = vpop.f32.mrf.mxu0
      %v3794 = vadd.f32 0.0, %v3793
      %v3795 = vpop.f32.mrf.mxu0
      %3796 = vmatprep.mubr.bf16.mxu0 0
      %3797 = vmatmul.mubr.bf16.gmra.mxu0 %v3678
      %v3798 = vpop.f32.mrf.mxu0
      %v3799 = vadd.f32 0.0, %v3798
      %v3800 = vpop.f32.mrf.mxu0
      %v3801 = vpop.f32.mrf.mxu0
      %v3802 = vadd.f32 0.0, %v3801
      %v3803 = vpop.f32.mrf.mxu0
      %3804 = vmatprep.mubr.bf16.mxu0 0
      %3805 = vmatmul.mubr.bf16.gmra.mxu0 %v3681
      %v3806 = vpop.f32.mrf.mxu0
      %v3807 = vadd.f32 0.0, %v3806
      %v3808 = vpop.f32.mrf.mxu0
      %v3809 = vpop.f32.mrf.mxu0
      %v3810 = vadd.f32 0.0, %v3809
      %v3811 = vpop.f32.mrf.mxu0
      %3812 = vmatprep.mubr.bf16.mxu0 0
      %3813 = vmatmul.mubr.bf16.gmra.mxu0 %v3684
      %v3814 = vpop.f32.mrf.mxu0
      %v3815 = vadd.f32 0.0, %v3814
      %v3816 = vpop.f32.mrf.mxu0
      %v3817 = vpop.f32.mrf.mxu0
      %v3818 = vadd.f32 0.0, %v3817
      %v3819 = vpop.f32.mrf.mxu0
      %3820 = vmatprep.mubr.bf16.mxu0 0
      %3821 = vmatmul.mubr.bf16.gmra.mxu0 %v3687
      %v3822 = vpop.f32.mrf.mxu0
      %v3823 = vadd.f32 0.0, %v3822
      %v3824 = vpop.f32.mrf.mxu0
      %v3825 = vpop.f32.mrf.mxu0
      %v3826 = vadd.f32 0.0, %v3825
      %v3827 = vpop.f32.mrf.mxu0
      %3828 = vmatprep.mubr.bf16.mxu0 0
      %3829 = vmatmul.mubr.bf16.gmra.mxu0 %v3690
      %v3830 = vpop.f32.mrf.mxu0
      %v3831 = vadd.f32 0.0, %v3830
      %v3832 = vpop.f32.mrf.mxu0
      %v3833 = vpop.f32.mrf.mxu0
      %v3834 = vadd.f32 0.0, %v3833
      %v3835 = vpop.f32.mrf.mxu0
      %3836 = vmatprep.mubr.bf16.mxu0 0
      %3837 = vmatmul.mubr.bf16.gmra.mxu0 %v3693
      %v3838 = vpop.f32.mrf.mxu0
      %v3839 = vadd.f32 0.0, %v3838
      %v3840 = vpop.f32.mrf.mxu0
      %v3841 = vpop.f32.mrf.mxu0
      %v3842 = vadd.f32 0.0, %v3841
      %v3843 = vpop.f32.mrf.mxu0
      %3844 = vmatprep.mubr.bf16.mxu0 0
      %3845 = vmatmul.mubr.bf16.gmra.mxu0 %v3696
      %v3846 = vpop.f32.mrf.mxu0
      %v3847 = vadd.f32 0.0, %v3846
      %v3848 = vpop.f32.mrf.mxu0
      %v3849 = vpop.f32.mrf.mxu0
      %v3850 = vadd.f32 0.0, %v3849
      %v3851 = vpop.f32.mrf.mxu0
      %3852 = vmatprep.mubr.bf16.mxu0 0
      %3853 = vmatmul.mubr.bf16.gmra.mxu0 %v3699
      %v3854 = vpop.f32.mrf.mxu0
      %v3855 = vadd.f32 0.0, %v3854
      %v3856 = vpop.f32.mrf.mxu0
      %v3857 = vpop.f32.mrf.mxu0
      %v3858 = vadd.f32 0.0, %v3857
      %v3859 = vpop.f32.mrf.mxu0
      %3860 = vmatprep.mubr.bf16.mxu0 0
      %3861 = vmatmul.mubr.bf16.gmra.mxu0 %v3702
      %v3862 = vpop.f32.mrf.mxu0
      %v3863 = vadd.f32 0.0, %v3862
      %v3864 = vpop.f32.mrf.mxu0
      %v3865 = vpop.f32.mrf.mxu0
      %v3866 = vadd.f32 0.0, %v3865
      %v3867 = vpop.f32.mrf.mxu0
      %3868 = vmatprep.mubr.bf16.mxu0 0
      %3869 = vmatmul.mubr.bf16.gmra.mxu0 %v3705
      %v3870 = vpop.f32.mrf.mxu0
      %v3871 = vadd.f32 0.0, %v3870
      %v3872 = vpop.f32.mrf.mxu0
      %v3873 = vpop.f32.mrf.mxu0
      %v3874 = vadd.f32 0.0, %v3873
      %v3875 = vpop.f32.mrf.mxu0
      %3876 = vmatprep.mubr.bf16.mxu0 0
      %3877 = vmatmul.mubr.bf16.gmra.mxu0 %v3708
      %v3878 = vpop.f32.mrf.mxu0
      %v3879 = vadd.f32 0.0, %v3878
      %v3880 = vpop.f32.mrf.mxu0
      %v3881 = vpop.f32.mrf.mxu0
      %v3882 = vadd.f32 0.0, %v3881
      %v3883 = vpop.f32.mrf.mxu0
      %3884 = vmatprep.mubr.bf16.mxu0 0
      %3885 = vmatmul.mubr.bf16.gmra.mxu0 %v3711
      %v3886 = vpop.f32.mrf.mxu0
      %v3887 = vadd.f32 0.0, %v3886
      %v3888 = vpop.f32.mrf.mxu0
      %v3889 = vpop.f32.mrf.mxu0
      %v3890 = vadd.f32 0.0, %v3889
      %v3891 = vpop.f32.mrf.mxu0
      %3892 = vdwg.mxu0
      %v3893 = vadd.f32 %v3579, %v3751
      %v3894 = vadd.f32 %v3580, %v3754
      %v3895 = vadd.f32 %v3581, %v3759
      %v3896 = vadd.f32 %v3582, %v3762
      %v3897 = vadd.f32 %v3583, %v3767
      %v3898 = vadd.f32 %v3584, %v3770
      %v3899 = vadd.f32 %v3585, %v3775
      %v3900 = vadd.f32 %v3586, %v3778
      %v3901 = vadd.f32 %v3587, %v3783
      %v3902 = vadd.f32 %v3588, %v3786
      %v3903 = vadd.f32 %v3589, %v3791
      %v3904 = vadd.f32 %v3590, %v3794
      %v3905 = vadd.f32 %v3591, %v3799
      %v3906 = vadd.f32 %v3592, %v3802
      %v3907 = vadd.f32 %v3593, %v3807
      %v3908 = vadd.f32 %v3594, %v3810
      %v3909 = vadd.f32 %v3595, %v3815
      %v3910 = vadd.f32 %v3596, %v3818
      %v3911 = vadd.f32 %v3597, %v3823
      %v3912 = vadd.f32 %v3598, %v3826
      %v3913 = vadd.f32 %v3599, %v3831
      %v3914 = vadd.f32 %v3600, %v3834
      %v3915 = vadd.f32 %v3601, %v3839
      %v3916 = vadd.f32 %v3602, %v3842
      %v3917 = vadd.f32 %v3603, %v3847
      %v3918 = vadd.f32 %v3604, %v3850
      %v3919 = vadd.f32 %v3605, %v3855
      %v3920 = vadd.f32 %v3606, %v3858
      %v3921 = vadd.f32 %v3607, %v3863
      %v3922 = vadd.f32 %v3608, %v3866
      %v3923 = vadd.f32 %v3609, %v3871
      %v3924 = vadd.f32 %v3610, %v3874
      %v3925 = vadd.f32 %v3611, %v3879
      %v3926 = vadd.f32 %v3612, %v3882
      %v3927 = vadd.f32 %v3613, %v3887
      %v3928 = vadd.f32 %v3614, %v3890
      %v3929 = vld [vmem:[%s5] sm:$0xff]
      %v3930 = vld [vmem:[%s5 + $0x8] sm:$0xff]
      %v3931 = vld [vmem:[%s5 + $0x10] sm:$0xff]
      %v3932 = vld [vmem:[%s5 + $0x18] sm:$0xff]
      %v3933 = vld [vmem:[%s5 + $0x20] sm:$0xff]
      %v3934 = vld [vmem:[%s5 + $0x28] sm:$0xff]
      %v3935 = vld [vmem:[%s5 + $0x30] sm:$0xff]
      %v3936 = vld [vmem:[%s5 + $0x38] sm:$0xff]
      %v3937 = vld [vmem:[%s5 + $0x40] sm:$0xff]
      %v3938 = vld [vmem:[%s5 + $0x48] sm:$0xff]
      %v3939 = vld [vmem:[%s5 + $0x50] sm:$0xff]
      %v3940 = vld [vmem:[%s5 + $0x58] sm:$0xff]
      %v3941 = vld [vmem:[%s5 + $0x60] sm:$0xff]
      %v3942 = vld [vmem:[%s5 + $0x68] sm:$0xff]
      %v3943 = vld [vmem:[%s5 + $0x70] sm:$0xff]
      %v3944 = vld [vmem:[%s5 + $0x78] sm:$0xff]
      %v3945 = vld [vmem:[%s5 + $0x80] sm:$0xff]
      %v3946 = vld [vmem:[%s5 + $0x88] sm:$0xff]
      %v3947 = vld [vmem:[%s5 + $0x90] sm:$0xff]
      %v3948 = vld [vmem:[%s5 + $0x98] sm:$0xff]
      %v3949 = vld [vmem:[%s5 + $0xa0] sm:$0xff]
      %v3950 = vld [vmem:[%s5 + $0xa8] sm:$0xff]
      %v3951 = vld [vmem:[%s5 + $0xb0] sm:$0xff]
      %v3952 = vld [vmem:[%s5 + $0xb8] sm:$0xff]
      %v3953 = vld [vmem:[%s5 + $0xc0] sm:$0xff]
      %v3954 = vld [vmem:[%s5 + $0xc8] sm:$0xff]
      %v3955 = vld [vmem:[%s5 + $0xd0] sm:$0xff]
      %v3956 = vld [vmem:[%s5 + $0xd8] sm:$0xff]
      %v3957 = vld [vmem:[%s5 + $0xe0] sm:$0xff]
      %v3958 = vld [vmem:[%s5 + $0xe8] sm:$0xff]
      %v3959 = vld [vmem:[%s5 + $0xf0] sm:$0xff]
      %v3960 = vld [vmem:[%s5 + $0xf8] sm:$0xff]
      %v3961 = vld [vmem:[%s5 + $0x100] sm:$0xff]
      %v3962 = vld [vmem:[%s5 + $0x108] sm:$0xff]
      %v3963 = vld [vmem:[%s5 + $0x110] sm:$0xff]
      %v3964 = vld [vmem:[%s5 + $0x118] sm:$0x3f]
      %vm3965 = vcmp.gt.f32.partialorder %v3929, 0.5
      %vm3966 = vcmp.gt.f32.partialorder %v3930, 0.5
      %vm3967 = vcmp.gt.f32.partialorder %v3931, 0.5
      %vm3968 = vcmp.gt.f32.partialorder %v3932, 0.5
      %vm3969 = vcmp.gt.f32.partialorder %v3933, 0.5
      %vm3970 = vcmp.gt.f32.partialorder %v3934, 0.5
      %vm3971 = vcmp.gt.f32.partialorder %v3935, 0.5
      %vm3972 = vcmp.gt.f32.partialorder %v3936, 0.5
      %vm3973 = vcmp.gt.f32.partialorder %v3937, 0.5
      %vm3974 = vcmp.gt.f32.partialorder %v3938, 0.5
      %vm3975 = vcmp.gt.f32.partialorder %v3939, 0.5
      %vm3976 = vcmp.gt.f32.partialorder %v3940, 0.5
      %vm3977 = vcmp.gt.f32.partialorder %v3941, 0.5
      %vm3978 = vcmp.gt.f32.partialorder %v3942, 0.5
      %vm3979 = vcmp.gt.f32.partialorder %v3943, 0.5
      %vm3980 = vcmp.gt.f32.partialorder %v3944, 0.5
      %vm3981 = vcmp.gt.f32.partialorder %v3945, 0.5
      %vm3982 = vcmp.gt.f32.partialorder %v3946, 0.5
      %vm3983 = vcmp.gt.f32.partialorder %v3947, 0.5
      %vm3984 = vcmp.gt.f32.partialorder %v3948, 0.5
      %vm3985 = vcmp.gt.f32.partialorder %v3949, 0.5
      %vm3986 = vcmp.gt.f32.partialorder %v3950, 0.5
      %vm3987 = vcmp.gt.f32.partialorder %v3951, 0.5
      %vm3988 = vcmp.gt.f32.partialorder %v3952, 0.5
      %vm3989 = vcmp.gt.f32.partialorder %v3953, 0.5
      %vm3990 = vcmp.gt.f32.partialorder %v3954, 0.5
      %vm3991 = vcmp.gt.f32.partialorder %v3955, 0.5
      %vm3992 = vcmp.gt.f32.partialorder %v3956, 0.5
      %vm3993 = vcmp.gt.f32.partialorder %v3957, 0.5
      %vm3994 = vcmp.gt.f32.partialorder %v3958, 0.5
      %vm3995 = vcmp.gt.f32.partialorder %v3959, 0.5
      %vm3996 = vcmp.gt.f32.partialorder %v3960, 0.5
      %vm3997 = vcmp.gt.f32.partialorder %v3961, 0.5
      %vm3998 = vcmp.gt.f32.partialorder %v3962, 0.5
      %vm3999 = vcmp.gt.f32.partialorder %v3963, 0.5
      %vm4000 = vcmp.gt.f32.partialorder %v3964, 0.5
      %v4001 = vsel %vm3965, 1, 0
      %v4002 = vsel %vm3966, 1, 0
      %v4003 = vsel %vm3967, 1, 0
      %v4004 = vsel %vm3968, 1, 0
      %v4005 = vsel %vm3969, 1, 0
      %v4006 = vsel %vm3970, 1, 0
      %v4007 = vsel %vm3971, 1, 0
      %v4008 = vsel %vm3972, 1, 0
      %v4009 = vsel %vm3973, 1, 0
      %v4010 = vsel %vm3974, 1, 0
      %v4011 = vsel %vm3975, 1, 0
      %v4012 = vsel %vm3976, 1, 0
      %v4013 = vsel %vm3977, 1, 0
      %v4014 = vsel %vm3978, 1, 0
      %v4015 = vsel %vm3979, 1, 0
      %v4016 = vsel %vm3980, 1, 0
      %v4017 = vsel %vm3981, 1, 0
      %v4018 = vsel %vm3982, 1, 0
      %v4019 = vsel %vm3983, 1, 0
      %v4020 = vsel %vm3984, 1, 0
      %v4021 = vsel %vm3985, 1, 0
      %v4022 = vsel %vm3986, 1, 0
      %v4023 = vsel %vm3987, 1, 0
      %v4024 = vsel %vm3988, 1, 0
      %v4025 = vsel %vm3989, 1, 0
      %v4026 = vsel %vm3990, 1, 0
      %v4027 = vsel %vm3991, 1, 0
      %v4028 = vsel %vm3992, 1, 0
      %v4029 = vsel %vm3993, 1, 0
      %v4030 = vsel %vm3994, 1, 0
      %v4031 = vsel %vm3995, 1, 0
      %v4032 = vsel %vm3996, 1, 0
      %v4033 = vsel %vm3997, 1, 0
      %v4034 = vsel %vm3998, 1, 0
      %v4035 = vsel %vm3999, 1, 0
      %v4036 = vsel %vm4000, 1, 0
      %4037 = vset.pattern.permute.xlu0 0
      %4038 = vperm.xlu0 %4037, %v4001
      %v4039 = vpop.permute.xlu0 %4038
      %4040 = vset.pattern.permute.xlu0 0
      %4041 = vperm.xlu0 %4040, %v4002
      %v4042 = vpop.permute.xlu0 %4041
      %4043 = vset.pattern.permute.xlu0 0
      %4044 = vperm.xlu0 %4043, %v4003
      %v4045 = vpop.permute.xlu0 %4044
      %4046 = vset.pattern.permute.xlu0 0
      %4047 = vperm.xlu0 %4046, %v4004
      %v4048 = vpop.permute.xlu0 %4047
      %4049 = vset.pattern.permute.xlu0 0
      %4050 = vperm.xlu0 %4049, %v4005
      %v4051 = vpop.permute.xlu0 %4050
      %4052 = vset.pattern.permute.xlu0 0
      %4053 = vperm.xlu0 %4052, %v4006
      %v4054 = vpop.permute.xlu0 %4053
      %4055 = vset.pattern.permute.xlu0 0
      %4056 = vperm.xlu0 %4055, %v4007
      %v4057 = vpop.permute.xlu0 %4056
      %4058 = vset.pattern.permute.xlu0 0
      %4059 = vperm.xlu0 %4058, %v4008
      %v4060 = vpop.permute.xlu0 %4059
      %4061 = vset.pattern.permute.xlu0 0
      %4062 = vperm.xlu0 %4061, %v4009
      %v4063 = vpop.permute.xlu0 %4062
      %4064 = vset.pattern.permute.xlu0 0
      %4065 = vperm.xlu0 %4064, %v4010
      %v4066 = vpop.permute.xlu0 %4065
      %4067 = vset.pattern.permute.xlu0 0
      %4068 = vperm.xlu0 %4067, %v4011
      %v4069 = vpop.permute.xlu0 %4068
      %4070 = vset.pattern.permute.xlu0 0
      %4071 = vperm.xlu0 %4070, %v4012
      %v4072 = vpop.permute.xlu0 %4071
      %4073 = vset.pattern.permute.xlu0 0
      %4074 = vperm.xlu0 %4073, %v4013
      %v4075 = vpop.permute.xlu0 %4074
      %4076 = vset.pattern.permute.xlu0 0
      %4077 = vperm.xlu0 %4076, %v4014
      %v4078 = vpop.permute.xlu0 %4077
      %4079 = vset.pattern.permute.xlu0 0
      %4080 = vperm.xlu0 %4079, %v4015
      %v4081 = vpop.permute.xlu0 %4080
      %4082 = vset.pattern.permute.xlu0 0
      %4083 = vperm.xlu0 %4082, %v4016
      %v4084 = vpop.permute.xlu0 %4083
      %4085 = vset.pattern.permute.xlu0 0
      %4086 = vperm.xlu0 %4085, %v4017
      %v4087 = vpop.permute.xlu0 %4086
      %4088 = vset.pattern.permute.xlu0 0
      %4089 = vperm.xlu0 %4088, %v4018
      %v4090 = vpop.permute.xlu0 %4089
      %4091 = vset.pattern.permute.xlu0 0
      %4092 = vperm.xlu0 %4091, %v4019
      %v4093 = vpop.permute.xlu0 %4092
      %4094 = vset.pattern.permute.xlu0 0
      %4095 = vperm.xlu0 %4094, %v4020
      %v4096 = vpop.permute.xlu0 %4095
      %4097 = vset.pattern.permute.xlu0 0
      %4098 = vperm.xlu0 %4097, %v4021
      %v4099 = vpop.permute.xlu0 %4098
      %4100 = vset.pattern.permute.xlu0 0
      %4101 = vperm.xlu0 %4100, %v4022
      %v4102 = vpop.permute.xlu0 %4101
      %4103 = vset.pattern.permute.xlu0 0
      %4104 = vperm.xlu0 %4103, %v4023
      %v4105 = vpop.permute.xlu0 %4104
      %4106 = vset.pattern.permute.xlu0 0
      %4107 = vperm.xlu0 %4106, %v4024
      %v4108 = vpop.permute.xlu0 %4107
      %4109 = vset.pattern.permute.xlu0 0
      %4110 = vperm.xlu0 %4109, %v4025
      %v4111 = vpop.permute.xlu0 %4110
      %4112 = vset.pattern.permute.xlu0 0
      %4113 = vperm.xlu0 %4112, %v4026
      %v4114 = vpop.permute.xlu0 %4113
      %4115 = vset.pattern.permute.xlu0 0
      %4116 = vperm.xlu0 %4115, %v4027
      %v4117 = vpop.permute.xlu0 %4116
      %4118 = vset.pattern.permute.xlu0 0
      %4119 = vperm.xlu0 %4118, %v4028
      %v4120 = vpop.permute.xlu0 %4119
      %4121 = vset.pattern.permute.xlu0 0
      %4122 = vperm.xlu0 %4121, %v4029
      %v4123 = vpop.permute.xlu0 %4122
      %4124 = vset.pattern.permute.xlu0 0
      %4125 = vperm.xlu0 %4124, %v4030
      %v4126 = vpop.permute.xlu0 %4125
      %4127 = vset.pattern.permute.xlu0 0
      %4128 = vperm.xlu0 %4127, %v4031
      %v4129 = vpop.permute.xlu0 %4128
      %4130 = vset.pattern.permute.xlu0 0
      %4131 = vperm.xlu0 %4130, %v4032
      %v4132 = vpop.permute.xlu0 %4131
      %4133 = vset.pattern.permute.xlu0 0
      %4134 = vperm.xlu0 %4133, %v4033
      %v4135 = vpop.permute.xlu0 %4134
      %4136 = vset.pattern.permute.xlu0 0
      %4137 = vperm.xlu0 %4136, %v4034
      %v4138 = vpop.permute.xlu0 %4137
      %4139 = vset.pattern.permute.xlu0 0
      %4140 = vperm.xlu0 %4139, %v4035
      %v4141 = vpop.permute.xlu0 %4140
      %4142 = vset.pattern.permute.xlu0 0
      %4143 = vperm.xlu0 %4142, %v4036
      %v4144 = vpop.permute.xlu0 %4143
      %vm4145 = vcmp.eq.s32.totalorder %v4039, 1
      %vm4146 = vcmp.eq.s32.totalorder %v4042, 1
      %vm4147 = vcmp.eq.s32.totalorder %v4045, 1
      %vm4148 = vcmp.eq.s32.totalorder %v4048, 1
      %vm4149 = vcmp.eq.s32.totalorder %v4051, 1
      %vm4150 = vcmp.eq.s32.totalorder %v4054, 1
      %vm4151 = vcmp.eq.s32.totalorder %v4057, 1
      %vm4152 = vcmp.eq.s32.totalorder %v4060, 1
      %vm4153 = vcmp.eq.s32.totalorder %v4063, 1
      %vm4154 = vcmp.eq.s32.totalorder %v4066, 1
      %vm4155 = vcmp.eq.s32.totalorder %v4069, 1
      %vm4156 = vcmp.eq.s32.totalorder %v4072, 1
      %vm4157 = vcmp.eq.s32.totalorder %v4075, 1
      %vm4158 = vcmp.eq.s32.totalorder %v4078, 1
      %vm4159 = vcmp.eq.s32.totalorder %v4081, 1
      %vm4160 = vcmp.eq.s32.totalorder %v4084, 1
      %vm4161 = vcmp.eq.s32.totalorder %v4087, 1
      %vm4162 = vcmp.eq.s32.totalorder %v4090, 1
      %vm4163 = vcmp.eq.s32.totalorder %v4093, 1
      %vm4164 = vcmp.eq.s32.totalorder %v4096, 1
      %vm4165 = vcmp.eq.s32.totalorder %v4099, 1
      %vm4166 = vcmp.eq.s32.totalorder %v4102, 1
      %vm4167 = vcmp.eq.s32.totalorder %v4105, 1
      %vm4168 = vcmp.eq.s32.totalorder %v4108, 1
      %vm4169 = vcmp.eq.s32.totalorder %v4111, 1
      %vm4170 = vcmp.eq.s32.totalorder %v4114, 1
      %vm4171 = vcmp.eq.s32.totalorder %v4117, 1
      %vm4172 = vcmp.eq.s32.totalorder %v4120, 1
      %vm4173 = vcmp.eq.s32.totalorder %v4123, 1
      %vm4174 = vcmp.eq.s32.totalorder %v4126, 1
      %vm4175 = vcmp.eq.s32.totalorder %v4129, 1
      %vm4176 = vcmp.eq.s32.totalorder %v4132, 1
      %vm4177 = vcmp.eq.s32.totalorder %v4135, 1
      %vm4178 = vcmp.eq.s32.totalorder %v4138, 1
      %vm4179 = vcmp.eq.s32.totalorder %v4141, 1
      %vm4180 = vcmp.eq.s32.totalorder %v4144, 1
      %v4181 = vsel %vm4145, %v3893, 0.0
      %v4182 = vsel %vm4146, %v3894, 0.0
      %v4183 = vsel %vm4147, %v3895, 0.0
      %v4184 = vsel %vm4148, %v3896, 0.0
      %v4185 = vsel %vm4149, %v3897, 0.0
      %v4186 = vsel %vm4150, %v3898, 0.0
      %v4187 = vsel %vm4151, %v3899, 0.0
      %v4188 = vsel %vm4152, %v3900, 0.0
      %v4189 = vsel %vm4153, %v3901, 0.0
      %v4190 = vsel %vm4154, %v3902, 0.0
      %v4191 = vsel %vm4155, %v3903, 0.0
      %v4192 = vsel %vm4156, %v3904, 0.0
      %v4193 = vsel %vm4157, %v3905, 0.0
      %v4194 = vsel %vm4158, %v3906, 0.0
      %v4195 = vsel %vm4159, %v3907, 0.0
      %v4196 = vsel %vm4160, %v3908, 0.0
      %v4197 = vsel %vm4161, %v3909, 0.0
      %v4198 = vsel %vm4162, %v3910, 0.0
      %v4199 = vsel %vm4163, %v3911, 0.0
      %v4200 = vsel %vm4164, %v3912, 0.0
      %v4201 = vsel %vm4165, %v3913, 0.0
      %v4202 = vsel %vm4166, %v3914, 0.0
      %v4203 = vsel %vm4167, %v3915, 0.0
      %v4204 = vsel %vm4168, %v3916, 0.0
      %v4205 = vsel %vm4169, %v3917, 0.0
      %v4206 = vsel %vm4170, %v3918, 0.0
      %v4207 = vsel %vm4171, %v3919, 0.0
      %v4208 = vsel %vm4172, %v3920, 0.0
      %v4209 = vsel %vm4173, %v3921, 0.0
      %v4210 = vsel %vm4174, %v3922, 0.0
      %v4211 = vsel %vm4175, %v3923, 0.0
      %v4212 = vsel %vm4176, %v3924, 0.0
      %v4213 = vsel %vm4177, %v3925, 0.0
      %v4214 = vsel %vm4178, %v3926, 0.0
      %v4215 = vsel %vm4179, %v3927, 0.0
      %v4216 = vsel %vm4180, %v3928, 0.0
      %v4217 = vadd.f32 %v4181, %v4182
      %v4218 = vadd.f32 %v4217, %v4183
      %v4219 = vadd.f32 %v4218, %v4184
      %v4220 = vadd.f32 %v4219, %v4185
      %v4221 = vadd.f32 %v4220, %v4186
      %v4222 = vadd.f32 %v4221, %v4187
      %v4223 = vadd.f32 %v4222, %v4188
      %v4224 = vadd.f32 %v4223, %v4189
      %v4225 = vadd.f32 %v4224, %v4190
      %v4226 = vadd.f32 %v4225, %v4191
      %v4227 = vadd.f32 %v4226, %v4192
      %v4228 = vadd.f32 %v4227, %v4193
      %v4229 = vadd.f32 %v4228, %v4194
      %v4230 = vadd.f32 %v4229, %v4195
      %v4231 = vadd.f32 %v4230, %v4196
      %v4232 = vadd.f32 %v4231, %v4197
      %v4233 = vadd.f32 %v4232, %v4198
      %v4234 = vadd.f32 %v4233, %v4199
      %v4235 = vadd.f32 %v4234, %v4200
      %v4236 = vadd.f32 %v4235, %v4201
      %v4237 = vadd.f32 %v4236, %v4202
      %v4238 = vadd.f32 %v4237, %v4203
      %v4239 = vadd.f32 %v4238, %v4204
      %v4240 = vadd.f32 %v4239, %v4205
      %v4241 = vadd.f32 %v4240, %v4206
      %v4242 = vadd.f32 %v4241, %v4207
      %v4243 = vadd.f32 %v4242, %v4208
      %v4244 = vadd.f32 %v4243, %v4209
      %v4245 = vadd.f32 %v4244, %v4210
      %v4246 = vadd.f32 %v4245, %v4211
      %v4247 = vadd.f32 %v4246, %v4212
      %v4248 = vadd.f32 %v4247, %v4213
      %v4249 = vadd.f32 %v4248, %v4214
      %v4250 = vadd.f32 %v4249, %v4215
      %vm4251 = vcmask 1045504
      %v4252 = vsel %vm4251, %v4216, 0.0
      %v4253 = vadd.f32 %v4250, %v4252
      %v4254 = vrot.slane %v4253, 4
      %v4255 = vadd.f32 %v4253, %v4254
      %v4256 = vrot.slane %v4255, 2
      %v4257 = vadd.f32 %v4255, %v4256
      %v4258 = vrot.slane %v4257, 1
      %v4259 = vadd.f32 %v4257, %v4258
      %4260 = vst [vmem:[%s289] sm:$0x1] %v4259
      %v4261 = vmul.f32 %v4181, %v4181
      %v4262 = vmul.f32 %v4182, %v4182
      %v4263 = vmul.f32 %v4183, %v4183
      %v4264 = vmul.f32 %v4184, %v4184
      %v4265 = vmul.f32 %v4185, %v4185
      %v4266 = vmul.f32 %v4186, %v4186
      %v4267 = vmul.f32 %v4187, %v4187
      %v4268 = vmul.f32 %v4188, %v4188
      %v4269 = vmul.f32 %v4189, %v4189
      %v4270 = vmul.f32 %v4190, %v4190
      %v4271 = vmul.f32 %v4191, %v4191
      %v4272 = vmul.f32 %v4192, %v4192
      %v4273 = vmul.f32 %v4193, %v4193
      %v4274 = vmul.f32 %v4194, %v4194
      %v4275 = vmul.f32 %v4195, %v4195
      %v4276 = vmul.f32 %v4196, %v4196
      %v4277 = vmul.f32 %v4197, %v4197
      %v4278 = vmul.f32 %v4198, %v4198
      %v4279 = vmul.f32 %v4199, %v4199
      %v4280 = vmul.f32 %v4200, %v4200
      %v4281 = vmul.f32 %v4201, %v4201
      %v4282 = vmul.f32 %v4202, %v4202
      %v4283 = vmul.f32 %v4203, %v4203
      %v4284 = vmul.f32 %v4204, %v4204
      %v4285 = vmul.f32 %v4205, %v4205
      %v4286 = vmul.f32 %v4206, %v4206
      %v4287 = vmul.f32 %v4207, %v4207
      %v4288 = vmul.f32 %v4208, %v4208
      %v4289 = vmul.f32 %v4209, %v4209
      %v4290 = vmul.f32 %v4210, %v4210
      %v4291 = vmul.f32 %v4211, %v4211
      %v4292 = vmul.f32 %v4212, %v4212
      %v4293 = vmul.f32 %v4213, %v4213
      %v4294 = vmul.f32 %v4214, %v4214
      %v4295 = vmul.f32 %v4215, %v4215
      %v4296 = vmul.f32 %v4216, %v4216
      %v4297 = vadd.f32 %v4261, %v4262
      %v4298 = vadd.f32 %v4297, %v4263
      %v4299 = vadd.f32 %v4298, %v4264
      %v4300 = vadd.f32 %v4299, %v4265
      %v4301 = vadd.f32 %v4300, %v4266
      %v4302 = vadd.f32 %v4301, %v4267
      %v4303 = vadd.f32 %v4302, %v4268
      %v4304 = vadd.f32 %v4303, %v4269
      %v4305 = vadd.f32 %v4304, %v4270
      %v4306 = vadd.f32 %v4305, %v4271
      %v4307 = vadd.f32 %v4306, %v4272
      %v4308 = vadd.f32 %v4307, %v4273
      %v4309 = vadd.f32 %v4308, %v4274
      %v4310 = vadd.f32 %v4309, %v4275
      %v4311 = vadd.f32 %v4310, %v4276
      %v4312 = vadd.f32 %v4311, %v4277
      %v4313 = vadd.f32 %v4312, %v4278
      %v4314 = vadd.f32 %v4313, %v4279
      %v4315 = vadd.f32 %v4314, %v4280
      %v4316 = vadd.f32 %v4315, %v4281
      %v4317 = vadd.f32 %v4316, %v4282
      %v4318 = vadd.f32 %v4317, %v4283
      %v4319 = vadd.f32 %v4318, %v4284
      %v4320 = vadd.f32 %v4319, %v4285
      %v4321 = vadd.f32 %v4320, %v4286
      %v4322 = vadd.f32 %v4321, %v4287
      %v4323 = vadd.f32 %v4322, %v4288
      %v4324 = vadd.f32 %v4323, %v4289
      %v4325 = vadd.f32 %v4324, %v4290
      %v4326 = vadd.f32 %v4325, %v4291
      %v4327 = vadd.f32 %v4326, %v4292
      %v4328 = vadd.f32 %v4327, %v4293
      %v4329 = vadd.f32 %v4328, %v4294
      %v4330 = vadd.f32 %v4329, %v4295
      %v4331 = vsel %vm4251, %v4296, 0.0
      %v4332 = vadd.f32 %v4330, %v4331
      %v4333 = vrot.slane %v4332, 4
      %v4334 = vadd.f32 %v4332, %v4333
      %v4335 = vrot.slane %v4334, 2
      %v4336 = vadd.f32 %v4334, %v4335
      %v4337 = vrot.slane %v4336, 1
      %v4338 = vadd.f32 %v4336, %v4337
      %4339 = vst [vmem:[%s289 + $0x1] sm:$0x1] %v4338
      %v4340 = vsel %vm4145, %v3893, -1e+09
      %v4341 = vsel %vm4146, %v3894, -1e+09
      %v4342 = vsel %vm4147, %v3895, -1e+09
      %v4343 = vsel %vm4148, %v3896, -1e+09
      %v4344 = vsel %vm4149, %v3897, -1e+09
      %v4345 = vsel %vm4150, %v3898, -1e+09
      %v4346 = vsel %vm4151, %v3899, -1e+09
      %v4347 = vsel %vm4152, %v3900, -1e+09
      %v4348 = vsel %vm4153, %v3901, -1e+09
      %v4349 = vsel %vm4154, %v3902, -1e+09
      %v4350 = vsel %vm4155, %v3903, -1e+09
      %v4351 = vsel %vm4156, %v3904, -1e+09
      %v4352 = vsel %vm4157, %v3905, -1e+09
      %v4353 = vsel %vm4158, %v3906, -1e+09
      %v4354 = vsel %vm4159, %v3907, -1e+09
      %v4355 = vsel %vm4160, %v3908, -1e+09
      %v4356 = vsel %vm4161, %v3909, -1e+09
      %v4357 = vsel %vm4162, %v3910, -1e+09
      %v4358 = vsel %vm4163, %v3911, -1e+09
      %v4359 = vsel %vm4164, %v3912, -1e+09
      %v4360 = vsel %vm4165, %v3913, -1e+09
      %v4361 = vsel %vm4166, %v3914, -1e+09
      %v4362 = vsel %vm4167, %v3915, -1e+09
      %v4363 = vsel %vm4168, %v3916, -1e+09
      %v4364 = vsel %vm4169, %v3917, -1e+09
      %v4365 = vsel %vm4170, %v3918, -1e+09
      %v4366 = vsel %vm4171, %v3919, -1e+09
      %v4367 = vsel %vm4172, %v3920, -1e+09
      %v4368 = vsel %vm4173, %v3921, -1e+09
      %v4369 = vsel %vm4174, %v3922, -1e+09
      %v4370 = vsel %vm4175, %v3923, -1e+09
      %v4371 = vsel %vm4176, %v3924, -1e+09
      %v4372 = vsel %vm4177, %v3925, -1e+09
      %v4373 = vsel %vm4178, %v3926, -1e+09
      %v4374 = vsel %vm4179, %v3927, -1e+09
      %v4375 = vsel %vm4180, %v3928, -1e+09
      %v4376 = vpack.c.bf16 %v4341, %v4340
      %v4377 = vpack.c.bf16 %v4343, %v4342
      %v4378 = vpack.c.bf16 %v4345, %v4344
      %v4379 = vpack.c.bf16 %v4347, %v4346
      %v4380 = vpack.c.bf16 %v4349, %v4348
      %v4381 = vpack.c.bf16 %v4351, %v4350
      %v4382 = vpack.c.bf16 %v4353, %v4352
      %v4383 = vpack.c.bf16 %v4355, %v4354
      %v4384 = vpack.c.bf16 %v4357, %v4356
      %v4385 = vpack.c.bf16 %v4359, %v4358
      %v4386 = vpack.c.bf16 %v4361, %v4360
      %v4387 = vpack.c.bf16 %v4363, %v4362
      %v4388 = vpack.c.bf16 %v4365, %v4364
      %v4389 = vpack.c.bf16 %v4367, %v4366
      %v4390 = vpack.c.bf16 %v4369, %v4368
      %v4391 = vpack.c.bf16 %v4371, %v4370
      %v4392 = vpack.c.bf16 %v4373, %v4372
      %v4393 = vpack.c.bf16 %v4375, %v4374
      %v4412 = vunpack.c.l.b16 %v4376
      %v4413 = vunpack.c.h.b16 %v4376
      %v4414 = vunpack.c.l.b16 %v4377
      %v4415 = vunpack.c.h.b16 %v4377
      %v4416 = vunpack.c.l.b16 %v4378
      %v4417 = vunpack.c.h.b16 %v4378
      %v4418 = vunpack.c.l.b16 %v4379
      %v4419 = vunpack.c.h.b16 %v4379
      %v4420 = vunpack.c.l.b16 %v4380
      %v4421 = vunpack.c.h.b16 %v4380
      %v4422 = vunpack.c.l.b16 %v4381
      %v4423 = vunpack.c.h.b16 %v4381
      %v4424 = vunpack.c.l.b16 %v4382
      %v4425 = vunpack.c.h.b16 %v4382
      %v4426 = vunpack.c.l.b16 %v4383
      %v4427 = vunpack.c.h.b16 %v4383
      %v4428 = vunpack.c.l.b16 %v4384
      %v4429 = vunpack.c.h.b16 %v4384
      %v4430 = vunpack.c.l.b16 %v4385
      %v4431 = vunpack.c.h.b16 %v4385
      %v4432 = vunpack.c.l.b16 %v4386
      %v4433 = vunpack.c.h.b16 %v4386
      %v4434 = vunpack.c.l.b16 %v4387
      %v4435 = vunpack.c.h.b16 %v4387
      %v4436 = vunpack.c.l.b16 %v4388
      %v4437 = vunpack.c.h.b16 %v4388
      %v4438 = vunpack.c.l.b16 %v4389
      %v4439 = vunpack.c.h.b16 %v4389
      %v4440 = vunpack.c.l.b16 %v4390
      %v4441 = vunpack.c.h.b16 %v4390
      %v4442 = vunpack.c.l.b16 %v4391
      %v4443 = vunpack.c.h.b16 %v4391
      %v4444 = vunpack.c.l.b16 %v4392
      %v4445 = vunpack.c.h.b16 %v4392
      %v4446 = vunpack.c.l.b16 %v4393
      %v4447 = vunpack.c.h.b16 %v4393
      %v4448 = vpack.c.b16 %v4412, %v4412
      %v4449 = vpack.c.b16 %v4413, %v4413
      %v4450 = vpack.c.b16 %v4414, %v4414
      %v4451 = vpack.c.b16 %v4415, %v4415
      %v4452 = vpack.c.b16 %v4416, %v4416
      %v4453 = vpack.c.b16 %v4417, %v4417
      %v4454 = vpack.c.b16 %v4418, %v4418
      %v4455 = vpack.c.b16 %v4419, %v4419
      %v4456 = vpack.c.b16 %v4420, %v4420
      %v4457 = vpack.c.b16 %v4421, %v4421
      %v4458 = vpack.c.b16 %v4422, %v4422
      %v4459 = vpack.c.b16 %v4423, %v4423
      %v4460 = vpack.c.b16 %v4424, %v4424
      %v4461 = vpack.c.b16 %v4425, %v4425
      %v4462 = vpack.c.b16 %v4426, %v4426
      %v4463 = vpack.c.b16 %v4427, %v4427
      %v4464 = vpack.c.b16 %v4428, %v4428
      %v4465 = vpack.c.b16 %v4429, %v4429
      %v4466 = vpack.c.b16 %v4430, %v4430
      %v4467 = vpack.c.b16 %v4431, %v4431
      %v4468 = vpack.c.b16 %v4432, %v4432
      %v4469 = vpack.c.b16 %v4433, %v4433
      %v4470 = vpack.c.b16 %v4434, %v4434
      %v4471 = vpack.c.b16 %v4435, %v4435
      %v4472 = vpack.c.b16 %v4436, %v4436
      %v4473 = vpack.c.b16 %v4437, %v4437
      %v4474 = vpack.c.b16 %v4438, %v4438
      %v4475 = vpack.c.b16 %v4439, %v4439
      %v4476 = vpack.c.b16 %v4440, %v4440
      %v4477 = vpack.c.b16 %v4441, %v4441
      %v4478 = vpack.c.b16 %v4442, %v4442
      %v4479 = vpack.c.b16 %v4443, %v4443
      %v4480 = vpack.c.b16 %v4444, %v4444
      %v4481 = vpack.c.b16 %v4445, %v4445
      %v4482 = vpack.c.b16 %v4446, %v4446
      %v4483 = vpack.c.b16 %v4447, %v4447
      %vm4484 = vsmask.f32 1280
      %vm4485 = vsmask.f32 5392
      %vm4486 = vmor %vm4484, %vm4485
      %v4488 = vshrl.u32 %v4448, 16
      %v4490 = vrot.slane %v4488, 6
      %v4491 = vshll.u32 %v4448, 16
      %v4493 = vrot.slane %v4491, 7
      %v4494 = vor.u32 %v4490, %v4493
      %v4495 = vrot.slane %v4494, 4
      %v4497 = vshrl.u32 %v4449, 16
      %v4499 = vrot.slane %v4497, 6
      %v4500 = vshll.u32 %v4449, 16
      %v4502 = vrot.slane %v4500, 7
      %v4503 = vor.u32 %v4499, %v4502
      %v4504 = vsel %vm4486, %v4495, %v4503
      %v4505 = vrot.slane %v4503, 4
      %v4507 = vshrl.u32 %v4450, 16
      %v4509 = vrot.slane %v4507, 6
      %v4510 = vshll.u32 %v4450, 16
      %v4512 = vrot.slane %v4510, 7
      %v4513 = vor.u32 %v4509, %v4512
      %v4514 = vsel %vm4486, %v4505, %v4513
      %v4515 = vrot.slane %v4513, 4
      %v4517 = vshrl.u32 %v4451, 16
      %v4519 = vrot.slane %v4517, 6
      %v4520 = vshll.u32 %v4451, 16
      %v4522 = vrot.slane %v4520, 7
      %v4523 = vor.u32 %v4519, %v4522
      %v4524 = vsel %vm4486, %v4515, %v4523
      %v4525 = vrot.slane %v4523, 4
      %v4527 = vshrl.u32 %v4452, 16
      %v4529 = vrot.slane %v4527, 6
      %v4530 = vshll.u32 %v4452, 16
      %v4532 = vrot.slane %v4530, 7
      %v4533 = vor.u32 %v4529, %v4532
      %v4534 = vsel %vm4486, %v4525, %v4533
      %v4535 = vrot.slane %v4533, 4
      %v4537 = vshrl.u32 %v4453, 16
      %v4539 = vrot.slane %v4537, 6
      %v4540 = vshll.u32 %v4453, 16
      %v4542 = vrot.slane %v4540, 7
      %v4543 = vor.u32 %v4539, %v4542
      %v4544 = vsel %vm4486, %v4535, %v4543
      %v4545 = vrot.slane %v4543, 4
      %v4547 = vshrl.u32 %v4454, 16
      %v4549 = vrot.slane %v4547, 6
      %v4550 = vshll.u32 %v4454, 16
      %v4552 = vrot.slane %v4550, 7
      %v4553 = vor.u32 %v4549, %v4552
      %v4554 = vsel %vm4486, %v4545, %v4553
      %v4555 = vrot.slane %v4553, 4
      %v4557 = vshrl.u32 %v4455, 16
      %v4559 = vrot.slane %v4557, 6
      %v4560 = vshll.u32 %v4455, 16
      %v4562 = vrot.slane %v4560, 7
      %v4563 = vor.u32 %v4559, %v4562
      %v4564 = vsel %vm4486, %v4555, %v4563
      %v4565 = vrot.slane %v4563, 4
      %v4567 = vshrl.u32 %v4456, 16
      %v4569 = vrot.slane %v4567, 6
      %v4570 = vshll.u32 %v4456, 16
      %v4572 = vrot.slane %v4570, 7
      %v4573 = vor.u32 %v4569, %v4572
      %v4574 = vsel %vm4486, %v4565, %v4573
      %v4575 = vrot.slane %v4573, 4
      %v4577 = vshrl.u32 %v4457, 16
      %v4579 = vrot.slane %v4577, 6
      %v4580 = vshll.u32 %v4457, 16
      %v4582 = vrot.slane %v4580, 7
      %v4583 = vor.u32 %v4579, %v4582
      %v4584 = vsel %vm4486, %v4575, %v4583
      %v4585 = vrot.slane %v4583, 4
      %v4587 = vshrl.u32 %v4458, 16
      %v4589 = vrot.slane %v4587, 6
      %v4590 = vshll.u32 %v4458, 16
      %v4592 = vrot.slane %v4590, 7
      %v4593 = vor.u32 %v4589, %v4592
      %v4594 = vsel %vm4486, %v4585, %v4593
      %v4595 = vrot.slane %v4593, 4
      %v4597 = vshrl.u32 %v4459, 16
      %v4599 = vrot.slane %v4597, 6
      %v4600 = vshll.u32 %v4459, 16
      %v4602 = vrot.slane %v4600, 7
      %v4603 = vor.u32 %v4599, %v4602
      %v4604 = vsel %vm4486, %v4595, %v4603
      %v4605 = vrot.slane %v4603, 4
      %v4607 = vshrl.u32 %v4460, 16
      %v4609 = vrot.slane %v4607, 6
      %v4610 = vshll.u32 %v4460, 16
      %v4612 = vrot.slane %v4610, 7
      %v4613 = vor.u32 %v4609, %v4612
      %v4614 = vsel %vm4486, %v4605, %v4613
      %v4615 = vrot.slane %v4613, 4
      %v4617 = vshrl.u32 %v4461, 16
      %v4619 = vrot.slane %v4617, 6
      %v4620 = vshll.u32 %v4461, 16
      %v4622 = vrot.slane %v4620, 7
      %v4623 = vor.u32 %v4619, %v4622
      %v4624 = vsel %vm4486, %v4615, %v4623
      %v4625 = vrot.slane %v4623, 4
      %v4627 = vshrl.u32 %v4462, 16
      %v4629 = vrot.slane %v4627, 6
      %v4630 = vshll.u32 %v4462, 16
      %v4632 = vrot.slane %v4630, 7
      %v4633 = vor.u32 %v4629, %v4632
      %v4634 = vsel %vm4486, %v4625, %v4633
      %v4635 = vrot.slane %v4633, 4
      %v4637 = vshrl.u32 %v4463, 16
      %v4639 = vrot.slane %v4637, 6
      %v4640 = vshll.u32 %v4463, 16
      %v4642 = vrot.slane %v4640, 7
      %v4643 = vor.u32 %v4639, %v4642
      %v4644 = vsel %vm4486, %v4635, %v4643
      %v4645 = vrot.slane %v4643, 4
      %v4647 = vshrl.u32 %v4464, 16
      %v4649 = vrot.slane %v4647, 6
      %v4650 = vshll.u32 %v4464, 16
      %v4652 = vrot.slane %v4650, 7
      %v4653 = vor.u32 %v4649, %v4652
      %v4654 = vsel %vm4486, %v4645, %v4653
      %v4655 = vrot.slane %v4653, 4
      %v4657 = vshrl.u32 %v4465, 16
      %v4659 = vrot.slane %v4657, 6
      %v4660 = vshll.u32 %v4465, 16
      %v4662 = vrot.slane %v4660, 7
      %v4663 = vor.u32 %v4659, %v4662
      %v4664 = vsel %vm4486, %v4655, %v4663
      %v4665 = vrot.slane %v4663, 4
      %v4667 = vshrl.u32 %v4466, 16
      %v4669 = vrot.slane %v4667, 6
      %v4670 = vshll.u32 %v4466, 16
      %v4672 = vrot.slane %v4670, 7
      %v4673 = vor.u32 %v4669, %v4672
      %v4674 = vsel %vm4486, %v4665, %v4673
      %v4675 = vrot.slane %v4673, 4
      %v4677 = vshrl.u32 %v4467, 16
      %v4679 = vrot.slane %v4677, 6
      %v4680 = vshll.u32 %v4467, 16
      %v4682 = vrot.slane %v4680, 7
      %v4683 = vor.u32 %v4679, %v4682
      %v4684 = vsel %vm4486, %v4675, %v4683
      %v4685 = vrot.slane %v4683, 4
      %v4687 = vshrl.u32 %v4468, 16
      %v4689 = vrot.slane %v4687, 6
      %v4690 = vshll.u32 %v4468, 16
      %v4692 = vrot.slane %v4690, 7
      %v4693 = vor.u32 %v4689, %v4692
      %v4694 = vsel %vm4486, %v4685, %v4693
      %v4695 = vrot.slane %v4693, 4
      %v4697 = vshrl.u32 %v4469, 16
      %v4699 = vrot.slane %v4697, 6
      %v4700 = vshll.u32 %v4469, 16
      %v4702 = vrot.slane %v4700, 7
      %v4703 = vor.u32 %v4699, %v4702
      %v4704 = vsel %vm4486, %v4695, %v4703
      %v4705 = vrot.slane %v4703, 4
      %v4707 = vshrl.u32 %v4470, 16
      %v4709 = vrot.slane %v4707, 6
      %v4710 = vshll.u32 %v4470, 16
      %v4712 = vrot.slane %v4710, 7
      %v4713 = vor.u32 %v4709, %v4712
      %v4714 = vsel %vm4486, %v4705, %v4713
      %v4715 = vrot.slane %v4713, 4
      %v4717 = vshrl.u32 %v4471, 16
      %v4719 = vrot.slane %v4717, 6
      %v4720 = vshll.u32 %v4471, 16
      %v4722 = vrot.slane %v4720, 7
      %v4723 = vor.u32 %v4719, %v4722
      %v4724 = vsel %vm4486, %v4715, %v4723
      %v4725 = vrot.slane %v4723, 4
      %v4727 = vshrl.u32 %v4472, 16
      %v4729 = vrot.slane %v4727, 6
      %v4730 = vshll.u32 %v4472, 16
      %v4732 = vrot.slane %v4730, 7
      %v4733 = vor.u32 %v4729, %v4732
      %v4734 = vsel %vm4486, %v4725, %v4733
      %v4735 = vrot.slane %v4733, 4
      %v4737 = vshrl.u32 %v4473, 16
      %v4739 = vrot.slane %v4737, 6
      %v4740 = vshll.u32 %v4473, 16
      %v4742 = vrot.slane %v4740, 7
      %v4743 = vor.u32 %v4739, %v4742
      %v4744 = vsel %vm4486, %v4735, %v4743
      %v4745 = vrot.slane %v4743, 4
      %v4747 = vshrl.u32 %v4474, 16
      %v4749 = vrot.slane %v4747, 6
      %v4750 = vshll.u32 %v4474, 16
      %v4752 = vrot.slane %v4750, 7
      %v4753 = vor.u32 %v4749, %v4752
      %v4754 = vsel %vm4486, %v4745, %v4753
      %v4755 = vrot.slane %v4753, 4
      %v4757 = vshrl.u32 %v4475, 16
      %v4759 = vrot.slane %v4757, 6
      %v4760 = vshll.u32 %v4475, 16
      %v4762 = vrot.slane %v4760, 7
      %v4763 = vor.u32 %v4759, %v4762
      %v4764 = vsel %vm4486, %v4755, %v4763
      %v4765 = vrot.slane %v4763, 4
      %v4767 = vshrl.u32 %v4476, 16
      %v4769 = vrot.slane %v4767, 6
      %v4770 = vshll.u32 %v4476, 16
      %v4772 = vrot.slane %v4770, 7
      %v4773 = vor.u32 %v4769, %v4772
      %v4774 = vsel %vm4486, %v4765, %v4773
      %v4775 = vrot.slane %v4773, 4
      %v4777 = vshrl.u32 %v4477, 16
      %v4779 = vrot.slane %v4777, 6
      %v4780 = vshll.u32 %v4477, 16
      %v4782 = vrot.slane %v4780, 7
      %v4783 = vor.u32 %v4779, %v4782
      %v4784 = vsel %vm4486, %v4775, %v4783
      %v4785 = vrot.slane %v4783, 4
      %v4787 = vshrl.u32 %v4478, 16
      %v4789 = vrot.slane %v4787, 6
      %v4790 = vshll.u32 %v4478, 16
      %v4792 = vrot.slane %v4790, 7
      %v4793 = vor.u32 %v4789, %v4792
      %v4794 = vsel %vm4486, %v4785, %v4793
      %v4795 = vrot.slane %v4793, 4
      %v4797 = vshrl.u32 %v4479, 16
      %v4799 = vrot.slane %v4797, 6
      %v4800 = vshll.u32 %v4479, 16
      %v4802 = vrot.slane %v4800, 7
      %v4803 = vor.u32 %v4799, %v4802
      %v4804 = vsel %vm4486, %v4795, %v4803
      %v4805 = vrot.slane %v4803, 4
      %v4807 = vshrl.u32 %v4480, 16
      %v4809 = vrot.slane %v4807, 6
      %v4810 = vshll.u32 %v4480, 16
      %v4812 = vrot.slane %v4810, 7
      %v4813 = vor.u32 %v4809, %v4812
      %v4814 = vsel %vm4486, %v4805, %v4813
      %v4815 = vrot.slane %v4813, 4
      %v4817 = vshrl.u32 %v4481, 16
      %v4819 = vrot.slane %v4817, 6
      %v4820 = vshll.u32 %v4481, 16
      %v4822 = vrot.slane %v4820, 7
      %v4823 = vor.u32 %v4819, %v4822
      %v4824 = vsel %vm4486, %v4815, %v4823
      %v4825 = vrot.slane %v4823, 4
      %v4827 = vshrl.u32 %v4482, 16
      %v4829 = vrot.slane %v4827, 6
      %v4830 = vshll.u32 %v4482, 16
      %v4832 = vrot.slane %v4830, 7
      %v4833 = vor.u32 %v4829, %v4832
      %v4834 = vsel %vm4486, %v4825, %v4833
      %v4835 = vrot.slane %v4833, 4
      %v4837 = vshrl.u32 %v4483, 16
      %v4839 = vrot.slane %v4837, 6
      %v4840 = vshll.u32 %v4483, 16
      %v4842 = vrot.slane %v4840, 7
      %v4843 = vor.u32 %v4839, %v4842
      %v4844 = vsel %vm4486, %v4835, %v4843
      %v4845 = vrot.slane %v4839, 4
      %vm4883 = vcmask 1043457
      %vm4884 = vsmask.f32 7942
      %vm4885 = vmand %vm4883, %vm4884
      %v4886 = vld [vmem:[%s285 + $0x8] sm:$0xe]
      %v4887 = vsel %vm4885, %v4494, %v4886
      %4888 = vst [vmem:[%s285 + $0x8] sm:$0xe] %v4887
      %4889 = vst [vmem:[%s285 + $0xc] sm:$0xf] %v4504
      %4890 = vst [vmem:[%s285 + $0x10] sm:$0xf] %v4514
      %4891 = vst [vmem:[%s285 + $0x14] sm:$0xf] %v4524
      %4892 = vst [vmem:[%s285 + $0x18] sm:$0xf] %v4534
      %4893 = vst [vmem:[%s285 + $0x1c] sm:$0xf] %v4544
      %4894 = vst [vmem:[%s285 + $0x20] sm:$0xf] %v4554
      %4895 = vst [vmem:[%s285 + $0x24] sm:$0xf] %v4564
      %4896 = vst [vmem:[%s285 + $0x28] sm:$0xf] %v4574
      %4897 = vst [vmem:[%s285 + $0x2c] sm:$0xf] %v4584
      %4898 = vst [vmem:[%s285 + $0x30] sm:$0xf] %v4594
      %4899 = vst [vmem:[%s285 + $0x34] sm:$0xf] %v4604
      %4900 = vst [vmem:[%s285 + $0x38] sm:$0xf] %v4614
      %4901 = vst [vmem:[%s285 + $0x3c] sm:$0xf] %v4624
      %4902 = vst [vmem:[%s285 + $0x40] sm:$0xf] %v4634
      %4903 = vst [vmem:[%s285 + $0x44] sm:$0xf] %v4644
      %4904 = vst [vmem:[%s285 + $0x48] sm:$0xf] %v4654
      %4905 = vst [vmem:[%s285 + $0x4c] sm:$0xf] %v4664
      %4906 = vst [vmem:[%s285 + $0x50] sm:$0xf] %v4674
      %4907 = vst [vmem:[%s285 + $0x54] sm:$0xf] %v4684
      %4908 = vst [vmem:[%s285 + $0x58] sm:$0xf] %v4694
      %4909 = vst [vmem:[%s285 + $0x5c] sm:$0xf] %v4704
      %4910 = vst [vmem:[%s285 + $0x60] sm:$0xf] %v4714
      %4911 = vst [vmem:[%s285 + $0x64] sm:$0xf] %v4724
      %4912 = vst [vmem:[%s285 + $0x68] sm:$0xf] %v4734
      %4913 = vst [vmem:[%s285 + $0x6c] sm:$0xf] %v4744
      %4914 = vst [vmem:[%s285 + $0x70] sm:$0xf] %v4754
      %4915 = vst [vmem:[%s285 + $0x74] sm:$0xf] %v4764
      %4916 = vst [vmem:[%s285 + $0x78] sm:$0xf] %v4774
      %4917 = vst [vmem:[%s285 + $0x7c] sm:$0xf] %v4784
      %4918 = vst [vmem:[%s285 + $0x80] sm:$0xf] %v4794
      %4919 = vst [vmem:[%s285 + $0x84] sm:$0xf] %v4804
      %4920 = vst [vmem:[%s285 + $0x88] sm:$0xf] %v4814
      %4921 = vst [vmem:[%s285 + $0x8c] sm:$0xf] %v4824
      %4922 = vst [vmem:[%s285 + $0x90] sm:$0xf] %v4834
      %4923 = vst [vmem:[%s285 + $0x94] sm:$0xf] %v4844
      %vm4924 = vcmask 1040384
      %vm4925 = vsmask.f32 256
      %vm4926 = vmand %vm4924, %vm4925
      %v4927 = vld [vmem:[%s285 + $0x98] sm:$0x1]
      %v4928 = vsel %vm4926, %v4845, %v4927
      %4929 = vst [vmem:[%s285 + $0x98] sm:$0x1] %v4928
      %4930 = vst [vmem:[%s285] sm:$0xf] 3463368302
      %4931 = vst [vmem:[%s285 + $0x4] sm:$0xf] 3463368302
      %vm4932 = vcmask 1041408
      %vm4933 = vmand %vm4932, %vm4484
      %v4934 = vld [vmem:[%s285 + $0x8] sm:$0x3]
      %v4935 = vsel %vm4933, 3463368302, %v4934
      %4936 = vst [vmem:[%s285 + $0x8] sm:$0x3] %v4935
      %vm4937 = vcmask 1043456
      %vm4938 = vsmask.f32 7938
      %vm4939 = vmand %vm4937, %vm4938
      %v4940 = vld [vmem:[%s285 + $0x98] sm:$0xf]
      %v4941 = vsel %vm4939, 3463368302, %v4940
      %4942 = vst [vmem:[%s285 + $0x98] sm:$0xf] %v4941
      %4943 = vst [vmem:[%s285 + $0x9c] sm:$0xf] 3463368302
      %4944 = vst [vmem:[%s285 + $0xa0] sm:$0x3] 3463368302
      %p4945 = scmp.lt.s32.totalorder %s19, 1
      %s4946 = scalar_select %p4945, %s19, 1
      %s4947 = smul.addr %s4946, 41
      %s4948 = smul.addr %s4947, 4
      %s4949 = scalar_lea.vmem %s6, %s4948
      %p4950 = scmp.lt.s32.totalorder %s19, 1
      %s4951 = scalar_select %p4950, %s19, 1
      %s4952 = smul.addr %s4951, 2
      %s4953 = scalar_lea.vmem %s7, %s4952
      // Predicated region
      $region45: #{convolution_block_forward.3} parent=43 // pred_check
        %p4954 = pneg %p168
      $region46: #{convolution_block_forward.3} parent=43 // pred_check_branch
        %4956 = sbr.rel (%p4954) target = $region48
      $region47: #{convolution_block_forward.3} parent=43 // pred_region
        _
      $region48: #{convolution_block_forward.3} parent=43 // pred_fallthru
        _
      // Predicated region
      $region49: #{convolution_block_forward.3} parent=43 // pred_check
        %p4957 = pneg %p194
      $region50: #{convolution_block_forward.3} parent=43 // pred_check_branch
        %4959 = sbr.rel (%p4957) target = $region52
      $region51: #{convolution_block_forward.3} parent=43 // pred_region
        _
      $region52: #{convolution_block_forward.3} parent=43 // pred_fallthru
        _
    $region44: #{convolution_block_forward.3} parent=5 // pred_fallthru
      _
    %p4960 = scmp.le.s32.totalorder 2, %s14
    // Predicated region
    $region53: #{convolution_block_forward.3} parent=5 // pred_check
      %p4961 = pneg %p4960
    $region54: #{convolution_block_forward.3} parent=5 // pred_check_branch
      %4963 = sbr.rel (%p4961) target = $region56
    $region55: #{convolution_block_forward.3} parent=5 // pred_region
      %s4964 = ssub.s32 %s14, 2
      // Predicated region
      $region57: #{convolution_block_forward.3} parent=55 // pred_check
        %p4965 = pneg %p174
      $region58: #{convolution_block_forward.3} parent=55 // pred_check_branch
        %4967 = sbr.rel (%p4965) target = $region60
      $region59: #{convolution_block_forward.3} parent=55 // pred_region
        %p4968 = scmp.lt.s32.totalorder %s20, 1
        %s4969 = scalar_select %p4968, %s20, 1
        %s4970 = smul.addr %s4969, 41
        %s4971 = smul.addr %s4970, 4
        %s4972 = scalar_lea.vmem %s6, %s4971
      $region60: #{convolution_block_forward.3} parent=55 // pred_fallthru
        _
      // Predicated region
      $region61: #{convolution_block_forward.3} parent=55 // pred_check
        %p4973 = pneg %p200
      $region62: #{convolution_block_forward.3} parent=55 // pred_check_branch
        %4975 = sbr.rel (%p4973) target = $region64
      $region63: #{convolution_block_forward.3} parent=55 // pred_region
        %p4976 = scmp.lt.s32.totalorder %s20, 1
        %s4977 = scalar_select %p4976, %s20, 1
        %s4978 = smul.addr %s4977, 2
        %s4979 = scalar_lea.vmem %s7, %s4978
      $region64: #{convolution_block_forward.3} parent=55 // pred_fallthru
        _
    $region56: #{convolution_block_forward.3} parent=5 // pred_fallthru
      _
  $region6: #{convolution_block_forward.3} parent=0 // loop_footer
    %s18 = sadd.s32 1, %s14
  $region7: #{convolution_block_forward.3} parent=0 // loop_footer_branch
    %13 = sbr.rel target = $region3
  $region8: #{convolution_block_forward.3} parent=0 // loop_exit
    _

// kernel: convolution_block_forward.4
$region0: #{convolution_block_forward.4}
  #allocation0 [shape = 'u32[]', space=smem, size = 0x4, offset = 0x4, fixed_abs, tag = 'smem constant byte address 0x4 - core index']
  #allocation1 [shape = 'u32[144,128]{1,0:T(1,128)}', space=vmem, size = 0x12000, scoped, tag = 'internal scratch']
  #allocation2 [shape = 'bf16[324,128]{1,0:T(8,128)(2,1)}', space=vmem, size = 0x14800, scoped, tag = 'scratch operand']
  %s0 = inlined_call_operand.vmem [shape: bf16[2,324,128], index: 0, kind: input, shape index: {}]
  %s1 = inlined_call_operand.vmem [shape: bf16[9,128,128], index: 1, kind: input, shape index: {}]
  %s2 = inlined_call_operand.vmem [shape: f32[1,128], index: 2, kind: input, shape index: {}]
  %s3 = inlined_call_operand.vmem [shape: f32[1,128], index: 3, kind: input, shape index: {}]
  %s4 = inlined_call_operand.vmem [shape: f32[1,128], index: 4, kind: input, shape index: {}]
  %s5 = inlined_call_operand.vmem [shape: f32[286,1], index: 5, kind: input, shape index: {}]
  %s6 = inlined_call_operand.vmem [shape: bf16[2,324,128], index: 6, kind: output, shape index: {0}]
  %s7 = inlined_call_operand.vmem [shape: f32[2,2,128], index: 7, kind: output, shape index: {1}]
  %8 = xla_tuple %s6, %s7
  %s9 = sld [smem:[#allocation0]]
  $region65: #{convolution_block_forward.4} parent=0
    _
  %s11 = ssub.s32 1, %s9
  %s12 = scalar_select 0, %s11, %s9
  loop: start=0, step=1, limit=4
  $region2: #{convolution_block_forward.4} parent=0 // loop_pre_header
    _
  $region3: #{convolution_block_forward.4} parent=0 // loop_header
    %s14 = sphi 0, %s18
    %p15 = scmp.ge.s32.totalorder %s14, 4
    %s24 = sphi 0, %s26
    %s27 = sphi 0, %s24
    %s28 = sphi 0, %s27
    %s44 = sphi 0, %s28
    %s48 = sphi 0, %s48
    %s50 = sphi 0, %s48
    %s51 = sphi 0, %s50
    %s65 = sphi 0, %s51
    %s69 = sphi 0, %s69
    %s71 = sphi 0, %s69
    %s72 = sphi 0, %s71
    %s86 = sphi 0, %s72
    %s90 = sphi 0, %s90
    %s92 = sphi 0, %s90
    %s93 = sphi 0, %s92
    %s107 = sphi 0, %s93
    %s111 = sphi 0, %s111
    %s113 = sphi 0, %s111
    %s114 = sphi 0, %s113
    %s128 = sphi 0, %s114
    %s132 = sphi 0, %s132
    %s134 = sphi 0, %s132
    %s135 = sphi 0, %s134
    %s149 = sphi 0, %s135
    %s155 = sphi 0, %s157
    %s158 = sphi 0, %s155
    %s159 = sphi 0, %s158
    %s175 = sphi 0, %s159
    %s181 = sphi 0, %s183
    %s184 = sphi 0, %s181
    %s185 = sphi 0, %s184
    %s201 = sphi 0, %s185
  $region4: #{convolution_block_forward.4} parent=0 // loop_header_branch
    %17 = sbr.rel (%p15) target = $region8
  $region5: #{convolution_block_forward.4} parent=0 // loop_body
    %s19 = ssub.s32 %s14, 1
    %s20 = ssub.s32 %s14, 2
    %s21 = sadd.s32 %s14, 1
    %s22 = ssub.s32 %s14, %s21
    %p23 = scmp.eq.s32.totalorder %s22, 0
    %s25 = sadd.s32 %s24, 1
    %s26 = scalar_select %p23, %s24, %s25
    %p29 = pneg %p23
    %p30 = scmp.eq.s32.totalorder %s14, 1
    %p31 = por %p29, %p30
    %p32 = scmp.ne.s32.totalorder %s24, %s27
    %p33 = scmp.eq.s32.totalorder %s14, 0
    %p34 = por %p32, %p33
    %p35 = scmp.ne.s32.totalorder %s24, %s27
    %p36 = scmp.eq.s32.totalorder %s19, 1
    %p37 = por %p35, %p36
    %p38 = scmp.ne.s32.totalorder %s27, %s28
    %p39 = scmp.eq.s32.totalorder %s19, 0
    %p40 = por %p38, %p39
    %p41 = scmp.ne.s32.totalorder %s27, %s28
    %p42 = scmp.eq.s32.totalorder %s20, 1
    %p43 = por %p41, %p42
    %p45 = scmp.ne.s32.totalorder %s28, %s44
    %p46 = scmp.eq.s32.totalorder %s20, 0
    %p47 = por %p45, %p46
    %s49 = sadd.s32 %s48, 1
    %p52 = scmp.eq.s32.totalorder %s14, 1
    %p53 = scmp.ne.s32.totalorder %s48, %s50
    %p54 = scmp.eq.s32.totalorder %s14, 0
    %p55 = por %p53, %p54
    %p56 = scmp.ne.s32.totalorder %s48, %s50
    %p57 = scmp.eq.s32.totalorder %s19, 1
    %p58 = por %p56, %p57
    %p59 = scmp.ne.s32.totalorder %s50, %s51
    %p60 = scmp.eq.s32.totalorder %s19, 0
    %p61 = por %p59, %p60
    %p62 = scmp.ne.s32.totalorder %s50, %s51
    %p63 = scmp.eq.s32.totalorder %s20, 1
    %p64 = por %p62, %p63
    %p66 = scmp.ne.s32.totalorder %s51, %s65
    %p67 = scmp.eq.s32.totalorder %s20, 0
    %p68 = por %p66, %p67
    %s70 = sadd.s32 %s69, 1
    %p73 = scmp.eq.s32.totalorder %s14, 1
    %p74 = scmp.ne.s32.totalorder %s69, %s71
    %p75 = scmp.eq.s32.totalorder %s14, 0
    %p76 = por %p74, %p75
    %p77 = scmp.ne.s32.totalorder %s69, %s71
    %p78 = scmp.eq.s32.totalorder %s19, 1
    %p79 = por %p77, %p78
    %p80 = scmp.ne.s32.totalorder %s71, %s72
    %p81 = scmp.eq.s32.totalorder %s19, 0
    %p82 = por %p80, %p81
    %p83 = scmp.ne.s32.totalorder %s71, %s72
    %p84 = scmp.eq.s32.totalorder %s20, 1
    %p85 = por %p83, %p84
    %p87 = scmp.ne.s32.totalorder %s72, %s86
    %p88 = scmp.eq.s32.totalorder %s20, 0
    %p89 = por %p87, %p88
    %s91 = sadd.s32 %s90, 1
    %p94 = scmp.eq.s32.totalorder %s14, 1
    %p95 = scmp.ne.s32.totalorder %s90, %s92
    %p96 = scmp.eq.s32.totalorder %s14, 0
    %p97 = por %p95, %p96
    %p98 = scmp.ne.s32.totalorder %s90, %s92
    %p99 = scmp.eq.s32.totalorder %s19, 1
    %p100 = por %p98, %p99
    %p101 = scmp.ne.s32.totalorder %s92, %s93
    %p102 = scmp.eq.s32.totalorder %s19, 0
    %p103 = por %p101, %p102
    %p104 = scmp.ne.s32.totalorder %s92, %s93
    %p105 = scmp.eq.s32.totalorder %s20, 1
    %p106 = por %p104, %p105
    %p108 = scmp.ne.s32.totalorder %s93, %s107
    %p109 = scmp.eq.s32.totalorder %s20, 0
    %p110 = por %p108, %p109
    %s112 = sadd.s32 %s111, 1
    %p115 = scmp.eq.s32.totalorder %s14, 1
    %p116 = scmp.ne.s32.totalorder %s111, %s113
    %p117 = scmp.eq.s32.totalorder %s14, 0
    %p118 = por %p116, %p117
    %p119 = scmp.ne.s32.totalorder %s111, %s113
    %p120 = scmp.eq.s32.totalorder %s19, 1
    %p121 = por %p119, %p120
    %p122 = scmp.ne.s32.totalorder %s113, %s114
    %p123 = scmp.eq.s32.totalorder %s19, 0
    %p124 = por %p122, %p123
    %p125 = scmp.ne.s32.totalorder %s113, %s114
    %p126 = scmp.eq.s32.totalorder %s20, 1
    %p127 = por %p125, %p126
    %p129 = scmp.ne.s32.totalorder %s114, %s128
    %p130 = scmp.eq.s32.totalorder %s20, 0
    %p131 = por %p129, %p130
    %s133 = sadd.s32 %s132, 1
    %p136 = scmp.eq.s32.totalorder %s14, 1
    %p137 = scmp.ne.s32.totalorder %s132, %s134
    %p138 = scmp.eq.s32.totalorder %s14, 0
    %p139 = por %p137, %p138
    %p140 = scmp.ne.s32.totalorder %s132, %s134
    %p141 = scmp.eq.s32.totalorder %s19, 1
    %p142 = por %p140, %p141
    %p143 = scmp.ne.s32.totalorder %s134, %s135
    %p144 = scmp.eq.s32.totalorder %s19, 0
    %p145 = por %p143, %p144
    %p146 = scmp.ne.s32.totalorder %s134, %s135
    %p147 = scmp.eq.s32.totalorder %s20, 1
    %p148 = por %p146, %p147
    %p150 = scmp.ne.s32.totalorder %s135, %s149
    %p151 = scmp.eq.s32.totalorder %s20, 0
    %p152 = por %p150, %p151
    %s153 = ssub.s32 %s14, %s21
    %p154 = scmp.eq.s32.totalorder %s153, 0
    %s156 = sadd.s32 %s155, 1
    %s157 = scalar_select %p154, %s155, %s156
    %p160 = pneg %p154
    %p161 = scmp.eq.s32.totalorder %s14, 1
    %p162 = por %p160, %p161
    %p163 = scmp.ne.s32.totalorder %s155, %s158
    %p164 = scmp.eq.s32.totalorder %s14, 0
    %p165 = por %p163, %p164
    %p166 = scmp.ne.s32.totalorder %s155, %s158
    %p167 = scmp.eq.s32.totalorder %s19, 1
    %p168 = por %p166, %p167
    %p169 = scmp.ne.s32.totalorder %s158, %s159
    %p170 = scmp.eq.s32.totalorder %s19, 0
    %p171 = por %p169, %p170
    %p172 = scmp.ne.s32.totalorder %s158, %s159
    %p173 = scmp.eq.s32.totalorder %s20, 1
    %p174 = por %p172, %p173
    %p176 = scmp.ne.s32.totalorder %s159, %s175
    %p177 = scmp.eq.s32.totalorder %s20, 0
    %p178 = por %p176, %p177
    %s179 = ssub.s32 %s14, %s21
    %p180 = scmp.eq.s32.totalorder %s179, 0
    %s182 = sadd.s32 %s181, 1
    %s183 = scalar_select %p180, %s181, %s182
    %p186 = pneg %p180
    %p187 = scmp.eq.s32.totalorder %s14, 1
    %p188 = por %p186, %p187
    %p189 = scmp.ne.s32.totalorder %s181, %s184
    %p190 = scmp.eq.s32.totalorder %s14, 0
    %p191 = por %p189, %p190
    %p192 = scmp.ne.s32.totalorder %s181, %s184
    %p193 = scmp.eq.s32.totalorder %s19, 1
    %p194 = por %p192, %p193
    %p195 = scmp.ne.s32.totalorder %s184, %s185
    %p196 = scmp.eq.s32.totalorder %s19, 0
    %p197 = por %p195, %p196
    %p198 = scmp.ne.s32.totalorder %s184, %s185
    %p199 = scmp.eq.s32.totalorder %s20, 1
    %p200 = por %p198, %p199
    %p202 = scmp.ne.s32.totalorder %s185, %s201
    %p203 = scmp.eq.s32.totalorder %s20, 0
    %p204 = por %p202, %p203
    %p205 = scmp.le.s32.totalorder 1, %s14
    %p206 = scmp.lt.s32.totalorder %s14, 3
    %p207 = pnand %p205, %p206
    %p208 = pneg %p207
    // Predicated region
    $region9: #{convolution_block_forward.4} parent=5 // pred_check
      _
    $region10: #{convolution_block_forward.4} parent=5 // pred_check_branch
      %210 = sbr.rel (%p207) target = $region12
    $region11: #{convolution_block_forward.4} parent=5 // pred_region
      %s211 = ssub.s32 %s14, 1
      // Predicated region
      $region13: #{convolution_block_forward.4} parent=11 // pred_check
        %p212 = pneg %p61
      $region14: #{convolution_block_forward.4} parent=11 // pred_check_branch
        %214 = sbr.rel (%p212) target = $region16
      $region15: #{convolution_block_forward.4} parent=11 // pred_region
        _
      $region16: #{convolution_block_forward.4} parent=11 // pred_fallthru
        _
      // Predicated region
      $region17: #{convolution_block_forward.4} parent=11 // pred_check
        %p215 = pneg %p82
      $region18: #{convolution_block_forward.4} parent=11 // pred_check_branch
        %217 = sbr.rel (%p215) target = $region20
      $region19: #{convolution_block_forward.4} parent=11 // pred_region
        _
      $region20: #{convolution_block_forward.4} parent=11 // pred_fallthru
        _
      // Predicated region
      $region21: #{convolution_block_forward.4} parent=11 // pred_check
        %p218 = pneg %p103
      $region22: #{convolution_block_forward.4} parent=11 // pred_check_branch
        %220 = sbr.rel (%p218) target = $region24
      $region23: #{convolution_block_forward.4} parent=11 // pred_region
        _
      $region24: #{convolution_block_forward.4} parent=11 // pred_fallthru
        _
      // Predicated region
      $region25: #{convolution_block_forward.4} parent=11 // pred_check
        %p221 = pneg %p124
      $region26: #{convolution_block_forward.4} parent=11 // pred_check_branch
        %223 = sbr.rel (%p221) target = $region28
      $region27: #{convolution_block_forward.4} parent=11 // pred_region
        _
      $region28: #{convolution_block_forward.4} parent=11 // pred_fallthru
        _
      // Predicated region
      $region29: #{convolution_block_forward.4} parent=11 // pred_check
        %p224 = pneg %p145
      $region30: #{convolution_block_forward.4} parent=11 // pred_check_branch
        %226 = sbr.rel (%p224) target = $region32
      $region31: #{convolution_block_forward.4} parent=11 // pred_region
        _
      $region32: #{convolution_block_forward.4} parent=11 // pred_fallthru
        _
    $region12: #{convolution_block_forward.4} parent=5 // pred_fallthru
      _
    %p227 = scmp.lt.s32.totalorder %s14, 2
    // Predicated region
    $region33: #{convolution_block_forward.4} parent=5 // pred_check
      %p228 = pneg %p227
    $region34: #{convolution_block_forward.4} parent=5 // pred_check_branch
      %230 = sbr.rel (%p228) target = $region36
    $region35: #{convolution_block_forward.4} parent=5 // pred_region
      // Predicated region
      $region37: #{convolution_block_forward.4} parent=35 // pred_check
        %p231 = pneg %p34
      $region38: #{convolution_block_forward.4} parent=35 // pred_check_branch
        %233 = sbr.rel (%p231) target = $region40
      $region39: #{convolution_block_forward.4} parent=35 // pred_region
        %p234 = scmp.lt.s32.totalorder %s14, 1
        %s235 = scalar_select %p234, %s14, 1
        %s236 = smul.addr %s235, 41
        %s237 = smul.addr %s236, 4
        %s238 = scalar_lea.vmem %s0, %s237
      $region40: #{convolution_block_forward.4} parent=35 // pred_fallthru
        _
    $region36: #{convolution_block_forward.4} parent=5 // pred_fallthru
      _
    %p239 = scmp.le.s32.totalorder 1, %s14
    %p240 = scmp.lt.s32.totalorder %s14, 3
    %p241 = pnand %p239, %p240
    %p242 = pneg %p241
    // Predicated region
    $region41: #{convolution_block_forward.4} parent=5 // pred_check
      _
    $region42: #{convolution_block_forward.4} parent=5 // pred_check_branch
      %244 = sbr.rel (%p241) target = $region44
    $region43: #{convolution_block_forward.4} parent=5 // pred_region
      %s245 = ssub.s32 %s14, 1
      %p246 = scmp.lt.s32.totalorder %s19, 1
      %s247 = scalar_select %p246, %s19, 1
      %s248 = smul.addr %s247, 41
      %s249 = smul.addr %s248, 4
      %s250 = scalar_lea.vmem %s0, %s249
      %p251 = pneg %p40
      %p252 = pneg %p37
      %p253 = pneg %p61
      %p254 = pneg %p58
      %p255 = pneg %p82
      %p256 = pneg %p79
      %p257 = pneg %p103
      %p258 = pneg %p100
      %p259 = pneg %p124
      %p260 = pneg %p121
      %p261 = pneg %p145
      %p262 = pneg %p142
      %p263 = pneg %p171
      %p264 = pneg %p168
      %p265 = scmp.lt.s32.totalorder %s19, 1
      %s266 = scalar_select %p265, %s19, 1
      %s267 = smul.addr %s266, 41
      %s268 = smul.addr %s267, 4
      %s269 = scalar_lea.vmem %s6, %s268
      %p270 = pneg %p197
      %p271 = pneg %p194
      %p272 = scmp.lt.s32.totalorder %s19, 1
      %s273 = scalar_select %p272, %s19, 1
      %s274 = smul.addr %s273, 2
      %s275 = scalar_lea.vmem %s7, %s274
      %p276 = scmp.lt.s32.totalorder %s19, 1
      %s277 = scalar_select %p276, %s19, 1
      %s278 = smul.addr %s277, 41
      %s279 = smul.addr %s278, 4
      %s280 = scalar_lea.vmem %s0, %s279
      %p281 = scmp.lt.s32.totalorder %s19, 1
      %s282 = scalar_select %p281, %s19, 1
      %s283 = smul.addr %s282, 41
      %s284 = smul.addr %s283, 4
      %s285 = scalar_lea.vmem %s6, %s284
      %p286 = scmp.lt.s32.totalorder %s19, 1
      %s287 = scalar_select %p286, %s19, 1
      %s288 = smul.addr %s287, 2
      %s289 = scalar_lea.vmem %s7, %s288
      %v292 = vld [vmem:[%s280] sm:$0xf]
      %v293 = vld [vmem:[%s280 + $0x4] sm:$0xf]
      %v294 = vld [vmem:[%s280 + $0x8] sm:$0xf]
      %v295 = vld [vmem:[%s280 + $0xc] sm:$0xf]
      %v296 = vld [vmem:[%s280 + $0x10] sm:$0xf]
      %v297 = vld [vmem:[%s280 + $0x14] sm:$0xf]
      %v298 = vld [vmem:[%s280 + $0x18] sm:$0xf]
      %v299 = vld [vmem:[%s280 + $0x1c] sm:$0xf]
      %v300 = vld [vmem:[%s280 + $0x20] sm:$0xf]
      %v301 = vld [vmem:[%s280 + $0x24] sm:$0xf]
      %v302 = vld [vmem:[%s280 + $0x28] sm:$0xf]
      %v303 = vld [vmem:[%s280 + $0x2c] sm:$0xf]
      %v304 = vld [vmem:[%s280 + $0x30] sm:$0xf]
      %v305 = vld [vmem:[%s280 + $0x34] sm:$0xf]
      %v306 = vld [vmem:[%s280 + $0x38] sm:$0xf]
      %v307 = vld [vmem:[%s280 + $0x3c] sm:$0xf]
      %v308 = vld [vmem:[%s280 + $0x40] sm:$0xf]
      %v309 = vld [vmem:[%s280 + $0x44] sm:$0xf]
      %v310 = vld [vmem:[%s280 + $0x48] sm:$0xf]
      %v311 = vld [vmem:[%s280 + $0x4c] sm:$0xf]
      %v312 = vld [vmem:[%s280 + $0x50] sm:$0xf]
      %v313 = vld [vmem:[%s280 + $0x54] sm:$0xf]
      %v314 = vld [vmem:[%s280 + $0x58] sm:$0xf]
      %v315 = vld [vmem:[%s280 + $0x5c] sm:$0xf]
      %v316 = vld [vmem:[%s280 + $0x60] sm:$0xf]
      %v317 = vld [vmem:[%s280 + $0x64] sm:$0xf]
      %v318 = vld [vmem:[%s280 + $0x68] sm:$0xf]
      %v319 = vld [vmem:[%s280 + $0x6c] sm:$0xf]
      %v320 = vld [vmem:[%s280 + $0x70] sm:$0xf]
      %v321 = vld [vmem:[%s280 + $0x74] sm:$0xf]
      %v322 = vld [vmem:[%s280 + $0x78] sm:$0xf]
      %v323 = vld [vmem:[%s280 + $0x7c] sm:$0xf]
      %v324 = vld [vmem:[%s280 + $0x80] sm:$0xf]
      %v325 = vld [vmem:[%s280 + $0x84] sm:$0xf]
      %v326 = vld [vmem:[%s280 + $0x88] sm:$0xf]
      %v327 = vld [vmem:[%s280 + $0x8c] sm:$0xf]
      %v328 = vld [vmem:[%s280 + $0x90] sm:$0xf]
      %v329 = vld [vmem:[%s280 + $0x94] sm:$0xf]
      %v330 = vld [vmem:[%s280 + $0x98] sm:$0xf]
      %v331 = vld [vmem:[%s280 + $0x9c] sm:$0xf]
      %v332 = vld [vmem:[%s280 + $0xa0] sm:$0x3]
      %v333 = vunpack.c.l.bf16 %v292
      %v334 = vunpack.c.l.bf16 %v293
      %v335 = vunpack.c.l.bf16 %v294
      %v336 = vunpack.c.l.bf16 %v295
      %v337 = vunpack.c.l.bf16 %v296
      %v338 = vunpack.c.l.bf16 %v297
      %v339 = vunpack.c.l.bf16 %v298
      %v340 = vunpack.c.l.bf16 %v299
      %v341 = vunpack.c.l.bf16 %v300
      %v342 = vunpack.c.l.bf16 %v301
      %v343 = vunpack.c.l.bf16 %v302
      %v344 = vunpack.c.l.bf16 %v303
      %v345 = vunpack.c.l.bf16 %v304
      %v346 = vunpack.c.l.bf16 %v305
      %v347 = vunpack.c.l.bf16 %v306
      %v348 = vunpack.c.l.bf16 %v307
      %v349 = vunpack.c.l.bf16 %v308
      %v350 = vunpack.c.l.bf16 %v309
      %v351 = vunpack.c.l.bf16 %v310
      %v352 = vunpack.c.l.bf16 %v311
      %v353 = vunpack.c.l.bf16 %v312
      %v354 = vunpack.c.l.bf16 %v313
      %v355 = vunpack.c.l.bf16 %v314
      %v356 = vunpack.c.l.bf16 %v315
      %v357 = vunpack.c.l.bf16 %v316
      %v358 = vunpack.c.l.bf16 %v317
      %v359 = vunpack.c.l.bf16 %v318
      %v360 = vunpack.c.l.bf16 %v319
      %v361 = vunpack.c.l.bf16 %v320
      %v362 = vunpack.c.l.bf16 %v321
      %v363 = vunpack.c.l.bf16 %v322
      %v364 = vunpack.c.l.bf16 %v323
      %v365 = vunpack.c.l.bf16 %v324
      %v366 = vunpack.c.l.bf16 %v325
      %v367 = vunpack.c.l.bf16 %v326
      %v368 = vunpack.c.l.bf16 %v327
      %v369 = vunpack.c.l.bf16 %v328
      %v370 = vunpack.c.l.bf16 %v329
      %v371 = vunpack.c.l.bf16 %v330
      %v372 = vunpack.c.l.bf16 %v331
      %v373 = vunpack.c.l.bf16 %v332
      %v374 = vld [vmem:[%s3] sm:$0x1]
      %v376 = vlaneseq
      %v377 = vshrl.u32 %v376, 7
      %v378 = vsub.s32 0, %v377
      %v379 = vrot.slane %v374, %v378
      %v381 = vmul.f32 %v333, %v379
      %v382 = vmul.f32 %v334, %v379
      %v383 = vmul.f32 %v335, %v379
      %v384 = vmul.f32 %v336, %v379
      %v385 = vmul.f32 %v337, %v379
      %v386 = vmul.f32 %v338, %v379
      %v387 = vmul.f32 %v339, %v379
      %v388 = vmul.f32 %v340, %v379
      %v389 = vmul.f32 %v341, %v379
      %v390 = vmul.f32 %v342, %v379
      %v391 = vmul.f32 %v343, %v379
      %v392 = vmul.f32 %v344, %v379
      %v393 = vmul.f32 %v345, %v379
      %v394 = vmul.f32 %v346, %v379
      %v395 = vmul.f32 %v347, %v379
      %v396 = vmul.f32 %v348, %v379
      %v397 = vmul.f32 %v349, %v379
      %v398 = vmul.f32 %v350, %v379
      %v399 = vmul.f32 %v351, %v379
      %v400 = vmul.f32 %v352, %v379
      %v401 = vmul.f32 %v353, %v379
      %v402 = vmul.f32 %v354, %v379
      %v403 = vmul.f32 %v355, %v379
      %v404 = vmul.f32 %v356, %v379
      %v405 = vmul.f32 %v357, %v379
      %v406 = vmul.f32 %v358, %v379
      %v407 = vmul.f32 %v359, %v379
      %v408 = vmul.f32 %v360, %v379
      %v409 = vmul.f32 %v361, %v379
      %v410 = vmul.f32 %v362, %v379
      %v411 = vmul.f32 %v363, %v379
      %v412 = vmul.f32 %v364, %v379
      %v413 = vmul.f32 %v365, %v379
      %v414 = vmul.f32 %v366, %v379
      %v415 = vmul.f32 %v367, %v379
      %v416 = vmul.f32 %v368, %v379
      %v417 = vmul.f32 %v369, %v379
      %v418 = vmul.f32 %v370, %v379
      %v419 = vmul.f32 %v371, %v379
      %v420 = vmul.f32 %v372, %v379
      %v421 = vmul.f32 %v373, %v379
      %v422 = vld [vmem:[%s4] sm:$0x1]
      %v424 = vlaneseq
      %v425 = vshrl.u32 %v424, 7
      %v426 = vsub.s32 0, %v425
      %v427 = vrot.slane %v422, %v426
      %v429 = vadd.f32 %v381, %v427
      %v430 = vadd.f32 %v382, %v427
      %v431 = vadd.f32 %v383, %v427
      %v432 = vadd.f32 %v384, %v427
      %v433 = vadd.f32 %v385, %v427
      %v434 = vadd.f32 %v386, %v427
      %v435 = vadd.f32 %v387, %v427
      %v436 = vadd.f32 %v388, %v427
      %v437 = vadd.f32 %v389, %v427
      %v438 = vadd.f32 %v390, %v427
      %v439 = vadd.f32 %v391, %v427
      %v440 = vadd.f32 %v392, %v427
      %v441 = vadd.f32 %v393, %v427
      %v442 = vadd.f32 %v394, %v427
      %v443 = vadd.f32 %v395, %v427
      %v444 = vadd.f32 %v396, %v427
      %v445 = vadd.f32 %v397, %v427
      %v446 = vadd.f32 %v398, %v427
      %v447 = vadd.f32 %v399, %v427
      %v448 = vadd.f32 %v400, %v427
      %v449 = vadd.f32 %v401, %v427
      %v450 = vadd.f32 %v402, %v427
      %v451 = vadd.f32 %v403, %v427
      %v452 = vadd.f32 %v404, %v427
      %v453 = vadd.f32 %v405, %v427
      %v454 = vadd.f32 %v406, %v427
      %v455 = vadd.f32 %v407, %v427
      %v456 = vadd.f32 %v408, %v427
      %v457 = vadd.f32 %v409, %v427
      %v458 = vadd.f32 %v410, %v427
      %v459 = vadd.f32 %v411, %v427
      %v460 = vadd.f32 %v412, %v427
      %v461 = vadd.f32 %v413, %v427
      %v462 = vadd.f32 %v414, %v427
      %v463 = vadd.f32 %v415, %v427
      %v464 = vadd.f32 %v416, %v427
      %v465 = vadd.f32 %v417, %v427
      %v466 = vadd.f32 %v418, %v427
      %v467 = vadd.f32 %v419, %v427
      %v468 = vadd.f32 %v420, %v427
      %v469 = vadd.f32 %v421, %v427
      %v470 = vmax.f32 %v429, 0.0
      %v471 = vmax.f32 %v430, 0.0
      %v472 = vmax.f32 %v431, 0.0
      %v473 = vmax.f32 %v432, 0.0
      %v474 = vmax.f32 %v433, 0.0
      %v475 = vmax.f32 %v434, 0.0
      %v476 = vmax.f32 %v435, 0.0
      %v477 = vmax.f32 %v436, 0.0
      %v478 = vmax.f32 %v437, 0.0
      %v479 = vmax.f32 %v438, 0.0
      %v480 = vmax.f32 %v439, 0.0
      %v481 = vmax.f32 %v440, 0.0
      %v482 = vmax.f32 %v441, 0.0
      %v483 = vmax.f32 %v442, 0.0
      %v484 = vmax.f32 %v443, 0.0
      %v485 = vmax.f32 %v444, 0.0
      %v486 = vmax.f32 %v445, 0.0
      %v487 = vmax.f32 %v446, 0.0
      %v488 = vmax.f32 %v447, 0.0
      %v489 = vmax.f32 %v448, 0.0
      %v490 = vmax.f32 %v449, 0.0
      %v491 = vmax.f32 %v450, 0.0
      %v492 = vmax.f32 %v451, 0.0
      %v493 = vmax.f32 %v452, 0.0
      %v494 = vmax.f32 %v453, 0.0
      %v495 = vmax.f32 %v454, 0.0
      %v496 = vmax.f32 %v455, 0.0
      %v497 = vmax.f32 %v456, 0.0
      %v498 = vmax.f32 %v457, 0.0
      %v499 = vmax.f32 %v458, 0.0
      %v500 = vmax.f32 %v459, 0.0
      %v501 = vmax.f32 %v460, 0.0
      %v502 = vmax.f32 %v461, 0.0
      %v503 = vmax.f32 %v462, 0.0
      %v504 = vmax.f32 %v463, 0.0
      %v505 = vmax.f32 %v464, 0.0
      %v506 = vmax.f32 %v465, 0.0
      %v507 = vmax.f32 %v466, 0.0
      %v508 = vmax.f32 %v467, 0.0
      %v509 = vmax.f32 %v468, 0.0
      %v510 = vmax.f32 %v469, 0.0
      %v511 = vpack.c.bf16 %v471, %v470
      %v512 = vpack.c.bf16 %v473, %v472
      %v513 = vpack.c.bf16 %v475, %v474
      %v514 = vpack.c.bf16 %v477, %v476
      %v515 = vpack.c.bf16 %v479, %v478
      %v516 = vpack.c.bf16 %v481, %v480
      %v517 = vpack.c.bf16 %v483, %v482
      %v518 = vpack.c.bf16 %v485, %v484
      %v519 = vpack.c.bf16 %v487, %v486
      %v520 = vpack.c.bf16 %v489, %v488
      %v521 = vpack.c.bf16 %v491, %v490
      %v522 = vpack.c.bf16 %v493, %v492
      %v523 = vpack.c.bf16 %v495, %v494
      %v524 = vpack.c.bf16 %v497, %v496
      %v525 = vpack.c.bf16 %v499, %v498
      %v526 = vpack.c.bf16 %v501, %v500
      %v527 = vpack.c.bf16 %v503, %v502
      %v528 = vpack.c.bf16 %v505, %v504
      %v529 = vpack.c.bf16 %v507, %v506
      %v530 = vpack.c.bf16 %v509, %v508
      %v531 = vpack.c.bf16 %v510, %v510
      %v553 = vunpack.c.l.b16 %v511
      %v554 = vunpack.c.h.b16 %v511
      %v555 = vunpack.c.l.b16 %v512
      %v556 = vunpack.c.h.b16 %v512
      %v557 = vunpack.c.l.b16 %v513
      %v558 = vunpack.c.h.b16 %v513
      %v559 = vunpack.c.l.b16 %v514
      %v560 = vunpack.c.h.b16 %v514
      %v561 = vunpack.c.l.b16 %v515
      %v562 = vunpack.c.h.b16 %v515
      %v563 = vunpack.c.l.b16 %v516
      %v564 = vunpack.c.h.b16 %v516
      %v565 = vunpack.c.l.b16 %v517
      %v566 = vunpack.c.h.b16 %v517
      %v567 = vunpack.c.l.b16 %v518
      %v568 = vunpack.c.h.b16 %v518
      %v569 = vunpack.c.l.b16 %v519
      %v570 = vunpack.c.h.b16 %v519
      %v571 = vunpack.c.l.b16 %v520
      %v572 = vunpack.c.h.b16 %v520
      %v573 = vunpack.c.l.b16 %v521
      %v574 = vunpack.c.h.b16 %v521
      %v575 = vunpack.c.l.b16 %v522
      %v576 = vunpack.c.h.b16 %v522
      %v577 = vunpack.c.l.b16 %v523
      %v578 = vunpack.c.h.b16 %v523
      %v579 = vunpack.c.l.b16 %v524
      %v580 = vunpack.c.h.b16 %v524
      %v581 = vunpack.c.l.b16 %v525
      %v582 = vunpack.c.h.b16 %v525
      %v583 = vunpack.c.l.b16 %v526
      %v584 = vunpack.c.h.b16 %v526
      %v585 = vunpack.c.l.b16 %v527
      %v586 = vunpack.c.h.b16 %v527
      %v587 = vunpack.c.l.b16 %v528
      %v588 = vunpack.c.h.b16 %v528
      %v589 = vunpack.c.l.b16 %v529
      %v590 = vunpack.c.h.b16 %v529
      %v591 = vunpack.c.l.b16 %v530
      %v592 = vunpack.c.h.b16 %v530
      %v593 = vunpack.c.l.b16 %v531
      %v594 = vpack.c.b16 %v553, %v553
      %v595 = vpack.c.b16 %v554, %v554
      %v596 = vpack.c.b16 %v555, %v555
      %v597 = vpack.c.b16 %v556, %v556
      %v598 = vpack.c.b16 %v557, %v557
      %v599 = vpack.c.b16 %v558, %v558
      %v600 = vpack.c.b16 %v559, %v559
      %v601 = vpack.c.b16 %v560, %v560
      %v602 = vpack.c.b16 %v561, %v561
      %v603 = vpack.c.b16 %v562, %v562
      %v604 = vpack.c.b16 %v563, %v563
      %v605 = vpack.c.b16 %v564, %v564
      %v606 = vpack.c.b16 %v565, %v565
      %v607 = vpack.c.b16 %v566, %v566
      %v608 = vpack.c.b16 %v567, %v567
      %v609 = vpack.c.b16 %v568, %v568
      %v610 = vpack.c.b16 %v569, %v569
      %v611 = vpack.c.b16 %v570, %v570
      %v612 = vpack.c.b16 %v571, %v571
      %v613 = vpack.c.b16 %v572, %v572
      %v614 = vpack.c.b16 %v573, %v573
      %v615 = vpack.c.b16 %v574, %v574
      %v616 = vpack.c.b16 %v575, %v575
      %v617 = vpack.c.b16 %v576, %v576
      %v618 = vpack.c.b16 %v577, %v577
      %v619 = vpack.c.b16 %v578, %v578
      %v620 = vpack.c.b16 %v579, %v579
      %v621 = vpack.c.b16 %v580, %v580
      %v622 = vpack.c.b16 %v581, %v581
      %v623 = vpack.c.b16 %v582, %v582
      %v624 = vpack.c.b16 %v583, %v583
      %v625 = vpack.c.b16 %v584, %v584
      %v626 = vpack.c.b16 %v585, %v585
      %v627 = vpack.c.b16 %v586, %v586
      %v628 = vpack.c.b16 %v587, %v587
      %v629 = vpack.c.b16 %v588, %v588
      %v630 = vpack.c.b16 %v589, %v589
      %v631 = vpack.c.b16 %v590, %v590
      %v632 = vpack.c.b16 %v591, %v591
      %v633 = vpack.c.b16 %v592, %v592
      %v634 = vpack.c.b16 %v593, %v593
      %676 = vst [vmem:[#allocation2] sm:$0xf] %v594
      %677 = vst [vmem:[#allocation2 + $0x4] sm:$0xf] %v595
      %678 = vst [vmem:[#allocation2 + $0x8] sm:$0xf] %v596
      %679 = vst [vmem:[#allocation2 + $0xc] sm:$0xf] %v597
      %680 = vst [vmem:[#allocation2 + $0x10] sm:$0xf] %v598
      %681 = vst [vmem:[#allocation2 + $0x14] sm:$0xf] %v599
      %682 = vst [vmem:[#allocation2 + $0x18] sm:$0xf] %v600
      %683 = vst [vmem:[#allocation2 + $0x1c] sm:$0xf] %v601
      %684 = vst [vmem:[#allocation2 + $0x20] sm:$0xf] %v602
      %685 = vst [vmem:[#allocation2 + $0x24] sm:$0xf] %v603
      %686 = vst [vmem:[#allocation2 + $0x28] sm:$0xf] %v604
      %687 = vst [vmem:[#allocation2 + $0x2c] sm:$0xf] %v605
      %688 = vst [vmem:[#allocation2 + $0x30] sm:$0xf] %v606
      %689 = vst [vmem:[#allocation2 + $0x34] sm:$0xf] %v607
      %690 = vst [vmem:[#allocation2 + $0x38] sm:$0xf] %v608
      %691 = vst [vmem:[#allocation2 + $0x3c] sm:$0xf] %v609
      %692 = vst [vmem:[#allocation2 + $0x40] sm:$0xf] %v610
      %693 = vst [vmem:[#allocation2 + $0x44] sm:$0xf] %v611
      %694 = vst [vmem:[#allocation2 + $0x48] sm:$0xf] %v612
      %695 = vst [vmem:[#allocation2 + $0x4c] sm:$0xf] %v613
      %696 = vst [vmem:[#allocation2 + $0x50] sm:$0xf] %v614
      %697 = vst [vmem:[#allocation2 + $0x54] sm:$0xf] %v615
      %698 = vst [vmem:[#allocation2 + $0x58] sm:$0xf] %v616
      %699 = vst [vmem:[#allocation2 + $0x5c] sm:$0xf] %v617
      %700 = vst [vmem:[#allocation2 + $0x60] sm:$0xf] %v618
      %701 = vst [vmem:[#allocation2 + $0x64] sm:$0xf] %v619
      %702 = vst [vmem:[#allocation2 + $0x68] sm:$0xf] %v620
      %703 = vst [vmem:[#allocation2 + $0x6c] sm:$0xf] %v621
      %704 = vst [vmem:[#allocation2 + $0x70] sm:$0xf] %v622
      %705 = vst [vmem:[#allocation2 + $0x74] sm:$0xf] %v623
      %706 = vst [vmem:[#allocation2 + $0x78] sm:$0xf] %v624
      %707 = vst [vmem:[#allocation2 + $0x7c] sm:$0xf] %v625
      %708 = vst [vmem:[#allocation2 + $0x80] sm:$0xf] %v626
      %709 = vst [vmem:[#allocation2 + $0x84] sm:$0xf] %v627
      %710 = vst [vmem:[#allocation2 + $0x88] sm:$0xf] %v628
      %711 = vst [vmem:[#allocation2 + $0x8c] sm:$0xf] %v629
      %712 = vst [vmem:[#allocation2 + $0x90] sm:$0xf] %v630
      %713 = vst [vmem:[#allocation2 + $0x94] sm:$0xf] %v631
      %714 = vst [vmem:[#allocation2 + $0x98] sm:$0xf] %v632
      %715 = vst [vmem:[#allocation2 + $0x9c] sm:$0xf] %v633
      %716 = vst [vmem:[#allocation2 + $0xa0] sm:$0x3] %v634
      %v717 = vld [vmem:[%s2] sm:$0x1]
      %v719 = vlaneseq
      %v720 = vshrl.u32 %v719, 7
      %v721 = vsub.s32 0, %v720
      %v722 = vrot.slane %v717, %v721
      %v724 = vld [vmem:[#allocation2] sm:$0xf]
      %v725 = vld [vmem:[#allocation2 + $0x4] sm:$0xf]
      %v726 = vld [vmem:[#allocation2 + $0x8] sm:$0xf]
      %v727 = vld [vmem:[#allocation2 + $0xc] sm:$0xf]
      %v728 = vld [vmem:[#allocation2 + $0x10] sm:$0xf]
      %v729 = vld [vmem:[#allocation2 + $0x14] sm:$0xf]
      %v730 = vld [vmem:[#allocation2 + $0x18] sm:$0xf]
      %v731 = vld [vmem:[#allocation2 + $0x1c] sm:$0xf]
      %v732 = vld [vmem:[#allocation2 + $0x20] sm:$0xf]
      %v733 = vld [vmem:[#allocation2 + $0x24] sm:$0xf]
      %v734 = vld [vmem:[#allocation2 + $0x28] sm:$0xf]
      %v735 = vld [vmem:[#allocation2 + $0x2c] sm:$0xf]
      %v736 = vld [vmem:[#allocation2 + $0x30] sm:$0xf]
      %v737 = vld [vmem:[#allocation2 + $0x34] sm:$0xf]
      %v738 = vld [vmem:[#allocation2 + $0x38] sm:$0xf]
      %v739 = vld [vmem:[#allocation2 + $0x3c] sm:$0xf]
      %v740 = vld [vmem:[#allocation2 + $0x40] sm:$0xf]
      %v741 = vld [vmem:[#allocation2 + $0x44] sm:$0xf]
      %v742 = vld [vmem:[#allocation2 + $0x48] sm:$0xf]
      %v743 = vld [vmem:[#allocation2 + $0x4c] sm:$0xf]
      %v744 = vld [vmem:[#allocation2 + $0x50] sm:$0xf]
      %v745 = vld [vmem:[#allocation2 + $0x54] sm:$0xf]
      %v746 = vld [vmem:[#allocation2 + $0x58] sm:$0xf]
      %v747 = vld [vmem:[#allocation2 + $0x5c] sm:$0xf]
      %v748 = vld [vmem:[#allocation2 + $0x60] sm:$0xf]
      %v749 = vld [vmem:[#allocation2 + $0x64] sm:$0xf]
      %v750 = vld [vmem:[#allocation2 + $0x68] sm:$0xf]
      %v751 = vld [vmem:[#allocation2 + $0x6c] sm:$0xf]
      %v752 = vld [vmem:[#allocation2 + $0x70] sm:$0xf]
      %v753 = vld [vmem:[#allocation2 + $0x74] sm:$0xf]
      %v754 = vld [vmem:[#allocation2 + $0x78] sm:$0xf]
      %v755 = vld [vmem:[#allocation2 + $0x7c] sm:$0xf]
      %v756 = vld [vmem:[#allocation2 + $0x80] sm:$0xf]
      %v757 = vld [vmem:[#allocation2 + $0x84] sm:$0xf]
      %v758 = vld [vmem:[#allocation2 + $0x88] sm:$0xf]
      %v759 = vld [vmem:[#allocation2 + $0x8c] sm:$0x7]
      %v760 = vld [vmem:[%s1] sm:$0xf]
      %v761 = vld [vmem:[%s1 + $0x4] sm:$0xf]
      %v762 = vld [vmem:[%s1 + $0x8] sm:$0xf]
      %v763 = vld [vmem:[%s1 + $0xc] sm:$0xf]
      %v764 = vld [vmem:[%s1 + $0x10] sm:$0xf]
      %v765 = vld [vmem:[%s1 + $0x14] sm:$0xf]
      %v766 = vld [vmem:[%s1 + $0x18] sm:$0xf]
      %v767 = vld [vmem:[%s1 + $0x1c] sm:$0xf]
      %v768 = vld [vmem:[%s1 + $0x20] sm:$0xf]
      %v769 = vld [vmem:[%s1 + $0x24] sm:$0xf]
      %v770 = vld [vmem:[%s1 + $0x28] sm:$0xf]
      %v771 = vld [vmem:[%s1 + $0x2c] sm:$0xf]
      %v772 = vld [vmem:[%s1 + $0x30] sm:$0xf]
      %v773 = vld [vmem:[%s1 + $0x34] sm:$0xf]
      %v774 = vld [vmem:[%s1 + $0x38] sm:$0xf]
      %v775 = vld [vmem:[%s1 + $0x3c] sm:$0xf]
      %v812 = vunpack.c.l.b16 %v724
      %v813 = vunpack.c.l.b16 %v725
      %v814 = vunpack.c.l.b16 %v726
      %v815 = vunpack.c.l.b16 %v727
      %v816 = vunpack.c.l.b16 %v728
      %v817 = vunpack.c.l.b16 %v729
      %v818 = vunpack.c.l.b16 %v730
      %v819 = vunpack.c.l.b16 %v731
      %v820 = vunpack.c.l.b16 %v732
      %v821 = vunpack.c.l.b16 %v733
      %v822 = vunpack.c.l.b16 %v734
      %v823 = vunpack.c.l.b16 %v735
      %v824 = vunpack.c.l.b16 %v736
      %v825 = vunpack.c.l.b16 %v737
      %v826 = vunpack.c.l.b16 %v738
      %v827 = vunpack.c.l.b16 %v739
      %v828 = vunpack.c.l.b16 %v740
      %v829 = vunpack.c.l.b16 %v741
      %v830 = vunpack.c.l.b16 %v742
      %v831 = vunpack.c.l.b16 %v743
      %v832 = vunpack.c.l.b16 %v744
      %v833 = vunpack.c.l.b16 %v745
      %v834 = vunpack.c.l.b16 %v746
      %v835 = vunpack.c.l.b16 %v747
      %v836 = vunpack.c.l.b16 %v748
      %v837 = vunpack.c.l.b16 %v749
      %v838 = vunpack.c.l.b16 %v750
      %v839 = vunpack.c.l.b16 %v751
      %v840 = vunpack.c.l.b16 %v752
      %v841 = vunpack.c.l.b16 %v753
      %v842 = vunpack.c.l.b16 %v754
      %v843 = vunpack.c.l.b16 %v755
      %v844 = vunpack.c.l.b16 %v756
      %v845 = vunpack.c.l.b16 %v757
      %v846 = vunpack.c.l.b16 %v758
      %v847 = vunpack.c.l.b16 %v759
      %v848 = vpack.c.b16 %v813, %v812
      %v849 = vpack.c.b16 %v815, %v814
      %v850 = vpack.c.b16 %v817, %v816
      %v851 = vpack.c.b16 %v819, %v818
      %v852 = vpack.c.b16 %v821, %v820
      %v853 = vpack.c.b16 %v823, %v822
      %v854 = vpack.c.b16 %v825, %v824
      %v855 = vpack.c.b16 %v827, %v826
      %v856 = vpack.c.b16 %v829, %v828
      %v857 = vpack.c.b16 %v831, %v830
      %v858 = vpack.c.b16 %v833, %v832
      %v859 = vpack.c.b16 %v835, %v834
      %v860 = vpack.c.b16 %v837, %v836
      %v861 = vpack.c.b16 %v839, %v838
      %v862 = vpack.c.b16 %v841, %v840
      %v863 = vpack.c.b16 %v843, %v842
      %v864 = vpack.c.b16 %v845, %v844
      %v865 = vpack.c.b16 %v847, %v846
      %v900 = vunpack.c.l.b16 %v760
      %v901 = vunpack.c.l.b16 %v761
      %v902 = vunpack.c.l.b16 %v762
      %v903 = vunpack.c.l.b16 %v763
      %v904 = vunpack.c.l.b16 %v764
      %v905 = vunpack.c.l.b16 %v765
      %v906 = vunpack.c.l.b16 %v766
      %v907 = vunpack.c.l.b16 %v767
      %v908 = vunpack.c.l.b16 %v768
      %v909 = vunpack.c.l.b16 %v769
      %v910 = vunpack.c.l.b16 %v770
      %v911 = vunpack.c.l.b16 %v771
      %v912 = vunpack.c.l.b16 %v772
      %v913 = vunpack.c.l.b16 %v773
      %v914 = vunpack.c.l.b16 %v774
      %v915 = vunpack.c.l.b16 %v775
      %v916 = vpack.c.b16 %v901, %v900
      %v917 = vpack.c.b16 %v903, %v902
      %v918 = vpack.c.b16 %v905, %v904
      %v919 = vpack.c.b16 %v907, %v906
      %v920 = vpack.c.b16 %v909, %v908
      %v921 = vpack.c.b16 %v911, %v910
      %v922 = vpack.c.b16 %v913, %v912
      %v923 = vpack.c.b16 %v915, %v914
      %932 = vmatprep.subr.bf16.mxu0 0
      %933 = vmatpush1.bf16.msra.mxu0 %v923
      %934 = vmatprep.subr.bf16.mxu0 0
      %935 = vmatpush1.bf16.msra.mxu0 %v922
      %936 = vmatprep.subr.bf16.mxu0 0
      %937 = vmatpush1.bf16.msra.mxu0 %v921
      %938 = vmatprep.subr.bf16.mxu0 0
      %939 = vmatpush1.bf16.msra.mxu0 %v920
      %940 = vmatprep.subr.bf16.mxu0 0
      %941 = vmatpush1.bf16.msra.mxu0 %v919
      %942 = vmatprep.subr.bf16.mxu0 0
      %943 = vmatpush1.bf16.msra.mxu0 %v918
      %944 = vmatprep.subr.bf16.mxu0 0
      %945 = vmatpush1.bf16.msra.mxu0 %v917
      %946 = vmatprep.subr.bf16.mxu0 0
      %947 = vmatpush1.bf16.msra.mxu0 %v916
      %948 = vmatprep.subr.bf16.mxu0 0
      %949 = vmatpush2.bf16.msra.mxu0 0
      %950 = vmatprep.subr.bf16.mxu0 0
      %951 = vmatpush2.bf16.msra.mxu0 0
      %952 = vmatprep.subr.bf16.mxu0 0
      %953 = vmatpush2.bf16.msra.mxu0 0
      %954 = vmatprep.subr.bf16.mxu0 0
      %955 = vmatpush2.bf16.msra.mxu0 0
      %956 = vmatprep.subr.bf16.mxu0 0
      %957 = vmatpush2.bf16.msra.mxu0 0
      %958 = vmatprep.subr.bf16.mxu0 0
      %959 = vmatpush2.bf16.msra.mxu0 0
      %960 = vmatprep.subr.bf16.mxu0 0
      %961 = vmatpush2.bf16.msra.mxu0 0
      %962 = vmatprep.subr.bf16.mxu0 0
      %963 = vmatpush2.bf16.msra.mxu0 0
      %964 = vmatprep.mubr.bf16.mxu0 0
      %965 = vmatmul.mubr.bf16.gmra.mxu0 %v848
      %v966 = vpop.f32.mrf.mxu0
      %v967 = vadd.f32 0.0, %v966
      %v968 = vpop.f32.mrf.mxu0
      %v969 = vpop.f32.mrf.mxu0
      %v970 = vadd.f32 0.0, %v969
      %v971 = vpop.f32.mrf.mxu0
      %972 = vmatprep.mubr.bf16.mxu0 0
      %973 = vmatmul.mubr.bf16.gmra.mxu0 %v849
      %v974 = vpop.f32.mrf.mxu0
      %v975 = vadd.f32 0.0, %v974
      %v976 = vpop.f32.mrf.mxu0
      %v977 = vpop.f32.mrf.mxu0
      %v978 = vadd.f32 0.0, %v977
      %v979 = vpop.f32.mrf.mxu0
      %980 = vmatprep.mubr.bf16.mxu0 0
      %981 = vmatmul.mubr.bf16.gmra.mxu0 %v850
      %v982 = vpop.f32.mrf.mxu0
      %v983 = vadd.f32 0.0, %v982
      %v984 = vpop.f32.mrf.mxu0
      %v985 = vpop.f32.mrf.mxu0
      %v986 = vadd.f32 0.0, %v985
      %v987 = vpop.f32.mrf.mxu0
      %988 = vmatprep.mubr.bf16.mxu0 0
      %989 = vmatmul.mubr.bf16.gmra.mxu0 %v851
      %v990 = vpop.f32.mrf.mxu0
      %v991 = vadd.f32 0.0, %v990
      %v992 = vpop.f32.mrf.mxu0
      %v993 = vpop.f32.mrf.mxu0
      %v994 = vadd.f32 0.0, %v993
      %v995 = vpop.f32.mrf.mxu0
      %996 = vmatprep.mubr.bf16.mxu0 0
      %997 = vmatmul.mubr.bf16.gmra.mxu0 %v852
      %v998 = vpop.f32.mrf.mxu0
      %v999 = vadd.f32 0.0, %v998
      %v1000 = vpop.f32.mrf.mxu0
      %v1001 = vpop.f32.mrf.mxu0
      %v1002 = vadd.f32 0.0, %v1001
      %v1003 = vpop.f32.mrf.mxu0
      %1004 = vmatprep.mubr.bf16.mxu0 0
      %1005 = vmatmul.mubr.bf16.gmra.mxu0 %v853
      %v1006 = vpop.f32.mrf.mxu0
      %v1007 = vadd.f32 0.0, %v1006
      %v1008 = vpop.f32.mrf.mxu0
      %v1009 = vpop.f32.mrf.mxu0
      %v1010 = vadd.f32 0.0, %v1009
      %v1011 = vpop.f32.mrf.mxu0
      %1012 = vmatprep.mubr.bf16.mxu0 0
      %1013 = vmatmul.mubr.bf16.gmra.mxu0 %v854
      %v1014 = vpop.f32.mrf.mxu0
      %v1015 = vadd.f32 0.0, %v1014
      %v1016 = vpop.f32.mrf.mxu0
      %v1017 = vpop.f32.mrf.mxu0
      %v1018 = vadd.f32 0.0, %v1017
      %v1019 = vpop.f32.mrf.mxu0
      %1020 = vmatprep.mubr.bf16.mxu0 0
      %1021 = vmatmul.mubr.bf16.gmra.mxu0 %v855
      %v1022 = vpop.f32.mrf.mxu0
      %v1023 = vadd.f32 0.0, %v1022
      %v1024 = vpop.f32.mrf.mxu0
      %v1025 = vpop.f32.mrf.mxu0
      %v1026 = vadd.f32 0.0, %v1025
      %v1027 = vpop.f32.mrf.mxu0
      %1028 = vmatprep.mubr.bf16.mxu0 0
      %1029 = vmatmul.mubr.bf16.gmra.mxu0 %v856
      %v1030 = vpop.f32.mrf.mxu0
      %v1031 = vadd.f32 0.0, %v1030
      %v1032 = vpop.f32.mrf.mxu0
      %v1033 = vpop.f32.mrf.mxu0
      %v1034 = vadd.f32 0.0, %v1033
      %v1035 = vpop.f32.mrf.mxu0
      %1036 = vmatprep.mubr.bf16.mxu0 0
      %1037 = vmatmul.mubr.bf16.gmra.mxu0 %v857
      %v1038 = vpop.f32.mrf.mxu0
      %v1039 = vadd.f32 0.0, %v1038
      %v1040 = vpop.f32.mrf.mxu0
      %v1041 = vpop.f32.mrf.mxu0
      %v1042 = vadd.f32 0.0, %v1041
      %v1043 = vpop.f32.mrf.mxu0
      %1044 = vmatprep.mubr.bf16.mxu0 0
      %1045 = vmatmul.mubr.bf16.gmra.mxu0 %v858
      %v1046 = vpop.f32.mrf.mxu0
      %v1047 = vadd.f32 0.0, %v1046
      %v1048 = vpop.f32.mrf.mxu0
      %v1049 = vpop.f32.mrf.mxu0
      %v1050 = vadd.f32 0.0, %v1049
      %v1051 = vpop.f32.mrf.mxu0
      %1052 = vmatprep.mubr.bf16.mxu0 0
      %1053 = vmatmul.mubr.bf16.gmra.mxu0 %v859
      %v1054 = vpop.f32.mrf.mxu0
      %v1055 = vadd.f32 0.0, %v1054
      %v1056 = vpop.f32.mrf.mxu0
      %v1057 = vpop.f32.mrf.mxu0
      %v1058 = vadd.f32 0.0, %v1057
      %v1059 = vpop.f32.mrf.mxu0
      %1060 = vmatprep.mubr.bf16.mxu0 0
      %1061 = vmatmul.mubr.bf16.gmra.mxu0 %v860
      %v1062 = vpop.f32.mrf.mxu0
      %v1063 = vadd.f32 0.0, %v1062
      %v1064 = vpop.f32.mrf.mxu0
      %v1065 = vpop.f32.mrf.mxu0
      %v1066 = vadd.f32 0.0, %v1065
      %v1067 = vpop.f32.mrf.mxu0
      %1068 = vmatprep.mubr.bf16.mxu0 0
      %1069 = vmatmul.mubr.bf16.gmra.mxu0 %v861
      %v1070 = vpop.f32.mrf.mxu0
      %v1071 = vadd.f32 0.0, %v1070
      %v1072 = vpop.f32.mrf.mxu0
      %v1073 = vpop.f32.mrf.mxu0
      %v1074 = vadd.f32 0.0, %v1073
      %v1075 = vpop.f32.mrf.mxu0
      %1076 = vmatprep.mubr.bf16.mxu0 0
      %1077 = vmatmul.mubr.bf16.gmra.mxu0 %v862
      %v1078 = vpop.f32.mrf.mxu0
      %v1079 = vadd.f32 0.0, %v1078
      %v1080 = vpop.f32.mrf.mxu0
      %v1081 = vpop.f32.mrf.mxu0
      %v1082 = vadd.f32 0.0, %v1081
      %v1083 = vpop.f32.mrf.mxu0
      %1084 = vmatprep.mubr.bf16.mxu0 0
      %1085 = vmatmul.mubr.bf16.gmra.mxu0 %v863
      %v1086 = vpop.f32.mrf.mxu0
      %v1087 = vadd.f32 0.0, %v1086
      %v1088 = vpop.f32.mrf.mxu0
      %v1089 = vpop.f32.mrf.mxu0
      %v1090 = vadd.f32 0.0, %v1089
      %v1091 = vpop.f32.mrf.mxu0
      %1092 = vmatprep.mubr.bf16.mxu0 0
      %1093 = vmatmul.mubr.bf16.gmra.mxu0 %v864
      %v1094 = vpop.f32.mrf.mxu0
      %v1095 = vadd.f32 0.0, %v1094
      %v1096 = vpop.f32.mrf.mxu0
      %v1097 = vpop.f32.mrf.mxu0
      %v1098 = vadd.f32 0.0, %v1097
      %v1099 = vpop.f32.mrf.mxu0
      %1100 = vmatprep.mubr.bf16.mxu0 0
      %1101 = vmatmul.mubr.bf16.gmra.mxu0 %v865
      %v1102 = vpop.f32.mrf.mxu0
      %v1103 = vadd.f32 0.0, %v1102
      %v1104 = vpop.f32.mrf.mxu0
      %v1105 = vpop.f32.mrf.mxu0
      %v1106 = vadd.f32 0.0, %v1105
      %v1107 = vpop.f32.mrf.mxu0
      %1108 = vdwg.mxu0
      %v1109 = vadd.f32 %v722, %v967
      %v1110 = vadd.f32 %v722, %v970
      %v1111 = vadd.f32 %v722, %v975
      %v1112 = vadd.f32 %v722, %v978
      %v1113 = vadd.f32 %v722, %v983
      %v1114 = vadd.f32 %v722, %v986
      %v1115 = vadd.f32 %v722, %v991
      %v1116 = vadd.f32 %v722, %v994
      %v1117 = vadd.f32 %v722, %v999
      %v1118 = vadd.f32 %v722, %v1002
      %v1119 = vadd.f32 %v722, %v1007
      %v1120 = vadd.f32 %v722, %v1010
      %v1121 = vadd.f32 %v722, %v1015
      %v1122 = vadd.f32 %v722, %v1018
      %v1123 = vadd.f32 %v722, %v1023
      %v1124 = vadd.f32 %v722, %v1026
      %v1125 = vadd.f32 %v722, %v1031
      %v1126 = vadd.f32 %v722, %v1034
      %v1127 = vadd.f32 %v722, %v1039
      %v1128 = vadd.f32 %v722, %v1042
      %v1129 = vadd.f32 %v722, %v1047
      %v1130 = vadd.f32 %v722, %v1050
      %v1131 = vadd.f32 %v722, %v1055
      %v1132 = vadd.f32 %v722, %v1058
      %v1133 = vadd.f32 %v722, %v1063
      %v1134 = vadd.f32 %v722, %v1066
      %v1135 = vadd.f32 %v722, %v1071
      %v1136 = vadd.f32 %v722, %v1074
      %v1137 = vadd.f32 %v722, %v1079
      %v1138 = vadd.f32 %v722, %v1082
      %v1139 = vadd.f32 %v722, %v1087
      %v1140 = vadd.f32 %v722, %v1090
      %v1141 = vadd.f32 %v722, %v1095
      %v1142 = vadd.f32 %v722, %v1098
      %v1143 = vadd.f32 %v722, %v1103
      %v1144 = vadd.f32 %v722, %v1106
      %v1145 = vld [vmem:[#allocation2 + $0x8c] sm:$0xf]
      %s1146 = scalar_lea.vmem %s1, 64
      %v1147 = vld [vmem:[%s1146] sm:$0xf]
      %v1148 = vld [vmem:[%s1146 + $0x4] sm:$0xf]
      %v1149 = vld [vmem:[%s1146 + $0x8] sm:$0xf]
      %v1150 = vld [vmem:[%s1146 + $0xc] sm:$0xf]
      %v1151 = vld [vmem:[%s1146 + $0x10] sm:$0xf]
      %v1152 = vld [vmem:[%s1146 + $0x14] sm:$0xf]
      %v1153 = vld [vmem:[%s1146 + $0x18] sm:$0xf]
      %v1154 = vld [vmem:[%s1146 + $0x1c] sm:$0xf]
      %v1155 = vld [vmem:[%s1146 + $0x20] sm:$0xf]
      %v1156 = vld [vmem:[%s1146 + $0x24] sm:$0xf]
      %v1157 = vld [vmem:[%s1146 + $0x28] sm:$0xf]
      %v1158 = vld [vmem:[%s1146 + $0x2c] sm:$0xf]
      %v1159 = vld [vmem:[%s1146 + $0x30] sm:$0xf]
      %v1160 = vld [vmem:[%s1146 + $0x34] sm:$0xf]
      %v1161 = vld [vmem:[%s1146 + $0x38] sm:$0xf]
      %v1162 = vld [vmem:[%s1146 + $0x3c] sm:$0xf]
      %v1164 = vunpack.c.l.b16 %v1145
      %v1165 = vpack.c.b16 %v1164, %v846
      %vm1166 = vsmask.f32 7424
      %v1168 = vshrl.u32 %v848, 16
      %v1170 = vshll.u32 %v848, 16
      %v1172 = vrot.slane %v1170, 1
      %v1173 = vor.u32 %v1168, %v1172
      %v1175 = vshll.u32 %v849, 16
      %v1177 = vrot.slane %v1175, 1
      %v1178 = vsel %vm1166, %v1173, %v1177
      %v1179 = vshrl.u32 %v849, 16
      %v1181 = vor.u32 %v1179, %v1177
      %v1183 = vshll.u32 %v850, 16
      %v1185 = vrot.slane %v1183, 1
      %v1186 = vsel %vm1166, %v1181, %v1185
      %v1187 = vshrl.u32 %v850, 16
      %v1189 = vor.u32 %v1187, %v1185
      %v1191 = vshll.u32 %v851, 16
      %v1193 = vrot.slane %v1191, 1
      %v1194 = vsel %vm1166, %v1189, %v1193
      %v1195 = vshrl.u32 %v851, 16
      %v1197 = vor.u32 %v1195, %v1193
      %v1199 = vshll.u32 %v852, 16
      %v1201 = vrot.slane %v1199, 1
      %v1202 = vsel %vm1166, %v1197, %v1201
      %v1203 = vshrl.u32 %v852, 16
      %v1205 = vor.u32 %v1203, %v1201
      %v1207 = vshll.u32 %v853, 16
      %v1209 = vrot.slane %v1207, 1
      %v1210 = vsel %vm1166, %v1205, %v1209
      %v1211 = vshrl.u32 %v853, 16
      %v1213 = vor.u32 %v1211, %v1209
      %v1215 = vshll.u32 %v854, 16
      %v1217 = vrot.slane %v1215, 1
      %v1218 = vsel %vm1166, %v1213, %v1217
      %v1219 = vshrl.u32 %v854, 16
      %v1221 = vor.u32 %v1219, %v1217
      %v1223 = vshll.u32 %v855, 16
      %v1225 = vrot.slane %v1223, 1
      %v1226 = vsel %vm1166, %v1221, %v1225
      %v1227 = vshrl.u32 %v855, 16
      %v1229 = vor.u32 %v1227, %v1225
      %v1231 = vshll.u32 %v856, 16
      %v1233 = vrot.slane %v1231, 1
      %v1234 = vsel %vm1166, %v1229, %v1233
      %v1235 = vshrl.u32 %v856, 16
      %v1237 = vor.u32 %v1235, %v1233
      %v1239 = vshll.u32 %v857, 16
      %v1241 = vrot.slane %v1239, 1
      %v1242 = vsel %vm1166, %v1237, %v1241
      %v1243 = vshrl.u32 %v857, 16
      %v1245 = vor.u32 %v1243, %v1241
      %v1247 = vshll.u32 %v858, 16
      %v1249 = vrot.slane %v1247, 1
      %v1250 = vsel %vm1166, %v1245, %v1249
      %v1251 = vshrl.u32 %v858, 16
      %v1253 = vor.u32 %v1251, %v1249
      %v1255 = vshll.u32 %v859, 16
      %v1257 = vrot.slane %v1255, 1
      %v1258 = vsel %vm1166, %v1253, %v1257
      %v1259 = vshrl.u32 %v859, 16
      %v1261 = vor.u32 %v1259, %v1257
      %v1263 = vshll.u32 %v860, 16
      %v1265 = vrot.slane %v1263, 1
      %v1266 = vsel %vm1166, %v1261, %v1265
      %v1267 = vshrl.u32 %v860, 16
      %v1269 = vor.u32 %v1267, %v1265
      %v1271 = vshll.u32 %v861, 16
      %v1273 = vrot.slane %v1271, 1
      %v1274 = vsel %vm1166, %v1269, %v1273
      %v1275 = vshrl.u32 %v861, 16
      %v1277 = vor.u32 %v1275, %v1273
      %v1279 = vshll.u32 %v862, 16
      %v1281 = vrot.slane %v1279, 1
      %v1282 = vsel %vm1166, %v1277, %v1281
      %v1283 = vshrl.u32 %v862, 16
      %v1285 = vor.u32 %v1283, %v1281
      %v1287 = vshll.u32 %v863, 16
      %v1289 = vrot.slane %v1287, 1
      %v1290 = vsel %vm1166, %v1285, %v1289
      %v1291 = vshrl.u32 %v863, 16
      %v1293 = vor.u32 %v1291, %v1289
      %v1295 = vshll.u32 %v864, 16
      %v1297 = vrot.slane %v1295, 1
      %v1298 = vsel %vm1166, %v1293, %v1297
      %v1299 = vshrl.u32 %v864, 16
      %v1301 = vor.u32 %v1299, %v1297
      %v1303 = vshll.u32 %v1165, 16
      %v1305 = vrot.slane %v1303, 1
      %v1306 = vsel %vm1166, %v1301, %v1305
      %v1307 = vshrl.u32 %v1165, 16
      %v1309 = vor.u32 %v1307, %v1305
      %v1344 = vunpack.c.l.b16 %v1147
      %v1345 = vunpack.c.l.b16 %v1148
      %v1346 = vunpack.c.l.b16 %v1149
      %v1347 = vunpack.c.l.b16 %v1150
      %v1348 = vunpack.c.l.b16 %v1151
      %v1349 = vunpack.c.l.b16 %v1152
      %v1350 = vunpack.c.l.b16 %v1153
      %v1351 = vunpack.c.l.b16 %v1154
      %v1352 = vunpack.c.l.b16 %v1155
      %v1353 = vunpack.c.l.b16 %v1156
      %v1354 = vunpack.c.l.b16 %v1157
      %v1355 = vunpack.c.l.b16 %v1158
      %v1356 = vunpack.c.l.b16 %v1159
      %v1357 = vunpack.c.l.b16 %v1160
      %v1358 = vunpack.c.l.b16 %v1161
      %v1359 = vunpack.c.l.b16 %v1162
      %v1360 = vpack.c.b16 %v1345, %v1344
      %v1361 = vpack.c.b16 %v1347, %v1346
      %v1362 = vpack.c.b16 %v1349, %v1348
      %v1363 = vpack.c.b16 %v1351, %v1350
      %v1364 = vpack.c.b16 %v1353, %v1352
      %v1365 = vpack.c.b16 %v1355, %v1354
      %v1366 = vpack.c.b16 %v1357, %v1356
      %v1367 = vpack.c.b16 %v1359, %v1358
      %1376 = vmatprep.subr.bf16.mxu0 0
      %1377 = vmatpush1.bf16.msra.mxu0 %v1367
      %1378 = vmatprep.subr.bf16.mxu0 0
      %1379 = vmatpush1.bf16.msra.mxu0 %v1366
      %1380 = vmatprep.subr.bf16.mxu0 0
      %1381 = vmatpush1.bf16.msra.mxu0 %v1365
      %1382 = vmatprep.subr.bf16.mxu0 0
      %1383 = vmatpush1.bf16.msra.mxu0 %v1364
      %1384 = vmatprep.subr.bf16.mxu0 0
      %1385 = vmatpush1.bf16.msra.mxu0 %v1363
      %1386 = vmatprep.subr.bf16.mxu0 0
      %1387 = vmatpush1.bf16.msra.mxu0 %v1362
      %1388 = vmatprep.subr.bf16.mxu0 0
      %1389 = vmatpush1.bf16.msra.mxu0 %v1361
      %1390 = vmatprep.subr.bf16.mxu0 0
      %1391 = vmatpush1.bf16.msra.mxu0 %v1360
      %1392 = vmatprep.subr.bf16.mxu0 0
      %1393 = vmatpush2.bf16.msra.mxu0 0
      %1394 = vmatprep.subr.bf16.mxu0 0
      %1395 = vmatpush2.bf16.msra.mxu0 0
      %1396 = vmatprep.subr.bf16.mxu0 0
      %1397 = vmatpush2.bf16.msra.mxu0 0
      %1398 = vmatprep.subr.bf16.mxu0 0
      %1399 = vmatpush2.bf16.msra.mxu0 0
      %1400 = vmatprep.subr.bf16.mxu0 0
      %1401 = vmatpush2.bf16.msra.mxu0 0
      %1402 = vmatprep.subr.bf16.mxu0 0
      %1403 = vmatpush2.bf16.msra.mxu0 0
      %1404 = vmatprep.subr.bf16.mxu0 0
      %1405 = vmatpush2.bf16.msra.mxu0 0
      %1406 = vmatprep.subr.bf16.mxu0 0
      %1407 = vmatpush2.bf16.msra.mxu0 0
      %1408 = vmatprep.mubr.bf16.mxu0 0
      %1409 = vmatmul.mubr.bf16.gmra.mxu0 %v1178
      %v1410 = vpop.f32.mrf.mxu0
      %v1411 = vadd.f32 0.0, %v1410
      %v1412 = vpop.f32.mrf.mxu0
      %v1413 = vpop.f32.mrf.mxu0
      %v1414 = vadd.f32 0.0, %v1413
      %v1415 = vpop.f32.mrf.mxu0
      %1416 = vmatprep.mubr.bf16.mxu0 0
      %1417 = vmatmul.mubr.bf16.gmra.mxu0 %v1186
      %v1418 = vpop.f32.mrf.mxu0
      %v1419 = vadd.f32 0.0, %v1418
      %v1420 = vpop.f32.mrf.mxu0
      %v1421 = vpop.f32.mrf.mxu0
      %v1422 = vadd.f32 0.0, %v1421
      %v1423 = vpop.f32.mrf.mxu0
      %1424 = vmatprep.mubr.bf16.mxu0 0
      %1425 = vmatmul.mubr.bf16.gmra.mxu0 %v1194
      %v1426 = vpop.f32.mrf.mxu0
      %v1427 = vadd.f32 0.0, %v1426
      %v1428 = vpop.f32.mrf.mxu0
      %v1429 = vpop.f32.mrf.mxu0
      %v1430 = vadd.f32 0.0, %v1429
      %v1431 = vpop.f32.mrf.mxu0
      %1432 = vmatprep.mubr.bf16.mxu0 0
      %1433 = vmatmul.mubr.bf16.gmra.mxu0 %v1202
      %v1434 = vpop.f32.mrf.mxu0
      %v1435 = vadd.f32 0.0, %v1434
      %v1436 = vpop.f32.mrf.mxu0
      %v1437 = vpop.f32.mrf.mxu0
      %v1438 = vadd.f32 0.0, %v1437
      %v1439 = vpop.f32.mrf.mxu0
      %1440 = vmatprep.mubr.bf16.mxu0 0
      %1441 = vmatmul.mubr.bf16.gmra.mxu0 %v1210
      %v1442 = vpop.f32.mrf.mxu0
      %v1443 = vadd.f32 0.0, %v1442
      %v1444 = vpop.f32.mrf.mxu0
      %v1445 = vpop.f32.mrf.mxu0
      %v1446 = vadd.f32 0.0, %v1445
      %v1447 = vpop.f32.mrf.mxu0
      %1448 = vmatprep.mubr.bf16.mxu0 0
      %1449 = vmatmul.mubr.bf16.gmra.mxu0 %v1218
      %v1450 = vpop.f32.mrf.mxu0
      %v1451 = vadd.f32 0.0, %v1450
      %v1452 = vpop.f32.mrf.mxu0
      %v1453 = vpop.f32.mrf.mxu0
      %v1454 = vadd.f32 0.0, %v1453
      %v1455 = vpop.f32.mrf.mxu0
      %1456 = vmatprep.mubr.bf16.mxu0 0
      %1457 = vmatmul.mubr.bf16.gmra.mxu0 %v1226
      %v1458 = vpop.f32.mrf.mxu0
      %v1459 = vadd.f32 0.0, %v1458
      %v1460 = vpop.f32.mrf.mxu0
      %v1461 = vpop.f32.mrf.mxu0
      %v1462 = vadd.f32 0.0, %v1461
      %v1463 = vpop.f32.mrf.mxu0
      %1464 = vmatprep.mubr.bf16.mxu0 0
      %1465 = vmatmul.mubr.bf16.gmra.mxu0 %v1234
      %v1466 = vpop.f32.mrf.mxu0
      %v1467 = vadd.f32 0.0, %v1466
      %v1468 = vpop.f32.mrf.mxu0
      %v1469 = vpop.f32.mrf.mxu0
      %v1470 = vadd.f32 0.0, %v1469
      %v1471 = vpop.f32.mrf.mxu0
      %1472 = vmatprep.mubr.bf16.mxu0 0
      %1473 = vmatmul.mubr.bf16.gmra.mxu0 %v1242
      %v1474 = vpop.f32.mrf.mxu0
      %v1475 = vadd.f32 0.0, %v1474
      %v1476 = vpop.f32.mrf.mxu0
      %v1477 = vpop.f32.mrf.mxu0
      %v1478 = vadd.f32 0.0, %v1477
      %v1479 = vpop.f32.mrf.mxu0
      %1480 = vmatprep.mubr.bf16.mxu0 0
      %1481 = vmatmul.mubr.bf16.gmra.mxu0 %v1250
      %v1482 = vpop.f32.mrf.mxu0
      %v1483 = vadd.f32 0.0, %v1482
      %v1484 = vpop.f32.mrf.mxu0
      %v1485 = vpop.f32.mrf.mxu0
      %v1486 = vadd.f32 0.0, %v1485
      %v1487 = vpop.f32.mrf.mxu0
      %1488 = vmatprep.mubr.bf16.mxu0 0
      %1489 = vmatmul.mubr.bf16.gmra.mxu0 %v1258
      %v1490 = vpop.f32.mrf.mxu0
      %v1491 = vadd.f32 0.0, %v1490
      %v1492 = vpop.f32.mrf.mxu0
      %v1493 = vpop.f32.mrf.mxu0
      %v1494 = vadd.f32 0.0, %v1493
      %v1495 = vpop.f32.mrf.mxu0
      %1496 = vmatprep.mubr.bf16.mxu0 0
      %1497 = vmatmul.mubr.bf16.gmra.mxu0 %v1266
      %v1498 = vpop.f32.mrf.mxu0
      %v1499 = vadd.f32 0.0, %v1498
      %v1500 = vpop.f32.mrf.mxu0
      %v1501 = vpop.f32.mrf.mxu0
      %v1502 = vadd.f32 0.0, %v1501
      %v1503 = vpop.f32.mrf.mxu0
      %1504 = vmatprep.mubr.bf16.mxu0 0
      %1505 = vmatmul.mubr.bf16.gmra.mxu0 %v1274
      %v1506 = vpop.f32.mrf.mxu0
      %v1507 = vadd.f32 0.0, %v1506
      %v1508 = vpop.f32.mrf.mxu0
      %v1509 = vpop.f32.mrf.mxu0
      %v1510 = vadd.f32 0.0, %v1509
      %v1511 = vpop.f32.mrf.mxu0
      %1512 = vmatprep.mubr.bf16.mxu0 0
      %1513 = vmatmul.mubr.bf16.gmra.mxu0 %v1282
      %v1514 = vpop.f32.mrf.mxu0
      %v1515 = vadd.f32 0.0, %v1514
      %v1516 = vpop.f32.mrf.mxu0
      %v1517 = vpop.f32.mrf.mxu0
      %v1518 = vadd.f32 0.0, %v1517
      %v1519 = vpop.f32.mrf.mxu0
      %1520 = vmatprep.mubr.bf16.mxu0 0
      %1521 = vmatmul.mubr.bf16.gmra.mxu0 %v1290
      %v1522 = vpop.f32.mrf.mxu0
      %v1523 = vadd.f32 0.0, %v1522
      %v1524 = vpop.f32.mrf.mxu0
      %v1525 = vpop.f32.mrf.mxu0
      %v1526 = vadd.f32 0.0, %v1525
      %v1527 = vpop.f32.mrf.mxu0
      %1528 = vmatprep.mubr.bf16.mxu0 0
      %1529 = vmatmul.mubr.bf16.gmra.mxu0 %v1298
      %v1530 = vpop.f32.mrf.mxu0
      %v1531 = vadd.f32 0.0, %v1530
      %v1532 = vpop.f32.mrf.mxu0
      %v1533 = vpop.f32.mrf.mxu0
      %v1534 = vadd.f32 0.0, %v1533
      %v1535 = vpop.f32.mrf.mxu0
      %1536 = vmatprep.mubr.bf16.mxu0 0
      %1537 = vmatmul.mubr.bf16.gmra.mxu0 %v1306
      %v1538 = vpop.f32.mrf.mxu0
      %v1539 = vadd.f32 0.0, %v1538
      %v1540 = vpop.f32.mrf.mxu0
      %v1541 = vpop.f32.mrf.mxu0
      %v1542 = vadd.f32 0.0, %v1541
      %v1543 = vpop.f32.mrf.mxu0
      %1544 = vmatprep.mubr.bf16.mxu0 0
      %1545 = vmatmul.mubr.bf16.gmra.mxu0 %v1309
      %v1546 = vpop.f32.mrf.mxu0
      %v1547 = vadd.f32 0.0, %v1546
      %v1548 = vpop.f32.mrf.mxu0
      %v1549 = vpop.f32.mrf.mxu0
      %v1550 = vadd.f32 0.0, %v1549
      %v1551 = vpop.f32.mrf.mxu0
      %1552 = vdwg.mxu0
      %v1553 = vadd.f32 %v1109, %v1411
      %v1554 = vadd.f32 %v1110, %v1414
      %v1555 = vadd.f32 %v1111, %v1419
      %v1556 = vadd.f32 %v1112, %v1422
      %v1557 = vadd.f32 %v1113, %v1427
      %v1558 = vadd.f32 %v1114, %v1430
      %v1559 = vadd.f32 %v1115, %v1435
      %v1560 = vadd.f32 %v1116, %v1438
      %v1561 = vadd.f32 %v1117, %v1443
      %v1562 = vadd.f32 %v1118, %v1446
      %v1563 = vadd.f32 %v1119, %v1451
      %v1564 = vadd.f32 %v1120, %v1454
      %v1565 = vadd.f32 %v1121, %v1459
      %v1566 = vadd.f32 %v1122, %v1462
      %v1567 = vadd.f32 %v1123, %v1467
      %v1568 = vadd.f32 %v1124, %v1470
      %v1569 = vadd.f32 %v1125, %v1475
      %v1570 = vadd.f32 %v1126, %v1478
      %v1571 = vadd.f32 %v1127, %v1483
      %v1572 = vadd.f32 %v1128, %v1486
      %v1573 = vadd.f32 %v1129, %v1491
      %v1574 = vadd.f32 %v1130, %v1494
      %v1575 = vadd.f32 %v1131, %v1499
      %v1576 = vadd.f32 %v1132, %v1502
      %v1577 = vadd.f32 %v1133, %v1507
      %v1578 = vadd.f32 %v1134, %v1510
      %v1579 = vadd.f32 %v1135, %v1515
      %v1580 = vadd.f32 %v1136, %v1518
      %v1581 = vadd.f32 %v1137, %v1523
      %v1582 = vadd.f32 %v1138, %v1526
      %v1583 = vadd.f32 %v1139, %v1531
      %v1584 = vadd.f32 %v1140, %v1534
      %v1585 = vadd.f32 %v1141, %v1539
      %v1586 = vadd.f32 %v1142, %v1542
      %v1587 = vadd.f32 %v1143, %v1547
      %v1588 = vadd.f32 %v1144, %v1550
      %v1589 = vld [vmem:[#allocation2] sm:$0xe]
      %s1590 = scalar_lea.vmem %s1, 128
      %v1591 = vld [vmem:[%s1590] sm:$0xf]
      %v1592 = vld [vmem:[%s1590 + $0x4] sm:$0xf]
      %v1593 = vld [vmem:[%s1590 + $0x8] sm:$0xf]
      %v1594 = vld [vmem:[%s1590 + $0xc] sm:$0xf]
      %v1595 = vld [vmem:[%s1590 + $0x10] sm:$0xf]
      %v1596 = vld [vmem:[%s1590 + $0x14] sm:$0xf]
      %v1597 = vld [vmem:[%s1590 + $0x18] sm:$0xf]
      %v1598 = vld [vmem:[%s1590 + $0x1c] sm:$0xf]
      %v1599 = vld [vmem:[%s1590 + $0x20] sm:$0xf]
      %v1600 = vld [vmem:[%s1590 + $0x24] sm:$0xf]
      %v1601 = vld [vmem:[%s1590 + $0x28] sm:$0xf]
      %v1602 = vld [vmem:[%s1590 + $0x2c] sm:$0xf]
      %v1603 = vld [vmem:[%s1590 + $0x30] sm:$0xf]
      %v1604 = vld [vmem:[%s1590 + $0x34] sm:$0xf]
      %v1605 = vld [vmem:[%s1590 + $0x38] sm:$0xf]
      %v1606 = vld [vmem:[%s1590 + $0x3c] sm:$0xf]
      %v1608 = vunpack.c.l.b16 %v1589
      %v1609 = vpack.c.b16 %v813, %v1608
      %vm1610 = vcmask 1046528
      %v1611 = vrot.slane %v1609, 1
      %v1612 = vrot.slane %v849, 1
      %v1613 = vsel %vm1610, %v1611, %v1612
      %v1614 = vrot.slane %v850, 1
      %v1615 = vsel %vm1610, %v1612, %v1614
      %v1616 = vrot.slane %v851, 1
      %v1617 = vsel %vm1610, %v1614, %v1616
      %v1618 = vrot.slane %v852, 1
      %v1619 = vsel %vm1610, %v1616, %v1618
      %v1620 = vrot.slane %v853, 1
      %v1621 = vsel %vm1610, %v1618, %v1620
      %v1622 = vrot.slane %v854, 1
      %v1623 = vsel %vm1610, %v1620, %v1622
      %v1624 = vrot.slane %v855, 1
      %v1625 = vsel %vm1610, %v1622, %v1624
      %v1626 = vrot.slane %v856, 1
      %v1627 = vsel %vm1610, %v1624, %v1626
      %v1628 = vrot.slane %v857, 1
      %v1629 = vsel %vm1610, %v1626, %v1628
      %v1630 = vrot.slane %v858, 1
      %v1631 = vsel %vm1610, %v1628, %v1630
      %v1632 = vrot.slane %v859, 1
      %v1633 = vsel %vm1610, %v1630, %v1632
      %v1634 = vrot.slane %v860, 1
      %v1635 = vsel %vm1610, %v1632, %v1634
      %v1636 = vrot.slane %v861, 1
      %v1637 = vsel %vm1610, %v1634, %v1636
      %v1638 = vrot.slane %v862, 1
      %v1639 = vsel %vm1610, %v1636, %v1638
      %v1640 = vrot.slane %v863, 1
      %v1641 = vsel %vm1610, %v1638, %v1640
      %v1642 = vrot.slane %v864, 1
      %v1643 = vsel %vm1610, %v1640, %v1642
      %v1644 = vrot.slane %v1165, 1
      %v1645 = vsel %vm1610, %v1642, %v1644
      %v1680 = vunpack.c.l.b16 %v1591
      %v1681 = vunpack.c.l.b16 %v1592
      %v1682 = vunpack.c.l.b16 %v1593
      %v1683 = vunpack.c.l.b16 %v1594
      %v1684 = vunpack.c.l.b16 %v1595
      %v1685 = vunpack.c.l.b16 %v1596
      %v1686 = vunpack.c.l.b16 %v1597
      %v1687 = vunpack.c.l.b16 %v1598
      %v1688 = vunpack.c.l.b16 %v1599
      %v1689 = vunpack.c.l.b16 %v1600
      %v1690 = vunpack.c.l.b16 %v1601
      %v1691 = vunpack.c.l.b16 %v1602
      %v1692 = vunpack.c.l.b16 %v1603
      %v1693 = vunpack.c.l.b16 %v1604
      %v1694 = vunpack.c.l.b16 %v1605
      %v1695 = vunpack.c.l.b16 %v1606
      %v1696 = vpack.c.b16 %v1681, %v1680
      %v1697 = vpack.c.b16 %v1683, %v1682
      %v1698 = vpack.c.b16 %v1685, %v1684
      %v1699 = vpack.c.b16 %v1687, %v1686
      %v1700 = vpack.c.b16 %v1689, %v1688
      %v1701 = vpack.c.b16 %v1691, %v1690
      %v1702 = vpack.c.b16 %v1693, %v1692
      %v1703 = vpack.c.b16 %v1695, %v1694
      %1712 = vmatprep.subr.bf16.mxu0 0
      %1713 = vmatpush1.bf16.msra.mxu0 %v1703
      %1714 = vmatprep.subr.bf16.mxu0 0
      %1715 = vmatpush1.bf16.msra.mxu0 %v1702
      %1716 = vmatprep.subr.bf16.mxu0 0
      %1717 = vmatpush1.bf16.msra.mxu0 %v1701
      %1718 = vmatprep.subr.bf16.mxu0 0
      %1719 = vmatpush1.bf16.msra.mxu0 %v1700
      %1720 = vmatprep.subr.bf16.mxu0 0
      %1721 = vmatpush1.bf16.msra.mxu0 %v1699
      %1722 = vmatprep.subr.bf16.mxu0 0
      %1723 = vmatpush1.bf16.msra.mxu0 %v1698
      %1724 = vmatprep.subr.bf16.mxu0 0
      %1725 = vmatpush1.bf16.msra.mxu0 %v1697
      %1726 = vmatprep.subr.bf16.mxu0 0
      %1727 = vmatpush1.bf16.msra.mxu0 %v1696
      %1728 = vmatprep.subr.bf16.mxu0 0
      %1729 = vmatpush2.bf16.msra.mxu0 0
      %1730 = vmatprep.subr.bf16.mxu0 0
      %1731 = vmatpush2.bf16.msra.mxu0 0
      %1732 = vmatprep.subr.bf16.mxu0 0
      %1733 = vmatpush2.bf16.msra.mxu0 0
      %1734 = vmatprep.subr.bf16.mxu0 0
      %1735 = vmatpush2.bf16.msra.mxu0 0
      %1736 = vmatprep.subr.bf16.mxu0 0
      %1737 = vmatpush2.bf16.msra.mxu0 0
      %1738 = vmatprep.subr.bf16.mxu0 0
      %1739 = vmatpush2.bf16.msra.mxu0 0
      %1740 = vmatprep.subr.bf16.mxu0 0
      %1741 = vmatpush2.bf16.msra.mxu0 0
      %1742 = vmatprep.subr.bf16.mxu0 0
      %1743 = vmatpush2.bf16.msra.mxu0 0
      %1744 = vmatprep.mubr.bf16.mxu0 0
      %1745 = vmatmul.mubr.bf16.gmra.mxu0 %v1613
      %v1746 = vpop.f32.mrf.mxu0
      %v1747 = vadd.f32 0.0, %v1746
      %v1748 = vpop.f32.mrf.mxu0
      %v1749 = vpop.f32.mrf.mxu0
      %v1750 = vadd.f32 0.0, %v1749
      %v1751 = vpop.f32.mrf.mxu0
      %1752 = vmatprep.mubr.bf16.mxu0 0
      %1753 = vmatmul.mubr.bf16.gmra.mxu0 %v1615
      %v1754 = vpop.f32.mrf.mxu0
      %v1755 = vadd.f32 0.0, %v1754
      %v1756 = vpop.f32.mrf.mxu0
      %v1757 = vpop.f32.mrf.mxu0
      %v1758 = vadd.f32 0.0, %v1757
      %v1759 = vpop.f32.mrf.mxu0
      %1760 = vmatprep.mubr.bf16.mxu0 0
      %1761 = vmatmul.mubr.bf16.gmra.mxu0 %v1617
      %v1762 = vpop.f32.mrf.mxu0
      %v1763 = vadd.f32 0.0, %v1762
      %v1764 = vpop.f32.mrf.mxu0
      %v1765 = vpop.f32.mrf.mxu0
      %v1766 = vadd.f32 0.0, %v1765
      %v1767 = vpop.f32.mrf.mxu0
      %1768 = vmatprep.mubr.bf16.mxu0 0
      %1769 = vmatmul.mubr.bf16.gmra.mxu0 %v1619
      %v1770 = vpop.f32.mrf.mxu0
      %v1771 = vadd.f32 0.0, %v1770
      %v1772 = vpop.f32.mrf.mxu0
      %v1773 = vpop.f32.mrf.mxu0
      %v1774 = vadd.f32 0.0, %v1773
      %v1775 = vpop.f32.mrf.mxu0
      %1776 = vmatprep.mubr.bf16.mxu0 0
      %1777 = vmatmul.mubr.bf16.gmra.mxu0 %v1621
      %v1778 = vpop.f32.mrf.mxu0
      %v1779 = vadd.f32 0.0, %v1778
      %v1780 = vpop.f32.mrf.mxu0
      %v1781 = vpop.f32.mrf.mxu0
      %v1782 = vadd.f32 0.0, %v1781
      %v1783 = vpop.f32.mrf.mxu0
      %1784 = vmatprep.mubr.bf16.mxu0 0
      %1785 = vmatmul.mubr.bf16.gmra.mxu0 %v1623
      %v1786 = vpop.f32.mrf.mxu0
      %v1787 = vadd.f32 0.0, %v1786
      %v1788 = vpop.f32.mrf.mxu0
      %v1789 = vpop.f32.mrf.mxu0
      %v1790 = vadd.f32 0.0, %v1789
      %v1791 = vpop.f32.mrf.mxu0
      %1792 = vmatprep.mubr.bf16.mxu0 0
      %1793 = vmatmul.mubr.bf16.gmra.mxu0 %v1625
      %v1794 = vpop.f32.mrf.mxu0
      %v1795 = vadd.f32 0.0, %v1794
      %v1796 = vpop.f32.mrf.mxu0
      %v1797 = vpop.f32.mrf.mxu0
      %v1798 = vadd.f32 0.0, %v1797
      %v1799 = vpop.f32.mrf.mxu0
      %1800 = vmatprep.mubr.bf16.mxu0 0
      %1801 = vmatmul.mubr.bf16.gmra.mxu0 %v1627
      %v1802 = vpop.f32.mrf.mxu0
      %v1803 = vadd.f32 0.0, %v1802
      %v1804 = vpop.f32.mrf.mxu0
      %v1805 = vpop.f32.mrf.mxu0
      %v1806 = vadd.f32 0.0, %v1805
      %v1807 = vpop.f32.mrf.mxu0
      %1808 = vmatprep.mubr.bf16.mxu0 0
      %1809 = vmatmul.mubr.bf16.gmra.mxu0 %v1629
      %v1810 = vpop.f32.mrf.mxu0
      %v1811 = vadd.f32 0.0, %v1810
      %v1812 = vpop.f32.mrf.mxu0
      %v1813 = vpop.f32.mrf.mxu0
      %v1814 = vadd.f32 0.0, %v1813
      %v1815 = vpop.f32.mrf.mxu0
      %1816 = vmatprep.mubr.bf16.mxu0 0
      %1817 = vmatmul.mubr.bf16.gmra.mxu0 %v1631
      %v1818 = vpop.f32.mrf.mxu0
      %v1819 = vadd.f32 0.0, %v1818
      %v1820 = vpop.f32.mrf.mxu0
      %v1821 = vpop.f32.mrf.mxu0
      %v1822 = vadd.f32 0.0, %v1821
      %v1823 = vpop.f32.mrf.mxu0
      %1824 = vmatprep.mubr.bf16.mxu0 0
      %1825 = vmatmul.mubr.bf16.gmra.mxu0 %v1633
      %v1826 = vpop.f32.mrf.mxu0
      %v1827 = vadd.f32 0.0, %v1826
      %v1828 = vpop.f32.mrf.mxu0
      %v1829 = vpop.f32.mrf.mxu0
      %v1830 = vadd.f32 0.0, %v1829
      %v1831 = vpop.f32.mrf.mxu0
      %1832 = vmatprep.mubr.bf16.mxu0 0
      %1833 = vmatmul.mubr.bf16.gmra.mxu0 %v1635
      %v1834 = vpop.f32.mrf.mxu0
      %v1835 = vadd.f32 0.0, %v1834
      %v1836 = vpop.f32.mrf.mxu0
      %v1837 = vpop.f32.mrf.mxu0
      %v1838 = vadd.f32 0.0, %v1837
      %v1839 = vpop.f32.mrf.mxu0
      %1840 = vmatprep.mubr.bf16.mxu0 0
      %1841 = vmatmul.mubr.bf16.gmra.mxu0 %v1637
      %v1842 = vpop.f32.mrf.mxu0
      %v1843 = vadd.f32 0.0, %v1842
      %v1844 = vpop.f32.mrf.mxu0
      %v1845 = vpop.f32.mrf.mxu0
      %v1846 = vadd.f32 0.0, %v1845
      %v1847 = vpop.f32.mrf.mxu0
      %1848 = vmatprep.mubr.bf16.mxu0 0
      %1849 = vmatmul.mubr.bf16.gmra.mxu0 %v1639
      %v1850 = vpop.f32.mrf.mxu0
      %v1851 = vadd.f32 0.0, %v1850
      %v1852 = vpop.f32.mrf.mxu0
      %v1853 = vpop.f32.mrf.mxu0
      %v1854 = vadd.f32 0.0, %v1853
      %v1855 = vpop.f32.mrf.mxu0
      %1856 = vmatprep.mubr.bf16.mxu0 0
      %1857 = vmatmul.mubr.bf16.gmra.mxu0 %v1641
      %v1858 = vpop.f32.mrf.mxu0
      %v1859 = vadd.f32 0.0, %v1858
      %v1860 = vpop.f32.mrf.mxu0
      %v1861 = vpop.f32.mrf.mxu0
      %v1862 = vadd.f32 0.0, %v1861
      %v1863 = vpop.f32.mrf.mxu0
      %1864 = vmatprep.mubr.bf16.mxu0 0
      %1865 = vmatmul.mubr.bf16.gmra.mxu0 %v1643
      %v1866 = vpop.f32.mrf.mxu0
      %v1867 = vadd.f32 0.0, %v1866
      %v1868 = vpop.f32.mrf.mxu0
      %v1869 = vpop.f32.mrf.mxu0
      %v1870 = vadd.f32 0.0, %v1869
      %v1871 = vpop.f32.mrf.mxu0
      %1872 = vmatprep.mubr.bf16.mxu0 0
      %1873 = vmatmul.mubr.bf16.gmra.mxu0 %v1645
      %v1874 = vpop.f32.mrf.mxu0
      %v1875 = vadd.f32 0.0, %v1874
      %v1876 = vpop.f32.mrf.mxu0
      %v1877 = vpop.f32.mrf.mxu0
      %v1878 = vadd.f32 0.0, %v1877
      %v1879 = vpop.f32.mrf.mxu0
      %1880 = vmatprep.mubr.bf16.mxu0 0
      %1881 = vmatmul.mubr.bf16.gmra.mxu0 %v1644
      %v1882 = vpop.f32.mrf.mxu0
      %v1883 = vadd.f32 0.0, %v1882
      %v1884 = vpop.f32.mrf.mxu0
      %v1885 = vpop.f32.mrf.mxu0
      %v1886 = vadd.f32 0.0, %v1885
      %v1887 = vpop.f32.mrf.mxu0
      %1888 = vdwg.mxu0
      %v1889 = vadd.f32 %v1553, %v1747
      %v1890 = vadd.f32 %v1554, %v1750
      %v1891 = vadd.f32 %v1555, %v1755
      %v1892 = vadd.f32 %v1556, %v1758
      %v1893 = vadd.f32 %v1557, %v1763
      %v1894 = vadd.f32 %v1558, %v1766
      %v1895 = vadd.f32 %v1559, %v1771
      %v1896 = vadd.f32 %v1560, %v1774
      %v1897 = vadd.f32 %v1561, %v1779
      %v1898 = vadd.f32 %v1562, %v1782
      %v1899 = vadd.f32 %v1563, %v1787
      %v1900 = vadd.f32 %v1564, %v1790
      %v1901 = vadd.f32 %v1565, %v1795
      %v1902 = vadd.f32 %v1566, %v1798
      %v1903 = vadd.f32 %v1567, %v1803
      %v1904 = vadd.f32 %v1568, %v1806
      %v1905 = vadd.f32 %v1569, %v1811
      %v1906 = vadd.f32 %v1570, %v1814
      %v1907 = vadd.f32 %v1571, %v1819
      %v1908 = vadd.f32 %v1572, %v1822
      %v1909 = vadd.f32 %v1573, %v1827
      %v1910 = vadd.f32 %v1574, %v1830
      %v1911 = vadd.f32 %v1575, %v1835
      %v1912 = vadd.f32 %v1576, %v1838
      %v1913 = vadd.f32 %v1577, %v1843
      %v1914 = vadd.f32 %v1578, %v1846
      %v1915 = vadd.f32 %v1579, %v1851
      %v1916 = vadd.f32 %v1580, %v1854
      %v1917 = vadd.f32 %v1581, %v1859
      %v1918 = vadd.f32 %v1582, %v1862
      %v1919 = vadd.f32 %v1583, %v1867
      %v1920 = vadd.f32 %v1584, %v1870
      %v1921 = vadd.f32 %v1585, %v1875
      %v1922 = vadd.f32 %v1586, %v1878
      %v1923 = vadd.f32 %v1587, %v1883
      %v1924 = vadd.f32 %v1588, %v1886
      %v1925 = vld [vmem:[#allocation2 + $0x8] sm:$0xe]
      %v1926 = vld [vmem:[#allocation2 + $0xc] sm:$0xf]
      %v1927 = vld [vmem:[#allocation2 + $0x10] sm:$0xf]
      %v1928 = vld [vmem:[#allocation2 + $0x14] sm:$0xf]
      %v1929 = vld [vmem:[#allocation2 + $0x18] sm:$0xf]
      %v1930 = vld [vmem:[#allocation2 + $0x1c] sm:$0xf]
      %v1931 = vld [vmem:[#allocation2 + $0x20] sm:$0xf]
      %v1932 = vld [vmem:[#allocation2 + $0x24] sm:$0xf]
      %v1933 = vld [vmem:[#allocation2 + $0x28] sm:$0xf]
      %v1934 = vld [vmem:[#allocation2 + $0x2c] sm:$0xf]
      %v1935 = vld [vmem:[#allocation2 + $0x30] sm:$0xf]
      %v1936 = vld [vmem:[#allocation2 + $0x34] sm:$0xf]
      %v1937 = vld [vmem:[#allocation2 + $0x38] sm:$0xf]
      %v1938 = vld [vmem:[#allocation2 + $0x3c] sm:$0xf]
      %v1939 = vld [vmem:[#allocation2 + $0x40] sm:$0xf]
      %v1940 = vld [vmem:[#allocation2 + $0x44] sm:$0xf]
      %v1941 = vld [vmem:[#allocation2 + $0x48] sm:$0xf]
      %v1942 = vld [vmem:[#allocation2 + $0x4c] sm:$0xf]
      %v1943 = vld [vmem:[#allocation2 + $0x50] sm:$0xf]
      %v1944 = vld [vmem:[#allocation2 + $0x54] sm:$0xf]
      %v1945 = vld [vmem:[#allocation2 + $0x58] sm:$0xf]
      %v1946 = vld [vmem:[#allocation2 + $0x5c] sm:$0xf]
      %v1947 = vld [vmem:[#allocation2 + $0x60] sm:$0xf]
      %v1948 = vld [vmem:[#allocation2 + $0x64] sm:$0xf]
      %v1949 = vld [vmem:[#allocation2 + $0x68] sm:$0xf]
      %v1950 = vld [vmem:[#allocation2 + $0x6c] sm:$0xf]
      %v1951 = vld [vmem:[#allocation2 + $0x70] sm:$0xf]
      %v1952 = vld [vmem:[#allocation2 + $0x74] sm:$0xf]
      %v1953 = vld [vmem:[#allocation2 + $0x78] sm:$0xf]
      %v1954 = vld [vmem:[#allocation2 + $0x7c] sm:$0xf]
      %v1955 = vld [vmem:[#allocation2 + $0x80] sm:$0xf]
      %v1956 = vld [vmem:[#allocation2 + $0x84] sm:$0xf]
      %v1957 = vld [vmem:[#allocation2 + $0x88] sm:$0xf]
      %v1958 = vld [vmem:[#allocation2 + $0x8c] sm:$0xf]
      %v1959 = vld [vmem:[#allocation2 + $0x90] sm:$0xf]
      %v1960 = vld [vmem:[#allocation2 + $0x94] sm:$0xf]
      %s1961 = scalar_lea.vmem %s1, 192
      %v1962 = vld [vmem:[%s1961] sm:$0xf]
      %v1963 = vld [vmem:[%s1961 + $0x4] sm:$0xf]
      %v1964 = vld [vmem:[%s1961 + $0x8] sm:$0xf]
      %v1965 = vld [vmem:[%s1961 + $0xc] sm:$0xf]
      %v1966 = vld [vmem:[%s1961 + $0x10] sm:$0xf]
      %v1967 = vld [vmem:[%s1961 + $0x14] sm:$0xf]
      %v1968 = vld [vmem:[%s1961 + $0x18] sm:$0xf]
      %v1969 = vld [vmem:[%s1961 + $0x1c] sm:$0xf]
      %v1970 = vld [vmem:[%s1961 + $0x20] sm:$0xf]
      %v1971 = vld [vmem:[%s1961 + $0x24] sm:$0xf]
      %v1972 = vld [vmem:[%s1961 + $0x28] sm:$0xf]
      %v1973 = vld [vmem:[%s1961 + $0x2c] sm:$0xf]
      %v1974 = vld [vmem:[%s1961 + $0x30] sm:$0xf]
      %v1975 = vld [vmem:[%s1961 + $0x34] sm:$0xf]
      %v1976 = vld [vmem:[%s1961 + $0x38] sm:$0xf]
      %v1977 = vld [vmem:[%s1961 + $0x3c] sm:$0xf]
      %v2014 = vunpack.c.l.b16 %v1925
      %v2015 = vunpack.c.l.b16 %v1926
      %v2016 = vunpack.c.l.b16 %v1927
      %v2017 = vunpack.c.l.b16 %v1928
      %v2018 = vunpack.c.l.b16 %v1929
      %v2019 = vunpack.c.l.b16 %v1930
      %v2020 = vunpack.c.l.b16 %v1931
      %v2021 = vunpack.c.l.b16 %v1932
      %v2022 = vunpack.c.l.b16 %v1933
      %v2023 = vunpack.c.l.b16 %v1934
      %v2024 = vunpack.c.l.b16 %v1935
      %v2025 = vunpack.c.l.b16 %v1936
      %v2026 = vunpack.c.l.b16 %v1937
      %v2027 = vunpack.c.l.b16 %v1938
      %v2028 = vunpack.c.l.b16 %v1939
      %v2029 = vunpack.c.l.b16 %v1940
      %v2030 = vunpack.c.l.b16 %v1941
      %v2031 = vunpack.c.l.b16 %v1942
      %v2032 = vunpack.c.l.b16 %v1943
      %v2033 = vunpack.c.l.b16 %v1944
      %v2034 = vunpack.c.l.b16 %v1945
      %v2035 = vunpack.c.l.b16 %v1946
      %v2036 = vunpack.c.l.b16 %v1947
      %v2037 = vunpack.c.l.b16 %v1948
      %v2038 = vunpack.c.l.b16 %v1949
      %v2039 = vunpack.c.l.b16 %v1950
      %v2040 = vunpack.c.l.b16 %v1951
      %v2041 = vunpack.c.l.b16 %v1952
      %v2042 = vunpack.c.l.b16 %v1953
      %v2043 = vunpack.c.l.b16 %v1954
      %v2044 = vunpack.c.l.b16 %v1955
      %v2045 = vunpack.c.l.b16 %v1956
      %v2046 = vunpack.c.l.b16 %v1957
      %v2047 = vunpack.c.l.b16 %v1958
      %v2048 = vunpack.c.l.b16 %v1959
      %v2049 = vunpack.c.l.b16 %v1960
      %v2050 = vpack.c.b16 %v2015, %v2014
      %v2051 = vpack.c.b16 %v2017, %v2016
      %v2052 = vpack.c.b16 %v2019, %v2018
      %v2053 = vpack.c.b16 %v2021, %v2020
      %v2054 = vpack.c.b16 %v2023, %v2022
      %v2055 = vpack.c.b16 %v2025, %v2024
      %v2056 = vpack.c.b16 %v2027, %v2026
      %v2057 = vpack.c.b16 %v2029, %v2028
      %v2058 = vpack.c.b16 %v2031, %v2030
      %v2059 = vpack.c.b16 %v2033, %v2032
      %v2060 = vpack.c.b16 %v2035, %v2034
      %v2061 = vpack.c.b16 %v2037, %v2036
      %v2062 = vpack.c.b16 %v2039, %v2038
      %v2063 = vpack.c.b16 %v2041, %v2040
      %v2064 = vpack.c.b16 %v2043, %v2042
      %v2065 = vpack.c.b16 %v2045, %v2044
      %v2066 = vpack.c.b16 %v2047, %v2046
      %v2067 = vpack.c.b16 %v2049, %v2048
      %v2068 = vrot.slane %v2050, 1
      %v2069 = vrot.slane %v2051, 1
      %v2070 = vsel %vm1610, %v2068, %v2069
      %v2071 = vrot.slane %v2052, 1
      %v2072 = vsel %vm1610, %v2069, %v2071
      %v2073 = vrot.slane %v2053, 1
      %v2074 = vsel %vm1610, %v2071, %v2073
      %v2075 = vrot.slane %v2054, 1
      %v2076 = vsel %vm1610, %v2073, %v2075
      %v2077 = vrot.slane %v2055, 1
      %v2078 = vsel %vm1610, %v2075, %v2077
      %v2079 = vrot.slane %v2056, 1
      %v2080 = vsel %vm1610, %v2077, %v2079
      %v2081 = vrot.slane %v2057, 1
      %v2082 = vsel %vm1610, %v2079, %v2081
      %v2083 = vrot.slane %v2058, 1
      %v2084 = vsel %vm1610, %v2081, %v2083
      %v2085 = vrot.slane %v2059, 1
      %v2086 = vsel %vm1610, %v2083, %v2085
      %v2087 = vrot.slane %v2060, 1
      %v2088 = vsel %vm1610, %v2085, %v2087
      %v2089 = vrot.slane %v2061, 1
      %v2090 = vsel %vm1610, %v2087, %v2089
      %v2091 = vrot.slane %v2062, 1
      %v2092 = vsel %vm1610, %v2089, %v2091
      %v2093 = vrot.slane %v2063, 1
      %v2094 = vsel %vm1610, %v2091, %v2093
      %v2095 = vrot.slane %v2064, 1
      %v2096 = vsel %vm1610, %v2093, %v2095
      %v2097 = vrot.slane %v2065, 1
      %v2098 = vsel %vm1610, %v2095, %v2097
      %v2099 = vrot.slane %v2066, 1
      %v2100 = vsel %vm1610, %v2097, %v2099
      %v2101 = vrot.slane %v2067, 1
      %v2102 = vsel %vm1610, %v2099, %v2101
      %v2137 = vunpack.c.l.b16 %v1962
      %v2138 = vunpack.c.l.b16 %v1963
      %v2139 = vunpack.c.l.b16 %v1964
      %v2140 = vunpack.c.l.b16 %v1965
      %v2141 = vunpack.c.l.b16 %v1966
      %v2142 = vunpack.c.l.b16 %v1967
      %v2143 = vunpack.c.l.b16 %v1968
      %v2144 = vunpack.c.l.b16 %v1969
      %v2145 = vunpack.c.l.b16 %v1970
      %v2146 = vunpack.c.l.b16 %v1971
      %v2147 = vunpack.c.l.b16 %v1972
      %v2148 = vunpack.c.l.b16 %v1973
      %v2149 = vunpack.c.l.b16 %v1974
      %v2150 = vunpack.c.l.b16 %v1975
      %v2151 = vunpack.c.l.b16 %v1976
      %v2152 = vunpack.c.l.b16 %v1977
      %v2153 = vpack.c.b16 %v2138, %v2137
      %v2154 = vpack.c.b16 %v2140, %v2139
      %v2155 = vpack.c.b16 %v2142, %v2141
      %v2156 = vpack.c.b16 %v2144, %v2143
      %v2157 = vpack.c.b16 %v2146, %v2145
      %v2158 = vpack.c.b16 %v2148, %v2147
      %v2159 = vpack.c.b16 %v2150, %v2149
      %v2160 = vpack.c.b16 %v2152, %v2151
      %2169 = vmatprep.subr.bf16.mxu0 0
      %2170 = vmatpush1.bf16.msra.mxu0 %v2160
      %2171 = vmatprep.subr.bf16.mxu0 0
      %2172 = vmatpush1.bf16.msra.mxu0 %v2159
      %2173 = vmatprep.subr.bf16.mxu0 0
      %2174 = vmatpush1.bf16.msra.mxu0 %v2158
      %2175 = vmatprep.subr.bf16.mxu0 0
      %2176 = vmatpush1.bf16.msra.mxu0 %v2157
      %2177 = vmatprep.subr.bf16.mxu0 0
      %2178 = vmatpush1.bf16.msra.mxu0 %v2156
      %2179 = vmatprep.subr.bf16.mxu0 0
      %2180 = vmatpush1.bf16.msra.mxu0 %v2155
      %2181 = vmatprep.subr.bf16.mxu0 0
      %2182 = vmatpush1.bf16.msra.mxu0 %v2154
      %2183 = vmatprep.subr.bf16.mxu0 0
      %2184 = vmatpush1.bf16.msra.mxu0 %v2153
      %2185 = vmatprep.subr.bf16.mxu0 0
      %2186 = vmatpush2.bf16.msra.mxu0 0
      %2187 = vmatprep.subr.bf16.mxu0 0
      %2188 = vmatpush2.bf16.msra.mxu0 0
      %2189 = vmatprep.subr.bf16.mxu0 0
      %2190 = vmatpush2.bf16.msra.mxu0 0
      %2191 = vmatprep.subr.bf16.mxu0 0
      %2192 = vmatpush2.bf16.msra.mxu0 0
      %2193 = vmatprep.subr.bf16.mxu0 0
      %2194 = vmatpush2.bf16.msra.mxu0 0
      %2195 = vmatprep.subr.bf16.mxu0 0
      %2196 = vmatpush2.bf16.msra.mxu0 0
      %2197 = vmatprep.subr.bf16.mxu0 0
      %2198 = vmatpush2.bf16.msra.mxu0 0
      %2199 = vmatprep.subr.bf16.mxu0 0
      %2200 = vmatpush2.bf16.msra.mxu0 0
      %2201 = vmatprep.mubr.bf16.mxu0 0
      %2202 = vmatmul.mubr.bf16.gmra.mxu0 %v2070
      %v2203 = vpop.f32.mrf.mxu0
      %v2204 = vadd.f32 0.0, %v2203
      %v2205 = vpop.f32.mrf.mxu0
      %v2206 = vpop.f32.mrf.mxu0
      %v2207 = vadd.f32 0.0, %v2206
      %v2208 = vpop.f32.mrf.mxu0
      %2209 = vmatprep.mubr.bf16.mxu0 0
      %2210 = vmatmul.mubr.bf16.gmra.mxu0 %v2072
      %v2211 = vpop.f32.mrf.mxu0
      %v2212 = vadd.f32 0.0, %v2211
      %v2213 = vpop.f32.mrf.mxu0
      %v2214 = vpop.f32.mrf.mxu0
      %v2215 = vadd.f32 0.0, %v2214
      %v2216 = vpop.f32.mrf.mxu0
      %2217 = vmatprep.mubr.bf16.mxu0 0
      %2218 = vmatmul.mubr.bf16.gmra.mxu0 %v2074
      %v2219 = vpop.f32.mrf.mxu0
      %v2220 = vadd.f32 0.0, %v2219
      %v2221 = vpop.f32.mrf.mxu0
      %v2222 = vpop.f32.mrf.mxu0
      %v2223 = vadd.f32 0.0, %v2222
      %v2224 = vpop.f32.mrf.mxu0
      %2225 = vmatprep.mubr.bf16.mxu0 0
      %2226 = vmatmul.mubr.bf16.gmra.mxu0 %v2076
      %v2227 = vpop.f32.mrf.mxu0
      %v2228 = vadd.f32 0.0, %v2227
      %v2229 = vpop.f32.mrf.mxu0
      %v2230 = vpop.f32.mrf.mxu0
      %v2231 = vadd.f32 0.0, %v2230
      %v2232 = vpop.f32.mrf.mxu0
      %2233 = vmatprep.mubr.bf16.mxu0 0
      %2234 = vmatmul.mubr.bf16.gmra.mxu0 %v2078
      %v2235 = vpop.f32.mrf.mxu0
      %v2236 = vadd.f32 0.0, %v2235
      %v2237 = vpop.f32.mrf.mxu0
      %v2238 = vpop.f32.mrf.mxu0
      %v2239 = vadd.f32 0.0, %v2238
      %v2240 = vpop.f32.mrf.mxu0
      %2241 = vmatprep.mubr.bf16.mxu0 0
      %2242 = vmatmul.mubr.bf16.gmra.mxu0 %v2080
      %v2243 = vpop.f32.mrf.mxu0
      %v2244 = vadd.f32 0.0, %v2243
      %v2245 = vpop.f32.mrf.mxu0
      %v2246 = vpop.f32.mrf.mxu0
      %v2247 = vadd.f32 0.0, %v2246
      %v2248 = vpop.f32.mrf.mxu0
      %2249 = vmatprep.mubr.bf16.mxu0 0
      %2250 = vmatmul.mubr.bf16.gmra.mxu0 %v2082
      %v2251 = vpop.f32.mrf.mxu0
      %v2252 = vadd.f32 0.0, %v2251
      %v2253 = vpop.f32.mrf.mxu0
      %v2254 = vpop.f32.mrf.mxu0
      %v2255 = vadd.f32 0.0, %v2254
      %v2256 = vpop.f32.mrf.mxu0
      %2257 = vmatprep.mubr.bf16.mxu0 0
      %2258 = vmatmul.mubr.bf16.gmra.mxu0 %v2084
      %v2259 = vpop.f32.mrf.mxu0
      %v2260 = vadd.f32 0.0, %v2259
      %v2261 = vpop.f32.mrf.mxu0
      %v2262 = vpop.f32.mrf.mxu0
      %v2263 = vadd.f32 0.0, %v2262
      %v2264 = vpop.f32.mrf.mxu0
      %2265 = vmatprep.mubr.bf16.mxu0 0
      %2266 = vmatmul.mubr.bf16.gmra.mxu0 %v2086
      %v2267 = vpop.f32.mrf.mxu0
      %v2268 = vadd.f32 0.0, %v2267
      %v2269 = vpop.f32.mrf.mxu0
      %v2270 = vpop.f32.mrf.mxu0
      %v2271 = vadd.f32 0.0, %v2270
      %v2272 = vpop.f32.mrf.mxu0
      %2273 = vmatprep.mubr.bf16.mxu0 0
      %2274 = vmatmul.mubr.bf16.gmra.mxu0 %v2088
      %v2275 = vpop.f32.mrf.mxu0
      %v2276 = vadd.f32 0.0, %v2275
      %v2277 = vpop.f32.mrf.mxu0
      %v2278 = vpop.f32.mrf.mxu0
      %v2279 = vadd.f32 0.0, %v2278
      %v2280 = vpop.f32.mrf.mxu0
      %2281 = vmatprep.mubr.bf16.mxu0 0
      %2282 = vmatmul.mubr.bf16.gmra.mxu0 %v2090
      %v2283 = vpop.f32.mrf.mxu0
      %v2284 = vadd.f32 0.0, %v2283
      %v2285 = vpop.f32.mrf.mxu0
      %v2286 = vpop.f32.mrf.mxu0
      %v2287 = vadd.f32 0.0, %v2286
      %v2288 = vpop.f32.mrf.mxu0
      %2289 = vmatprep.mubr.bf16.mxu0 0
      %2290 = vmatmul.mubr.bf16.gmra.mxu0 %v2092
      %v2291 = vpop.f32.mrf.mxu0
      %v2292 = vadd.f32 0.0, %v2291
      %v2293 = vpop.f32.mrf.mxu0
      %v2294 = vpop.f32.mrf.mxu0
      %v2295 = vadd.f32 0.0, %v2294
      %v2296 = vpop.f32.mrf.mxu0
      %2297 = vmatprep.mubr.bf16.mxu0 0
      %2298 = vmatmul.mubr.bf16.gmra.mxu0 %v2094
      %v2299 = vpop.f32.mrf.mxu0
      %v2300 = vadd.f32 0.0, %v2299
      %v2301 = vpop.f32.mrf.mxu0
      %v2302 = vpop.f32.mrf.mxu0
      %v2303 = vadd.f32 0.0, %v2302
      %v2304 = vpop.f32.mrf.mxu0
      %2305 = vmatprep.mubr.bf16.mxu0 0
      %2306 = vmatmul.mubr.bf16.gmra.mxu0 %v2096
      %v2307 = vpop.f32.mrf.mxu0
      %v2308 = vadd.f32 0.0, %v2307
      %v2309 = vpop.f32.mrf.mxu0
      %v2310 = vpop.f32.mrf.mxu0
      %v2311 = vadd.f32 0.0, %v2310
      %v2312 = vpop.f32.mrf.mxu0
      %2313 = vmatprep.mubr.bf16.mxu0 0
      %2314 = vmatmul.mubr.bf16.gmra.mxu0 %v2098
      %v2315 = vpop.f32.mrf.mxu0
      %v2316 = vadd.f32 0.0, %v2315
      %v2317 = vpop.f32.mrf.mxu0
      %v2318 = vpop.f32.mrf.mxu0
      %v2319 = vadd.f32 0.0, %v2318
      %v2320 = vpop.f32.mrf.mxu0
      %2321 = vmatprep.mubr.bf16.mxu0 0
      %2322 = vmatmul.mubr.bf16.gmra.mxu0 %v2100
      %v2323 = vpop.f32.mrf.mxu0
      %v2324 = vadd.f32 0.0, %v2323
      %v2325 = vpop.f32.mrf.mxu0
      %v2326 = vpop.f32.mrf.mxu0
      %v2327 = vadd.f32 0.0, %v2326
      %v2328 = vpop.f32.mrf.mxu0
      %2329 = vmatprep.mubr.bf16.mxu0 0
      %2330 = vmatmul.mubr.bf16.gmra.mxu0 %v2102
      %v2331 = vpop.f32.mrf.mxu0
      %v2332 = vadd.f32 0.0, %v2331
      %v2333 = vpop.f32.mrf.mxu0
      %v2334 = vpop.f32.mrf.mxu0
      %v2335 = vadd.f32 0.0, %v2334
      %v2336 = vpop.f32.mrf.mxu0
      %2337 = vmatprep.mubr.bf16.mxu0 0
      %2338 = vmatmul.mubr.bf16.gmra.mxu0 %v2101
      %v2339 = vpop.f32.mrf.mxu0
      %v2340 = vadd.f32 0.0, %v2339
      %v2341 = vpop.f32.mrf.mxu0
      %v2342 = vpop.f32.mrf.mxu0
      %v2343 = vadd.f32 0.0, %v2342
      %v2344 = vpop.f32.mrf.mxu0
      %2345 = vdwg.mxu0
      %v2346 = vadd.f32 %v1889, %v2204
      %v2347 = vadd.f32 %v1890, %v2207
      %v2348 = vadd.f32 %v1891, %v2212
      %v2349 = vadd.f32 %v1892, %v2215
      %v2350 = vadd.f32 %v1893, %v2220
      %v2351 = vadd.f32 %v1894, %v2223
      %v2352 = vadd.f32 %v1895, %v2228
      %v2353 = vadd.f32 %v1896, %v2231
      %v2354 = vadd.f32 %v1897, %v2236
      %v2355 = vadd.f32 %v1898, %v2239
      %v2356 = vadd.f32 %v1899, %v2244
      %v2357 = vadd.f32 %v1900, %v2247
      %v2358 = vadd.f32 %v1901, %v2252
      %v2359 = vadd.f32 %v1902, %v2255
      %v2360 = vadd.f32 %v1903, %v2260
      %v2361 = vadd.f32 %v1904, %v2263
      %v2362 = vadd.f32 %v1905, %v2268
      %v2363 = vadd.f32 %v1906, %v2271
      %v2364 = vadd.f32 %v1907, %v2276
      %v2365 = vadd.f32 %v1908, %v2279
      %v2366 = vadd.f32 %v1909, %v2284
      %v2367 = vadd.f32 %v1910, %v2287
      %v2368 = vadd.f32 %v1911, %v2292
      %v2369 = vadd.f32 %v1912, %v2295
      %v2370 = vadd.f32 %v1913, %v2300
      %v2371 = vadd.f32 %v1914, %v2303
      %v2372 = vadd.f32 %v1915, %v2308
      %v2373 = vadd.f32 %v1916, %v2311
      %v2374 = vadd.f32 %v1917, %v2316
      %v2375 = vadd.f32 %v1918, %v2319
      %v2376 = vadd.f32 %v1919, %v2324
      %v2377 = vadd.f32 %v1920, %v2327
      %v2378 = vadd.f32 %v1921, %v2332
      %v2379 = vadd.f32 %v1922, %v2335
      %v2380 = vadd.f32 %v1923, %v2340
      %v2381 = vadd.f32 %v1924, %v2343
      %v2382 = vld [vmem:[#allocation2 + $0x8] sm:$0xe]
      %v2383 = vld [vmem:[#allocation2 + $0xc] sm:$0xf]
      %v2384 = vld [vmem:[#allocation2 + $0x10] sm:$0xf]
      %v2385 = vld [vmem:[#allocation2 + $0x14] sm:$0xf]
      %v2386 = vld [vmem:[#allocation2 + $0x18] sm:$0xf]
      %v2387 = vld [vmem:[#allocation2 + $0x1c] sm:$0xf]
      %v2388 = vld [vmem:[#allocation2 + $0x20] sm:$0xf]
      %v2389 = vld [vmem:[#allocation2 + $0x24] sm:$0xf]
      %v2390 = vld [vmem:[#allocation2 + $0x28] sm:$0xf]
      %v2391 = vld [vmem:[#allocation2 + $0x2c] sm:$0xf]
      %v2392 = vld [vmem:[#allocation2 + $0x30] sm:$0xf]
      %v2393 = vld [vmem:[#allocation2 + $0x34] sm:$0xf]
      %v2394 = vld [vmem:[#allocation2 + $0x38] sm:$0xf]
      %v2395 = vld [vmem:[#allocation2 + $0x3c] sm:$0xf]
      %v2396 = vld [vmem:[#allocation2 + $0x40] sm:$0xf]
      %v2397 = vld [vmem:[#allocation2 + $0x44] sm:$0xf]
      %v2398 = vld [vmem:[#allocation2 + $0x48] sm:$0xf]
      %v2399 = vld [vmem:[#allocation2 + $0x4c] sm:$0xf]
      %v2400 = vld [vmem:[#allocation2 + $0x50] sm:$0xf]
      %v2401 = vld [vmem:[#allocation2 + $0x54] sm:$0xf]
      %v2402 = vld [vmem:[#allocation2 + $0x58] sm:$0xf]
      %v2403 = vld [vmem:[#allocation2 + $0x5c] sm:$0xf]
      %v2404 = vld [vmem:[#allocation2 + $0x60] sm:$0xf]
      %v2405 = vld [vmem:[#allocation2 + $0x64] sm:$0xf]
      %v2406 = vld [vmem:[#allocation2 + $0x68] sm:$0xf]
      %v2407 = vld [vmem:[#allocation2 + $0x6c] sm:$0xf]
      %v2408 = vld [vmem:[#allocation2 + $0x70] sm:$0xf]
      %v2409 = vld [vmem:[#allocation2 + $0x74] sm:$0xf]
      %v2410 = vld [vmem:[#allocation2 + $0x78] sm:$0xf]
      %v2411 = vld [vmem:[#allocation2 + $0x7c] sm:$0xf]
      %v2412 = vld [vmem:[#allocation2 + $0x80] sm:$0xf]
      %v2413 = vld [vmem:[#allocation2 + $0x84] sm:$0xf]
      %v2414 = vld [vmem:[#allocation2 + $0x88] sm:$0xf]
      %v2415 = vld [vmem:[#allocation2 + $0x8c] sm:$0xf]
      %v2416 = vld [vmem:[#allocation2 + $0x90] sm:$0xf]
      %v2417 = vld [vmem:[#allocation2 + $0x94] sm:$0xf]
      %v2418 = vld [vmem:[#allocation2 + $0x98] sm:$0x1]
      %s2419 = scalar_lea.vmem %s1, 256
      %v2420 = vld [vmem:[%s2419] sm:$0xf]
      %v2421 = vld [vmem:[%s2419 + $0x4] sm:$0xf]
      %v2422 = vld [vmem:[%s2419 + $0x8] sm:$0xf]
      %v2423 = vld [vmem:[%s2419 + $0xc] sm:$0xf]
      %v2424 = vld [vmem:[%s2419 + $0x10] sm:$0xf]
      %v2425 = vld [vmem:[%s2419 + $0x14] sm:$0xf]
      %v2426 = vld [vmem:[%s2419 + $0x18] sm:$0xf]
      %v2427 = vld [vmem:[%s2419 + $0x1c] sm:$0xf]
      %v2428 = vld [vmem:[%s2419 + $0x20] sm:$0xf]
      %v2429 = vld [vmem:[%s2419 + $0x24] sm:$0xf]
      %v2430 = vld [vmem:[%s2419 + $0x28] sm:$0xf]
      %v2431 = vld [vmem:[%s2419 + $0x2c] sm:$0xf]
      %v2432 = vld [vmem:[%s2419 + $0x30] sm:$0xf]
      %v2433 = vld [vmem:[%s2419 + $0x34] sm:$0xf]
      %v2434 = vld [vmem:[%s2419 + $0x38] sm:$0xf]
      %v2435 = vld [vmem:[%s2419 + $0x3c] sm:$0xf]
      %v2473 = vunpack.c.l.b16 %v2382
      %v2474 = vunpack.c.l.b16 %v2383
      %v2475 = vunpack.c.l.b16 %v2384
      %v2476 = vunpack.c.l.b16 %v2385
      %v2477 = vunpack.c.l.b16 %v2386
      %v2478 = vunpack.c.l.b16 %v2387
      %v2479 = vunpack.c.l.b16 %v2388
      %v2480 = vunpack.c.l.b16 %v2389
      %v2481 = vunpack.c.l.b16 %v2390
      %v2482 = vunpack.c.l.b16 %v2391
      %v2483 = vunpack.c.l.b16 %v2392
      %v2484 = vunpack.c.l.b16 %v2393
      %v2485 = vunpack.c.l.b16 %v2394
      %v2486 = vunpack.c.l.b16 %v2395
      %v2487 = vunpack.c.l.b16 %v2396
      %v2488 = vunpack.c.l.b16 %v2397
      %v2489 = vunpack.c.l.b16 %v2398
      %v2490 = vunpack.c.l.b16 %v2399
      %v2491 = vunpack.c.l.b16 %v2400
      %v2492 = vunpack.c.l.b16 %v2401
      %v2493 = vunpack.c.l.b16 %v2402
      %v2494 = vunpack.c.l.b16 %v2403
      %v2495 = vunpack.c.l.b16 %v2404
      %v2496 = vunpack.c.l.b16 %v2405
      %v2497 = vunpack.c.l.b16 %v2406
      %v2498 = vunpack.c.l.b16 %v2407
      %v2499 = vunpack.c.l.b16 %v2408
      %v2500 = vunpack.c.l.b16 %v2409
      %v2501 = vunpack.c.l.b16 %v2410
      %v2502 = vunpack.c.l.b16 %v2411
      %v2503 = vunpack.c.l.b16 %v2412
      %v2504 = vunpack.c.l.b16 %v2413
      %v2505 = vunpack.c.l.b16 %v2414
      %v2506 = vunpack.c.l.b16 %v2415
      %v2507 = vunpack.c.l.b16 %v2416
      %v2508 = vunpack.c.l.b16 %v2417
      %v2509 = vunpack.c.l.b16 %v2418
      %v2510 = vpack.c.b16 %v2474, %v2473
      %v2511 = vpack.c.b16 %v2476, %v2475
      %v2512 = vpack.c.b16 %v2478, %v2477
      %v2513 = vpack.c.b16 %v2480, %v2479
      %v2514 = vpack.c.b16 %v2482, %v2481
      %v2515 = vpack.c.b16 %v2484, %v2483
      %v2516 = vpack.c.b16 %v2486, %v2485
      %v2517 = vpack.c.b16 %v2488, %v2487
      %v2518 = vpack.c.b16 %v2490, %v2489
      %v2519 = vpack.c.b16 %v2492, %v2491
      %v2520 = vpack.c.b16 %v2494, %v2493
      %v2521 = vpack.c.b16 %v2496, %v2495
      %v2522 = vpack.c.b16 %v2498, %v2497
      %v2523 = vpack.c.b16 %v2500, %v2499
      %v2524 = vpack.c.b16 %v2502, %v2501
      %v2525 = vpack.c.b16 %v2504, %v2503
      %v2526 = vpack.c.b16 %v2506, %v2505
      %v2527 = vpack.c.b16 %v2508, %v2507
      %v2528 = vpack.c.b16 %v2509, %v2509
      %vm2529 = vsmask.f32 6400
      %v2531 = vshrl.u32 %v2510, 16
      %v2533 = vrot.slane %v2531, 1
      %v2534 = vshll.u32 %v2510, 16
      %v2536 = vrot.slane %v2534, 2
      %v2537 = vor.u32 %v2533, %v2536
      %v2539 = vshrl.u32 %v2511, 16
      %v2541 = vrot.slane %v2539, 1
      %v2542 = vshll.u32 %v2511, 16
      %v2544 = vrot.slane %v2542, 2
      %v2545 = vor.u32 %v2541, %v2544
      %v2546 = vsel %vm2529, %v2537, %v2545
      %v2548 = vshrl.u32 %v2512, 16
      %v2550 = vrot.slane %v2548, 1
      %v2551 = vshll.u32 %v2512, 16
      %v2553 = vrot.slane %v2551, 2
      %v2554 = vor.u32 %v2550, %v2553
      %v2555 = vsel %vm2529, %v2545, %v2554
      %v2557 = vshrl.u32 %v2513, 16
      %v2559 = vrot.slane %v2557, 1
      %v2560 = vshll.u32 %v2513, 16
      %v2562 = vrot.slane %v2560, 2
      %v2563 = vor.u32 %v2559, %v2562
      %v2564 = vsel %vm2529, %v2554, %v2563
      %v2566 = vshrl.u32 %v2514, 16
      %v2568 = vrot.slane %v2566, 1
      %v2569 = vshll.u32 %v2514, 16
      %v2571 = vrot.slane %v2569, 2
      %v2572 = vor.u32 %v2568, %v2571
      %v2573 = vsel %vm2529, %v2563, %v2572
      %v2575 = vshrl.u32 %v2515, 16
      %v2577 = vrot.slane %v2575, 1
      %v2578 = vshll.u32 %v2515, 16
      %v2580 = vrot.slane %v2578, 2
      %v2581 = vor.u32 %v2577, %v2580
      %v2582 = vsel %vm2529, %v2572, %v2581
      %v2584 = vshrl.u32 %v2516, 16
      %v2586 = vrot.slane %v2584, 1
      %v2587 = vshll.u32 %v2516, 16
      %v2589 = vrot.slane %v2587, 2
      %v2590 = vor.u32 %v2586, %v2589
      %v2591 = vsel %vm2529, %v2581, %v2590
      %v2593 = vshrl.u32 %v2517, 16
      %v2595 = vrot.slane %v2593, 1
      %v2596 = vshll.u32 %v2517, 16
      %v2598 = vrot.slane %v2596, 2
      %v2599 = vor.u32 %v2595, %v2598
      %v2600 = vsel %vm2529, %v2590, %v2599
      %v2602 = vshrl.u32 %v2518, 16
      %v2604 = vrot.slane %v2602, 1
      %v2605 = vshll.u32 %v2518, 16
      %v2607 = vrot.slane %v2605, 2
      %v2608 = vor.u32 %v2604, %v2607
      %v2609 = vsel %vm2529, %v2599, %v2608
      %v2611 = vshrl.u32 %v2519, 16
      %v2613 = vrot.slane %v2611, 1
      %v2614 = vshll.u32 %v2519, 16
      %v2616 = vrot.slane %v2614, 2
      %v2617 = vor.u32 %v2613, %v2616
      %v2618 = vsel %vm2529, %v2608, %v2617
      %v2620 = vshrl.u32 %v2520, 16
      %v2622 = vrot.slane %v2620, 1
      %v2623 = vshll.u32 %v2520, 16
      %v2625 = vrot.slane %v2623, 2
      %v2626 = vor.u32 %v2622, %v2625
      %v2627 = vsel %vm2529, %v2617, %v2626
      %v2629 = vshrl.u32 %v2521, 16
      %v2631 = vrot.slane %v2629, 1
      %v2632 = vshll.u32 %v2521, 16
      %v2634 = vrot.slane %v2632, 2
      %v2635 = vor.u32 %v2631, %v2634
      %v2636 = vsel %vm2529, %v2626, %v2635
      %v2638 = vshrl.u32 %v2522, 16
      %v2640 = vrot.slane %v2638, 1
      %v2641 = vshll.u32 %v2522, 16
      %v2643 = vrot.slane %v2641, 2
      %v2644 = vor.u32 %v2640, %v2643
      %v2645 = vsel %vm2529, %v2635, %v2644
      %v2647 = vshrl.u32 %v2523, 16
      %v2649 = vrot.slane %v2647, 1
      %v2650 = vshll.u32 %v2523, 16
      %v2652 = vrot.slane %v2650, 2
      %v2653 = vor.u32 %v2649, %v2652
      %v2654 = vsel %vm2529, %v2644, %v2653
      %v2656 = vshrl.u32 %v2524, 16
      %v2658 = vrot.slane %v2656, 1
      %v2659 = vshll.u32 %v2524, 16
      %v2661 = vrot.slane %v2659, 2
      %v2662 = vor.u32 %v2658, %v2661
      %v2663 = vsel %vm2529, %v2653, %v2662
      %v2665 = vshrl.u32 %v2525, 16
      %v2667 = vrot.slane %v2665, 1
      %v2668 = vshll.u32 %v2525, 16
      %v2670 = vrot.slane %v2668, 2
      %v2671 = vor.u32 %v2667, %v2670
      %v2672 = vsel %vm2529, %v2662, %v2671
      %v2674 = vshrl.u32 %v2526, 16
      %v2676 = vrot.slane %v2674, 1
      %v2677 = vshll.u32 %v2526, 16
      %v2679 = vrot.slane %v2677, 2
      %v2680 = vor.u32 %v2676, %v2679
      %v2681 = vsel %vm2529, %v2671, %v2680
      %v2683 = vshrl.u32 %v2527, 16
      %v2685 = vrot.slane %v2683, 1
      %v2686 = vshll.u32 %v2527, 16
      %v2688 = vrot.slane %v2686, 2
      %v2689 = vor.u32 %v2685, %v2688
      %v2690 = vsel %vm2529, %v2680, %v2689
      %v2692 = vshll.u32 %v2528, 16
      %v2694 = vrot.slane %v2692, 2
      %v2695 = vsel %vm2529, %v2689, %v2694
      %v2730 = vunpack.c.l.b16 %v2420
      %v2731 = vunpack.c.l.b16 %v2421
      %v2732 = vunpack.c.l.b16 %v2422
      %v2733 = vunpack.c.l.b16 %v2423
      %v2734 = vunpack.c.l.b16 %v2424
      %v2735 = vunpack.c.l.b16 %v2425
      %v2736 = vunpack.c.l.b16 %v2426
      %v2737 = vunpack.c.l.b16 %v2427
      %v2738 = vunpack.c.l.b16 %v2428
      %v2739 = vunpack.c.l.b16 %v2429
      %v2740 = vunpack.c.l.b16 %v2430
      %v2741 = vunpack.c.l.b16 %v2431
      %v2742 = vunpack.c.l.b16 %v2432
      %v2743 = vunpack.c.l.b16 %v2433
      %v2744 = vunpack.c.l.b16 %v2434
      %v2745 = vunpack.c.l.b16 %v2435
      %v2746 = vpack.c.b16 %v2731, %v2730
      %v2747 = vpack.c.b16 %v2733, %v2732
      %v2748 = vpack.c.b16 %v2735, %v2734
      %v2749 = vpack.c.b16 %v2737, %v2736
      %v2750 = vpack.c.b16 %v2739, %v2738
      %v2751 = vpack.c.b16 %v2741, %v2740
      %v2752 = vpack.c.b16 %v2743, %v2742
      %v2753 = vpack.c.b16 %v2745, %v2744
      %2762 = vmatprep.subr.bf16.mxu0 0
      %2763 = vmatpush1.bf16.msra.mxu0 %v2753
      %2764 = vmatprep.subr.bf16.mxu0 0
      %2765 = vmatpush1.bf16.msra.mxu0 %v2752
      %2766 = vmatprep.subr.bf16.mxu0 0
      %2767 = vmatpush1.bf16.msra.mxu0 %v2751
      %2768 = vmatprep.subr.bf16.mxu0 0
      %2769 = vmatpush1.bf16.msra.mxu0 %v2750
      %2770 = vmatprep.subr.bf16.mxu0 0
      %2771 = vmatpush1.bf16.msra.mxu0 %v2749
      %2772 = vmatprep.subr.bf16.mxu0 0
      %2773 = vmatpush1.bf16.msra.mxu0 %v2748
      %2774 = vmatprep.subr.bf16.mxu0 0
      %2775 = vmatpush1.bf16.msra.mxu0 %v2747
      %2776 = vmatprep.subr.bf16.mxu0 0
      %2777 = vmatpush1.bf16.msra.mxu0 %v2746
      %2778 = vmatprep.subr.bf16.mxu0 0
      %2779 = vmatpush2.bf16.msra.mxu0 0
      %2780 = vmatprep.subr.bf16.mxu0 0
      %2781 = vmatpush2.bf16.msra.mxu0 0
      %2782 = vmatprep.subr.bf16.mxu0 0
      %2783 = vmatpush2.bf16.msra.mxu0 0
      %2784 = vmatprep.subr.bf16.mxu0 0
      %2785 = vmatpush2.bf16.msra.mxu0 0
      %2786 = vmatprep.subr.bf16.mxu0 0
      %2787 = vmatpush2.bf16.msra.mxu0 0
      %2788 = vmatprep.subr.bf16.mxu0 0
      %2789 = vmatpush2.bf16.msra.mxu0 0
      %2790 = vmatprep.subr.bf16.mxu0 0
      %2791 = vmatpush2.bf16.msra.mxu0 0
      %2792 = vmatprep.subr.bf16.mxu0 0
      %2793 = vmatpush2.bf16.msra.mxu0 0
      %2794 = vmatprep.mubr.bf16.mxu0 0
      %2795 = vmatmul.mubr.bf16.gmra.mxu0 %v2546
      %v2796 = vpop.f32.mrf.mxu0
      %v2797 = vadd.f32 0.0, %v2796
      %v2798 = vpop.f32.mrf.mxu0
      %v2799 = vpop.f32.mrf.mxu0
      %v2800 = vadd.f32 0.0, %v2799
      %v2801 = vpop.f32.mrf.mxu0
      %2802 = vmatprep.mubr.bf16.mxu0 0
      %2803 = vmatmul.mubr.bf16.gmra.mxu0 %v2555
      %v2804 = vpop.f32.mrf.mxu0
      %v2805 = vadd.f32 0.0, %v2804
      %v2806 = vpop.f32.mrf.mxu0
      %v2807 = vpop.f32.mrf.mxu0
      %v2808 = vadd.f32 0.0, %v2807
      %v2809 = vpop.f32.mrf.mxu0
      %2810 = vmatprep.mubr.bf16.mxu0 0
      %2811 = vmatmul.mubr.bf16.gmra.mxu0 %v2564
      %v2812 = vpop.f32.mrf.mxu0
      %v2813 = vadd.f32 0.0, %v2812
      %v2814 = vpop.f32.mrf.mxu0
      %v2815 = vpop.f32.mrf.mxu0
      %v2816 = vadd.f32 0.0, %v2815
      %v2817 = vpop.f32.mrf.mxu0
      %2818 = vmatprep.mubr.bf16.mxu0 0
      %2819 = vmatmul.mubr.bf16.gmra.mxu0 %v2573
      %v2820 = vpop.f32.mrf.mxu0
      %v2821 = vadd.f32 0.0, %v2820
      %v2822 = vpop.f32.mrf.mxu0
      %v2823 = vpop.f32.mrf.mxu0
      %v2824 = vadd.f32 0.0, %v2823
      %v2825 = vpop.f32.mrf.mxu0
      %2826 = vmatprep.mubr.bf16.mxu0 0
      %2827 = vmatmul.mubr.bf16.gmra.mxu0 %v2582
      %v2828 = vpop.f32.mrf.mxu0
      %v2829 = vadd.f32 0.0, %v2828
      %v2830 = vpop.f32.mrf.mxu0
      %v2831 = vpop.f32.mrf.mxu0
      %v2832 = vadd.f32 0.0, %v2831
      %v2833 = vpop.f32.mrf.mxu0
      %2834 = vmatprep.mubr.bf16.mxu0 0
      %2835 = vmatmul.mubr.bf16.gmra.mxu0 %v2591
      %v2836 = vpop.f32.mrf.mxu0
      %v2837 = vadd.f32 0.0, %v2836
      %v2838 = vpop.f32.mrf.mxu0
      %v2839 = vpop.f32.mrf.mxu0
      %v2840 = vadd.f32 0.0, %v2839
      %v2841 = vpop.f32.mrf.mxu0
      %2842 = vmatprep.mubr.bf16.mxu0 0
      %2843 = vmatmul.mubr.bf16.gmra.mxu0 %v2600
      %v2844 = vpop.f32.mrf.mxu0
      %v2845 = vadd.f32 0.0, %v2844
      %v2846 = vpop.f32.mrf.mxu0
      %v2847 = vpop.f32.mrf.mxu0
      %v2848 = vadd.f32 0.0, %v2847
      %v2849 = vpop.f32.mrf.mxu0
      %2850 = vmatprep.mubr.bf16.mxu0 0
      %2851 = vmatmul.mubr.bf16.gmra.mxu0 %v2609
      %v2852 = vpop.f32.mrf.mxu0
      %v2853 = vadd.f32 0.0, %v2852
      %v2854 = vpop.f32.mrf.mxu0
      %v2855 = vpop.f32.mrf.mxu0
      %v2856 = vadd.f32 0.0, %v2855
      %v2857 = vpop.f32.mrf.mxu0
      %2858 = vmatprep.mubr.bf16.mxu0 0
      %2859 = vmatmul.mubr.bf16.gmra.mxu0 %v2618
      %v2860 = vpop.f32.mrf.mxu0
      %v2861 = vadd.f32 0.0, %v2860
      %v2862 = vpop.f32.mrf.mxu0
      %v2863 = vpop.f32.mrf.mxu0
      %v2864 = vadd.f32 0.0, %v2863
      %v2865 = vpop.f32.mrf.mxu0
      %2866 = vmatprep.mubr.bf16.mxu0 0
      %2867 = vmatmul.mubr.bf16.gmra.mxu0 %v2627
      %v2868 = vpop.f32.mrf.mxu0
      %v2869 = vadd.f32 0.0, %v2868
      %v2870 = vpop.f32.mrf.mxu0
      %v2871 = vpop.f32.mrf.mxu0
      %v2872 = vadd.f32 0.0, %v2871
      %v2873 = vpop.f32.mrf.mxu0
      %2874 = vmatprep.mubr.bf16.mxu0 0
      %2875 = vmatmul.mubr.bf16.gmra.mxu0 %v2636
      %v2876 = vpop.f32.mrf.mxu0
      %v2877 = vadd.f32 0.0, %v2876
      %v2878 = vpop.f32.mrf.mxu0
      %v2879 = vpop.f32.mrf.mxu0
      %v2880 = vadd.f32 0.0, %v2879
      %v2881 = vpop.f32.mrf.mxu0
      %2882 = vmatprep.mubr.bf16.mxu0 0
      %2883 = vmatmul.mubr.bf16.gmra.mxu0 %v2645
      %v2884 = vpop.f32.mrf.mxu0
      %v2885 = vadd.f32 0.0, %v2884
      %v2886 = vpop.f32.mrf.mxu0
      %v2887 = vpop.f32.mrf.mxu0
      %v2888 = vadd.f32 0.0, %v2887
      %v2889 = vpop.f32.mrf.mxu0
      %2890 = vmatprep.mubr.bf16.mxu0 0
      %2891 = vmatmul.mubr.bf16.gmra.mxu0 %v2654
      %v2892 = vpop.f32.mrf.mxu0
      %v2893 = vadd.f32 0.0, %v2892
      %v2894 = vpop.f32.mrf.mxu0
      %v2895 = vpop.f32.mrf.mxu0
      %v2896 = vadd.f32 0.0, %v2895
      %v2897 = vpop.f32.mrf.mxu0
      %2898 = vmatprep.mubr.bf16.mxu0 0
      %2899 = vmatmul.mubr.bf16.gmra.mxu0 %v2663
      %v2900 = vpop.f32.mrf.mxu0
      %v2901 = vadd.f32 0.0, %v2900
      %v2902 = vpop.f32.mrf.mxu0
      %v2903 = vpop.f32.mrf.mxu0
      %v2904 = vadd.f32 0.0, %v2903
      %v2905 = vpop.f32.mrf.mxu0
      %2906 = vmatprep.mubr.bf16.mxu0 0
      %2907 = vmatmul.mubr.bf16.gmra.mxu0 %v2672
      %v2908 = vpop.f32.mrf.mxu0
      %v2909 = vadd.f32 0.0, %v2908
      %v2910 = vpop.f32.mrf.mxu0
      %v2911 = vpop.f32.mrf.mxu0
      %v2912 = vadd.f32 0.0, %v2911
      %v2913 = vpop.f32.mrf.mxu0
      %2914 = vmatprep.mubr.bf16.mxu0 0
      %2915 = vmatmul.mubr.bf16.gmra.mxu0 %v2681
      %v2916 = vpop.f32.mrf.mxu0
      %v2917 = vadd.f32 0.0, %v2916
      %v2918 = vpop.f32.mrf.mxu0
      %v2919 = vpop.f32.mrf.mxu0
      %v2920 = vadd.f32 0.0, %v2919
      %v2921 = vpop.f32.mrf.mxu0
      %2922 = vmatprep.mubr.bf16.mxu0 0
      %2923 = vmatmul.mubr.bf16.gmra.mxu0 %v2690
      %v2924 = vpop.f32.mrf.mxu0
      %v2925 = vadd.f32 0.0, %v2924
      %v2926 = vpop.f32.mrf.mxu0
      %v2927 = vpop.f32.mrf.mxu0
      %v2928 = vadd.f32 0.0, %v2927
      %v2929 = vpop.f32.mrf.mxu0
      %2930 = vmatprep.mubr.bf16.mxu0 0
      %2931 = vmatmul.mubr.bf16.gmra.mxu0 %v2695
      %v2932 = vpop.f32.mrf.mxu0
      %v2933 = vadd.f32 0.0, %v2932
      %v2934 = vpop.f32.mrf.mxu0
      %v2935 = vpop.f32.mrf.mxu0
      %v2936 = vadd.f32 0.0, %v2935
      %v2937 = vpop.f32.mrf.mxu0
      %2938 = vdwg.mxu0
      %v2939 = vadd.f32 %v2346, %v2797
      %v2940 = vadd.f32 %v2347, %v2800
      %v2941 = vadd.f32 %v2348, %v2805
      %v2942 = vadd.f32 %v2349, %v2808
      %v2943 = vadd.f32 %v2350, %v2813
      %v2944 = vadd.f32 %v2351, %v2816
      %v2945 = vadd.f32 %v2352, %v2821
      %v2946 = vadd.f32 %v2353, %v2824
      %v2947 = vadd.f32 %v2354, %v2829
      %v2948 = vadd.f32 %v2355, %v2832
      %v2949 = vadd.f32 %v2356, %v2837
      %v2950 = vadd.f32 %v2357, %v2840
      %v2951 = vadd.f32 %v2358, %v2845
      %v2952 = vadd.f32 %v2359, %v2848
      %v2953 = vadd.f32 %v2360, %v2853
      %v2954 = vadd.f32 %v2361, %v2856
      %v2955 = vadd.f32 %v2362, %v2861
      %v2956 = vadd.f32 %v2363, %v2864
      %v2957 = vadd.f32 %v2364, %v2869
      %v2958 = vadd.f32 %v2365, %v2872
      %v2959 = vadd.f32 %v2366, %v2877
      %v2960 = vadd.f32 %v2367, %v2880
      %v2961 = vadd.f32 %v2368, %v2885
      %v2962 = vadd.f32 %v2369, %v2888
      %v2963 = vadd.f32 %v2370, %v2893
      %v2964 = vadd.f32 %v2371, %v2896
      %v2965 = vadd.f32 %v2372, %v2901
      %v2966 = vadd.f32 %v2373, %v2904
      %v2967 = vadd.f32 %v2374, %v2909
      %v2968 = vadd.f32 %v2375, %v2912
      %v2969 = vadd.f32 %v2376, %v2917
      %v2970 = vadd.f32 %v2377, %v2920
      %v2971 = vadd.f32 %v2378, %v2925
      %v2972 = vadd.f32 %v2379, %v2928
      %v2973 = vadd.f32 %v2380, %v2933
      %v2974 = vadd.f32 %v2381, %v2936
      %v2975 = vld [vmem:[#allocation2 + $0x8] sm:$0xc]
      %s2976 = scalar_lea.vmem %s1, 320
      %v2977 = vld [vmem:[%s2976] sm:$0xf]
      %v2978 = vld [vmem:[%s2976 + $0x4] sm:$0xf]
      %v2979 = vld [vmem:[%s2976 + $0x8] sm:$0xf]
      %v2980 = vld [vmem:[%s2976 + $0xc] sm:$0xf]
      %v2981 = vld [vmem:[%s2976 + $0x10] sm:$0xf]
      %v2982 = vld [vmem:[%s2976 + $0x14] sm:$0xf]
      %v2983 = vld [vmem:[%s2976 + $0x18] sm:$0xf]
      %v2984 = vld [vmem:[%s2976 + $0x1c] sm:$0xf]
      %v2985 = vld [vmem:[%s2976 + $0x20] sm:$0xf]
      %v2986 = vld [vmem:[%s2976 + $0x24] sm:$0xf]
      %v2987 = vld [vmem:[%s2976 + $0x28] sm:$0xf]
      %v2988 = vld [vmem:[%s2976 + $0x2c] sm:$0xf]
      %v2989 = vld [vmem:[%s2976 + $0x30] sm:$0xf]
      %v2990 = vld [vmem:[%s2976 + $0x34] sm:$0xf]
      %v2991 = vld [vmem:[%s2976 + $0x38] sm:$0xf]
      %v2992 = vld [vmem:[%s2976 + $0x3c] sm:$0xf]
      %v2994 = vunpack.c.l.b16 %v2975
      %v2995 = vpack.c.b16 %v2474, %v2994
      %vm2996 = vcmask 1045504
      %v2997 = vrot.slane %v2995, 2
      %v2998 = vrot.slane %v2511, 2
      %v2999 = vsel %vm2996, %v2997, %v2998
      %v3000 = vrot.slane %v2512, 2
      %v3001 = vsel %vm2996, %v2998, %v3000
      %v3002 = vrot.slane %v2513, 2
      %v3003 = vsel %vm2996, %v3000, %v3002
      %v3004 = vrot.slane %v2514, 2
      %v3005 = vsel %vm2996, %v3002, %v3004
      %v3006 = vrot.slane %v2515, 2
      %v3007 = vsel %vm2996, %v3004, %v3006
      %v3008 = vrot.slane %v2516, 2
      %v3009 = vsel %vm2996, %v3006, %v3008
      %v3010 = vrot.slane %v2517, 2
      %v3011 = vsel %vm2996, %v3008, %v3010
      %v3012 = vrot.slane %v2518, 2
      %v3013 = vsel %vm2996, %v3010, %v3012
      %v3014 = vrot.slane %v2519, 2
      %v3015 = vsel %vm2996, %v3012, %v3014
      %v3016 = vrot.slane %v2520, 2
      %v3017 = vsel %vm2996, %v3014, %v3016
      %v3018 = vrot.slane %v2521, 2
      %v3019 = vsel %vm2996, %v3016, %v3018
      %v3020 = vrot.slane %v2522, 2
      %v3021 = vsel %vm2996, %v3018, %v3020
      %v3022 = vrot.slane %v2523, 2
      %v3023 = vsel %vm2996, %v3020, %v3022
      %v3024 = vrot.slane %v2524, 2
      %v3025 = vsel %vm2996, %v3022, %v3024
      %v3026 = vrot.slane %v2525, 2
      %v3027 = vsel %vm2996, %v3024, %v3026
      %v3028 = vrot.slane %v2526, 2
      %v3029 = vsel %vm2996, %v3026, %v3028
      %v3030 = vrot.slane %v2527, 2
      %v3031 = vsel %vm2996, %v3028, %v3030
      %v3032 = vrot.slane %v2528, 2
      %v3033 = vsel %vm2996, %v3030, %v3032
      %v3068 = vunpack.c.l.b16 %v2977
      %v3069 = vunpack.c.l.b16 %v2978
      %v3070 = vunpack.c.l.b16 %v2979
      %v3071 = vunpack.c.l.b16 %v2980
      %v3072 = vunpack.c.l.b16 %v2981
      %v3073 = vunpack.c.l.b16 %v2982
      %v3074 = vunpack.c.l.b16 %v2983
      %v3075 = vunpack.c.l.b16 %v2984
      %v3076 = vunpack.c.l.b16 %v2985
      %v3077 = vunpack.c.l.b16 %v2986
      %v3078 = vunpack.c.l.b16 %v2987
      %v3079 = vunpack.c.l.b16 %v2988
      %v3080 = vunpack.c.l.b16 %v2989
      %v3081 = vunpack.c.l.b16 %v2990
      %v3082 = vunpack.c.l.b16 %v2991
      %v3083 = vunpack.c.l.b16 %v2992
      %v3084 = vpack.c.b16 %v3069, %v3068
      %v3085 = vpack.c.b16 %v3071, %v3070
      %v3086 = vpack.c.b16 %v3073, %v3072
      %v3087 = vpack.c.b16 %v3075, %v3074
      %v3088 = vpack.c.b16 %v3077, %v3076
      %v3089 = vpack.c.b16 %v3079, %v3078
      %v3090 = vpack.c.b16 %v3081, %v3080
      %v3091 = vpack.c.b16 %v3083, %v3082
      %3100 = vmatprep.subr.bf16.mxu0 0
      %3101 = vmatpush1.bf16.msra.mxu0 %v3091
      %3102 = vmatprep.subr.bf16.mxu0 0
      %3103 = vmatpush1.bf16.msra.mxu0 %v3090
      %3104 = vmatprep.subr.bf16.mxu0 0
      %3105 = vmatpush1.bf16.msra.mxu0 %v3089
      %3106 = vmatprep.subr.bf16.mxu0 0
      %3107 = vmatpush1.bf16.msra.mxu0 %v3088
      %3108 = vmatprep.subr.bf16.mxu0 0
      %3109 = vmatpush1.bf16.msra.mxu0 %v3087
      %3110 = vmatprep.subr.bf16.mxu0 0
      %3111 = vmatpush1.bf16.msra.mxu0 %v3086
      %3112 = vmatprep.subr.bf16.mxu0 0
      %3113 = vmatpush1.bf16.msra.mxu0 %v3085
      %3114 = vmatprep.subr.bf16.mxu0 0
      %3115 = vmatpush1.bf16.msra.mxu0 %v3084
      %3116 = vmatprep.subr.bf16.mxu0 0
      %3117 = vmatpush2.bf16.msra.mxu0 0
      %3118 = vmatprep.subr.bf16.mxu0 0
      %3119 = vmatpush2.bf16.msra.mxu0 0
      %3120 = vmatprep.subr.bf16.mxu0 0
      %3121 = vmatpush2.bf16.msra.mxu0 0
      %3122 = vmatprep.subr.bf16.mxu0 0
      %3123 = vmatpush2.bf16.msra.mxu0 0
      %3124 = vmatprep.subr.bf16.mxu0 0
      %3125 = vmatpush2.bf16.msra.mxu0 0
      %3126 = vmatprep.subr.bf16.mxu0 0
      %3127 = vmatpush2.bf16.msra.mxu0 0
      %3128 = vmatprep.subr.bf16.mxu0 0
      %3129 = vmatpush2.bf16.msra.mxu0 0
      %3130 = vmatprep.subr.bf16.mxu0 0
      %3131 = vmatpush2.bf16.msra.mxu0 0
      %3132 = vmatprep.mubr.bf16.mxu0 0
      %3133 = vmatmul.mubr.bf16.gmra.mxu0 %v2999
      %v3134 = vpop.f32.mrf.mxu0
      %v3135 = vadd.f32 0.0, %v3134
      %v3136 = vpop.f32.mrf.mxu0
      %v3137 = vpop.f32.mrf.mxu0
      %v3138 = vadd.f32 0.0, %v3137
      %v3139 = vpop.f32.mrf.mxu0
      %3140 = vmatprep.mubr.bf16.mxu0 0
      %3141 = vmatmul.mubr.bf16.gmra.mxu0 %v3001
      %v3142 = vpop.f32.mrf.mxu0
      %v3143 = vadd.f32 0.0, %v3142
      %v3144 = vpop.f32.mrf.mxu0
      %v3145 = vpop.f32.mrf.mxu0
      %v3146 = vadd.f32 0.0, %v3145
      %v3147 = vpop.f32.mrf.mxu0
      %3148 = vmatprep.mubr.bf16.mxu0 0
      %3149 = vmatmul.mubr.bf16.gmra.mxu0 %v3003
      %v3150 = vpop.f32.mrf.mxu0
      %v3151 = vadd.f32 0.0, %v3150
      %v3152 = vpop.f32.mrf.mxu0
      %v3153 = vpop.f32.mrf.mxu0
      %v3154 = vadd.f32 0.0, %v3153
      %v3155 = vpop.f32.mrf.mxu0
      %3156 = vmatprep.mubr.bf16.mxu0 0
      %3157 = vmatmul.mubr.bf16.gmra.mxu0 %v3005
      %v3158 = vpop.f32.mrf.mxu0
      %v3159 = vadd.f32 0.0, %v3158
      %v3160 = vpop.f32.mrf.mxu0
      %v3161 = vpop.f32.mrf.mxu0
      %v3162 = vadd.f32 0.0, %v3161
      %v3163 = vpop.f32.mrf.mxu0
      %3164 = vmatprep.mubr.bf16.mxu0 0
      %3165 = vmatmul.mubr.bf16.gmra.mxu0 %v3007
      %v3166 = vpop.f32.mrf.mxu0
      %v3167 = vadd.f32 0.0, %v3166
      %v3168 = vpop.f32.mrf.mxu0
      %v3169 = vpop.f32.mrf.mxu0
      %v3170 = vadd.f32 0.0, %v3169
      %v3171 = vpop.f32.mrf.mxu0
      %3172 = vmatprep.mubr.bf16.mxu0 0
      %3173 = vmatmul.mubr.bf16.gmra.mxu0 %v3009
      %v3174 = vpop.f32.mrf.mxu0
      %v3175 = vadd.f32 0.0, %v3174
      %v3176 = vpop.f32.mrf.mxu0
      %v3177 = vpop.f32.mrf.mxu0
      %v3178 = vadd.f32 0.0, %v3177
      %v3179 = vpop.f32.mrf.mxu0
      %3180 = vmatprep.mubr.bf16.mxu0 0
      %3181 = vmatmul.mubr.bf16.gmra.mxu0 %v3011
      %v3182 = vpop.f32.mrf.mxu0
      %v3183 = vadd.f32 0.0, %v3182
      %v3184 = vpop.f32.mrf.mxu0
      %v3185 = vpop.f32.mrf.mxu0
      %v3186 = vadd.f32 0.0, %v3185
      %v3187 = vpop.f32.mrf.mxu0
      %3188 = vmatprep.mubr.bf16.mxu0 0
      %3189 = vmatmul.mubr.bf16.gmra.mxu0 %v3013
      %v3190 = vpop.f32.mrf.mxu0
      %v3191 = vadd.f32 0.0, %v3190
      %v3192 = vpop.f32.mrf.mxu0
      %v3193 = vpop.f32.mrf.mxu0
      %v3194 = vadd.f32 0.0, %v3193
      %v3195 = vpop.f32.mrf.mxu0
      %3196 = vmatprep.mubr.bf16.mxu0 0
      %3197 = vmatmul.mubr.bf16.gmra.mxu0 %v3015
      %v3198 = vpop.f32.mrf.mxu0
      %v3199 = vadd.f32 0.0, %v3198
      %v3200 = vpop.f32.mrf.mxu0
      %v3201 = vpop.f32.mrf.mxu0
      %v3202 = vadd.f32 0.0, %v3201
      %v3203 = vpop.f32.mrf.mxu0
      %3204 = vmatprep.mubr.bf16.mxu0 0
      %3205 = vmatmul.mubr.bf16.gmra.mxu0 %v3017
      %v3206 = vpop.f32.mrf.mxu0
      %v3207 = vadd.f32 0.0, %v3206
      %v3208 = vpop.f32.mrf.mxu0
      %v3209 = vpop.f32.mrf.mxu0
      %v3210 = vadd.f32 0.0, %v3209
      %v3211 = vpop.f32.mrf.mxu0
      %3212 = vmatprep.mubr.bf16.mxu0 0
      %3213 = vmatmul.mubr.bf16.gmra.mxu0 %v3019
      %v3214 = vpop.f32.mrf.mxu0
      %v3215 = vadd.f32 0.0, %v3214
      %v3216 = vpop.f32.mrf.mxu0
      %v3217 = vpop.f32.mrf.mxu0
      %v3218 = vadd.f32 0.0, %v3217
      %v3219 = vpop.f32.mrf.mxu0
      %3220 = vmatprep.mubr.bf16.mxu0 0
      %3221 = vmatmul.mubr.bf16.gmra.mxu0 %v3021
      %v3222 = vpop.f32.mrf.mxu0
      %v3223 = vadd.f32 0.0, %v3222
      %v3224 = vpop.f32.mrf.mxu0
      %v3225 = vpop.f32.mrf.mxu0
      %v3226 = vadd.f32 0.0, %v3225
      %v3227 = vpop.f32.mrf.mxu0
      %3228 = vmatprep.mubr.bf16.mxu0 0
      %3229 = vmatmul.mubr.bf16.gmra.mxu0 %v3023
      %v3230 = vpop.f32.mrf.mxu0
      %v3231 = vadd.f32 0.0, %v3230
      %v3232 = vpop.f32.mrf.mxu0
      %v3233 = vpop.f32.mrf.mxu0
      %v3234 = vadd.f32 0.0, %v3233
      %v3235 = vpop.f32.mrf.mxu0
      %3236 = vmatprep.mubr.bf16.mxu0 0
      %3237 = vmatmul.mubr.bf16.gmra.mxu0 %v3025
      %v3238 = vpop.f32.mrf.mxu0
      %v3239 = vadd.f32 0.0, %v3238
      %v3240 = vpop.f32.mrf.mxu0
      %v3241 = vpop.f32.mrf.mxu0
      %v3242 = vadd.f32 0.0, %v3241
      %v3243 = vpop.f32.mrf.mxu0
      %3244 = vmatprep.mubr.bf16.mxu0 0
      %3245 = vmatmul.mubr.bf16.gmra.mxu0 %v3027
      %v3246 = vpop.f32.mrf.mxu0
      %v3247 = vadd.f32 0.0, %v3246
      %v3248 = vpop.f32.mrf.mxu0
      %v3249 = vpop.f32.mrf.mxu0
      %v3250 = vadd.f32 0.0, %v3249
      %v3251 = vpop.f32.mrf.mxu0
      %3252 = vmatprep.mubr.bf16.mxu0 0
      %3253 = vmatmul.mubr.bf16.gmra.mxu0 %v3029
      %v3254 = vpop.f32.mrf.mxu0
      %v3255 = vadd.f32 0.0, %v3254
      %v3256 = vpop.f32.mrf.mxu0
      %v3257 = vpop.f32.mrf.mxu0
      %v3258 = vadd.f32 0.0, %v3257
      %v3259 = vpop.f32.mrf.mxu0
      %3260 = vmatprep.mubr.bf16.mxu0 0
      %3261 = vmatmul.mubr.bf16.gmra.mxu0 %v3031
      %v3262 = vpop.f32.mrf.mxu0
      %v3263 = vadd.f32 0.0, %v3262
      %v3264 = vpop.f32.mrf.mxu0
      %v3265 = vpop.f32.mrf.mxu0
      %v3266 = vadd.f32 0.0, %v3265
      %v3267 = vpop.f32.mrf.mxu0
      %3268 = vmatprep.mubr.bf16.mxu0 0
      %3269 = vmatmul.mubr.bf16.gmra.mxu0 %v3033
      %v3270 = vpop.f32.mrf.mxu0
      %v3271 = vadd.f32 0.0, %v3270
      %v3272 = vpop.f32.mrf.mxu0
      %v3273 = vpop.f32.mrf.mxu0
      %v3274 = vadd.f32 0.0, %v3273
      %v3275 = vpop.f32.mrf.mxu0
      %3276 = vdwg.mxu0
      %v3277 = vadd.f32 %v2939, %v3135
      %v3278 = vadd.f32 %v2940, %v3138
      %v3279 = vadd.f32 %v2941, %v3143
      %v3280 = vadd.f32 %v2942, %v3146
      %v3281 = vadd.f32 %v2943, %v3151
      %v3282 = vadd.f32 %v2944, %v3154
      %v3283 = vadd.f32 %v2945, %v3159
      %v3284 = vadd.f32 %v2946, %v3162
      %v3285 = vadd.f32 %v2947, %v3167
      %v3286 = vadd.f32 %v2948, %v3170
      %v3287 = vadd.f32 %v2949, %v3175
      %v3288 = vadd.f32 %v2950, %v3178
      %v3289 = vadd.f32 %v2951, %v3183
      %v3290 = vadd.f32 %v2952, %v3186
      %v3291 = vadd.f32 %v2953, %v3191
      %v3292 = vadd.f32 %v2954, %v3194
      %v3293 = vadd.f32 %v2955, %v3199
      %v3294 = vadd.f32 %v2956, %v3202
      %v3295 = vadd.f32 %v2957, %v3207
      %v3296 = vadd.f32 %v2958, %v3210
      %v3297 = vadd.f32 %v2959, %v3215
      %v3298 = vadd.f32 %v2960, %v3218
      %v3299 = vadd.f32 %v2961, %v3223
      %v3300 = vadd.f32 %v2962, %v3226
      %v3301 = vadd.f32 %v2963, %v3231
      %v3302 = vadd.f32 %v2964, %v3234
      %v3303 = vadd.f32 %v2965, %v3239
      %v3304 = vadd.f32 %v2966, %v3242
      %v3305 = vadd.f32 %v2967, %v3247
      %v3306 = vadd.f32 %v2968, %v3250
      %v3307 = vadd.f32 %v2969, %v3255
      %v3308 = vadd.f32 %v2970, %v3258
      %v3309 = vadd.f32 %v2971, %v3263
      %v3310 = vadd.f32 %v2972, %v3266
      %v3311 = vadd.f32 %v2973, %v3271
      %v3312 = vadd.f32 %v2974, %v3274
      %v3313 = vld [vmem:[#allocation2 + $0x10] sm:$0xc]
      %v3314 = vld [vmem:[#allocation2 + $0x14] sm:$0xf]
      %v3315 = vld [vmem:[#allocation2 + $0x18] sm:$0xf]
      %v3316 = vld [vmem:[#allocation2 + $0x1c] sm:$0xf]
      %v3317 = vld [vmem:[#allocation2 + $0x20] sm:$0xf]
      %v3318 = vld [vmem:[#allocation2 + $0x24] sm:$0xf]
      %v3319 = vld [vmem:[#allocation2 + $0x28] sm:$0xf]
      %v3320 = vld [vmem:[#allocation2 + $0x2c] sm:$0xf]
      %v3321 = vld [vmem:[#allocation2 + $0x30] sm:$0xf]
      %v3322 = vld [vmem:[#allocation2 + $0x34] sm:$0xf]
      %v3323 = vld [vmem:[#allocation2 + $0x38] sm:$0xf]
      %v3324 = vld [vmem:[#allocation2 + $0x3c] sm:$0xf]
      %v3325 = vld [vmem:[#allocation2 + $0x40] sm:$0xf]
      %v3326 = vld [vmem:[#allocation2 + $0x44] sm:$0xf]
      %v3327 = vld [vmem:[#allocation2 + $0x48] sm:$0xf]
      %v3328 = vld [vmem:[#allocation2 + $0x4c] sm:$0xf]
      %v3329 = vld [vmem:[#allocation2 + $0x50] sm:$0xf]
      %v3330 = vld [vmem:[#allocation2 + $0x54] sm:$0xf]
      %v3331 = vld [vmem:[#allocation2 + $0x58] sm:$0xf]
      %v3332 = vld [vmem:[#allocation2 + $0x5c] sm:$0xf]
      %v3333 = vld [vmem:[#allocation2 + $0x60] sm:$0xf]
      %v3334 = vld [vmem:[#allocation2 + $0x64] sm:$0xf]
      %v3335 = vld [vmem:[#allocation2 + $0x68] sm:$0xf]
      %v3336 = vld [vmem:[#allocation2 + $0x6c] sm:$0xf]
      %v3337 = vld [vmem:[#allocation2 + $0x70] sm:$0xf]
      %v3338 = vld [vmem:[#allocation2 + $0x74] sm:$0xf]
      %v3339 = vld [vmem:[#allocation2 + $0x78] sm:$0xf]
      %v3340 = vld [vmem:[#allocation2 + $0x7c] sm:$0xf]
      %v3341 = vld [vmem:[#allocation2 + $0x80] sm:$0xf]
      %v3342 = vld [vmem:[#allocation2 + $0x84] sm:$0xf]
      %v3343 = vld [vmem:[#allocation2 + $0x88] sm:$0xf]
      %v3344 = vld [vmem:[#allocation2 + $0x8c] sm:$0xf]
      %v3345 = vld [vmem:[#allocation2 + $0x90] sm:$0xf]
      %v3346 = vld [vmem:[#allocation2 + $0x94] sm:$0xf]
      %v3347 = vld [vmem:[#allocation2 + $0x98] sm:$0xf]
      %v3348 = vld [vmem:[#allocation2 + $0x9c] sm:$0xf]
      %v3349 = vld [vmem:[#allocation2 + $0xa0] sm:$0x1]
      %s3350 = scalar_lea.vmem %s1, 384
      %v3351 = vld [vmem:[%s3350] sm:$0xf]
      %v3352 = vld [vmem:[%s3350 + $0x4] sm:$0xf]
      %v3353 = vld [vmem:[%s3350 + $0x8] sm:$0xf]
      %v3354 = vld [vmem:[%s3350 + $0xc] sm:$0xf]
      %v3355 = vld [vmem:[%s3350 + $0x10] sm:$0xf]
      %v3356 = vld [vmem:[%s3350 + $0x14] sm:$0xf]
      %v3357 = vld [vmem:[%s3350 + $0x18] sm:$0xf]
      %v3358 = vld [vmem:[%s3350 + $0x1c] sm:$0xf]
      %v3359 = vld [vmem:[%s3350 + $0x20] sm:$0xf]
      %v3360 = vld [vmem:[%s3350 + $0x24] sm:$0xf]
      %v3361 = vld [vmem:[%s3350 + $0x28] sm:$0xf]
      %v3362 = vld [vmem:[%s3350 + $0x2c] sm:$0xf]
      %v3363 = vld [vmem:[%s3350 + $0x30] sm:$0xf]
      %v3364 = vld [vmem:[%s3350 + $0x34] sm:$0xf]
      %v3365 = vld [vmem:[%s3350 + $0x38] sm:$0xf]
      %v3366 = vld [vmem:[%s3350 + $0x3c] sm:$0xf]
      %v3404 = vunpack.c.l.b16 %v3313
      %v3405 = vunpack.c.l.b16 %v3314
      %v3406 = vunpack.c.l.b16 %v3315
      %v3407 = vunpack.c.l.b16 %v3316
      %v3408 = vunpack.c.l.b16 %v3317
      %v3409 = vunpack.c.l.b16 %v3318
      %v3410 = vunpack.c.l.b16 %v3319
      %v3411 = vunpack.c.l.b16 %v3320
      %v3412 = vunpack.c.l.b16 %v3321
      %v3413 = vunpack.c.l.b16 %v3322
      %v3414 = vunpack.c.l.b16 %v3323
      %v3415 = vunpack.c.l.b16 %v3324
      %v3416 = vunpack.c.l.b16 %v3325
      %v3417 = vunpack.c.l.b16 %v3326
      %v3418 = vunpack.c.l.b16 %v3327
      %v3419 = vunpack.c.l.b16 %v3328
      %v3420 = vunpack.c.l.b16 %v3329
      %v3421 = vunpack.c.l.b16 %v3330
      %v3422 = vunpack.c.l.b16 %v3331
      %v3423 = vunpack.c.l.b16 %v3332
      %v3424 = vunpack.c.l.b16 %v3333
      %v3425 = vunpack.c.l.b16 %v3334
      %v3426 = vunpack.c.l.b16 %v3335
      %v3427 = vunpack.c.l.b16 %v3336
      %v3428 = vunpack.c.l.b16 %v3337
      %v3429 = vunpack.c.l.b16 %v3338
      %v3430 = vunpack.c.l.b16 %v3339
      %v3431 = vunpack.c.l.b16 %v3340
      %v3432 = vunpack.c.l.b16 %v3341
      %v3433 = vunpack.c.l.b16 %v3342
      %v3434 = vunpack.c.l.b16 %v3343
      %v3435 = vunpack.c.l.b16 %v3344
      %v3436 = vunpack.c.l.b16 %v3345
      %v3437 = vunpack.c.l.b16 %v3346
      %v3438 = vunpack.c.l.b16 %v3347
      %v3439 = vunpack.c.l.b16 %v3348
      %v3440 = vunpack.c.l.b16 %v3349
      %v3441 = vpack.c.b16 %v3405, %v3404
      %v3442 = vpack.c.b16 %v3407, %v3406
      %v3443 = vpack.c.b16 %v3409, %v3408
      %v3444 = vpack.c.b16 %v3411, %v3410
      %v3445 = vpack.c.b16 %v3413, %v3412
      %v3446 = vpack.c.b16 %v3415, %v3414
      %v3447 = vpack.c.b16 %v3417, %v3416
      %v3448 = vpack.c.b16 %v3419, %v3418
      %v3449 = vpack.c.b16 %v3421, %v3420
      %v3450 = vpack.c.b16 %v3423, %v3422
      %v3451 = vpack.c.b16 %v3425, %v3424
      %v3452 = vpack.c.b16 %v3427, %v3426
      %v3453 = vpack.c.b16 %v3429, %v3428
      %v3454 = vpack.c.b16 %v3431, %v3430
      %v3455 = vpack.c.b16 %v3433, %v3432
      %v3456 = vpack.c.b16 %v3435, %v3434
      %v3457 = vpack.c.b16 %v3437, %v3436
      %v3458 = vpack.c.b16 %v3439, %v3438
      %v3459 = vpack.c.b16 %v3440, %v3440
      %v3460 = vrot.slane %v3441, 2
      %v3461 = vrot.slane %v3442, 2
      %v3462 = vsel %vm2996, %v3460, %v3461
      %v3463 = vrot.slane %v3443, 2
      %v3464 = vsel %vm2996, %v3461, %v3463
      %v3465 = vrot.slane %v3444, 2
      %v3466 = vsel %vm2996, %v3463, %v3465
      %v3467 = vrot.slane %v3445, 2
      %v3468 = vsel %vm2996, %v3465, %v3467
      %v3469 = vrot.slane %v3446, 2
      %v3470 = vsel %vm2996, %v3467, %v3469
      %v3471 = vrot.slane %v3447, 2
      %v3472 = vsel %vm2996, %v3469, %v3471
      %v3473 = vrot.slane %v3448, 2
      %v3474 = vsel %vm2996, %v3471, %v3473
      %v3475 = vrot.slane %v3449, 2
      %v3476 = vsel %vm2996, %v3473, %v3475
      %v3477 = vrot.slane %v3450, 2
      %v3478 = vsel %vm2996, %v3475, %v3477
      %v3479 = vrot.slane %v3451, 2
      %v3480 = vsel %vm2996, %v3477, %v3479
      %v3481 = vrot.slane %v3452, 2
      %v3482 = vsel %vm2996, %v3479, %v3481
      %v3483 = vrot.slane %v3453, 2
      %v3484 = vsel %vm2996, %v3481, %v3483
      %v3485 = vrot.slane %v3454, 2
      %v3486 = vsel %vm2996, %v3483, %v3485
      %v3487 = vrot.slane %v3455, 2
      %v3488 = vsel %vm2996, %v3485, %v3487
      %v3489 = vrot.slane %v3456, 2
      %v3490 = vsel %vm2996, %v3487, %v3489
      %v3491 = vrot.slane %v3457, 2
      %v3492 = vsel %vm2996, %v3489, %v3491
      %v3493 = vrot.slane %v3458, 2
      %v3494 = vsel %vm2996, %v3491, %v3493
      %v3495 = vrot.slane %v3459, 2
      %v3496 = vsel %vm2996, %v3493, %v3495
      %v3531 = vunpack.c.l.b16 %v3351
      %v3532 = vunpack.c.l.b16 %v3352
      %v3533 = vunpack.c.l.b16 %v3353
      %v3534 = vunpack.c.l.b16 %v3354
      %v3535 = vunpack.c.l.b16 %v3355
      %v3536 = vunpack.c.l.b16 %v3356
      %v3537 = vunpack.c.l.b16 %v3357
      %v3538 = vunpack.c.l.b16 %v3358
      %v3539 = vunpack.c.l.b16 %v3359
      %v3540 = vunpack.c.l.b16 %v3360
      %v3541 = vunpack.c.l.b16 %v3361
      %v3542 = vunpack.c.l.b16 %v3362
      %v3543 = vunpack.c.l.b16 %v3363
      %v3544 = vunpack.c.l.b16 %v3364
      %v3545 = vunpack.c.l.b16 %v3365
      %v3546 = vunpack.c.l.b16 %v3366
      %v3547 = vpack.c.b16 %v3532, %v3531
      %v3548 = vpack.c.b16 %v3534, %v3533
      %v3549 = vpack.c.b16 %v3536, %v3535
      %v3550 = vpack.c.b16 %v3538, %v3537
      %v3551 = vpack.c.b16 %v3540, %v3539
      %v3552 = vpack.c.b16 %v3542, %v3541
      %v3553 = vpack.c.b16 %v3544, %v3543
      %v3554 = vpack.c.b16 %v3546, %v3545
      %3563 = vmatprep.subr.bf16.mxu0 0
      %3564 = vmatpush1.bf16.msra.mxu0 %v3554
      %3565 = vmatprep.subr.bf16.mxu0 0
      %3566 = vmatpush1.bf16.msra.mxu0 %v3553
      %3567 = vmatprep.subr.bf16.mxu0 0
      %3568 = vmatpush1.bf16.msra.mxu0 %v3552
      %3569 = vmatprep.subr.bf16.mxu0 0
      %3570 = vmatpush1.bf16.msra.mxu0 %v3551
      %3571 = vmatprep.subr.bf16.mxu0 0
      %3572 = vmatpush1.bf16.msra.mxu0 %v3550
      %3573 = vmatprep.subr.bf16.mxu0 0
      %3574 = vmatpush1.bf16.msra.mxu0 %v3549
      %3575 = vmatprep.subr.bf16.mxu0 0
      %3576 = vmatpush1.bf16.msra.mxu0 %v3548
      %3577 = vmatprep.subr.bf16.mxu0 0
      %3578 = vmatpush1.bf16.msra.mxu0 %v3547
      %3579 = vmatprep.subr.bf16.mxu0 0
      %3580 = vmatpush2.bf16.msra.mxu0 0
      %3581 = vmatprep.subr.bf16.mxu0 0
      %3582 = vmatpush2.bf16.msra.mxu0 0
      %3583 = vmatprep.subr.bf16.mxu0 0
      %3584 = vmatpush2.bf16.msra.mxu0 0
      %3585 = vmatprep.subr.bf16.mxu0 0
      %3586 = vmatpush2.bf16.msra.mxu0 0
      %3587 = vmatprep.subr.bf16.mxu0 0
      %3588 = vmatpush2.bf16.msra.mxu0 0
      %3589 = vmatprep.subr.bf16.mxu0 0
      %3590 = vmatpush2.bf16.msra.mxu0 0
      %3591 = vmatprep.subr.bf16.mxu0 0
      %3592 = vmatpush2.bf16.msra.mxu0 0
      %3593 = vmatprep.subr.bf16.mxu0 0
      %3594 = vmatpush2.bf16.msra.mxu0 0
      %3595 = vmatprep.mubr.bf16.mxu0 0
      %3596 = vmatmul.mubr.bf16.gmra.mxu0 %v3462
      %v3597 = vpop.f32.mrf.mxu0
      %v3598 = vadd.f32 0.0, %v3597
      %v3599 = vpop.f32.mrf.mxu0
      %v3600 = vpop.f32.mrf.mxu0
      %v3601 = vadd.f32 0.0, %v3600
      %v3602 = vpop.f32.mrf.mxu0
      %3603 = vmatprep.mubr.bf16.mxu0 0
      %3604 = vmatmul.mubr.bf16.gmra.mxu0 %v3464
      %v3605 = vpop.f32.mrf.mxu0
      %v3606 = vadd.f32 0.0, %v3605
      %v3607 = vpop.f32.mrf.mxu0
      %v3608 = vpop.f32.mrf.mxu0
      %v3609 = vadd.f32 0.0, %v3608
      %v3610 = vpop.f32.mrf.mxu0
      %3611 = vmatprep.mubr.bf16.mxu0 0
      %3612 = vmatmul.mubr.bf16.gmra.mxu0 %v3466
      %v3613 = vpop.f32.mrf.mxu0
      %v3614 = vadd.f32 0.0, %v3613
      %v3615 = vpop.f32.mrf.mxu0
      %v3616 = vpop.f32.mrf.mxu0
      %v3617 = vadd.f32 0.0, %v3616
      %v3618 = vpop.f32.mrf.mxu0
      %3619 = vmatprep.mubr.bf16.mxu0 0
      %3620 = vmatmul.mubr.bf16.gmra.mxu0 %v3468
      %v3621 = vpop.f32.mrf.mxu0
      %v3622 = vadd.f32 0.0, %v3621
      %v3623 = vpop.f32.mrf.mxu0
      %v3624 = vpop.f32.mrf.mxu0
      %v3625 = vadd.f32 0.0, %v3624
      %v3626 = vpop.f32.mrf.mxu0
      %3627 = vmatprep.mubr.bf16.mxu0 0
      %3628 = vmatmul.mubr.bf16.gmra.mxu0 %v3470
      %v3629 = vpop.f32.mrf.mxu0
      %v3630 = vadd.f32 0.0, %v3629
      %v3631 = vpop.f32.mrf.mxu0
      %v3632 = vpop.f32.mrf.mxu0
      %v3633 = vadd.f32 0.0, %v3632
      %v3634 = vpop.f32.mrf.mxu0
      %3635 = vmatprep.mubr.bf16.mxu0 0
      %3636 = vmatmul.mubr.bf16.gmra.mxu0 %v3472
      %v3637 = vpop.f32.mrf.mxu0
      %v3638 = vadd.f32 0.0, %v3637
      %v3639 = vpop.f32.mrf.mxu0
      %v3640 = vpop.f32.mrf.mxu0
      %v3641 = vadd.f32 0.0, %v3640
      %v3642 = vpop.f32.mrf.mxu0
      %3643 = vmatprep.mubr.bf16.mxu0 0
      %3644 = vmatmul.mubr.bf16.gmra.mxu0 %v3474
      %v3645 = vpop.f32.mrf.mxu0
      %v3646 = vadd.f32 0.0, %v3645
      %v3647 = vpop.f32.mrf.mxu0
      %v3648 = vpop.f32.mrf.mxu0
      %v3649 = vadd.f32 0.0, %v3648
      %v3650 = vpop.f32.mrf.mxu0
      %3651 = vmatprep.mubr.bf16.mxu0 0
      %3652 = vmatmul.mubr.bf16.gmra.mxu0 %v3476
      %v3653 = vpop.f32.mrf.mxu0
      %v3654 = vadd.f32 0.0, %v3653
      %v3655 = vpop.f32.mrf.mxu0
      %v3656 = vpop.f32.mrf.mxu0
      %v3657 = vadd.f32 0.0, %v3656
      %v3658 = vpop.f32.mrf.mxu0
      %3659 = vmatprep.mubr.bf16.mxu0 0
      %3660 = vmatmul.mubr.bf16.gmra.mxu0 %v3478
      %v3661 = vpop.f32.mrf.mxu0
      %v3662 = vadd.f32 0.0, %v3661
      %v3663 = vpop.f32.mrf.mxu0
      %v3664 = vpop.f32.mrf.mxu0
      %v3665 = vadd.f32 0.0, %v3664
      %v3666 = vpop.f32.mrf.mxu0
      %3667 = vmatprep.mubr.bf16.mxu0 0
      %3668 = vmatmul.mubr.bf16.gmra.mxu0 %v3480
      %v3669 = vpop.f32.mrf.mxu0
      %v3670 = vadd.f32 0.0, %v3669
      %v3671 = vpop.f32.mrf.mxu0
      %v3672 = vpop.f32.mrf.mxu0
      %v3673 = vadd.f32 0.0, %v3672
      %v3674 = vpop.f32.mrf.mxu0
      %3675 = vmatprep.mubr.bf16.mxu0 0
      %3676 = vmatmul.mubr.bf16.gmra.mxu0 %v3482
      %v3677 = vpop.f32.mrf.mxu0
      %v3678 = vadd.f32 0.0, %v3677
      %v3679 = vpop.f32.mrf.mxu0
      %v3680 = vpop.f32.mrf.mxu0
      %v3681 = vadd.f32 0.0, %v3680
      %v3682 = vpop.f32.mrf.mxu0
      %3683 = vmatprep.mubr.bf16.mxu0 0
      %3684 = vmatmul.mubr.bf16.gmra.mxu0 %v3484
      %v3685 = vpop.f32.mrf.mxu0
      %v3686 = vadd.f32 0.0, %v3685
      %v3687 = vpop.f32.mrf.mxu0
      %v3688 = vpop.f32.mrf.mxu0
      %v3689 = vadd.f32 0.0, %v3688
      %v3690 = vpop.f32.mrf.mxu0
      %3691 = vmatprep.mubr.bf16.mxu0 0
      %3692 = vmatmul.mubr.bf16.gmra.mxu0 %v3486
      %v3693 = vpop.f32.mrf.mxu0
      %v3694 = vadd.f32 0.0, %v3693
      %v3695 = vpop.f32.mrf.mxu0
      %v3696 = vpop.f32.mrf.mxu0
      %v3697 = vadd.f32 0.0, %v3696
      %v3698 = vpop.f32.mrf.mxu0
      %3699 = vmatprep.mubr.bf16.mxu0 0
      %3700 = vmatmul.mubr.bf16.gmra.mxu0 %v3488
      %v3701 = vpop.f32.mrf.mxu0
      %v3702 = vadd.f32 0.0, %v3701
      %v3703 = vpop.f32.mrf.mxu0
      %v3704 = vpop.f32.mrf.mxu0
      %v3705 = vadd.f32 0.0, %v3704
      %v3706 = vpop.f32.mrf.mxu0
      %3707 = vmatprep.mubr.bf16.mxu0 0
      %3708 = vmatmul.mubr.bf16.gmra.mxu0 %v3490
      %v3709 = vpop.f32.mrf.mxu0
      %v3710 = vadd.f32 0.0, %v3709
      %v3711 = vpop.f32.mrf.mxu0
      %v3712 = vpop.f32.mrf.mxu0
      %v3713 = vadd.f32 0.0, %v3712
      %v3714 = vpop.f32.mrf.mxu0
      %3715 = vmatprep.mubr.bf16.mxu0 0
      %3716 = vmatmul.mubr.bf16.gmra.mxu0 %v3492
      %v3717 = vpop.f32.mrf.mxu0
      %v3718 = vadd.f32 0.0, %v3717
      %v3719 = vpop.f32.mrf.mxu0
      %v3720 = vpop.f32.mrf.mxu0
      %v3721 = vadd.f32 0.0, %v3720
      %v3722 = vpop.f32.mrf.mxu0
      %3723 = vmatprep.mubr.bf16.mxu0 0
      %3724 = vmatmul.mubr.bf16.gmra.mxu0 %v3494
      %v3725 = vpop.f32.mrf.mxu0
      %v3726 = vadd.f32 0.0, %v3725
      %v3727 = vpop.f32.mrf.mxu0
      %v3728 = vpop.f32.mrf.mxu0
      %v3729 = vadd.f32 0.0, %v3728
      %v3730 = vpop.f32.mrf.mxu0
      %3731 = vmatprep.mubr.bf16.mxu0 0
      %3732 = vmatmul.mubr.bf16.gmra.mxu0 %v3496
      %v3733 = vpop.f32.mrf.mxu0
      %v3734 = vadd.f32 0.0, %v3733
      %v3735 = vpop.f32.mrf.mxu0
      %v3736 = vpop.f32.mrf.mxu0
      %v3737 = vadd.f32 0.0, %v3736
      %v3738 = vpop.f32.mrf.mxu0
      %3739 = vdwg.mxu0
      %v3740 = vadd.f32 %v3277, %v3598
      %v3741 = vadd.f32 %v3278, %v3601
      %v3742 = vadd.f32 %v3279, %v3606
      %v3743 = vadd.f32 %v3280, %v3609
      %v3744 = vadd.f32 %v3281, %v3614
      %v3745 = vadd.f32 %v3282, %v3617
      %v3746 = vadd.f32 %v3283, %v3622
      %v3747 = vadd.f32 %v3284, %v3625
      %v3748 = vadd.f32 %v3285, %v3630
      %v3749 = vadd.f32 %v3286, %v3633
      %v3750 = vadd.f32 %v3287, %v3638
      %v3751 = vadd.f32 %v3288, %v3641
      %v3752 = vadd.f32 %v3289, %v3646
      %v3753 = vadd.f32 %v3290, %v3649
      %v3754 = vadd.f32 %v3291, %v3654
      %v3755 = vadd.f32 %v3292, %v3657
      %v3756 = vadd.f32 %v3293, %v3662
      %v3757 = vadd.f32 %v3294, %v3665
      %v3758 = vadd.f32 %v3295, %v3670
      %v3759 = vadd.f32 %v3296, %v3673
      %v3760 = vadd.f32 %v3297, %v3678
      %v3761 = vadd.f32 %v3298, %v3681
      %v3762 = vadd.f32 %v3299, %v3686
      %v3763 = vadd.f32 %v3300, %v3689
      %v3764 = vadd.f32 %v3301, %v3694
      %v3765 = vadd.f32 %v3302, %v3697
      %v3766 = vadd.f32 %v3303, %v3702
      %v3767 = vadd.f32 %v3304, %v3705
      %v3768 = vadd.f32 %v3305, %v3710
      %v3769 = vadd.f32 %v3306, %v3713
      %v3770 = vadd.f32 %v3307, %v3718
      %v3771 = vadd.f32 %v3308, %v3721
      %v3772 = vadd.f32 %v3309, %v3726
      %v3773 = vadd.f32 %v3310, %v3729
      %v3774 = vadd.f32 %v3311, %v3734
      %v3775 = vadd.f32 %v3312, %v3737
      %v3776 = vld [vmem:[#allocation2 + $0xa0] sm:$0x3]
      %s3777 = scalar_lea.vmem %s1, 448
      %v3778 = vld [vmem:[%s3777] sm:$0xf]
      %v3779 = vld [vmem:[%s3777 + $0x4] sm:$0xf]
      %v3780 = vld [vmem:[%s3777 + $0x8] sm:$0xf]
      %v3781 = vld [vmem:[%s3777 + $0xc] sm:$0xf]
      %v3782 = vld [vmem:[%s3777 + $0x10] sm:$0xf]
      %v3783 = vld [vmem:[%s3777 + $0x14] sm:$0xf]
      %v3784 = vld [vmem:[%s3777 + $0x18] sm:$0xf]
      %v3785 = vld [vmem:[%s3777 + $0x1c] sm:$0xf]
      %v3786 = vld [vmem:[%s3777 + $0x20] sm:$0xf]
      %v3787 = vld [vmem:[%s3777 + $0x24] sm:$0xf]
      %v3788 = vld [vmem:[%s3777 + $0x28] sm:$0xf]
      %v3789 = vld [vmem:[%s3777 + $0x2c] sm:$0xf]
      %v3790 = vld [vmem:[%s3777 + $0x30] sm:$0xf]
      %v3791 = vld [vmem:[%s3777 + $0x34] sm:$0xf]
      %v3792 = vld [vmem:[%s3777 + $0x38] sm:$0xf]
      %v3793 = vld [vmem:[%s3777 + $0x3c] sm:$0xf]
      %v3795 = vunpack.c.l.b16 %v3776
      %v3796 = vpack.c.b16 %v3795, %v3795
      %vm3797 = vsmask.f32 5376
      %v3799 = vshrl.u32 %v3441, 16
      %v3801 = vrot.slane %v3799, 2
      %v3802 = vshll.u32 %v3441, 16
      %v3804 = vrot.slane %v3802, 3
      %v3805 = vor.u32 %v3801, %v3804
      %v3807 = vshrl.u32 %v3442, 16
      %v3809 = vrot.slane %v3807, 2
      %v3810 = vshll.u32 %v3442, 16
      %v3812 = vrot.slane %v3810, 3
      %v3813 = vor.u32 %v3809, %v3812
      %v3814 = vsel %vm3797, %v3805, %v3813
      %v3816 = vshrl.u32 %v3443, 16
      %v3818 = vrot.slane %v3816, 2
      %v3819 = vshll.u32 %v3443, 16
      %v3821 = vrot.slane %v3819, 3
      %v3822 = vor.u32 %v3818, %v3821
      %v3823 = vsel %vm3797, %v3813, %v3822
      %v3825 = vshrl.u32 %v3444, 16
      %v3827 = vrot.slane %v3825, 2
      %v3828 = vshll.u32 %v3444, 16
      %v3830 = vrot.slane %v3828, 3
      %v3831 = vor.u32 %v3827, %v3830
      %v3832 = vsel %vm3797, %v3822, %v3831
      %v3834 = vshrl.u32 %v3445, 16
      %v3836 = vrot.slane %v3834, 2
      %v3837 = vshll.u32 %v3445, 16
      %v3839 = vrot.slane %v3837, 3
      %v3840 = vor.u32 %v3836, %v3839
      %v3841 = vsel %vm3797, %v3831, %v3840
      %v3843 = vshrl.u32 %v3446, 16
      %v3845 = vrot.slane %v3843, 2
      %v3846 = vshll.u32 %v3446, 16
      %v3848 = vrot.slane %v3846, 3
      %v3849 = vor.u32 %v3845, %v3848
      %v3850 = vsel %vm3797, %v3840, %v3849
      %v3852 = vshrl.u32 %v3447, 16
      %v3854 = vrot.slane %v3852, 2
      %v3855 = vshll.u32 %v3447, 16
      %v3857 = vrot.slane %v3855, 3
      %v3858 = vor.u32 %v3854, %v3857
      %v3859 = vsel %vm3797, %v3849, %v3858
      %v3861 = vshrl.u32 %v3448, 16
      %v3863 = vrot.slane %v3861, 2
      %v3864 = vshll.u32 %v3448, 16
      %v3866 = vrot.slane %v3864, 3
      %v3867 = vor.u32 %v3863, %v3866
      %v3868 = vsel %vm3797, %v3858, %v3867
      %v3870 = vshrl.u32 %v3449, 16
      %v3872 = vrot.slane %v3870, 2
      %v3873 = vshll.u32 %v3449, 16
      %v3875 = vrot.slane %v3873, 3
      %v3876 = vor.u32 %v3872, %v3875
      %v3877 = vsel %vm3797, %v3867, %v3876
      %v3879 = vshrl.u32 %v3450, 16
      %v3881 = vrot.slane %v3879, 2
      %v3882 = vshll.u32 %v3450, 16
      %v3884 = vrot.slane %v3882, 3
      %v3885 = vor.u32 %v3881, %v3884
      %v3886 = vsel %vm3797, %v3876, %v3885
      %v3888 = vshrl.u32 %v3451, 16
      %v3890 = vrot.slane %v3888, 2
      %v3891 = vshll.u32 %v3451, 16
      %v3893 = vrot.slane %v3891, 3
      %v3894 = vor.u32 %v3890, %v3893
      %v3895 = vsel %vm3797, %v3885, %v3894
      %v3897 = vshrl.u32 %v3452, 16
      %v3899 = vrot.slane %v3897, 2
      %v3900 = vshll.u32 %v3452, 16
      %v3902 = vrot.slane %v3900, 3
      %v3903 = vor.u32 %v3899, %v3902
      %v3904 = vsel %vm3797, %v3894, %v3903
      %v3906 = vshrl.u32 %v3453, 16
      %v3908 = vrot.slane %v3906, 2
      %v3909 = vshll.u32 %v3453, 16
      %v3911 = vrot.slane %v3909, 3
      %v3912 = vor.u32 %v3908, %v3911
      %v3913 = vsel %vm3797, %v3903, %v3912
      %v3915 = vshrl.u32 %v3454, 16
      %v3917 = vrot.slane %v3915, 2
      %v3918 = vshll.u32 %v3454, 16
      %v3920 = vrot.slane %v3918, 3
      %v3921 = vor.u32 %v3917, %v3920
      %v3922 = vsel %vm3797, %v3912, %v3921
      %v3924 = vshrl.u32 %v3455, 16
      %v3926 = vrot.slane %v3924, 2
      %v3927 = vshll.u32 %v3455, 16
      %v3929 = vrot.slane %v3927, 3
      %v3930 = vor.u32 %v3926, %v3929
      %v3931 = vsel %vm3797, %v3921, %v3930
      %v3933 = vshrl.u32 %v3456, 16
      %v3935 = vrot.slane %v3933, 2
      %v3936 = vshll.u32 %v3456, 16
      %v3938 = vrot.slane %v3936, 3
      %v3939 = vor.u32 %v3935, %v3938
      %v3940 = vsel %vm3797, %v3930, %v3939
      %v3942 = vshrl.u32 %v3457, 16
      %v3944 = vrot.slane %v3942, 2
      %v3945 = vshll.u32 %v3457, 16
      %v3947 = vrot.slane %v3945, 3
      %v3948 = vor.u32 %v3944, %v3947
      %v3949 = vsel %vm3797, %v3939, %v3948
      %v3951 = vshrl.u32 %v3458, 16
      %v3953 = vrot.slane %v3951, 2
      %v3954 = vshll.u32 %v3458, 16
      %v3956 = vrot.slane %v3954, 3
      %v3957 = vor.u32 %v3953, %v3956
      %v3958 = vsel %vm3797, %v3948, %v3957
      %v3960 = vshrl.u32 %v3796, 16
      %v3962 = vrot.slane %v3960, 2
      %v3963 = vshll.u32 %v3796, 16
      %v3965 = vrot.slane %v3963, 3
      %v3966 = vor.u32 %v3962, %v3965
      %v3967 = vsel %vm3797, %v3957, %v3966
      %v4002 = vunpack.c.l.b16 %v3778
      %v4003 = vunpack.c.l.b16 %v3779
      %v4004 = vunpack.c.l.b16 %v3780
      %v4005 = vunpack.c.l.b16 %v3781
      %v4006 = vunpack.c.l.b16 %v3782
      %v4007 = vunpack.c.l.b16 %v3783
      %v4008 = vunpack.c.l.b16 %v3784
      %v4009 = vunpack.c.l.b16 %v3785
      %v4010 = vunpack.c.l.b16 %v3786
      %v4011 = vunpack.c.l.b16 %v3787
      %v4012 = vunpack.c.l.b16 %v3788
      %v4013 = vunpack.c.l.b16 %v3789
      %v4014 = vunpack.c.l.b16 %v3790
      %v4015 = vunpack.c.l.b16 %v3791
      %v4016 = vunpack.c.l.b16 %v3792
      %v4017 = vunpack.c.l.b16 %v3793
      %v4018 = vpack.c.b16 %v4003, %v4002
      %v4019 = vpack.c.b16 %v4005, %v4004
      %v4020 = vpack.c.b16 %v4007, %v4006
      %v4021 = vpack.c.b16 %v4009, %v4008
      %v4022 = vpack.c.b16 %v4011, %v4010
      %v4023 = vpack.c.b16 %v4013, %v4012
      %v4024 = vpack.c.b16 %v4015, %v4014
      %v4025 = vpack.c.b16 %v4017, %v4016
      %4034 = vmatprep.subr.bf16.mxu0 0
      %4035 = vmatpush1.bf16.msra.mxu0 %v4025
      %4036 = vmatprep.subr.bf16.mxu0 0
      %4037 = vmatpush1.bf16.msra.mxu0 %v4024
      %4038 = vmatprep.subr.bf16.mxu0 0
      %4039 = vmatpush1.bf16.msra.mxu0 %v4023
      %4040 = vmatprep.subr.bf16.mxu0 0
      %4041 = vmatpush1.bf16.msra.mxu0 %v4022
      %4042 = vmatprep.subr.bf16.mxu0 0
      %4043 = vmatpush1.bf16.msra.mxu0 %v4021
      %4044 = vmatprep.subr.bf16.mxu0 0
      %4045 = vmatpush1.bf16.msra.mxu0 %v4020
      %4046 = vmatprep.subr.bf16.mxu0 0
      %4047 = vmatpush1.bf16.msra.mxu0 %v4019
      %4048 = vmatprep.subr.bf16.mxu0 0
      %4049 = vmatpush1.bf16.msra.mxu0 %v4018
      %4050 = vmatprep.subr.bf16.mxu0 0
      %4051 = vmatpush2.bf16.msra.mxu0 0
      %4052 = vmatprep.subr.bf16.mxu0 0
      %4053 = vmatpush2.bf16.msra.mxu0 0
      %4054 = vmatprep.subr.bf16.mxu0 0
      %4055 = vmatpush2.bf16.msra.mxu0 0
      %4056 = vmatprep.subr.bf16.mxu0 0
      %4057 = vmatpush2.bf16.msra.mxu0 0
      %4058 = vmatprep.subr.bf16.mxu0 0
      %4059 = vmatpush2.bf16.msra.mxu0 0
      %4060 = vmatprep.subr.bf16.mxu0 0
      %4061 = vmatpush2.bf16.msra.mxu0 0
      %4062 = vmatprep.subr.bf16.mxu0 0
      %4063 = vmatpush2.bf16.msra.mxu0 0
      %4064 = vmatprep.subr.bf16.mxu0 0
      %4065 = vmatpush2.bf16.msra.mxu0 0
      %4066 = vmatprep.mubr.bf16.mxu0 0
      %4067 = vmatmul.mubr.bf16.gmra.mxu0 %v3814
      %v4068 = vpop.f32.mrf.mxu0
      %v4069 = vadd.f32 0.0, %v4068
      %v4070 = vpop.f32.mrf.mxu0
      %v4071 = vpop.f32.mrf.mxu0
      %v4072 = vadd.f32 0.0, %v4071
      %v4073 = vpop.f32.mrf.mxu0
      %4074 = vmatprep.mubr.bf16.mxu0 0
      %4075 = vmatmul.mubr.bf16.gmra.mxu0 %v3823
      %v4076 = vpop.f32.mrf.mxu0
      %v4077 = vadd.f32 0.0, %v4076
      %v4078 = vpop.f32.mrf.mxu0
      %v4079 = vpop.f32.mrf.mxu0
      %v4080 = vadd.f32 0.0, %v4079
      %v4081 = vpop.f32.mrf.mxu0
      %4082 = vmatprep.mubr.bf16.mxu0 0
      %4083 = vmatmul.mubr.bf16.gmra.mxu0 %v3832
      %v4084 = vpop.f32.mrf.mxu0
      %v4085 = vadd.f32 0.0, %v4084
      %v4086 = vpop.f32.mrf.mxu0
      %v4087 = vpop.f32.mrf.mxu0
      %v4088 = vadd.f32 0.0, %v4087
      %v4089 = vpop.f32.mrf.mxu0
      %4090 = vmatprep.mubr.bf16.mxu0 0
      %4091 = vmatmul.mubr.bf16.gmra.mxu0 %v3841
      %v4092 = vpop.f32.mrf.mxu0
      %v4093 = vadd.f32 0.0, %v4092
      %v4094 = vpop.f32.mrf.mxu0
      %v4095 = vpop.f32.mrf.mxu0
      %v4096 = vadd.f32 0.0, %v4095
      %v4097 = vpop.f32.mrf.mxu0
      %4098 = vmatprep.mubr.bf16.mxu0 0
      %4099 = vmatmul.mubr.bf16.gmra.mxu0 %v3850
      %v4100 = vpop.f32.mrf.mxu0
      %v4101 = vadd.f32 0.0, %v4100
      %v4102 = vpop.f32.mrf.mxu0
      %v4103 = vpop.f32.mrf.mxu0
      %v4104 = vadd.f32 0.0, %v4103
      %v4105 = vpop.f32.mrf.mxu0
      %4106 = vmatprep.mubr.bf16.mxu0 0
      %4107 = vmatmul.mubr.bf16.gmra.mxu0 %v3859
      %v4108 = vpop.f32.mrf.mxu0
      %v4109 = vadd.f32 0.0, %v4108
      %v4110 = vpop.f32.mrf.mxu0
      %v4111 = vpop.f32.mrf.mxu0
      %v4112 = vadd.f32 0.0, %v4111
      %v4113 = vpop.f32.mrf.mxu0
      %4114 = vmatprep.mubr.bf16.mxu0 0
      %4115 = vmatmul.mubr.bf16.gmra.mxu0 %v3868
      %v4116 = vpop.f32.mrf.mxu0
      %v4117 = vadd.f32 0.0, %v4116
      %v4118 = vpop.f32.mrf.mxu0
      %v4119 = vpop.f32.mrf.mxu0
      %v4120 = vadd.f32 0.0, %v4119
      %v4121 = vpop.f32.mrf.mxu0
      %4122 = vmatprep.mubr.bf16.mxu0 0
      %4123 = vmatmul.mubr.bf16.gmra.mxu0 %v3877
      %v4124 = vpop.f32.mrf.mxu0
      %v4125 = vadd.f32 0.0, %v4124
      %v4126 = vpop.f32.mrf.mxu0
      %v4127 = vpop.f32.mrf.mxu0
      %v4128 = vadd.f32 0.0, %v4127
      %v4129 = vpop.f32.mrf.mxu0
      %4130 = vmatprep.mubr.bf16.mxu0 0
      %4131 = vmatmul.mubr.bf16.gmra.mxu0 %v3886
      %v4132 = vpop.f32.mrf.mxu0
      %v4133 = vadd.f32 0.0, %v4132
      %v4134 = vpop.f32.mrf.mxu0
      %v4135 = vpop.f32.mrf.mxu0
      %v4136 = vadd.f32 0.0, %v4135
      %v4137 = vpop.f32.mrf.mxu0
      %4138 = vmatprep.mubr.bf16.mxu0 0
      %4139 = vmatmul.mubr.bf16.gmra.mxu0 %v3895
      %v4140 = vpop.f32.mrf.mxu0
      %v4141 = vadd.f32 0.0, %v4140
      %v4142 = vpop.f32.mrf.mxu0
      %v4143 = vpop.f32.mrf.mxu0
      %v4144 = vadd.f32 0.0, %v4143
      %v4145 = vpop.f32.mrf.mxu0
      %4146 = vmatprep.mubr.bf16.mxu0 0
      %4147 = vmatmul.mubr.bf16.gmra.mxu0 %v3904
      %v4148 = vpop.f32.mrf.mxu0
      %v4149 = vadd.f32 0.0, %v4148
      %v4150 = vpop.f32.mrf.mxu0
      %v4151 = vpop.f32.mrf.mxu0
      %v4152 = vadd.f32 0.0, %v4151
      %v4153 = vpop.f32.mrf.mxu0
      %4154 = vmatprep.mubr.bf16.mxu0 0
      %4155 = vmatmul.mubr.bf16.gmra.mxu0 %v3913
      %v4156 = vpop.f32.mrf.mxu0
      %v4157 = vadd.f32 0.0, %v4156
      %v4158 = vpop.f32.mrf.mxu0
      %v4159 = vpop.f32.mrf.mxu0
      %v4160 = vadd.f32 0.0, %v4159
      %v4161 = vpop.f32.mrf.mxu0
      %4162 = vmatprep.mubr.bf16.mxu0 0
      %4163 = vmatmul.mubr.bf16.gmra.mxu0 %v3922
      %v4164 = vpop.f32.mrf.mxu0
      %v4165 = vadd.f32 0.0, %v4164
      %v4166 = vpop.f32.mrf.mxu0
      %v4167 = vpop.f32.mrf.mxu0
      %v4168 = vadd.f32 0.0, %v4167
      %v4169 = vpop.f32.mrf.mxu0
      %4170 = vmatprep.mubr.bf16.mxu0 0
      %4171 = vmatmul.mubr.bf16.gmra.mxu0 %v3931
      %v4172 = vpop.f32.mrf.mxu0
      %v4173 = vadd.f32 0.0, %v4172
      %v4174 = vpop.f32.mrf.mxu0
      %v4175 = vpop.f32.mrf.mxu0
      %v4176 = vadd.f32 0.0, %v4175
      %v4177 = vpop.f32.mrf.mxu0
      %4178 = vmatprep.mubr.bf16.mxu0 0
      %4179 = vmatmul.mubr.bf16.gmra.mxu0 %v3940
      %v4180 = vpop.f32.mrf.mxu0
      %v4181 = vadd.f32 0.0, %v4180
      %v4182 = vpop.f32.mrf.mxu0
      %v4183 = vpop.f32.mrf.mxu0
      %v4184 = vadd.f32 0.0, %v4183
      %v4185 = vpop.f32.mrf.mxu0
      %4186 = vmatprep.mubr.bf16.mxu0 0
      %4187 = vmatmul.mubr.bf16.gmra.mxu0 %v3949
      %v4188 = vpop.f32.mrf.mxu0
      %v4189 = vadd.f32 0.0, %v4188
      %v4190 = vpop.f32.mrf.mxu0
      %v4191 = vpop.f32.mrf.mxu0
      %v4192 = vadd.f32 0.0, %v4191
      %v4193 = vpop.f32.mrf.mxu0
      %4194 = vmatprep.mubr.bf16.mxu0 0
      %4195 = vmatmul.mubr.bf16.gmra.mxu0 %v3958
      %v4196 = vpop.f32.mrf.mxu0
      %v4197 = vadd.f32 0.0, %v4196
      %v4198 = vpop.f32.mrf.mxu0
      %v4199 = vpop.f32.mrf.mxu0
      %v4200 = vadd.f32 0.0, %v4199
      %v4201 = vpop.f32.mrf.mxu0
      %4202 = vmatprep.mubr.bf16.mxu0 0
      %4203 = vmatmul.mubr.bf16.gmra.mxu0 %v3967
      %v4204 = vpop.f32.mrf.mxu0
      %v4205 = vadd.f32 0.0, %v4204
      %v4206 = vpop.f32.mrf.mxu0
      %v4207 = vpop.f32.mrf.mxu0
      %v4208 = vadd.f32 0.0, %v4207
      %v4209 = vpop.f32.mrf.mxu0
      %4210 = vdwg.mxu0
      %v4211 = vadd.f32 %v3740, %v4069
      %v4212 = vadd.f32 %v3741, %v4072
      %v4213 = vadd.f32 %v3742, %v4077
      %v4214 = vadd.f32 %v3743, %v4080
      %v4215 = vadd.f32 %v3744, %v4085
      %v4216 = vadd.f32 %v3745, %v4088
      %v4217 = vadd.f32 %v3746, %v4093
      %v4218 = vadd.f32 %v3747, %v4096
      %v4219 = vadd.f32 %v3748, %v4101
      %v4220 = vadd.f32 %v3749, %v4104
      %v4221 = vadd.f32 %v3750, %v4109
      %v4222 = vadd.f32 %v3751, %v4112
      %v4223 = vadd.f32 %v3752, %v4117
      %v4224 = vadd.f32 %v3753, %v4120
      %v4225 = vadd.f32 %v3754, %v4125
      %v4226 = vadd.f32 %v3755, %v4128
      %v4227 = vadd.f32 %v3756, %v4133
      %v4228 = vadd.f32 %v3757, %v4136
      %v4229 = vadd.f32 %v3758, %v4141
      %v4230 = vadd.f32 %v3759, %v4144
      %v4231 = vadd.f32 %v3760, %v4149
      %v4232 = vadd.f32 %v3761, %v4152
      %v4233 = vadd.f32 %v3762, %v4157
      %v4234 = vadd.f32 %v3763, %v4160
      %v4235 = vadd.f32 %v3764, %v4165
      %v4236 = vadd.f32 %v3765, %v4168
      %v4237 = vadd.f32 %v3766, %v4173
      %v4238 = vadd.f32 %v3767, %v4176
      %v4239 = vadd.f32 %v3768, %v4181
      %v4240 = vadd.f32 %v3769, %v4184
      %v4241 = vadd.f32 %v3770, %v4189
      %v4242 = vadd.f32 %v3771, %v4192
      %v4243 = vadd.f32 %v3772, %v4197
      %v4244 = vadd.f32 %v3773, %v4200
      %v4245 = vadd.f32 %v3774, %v4205
      %v4246 = vadd.f32 %v3775, %v4208
      %v4247 = vld [vmem:[#allocation2 + $0x10] sm:$0x8]
      %s4248 = scalar_lea.vmem %s1, 512
      %v4249 = vld [vmem:[%s4248] sm:$0xf]
      %v4250 = vld [vmem:[%s4248 + $0x4] sm:$0xf]
      %v4251 = vld [vmem:[%s4248 + $0x8] sm:$0xf]
      %v4252 = vld [vmem:[%s4248 + $0xc] sm:$0xf]
      %v4253 = vld [vmem:[%s4248 + $0x10] sm:$0xf]
      %v4254 = vld [vmem:[%s4248 + $0x14] sm:$0xf]
      %v4255 = vld [vmem:[%s4248 + $0x18] sm:$0xf]
      %v4256 = vld [vmem:[%s4248 + $0x1c] sm:$0xf]
      %v4257 = vld [vmem:[%s4248 + $0x20] sm:$0xf]
      %v4258 = vld [vmem:[%s4248 + $0x24] sm:$0xf]
      %v4259 = vld [vmem:[%s4248 + $0x28] sm:$0xf]
      %v4260 = vld [vmem:[%s4248 + $0x2c] sm:$0xf]
      %v4261 = vld [vmem:[%s4248 + $0x30] sm:$0xf]
      %v4262 = vld [vmem:[%s4248 + $0x34] sm:$0xf]
      %v4263 = vld [vmem:[%s4248 + $0x38] sm:$0xf]
      %v4264 = vld [vmem:[%s4248 + $0x3c] sm:$0xf]
      %v4266 = vunpack.c.l.b16 %v4247
      %v4267 = vpack.c.b16 %v3405, %v4266
      %vm4268 = vcmask 1044480
      %v4269 = vrot.slane %v4267, 3
      %v4270 = vrot.slane %v3442, 3
      %v4271 = vsel %vm4268, %v4269, %v4270
      %v4272 = vrot.slane %v3443, 3
      %v4273 = vsel %vm4268, %v4270, %v4272
      %v4274 = vrot.slane %v3444, 3
      %v4275 = vsel %vm4268, %v4272, %v4274
      %v4276 = vrot.slane %v3445, 3
      %v4277 = vsel %vm4268, %v4274, %v4276
      %v4278 = vrot.slane %v3446, 3
      %v4279 = vsel %vm4268, %v4276, %v4278
      %v4280 = vrot.slane %v3447, 3
      %v4281 = vsel %vm4268, %v4278, %v4280
      %v4282 = vrot.slane %v3448, 3
      %v4283 = vsel %vm4268, %v4280, %v4282
      %v4284 = vrot.slane %v3449, 3
      %v4285 = vsel %vm4268, %v4282, %v4284
      %v4286 = vrot.slane %v3450, 3
      %v4287 = vsel %vm4268, %v4284, %v4286
      %v4288 = vrot.slane %v3451, 3
      %v4289 = vsel %vm4268, %v4286, %v4288
      %v4290 = vrot.slane %v3452, 3
      %v4291 = vsel %vm4268, %v4288, %v4290
      %v4292 = vrot.slane %v3453, 3
      %v4293 = vsel %vm4268, %v4290, %v4292
      %v4294 = vrot.slane %v3454, 3
      %v4295 = vsel %vm4268, %v4292, %v4294
      %v4296 = vrot.slane %v3455, 3
      %v4297 = vsel %vm4268, %v4294, %v4296
      %v4298 = vrot.slane %v3456, 3
      %v4299 = vsel %vm4268, %v4296, %v4298
      %v4300 = vrot.slane %v3457, 3
      %v4301 = vsel %vm4268, %v4298, %v4300
      %v4302 = vrot.slane %v3458, 3
      %v4303 = vsel %vm4268, %v4300, %v4302
      %v4304 = vrot.slane %v3796, 3
      %v4305 = vsel %vm4268, %v4302, %v4304
      %v4340 = vunpack.c.l.b16 %v4249
      %v4341 = vunpack.c.l.b16 %v4250
      %v4342 = vunpack.c.l.b16 %v4251
      %v4343 = vunpack.c.l.b16 %v4252
      %v4344 = vunpack.c.l.b16 %v4253
      %v4345 = vunpack.c.l.b16 %v4254
      %v4346 = vunpack.c.l.b16 %v4255
      %v4347 = vunpack.c.l.b16 %v4256
      %v4348 = vunpack.c.l.b16 %v4257
      %v4349 = vunpack.c.l.b16 %v4258
      %v4350 = vunpack.c.l.b16 %v4259
      %v4351 = vunpack.c.l.b16 %v4260
      %v4352 = vunpack.c.l.b16 %v4261
      %v4353 = vunpack.c.l.b16 %v4262
      %v4354 = vunpack.c.l.b16 %v4263
      %v4355 = vunpack.c.l.b16 %v4264
      %v4356 = vpack.c.b16 %v4341, %v4340
      %v4357 = vpack.c.b16 %v4343, %v4342
      %v4358 = vpack.c.b16 %v4345, %v4344
      %v4359 = vpack.c.b16 %v4347, %v4346
      %v4360 = vpack.c.b16 %v4349, %v4348
      %v4361 = vpack.c.b16 %v4351, %v4350
      %v4362 = vpack.c.b16 %v4353, %v4352
      %v4363 = vpack.c.b16 %v4355, %v4354
      %4372 = vmatprep.subr.bf16.mxu0 0
      %4373 = vmatpush1.bf16.msra.mxu0 %v4363
      %4374 = vmatprep.subr.bf16.mxu0 0
      %4375 = vmatpush1.bf16.msra.mxu0 %v4362
      %4376 = vmatprep.subr.bf16.mxu0 0
      %4377 = vmatpush1.bf16.msra.mxu0 %v4361
      %4378 = vmatprep.subr.bf16.mxu0 0
      %4379 = vmatpush1.bf16.msra.mxu0 %v4360
      %4380 = vmatprep.subr.bf16.mxu0 0
      %4381 = vmatpush1.bf16.msra.mxu0 %v4359
      %4382 = vmatprep.subr.bf16.mxu0 0
      %4383 = vmatpush1.bf16.msra.mxu0 %v4358
      %4384 = vmatprep.subr.bf16.mxu0 0
      %4385 = vmatpush1.bf16.msra.mxu0 %v4357
      %4386 = vmatprep.subr.bf16.mxu0 0
      %4387 = vmatpush1.bf16.msra.mxu0 %v4356
      %4388 = vmatprep.subr.bf16.mxu0 0
      %4389 = vmatpush2.bf16.msra.mxu0 0
      %4390 = vmatprep.subr.bf16.mxu0 0
      %4391 = vmatpush2.bf16.msra.mxu0 0
      %4392 = vmatprep.subr.bf16.mxu0 0
      %4393 = vmatpush2.bf16.msra.mxu0 0
      %4394 = vmatprep.subr.bf16.mxu0 0
      %4395 = vmatpush2.bf16.msra.mxu0 0
      %4396 = vmatprep.subr.bf16.mxu0 0
      %4397 = vmatpush2.bf16.msra.mxu0 0
      %4398 = vmatprep.subr.bf16.mxu0 0
      %4399 = vmatpush2.bf16.msra.mxu0 0
      %4400 = vmatprep.subr.bf16.mxu0 0
      %4401 = vmatpush2.bf16.msra.mxu0 0
      %4402 = vmatprep.subr.bf16.mxu0 0
      %4403 = vmatpush2.bf16.msra.mxu0 0
      %4404 = vmatprep.mubr.bf16.mxu0 0
      %4405 = vmatmul.mubr.bf16.gmra.mxu0 %v4271
      %v4406 = vpop.f32.mrf.mxu0
      %v4407 = vadd.f32 0.0, %v4406
      %v4408 = vpop.f32.mrf.mxu0
      %v4409 = vpop.f32.mrf.mxu0
      %v4410 = vadd.f32 0.0, %v4409
      %v4411 = vpop.f32.mrf.mxu0
      %4412 = vmatprep.mubr.bf16.mxu0 0
      %4413 = vmatmul.mubr.bf16.gmra.mxu0 %v4273
      %v4414 = vpop.f32.mrf.mxu0
      %v4415 = vadd.f32 0.0, %v4414
      %v4416 = vpop.f32.mrf.mxu0
      %v4417 = vpop.f32.mrf.mxu0
      %v4418 = vadd.f32 0.0, %v4417
      %v4419 = vpop.f32.mrf.mxu0
      %4420 = vmatprep.mubr.bf16.mxu0 0
      %4421 = vmatmul.mubr.bf16.gmra.mxu0 %v4275
      %v4422 = vpop.f32.mrf.mxu0
      %v4423 = vadd.f32 0.0, %v4422
      %v4424 = vpop.f32.mrf.mxu0
      %v4425 = vpop.f32.mrf.mxu0
      %v4426 = vadd.f32 0.0, %v4425
      %v4427 = vpop.f32.mrf.mxu0
      %4428 = vmatprep.mubr.bf16.mxu0 0
      %4429 = vmatmul.mubr.bf16.gmra.mxu0 %v4277
      %v4430 = vpop.f32.mrf.mxu0
      %v4431 = vadd.f32 0.0, %v4430
      %v4432 = vpop.f32.mrf.mxu0
      %v4433 = vpop.f32.mrf.mxu0
      %v4434 = vadd.f32 0.0, %v4433
      %v4435 = vpop.f32.mrf.mxu0
      %4436 = vmatprep.mubr.bf16.mxu0 0
      %4437 = vmatmul.mubr.bf16.gmra.mxu0 %v4279
      %v4438 = vpop.f32.mrf.mxu0
      %v4439 = vadd.f32 0.0, %v4438
      %v4440 = vpop.f32.mrf.mxu0
      %v4441 = vpop.f32.mrf.mxu0
      %v4442 = vadd.f32 0.0, %v4441
      %v4443 = vpop.f32.mrf.mxu0
      %4444 = vmatprep.mubr.bf16.mxu0 0
      %4445 = vmatmul.mubr.bf16.gmra.mxu0 %v4281
      %v4446 = vpop.f32.mrf.mxu0
      %v4447 = vadd.f32 0.0, %v4446
      %v4448 = vpop.f32.mrf.mxu0
      %v4449 = vpop.f32.mrf.mxu0
      %v4450 = vadd.f32 0.0, %v4449
      %v4451 = vpop.f32.mrf.mxu0
      %4452 = vmatprep.mubr.bf16.mxu0 0
      %4453 = vmatmul.mubr.bf16.gmra.mxu0 %v4283
      %v4454 = vpop.f32.mrf.mxu0
      %v4455 = vadd.f32 0.0, %v4454
      %v4456 = vpop.f32.mrf.mxu0
      %v4457 = vpop.f32.mrf.mxu0
      %v4458 = vadd.f32 0.0, %v4457
      %v4459 = vpop.f32.mrf.mxu0
      %4460 = vmatprep.mubr.bf16.mxu0 0
      %4461 = vmatmul.mubr.bf16.gmra.mxu0 %v4285
      %v4462 = vpop.f32.mrf.mxu0
      %v4463 = vadd.f32 0.0, %v4462
      %v4464 = vpop.f32.mrf.mxu0
      %v4465 = vpop.f32.mrf.mxu0
      %v4466 = vadd.f32 0.0, %v4465
      %v4467 = vpop.f32.mrf.mxu0
      %4468 = vmatprep.mubr.bf16.mxu0 0
      %4469 = vmatmul.mubr.bf16.gmra.mxu0 %v4287
      %v4470 = vpop.f32.mrf.mxu0
      %v4471 = vadd.f32 0.0, %v4470
      %v4472 = vpop.f32.mrf.mxu0
      %v4473 = vpop.f32.mrf.mxu0
      %v4474 = vadd.f32 0.0, %v4473
      %v4475 = vpop.f32.mrf.mxu0
      %4476 = vmatprep.mubr.bf16.mxu0 0
      %4477 = vmatmul.mubr.bf16.gmra.mxu0 %v4289
      %v4478 = vpop.f32.mrf.mxu0
      %v4479 = vadd.f32 0.0, %v4478
      %v4480 = vpop.f32.mrf.mxu0
      %v4481 = vpop.f32.mrf.mxu0
      %v4482 = vadd.f32 0.0, %v4481
      %v4483 = vpop.f32.mrf.mxu0
      %4484 = vmatprep.mubr.bf16.mxu0 0
      %4485 = vmatmul.mubr.bf16.gmra.mxu0 %v4291
      %v4486 = vpop.f32.mrf.mxu0
      %v4487 = vadd.f32 0.0, %v4486
      %v4488 = vpop.f32.mrf.mxu0
      %v4489 = vpop.f32.mrf.mxu0
      %v4490 = vadd.f32 0.0, %v4489
      %v4491 = vpop.f32.mrf.mxu0
      %4492 = vmatprep.mubr.bf16.mxu0 0
      %4493 = vmatmul.mubr.bf16.gmra.mxu0 %v4293
      %v4494 = vpop.f32.mrf.mxu0
      %v4495 = vadd.f32 0.0, %v4494
      %v4496 = vpop.f32.mrf.mxu0
      %v4497 = vpop.f32.mrf.mxu0
      %v4498 = vadd.f32 0.0, %v4497
      %v4499 = vpop.f32.mrf.mxu0
      %4500 = vmatprep.mubr.bf16.mxu0 0
      %4501 = vmatmul.mubr.bf16.gmra.mxu0 %v4295
      %v4502 = vpop.f32.mrf.mxu0
      %v4503 = vadd.f32 0.0, %v4502
      %v4504 = vpop.f32.mrf.mxu0
      %v4505 = vpop.f32.mrf.mxu0
      %v4506 = vadd.f32 0.0, %v4505
      %v4507 = vpop.f32.mrf.mxu0
      %4508 = vmatprep.mubr.bf16.mxu0 0
      %4509 = vmatmul.mubr.bf16.gmra.mxu0 %v4297
      %v4510 = vpop.f32.mrf.mxu0
      %v4511 = vadd.f32 0.0, %v4510
      %v4512 = vpop.f32.mrf.mxu0
      %v4513 = vpop.f32.mrf.mxu0
      %v4514 = vadd.f32 0.0, %v4513
      %v4515 = vpop.f32.mrf.mxu0
      %4516 = vmatprep.mubr.bf16.mxu0 0
      %4517 = vmatmul.mubr.bf16.gmra.mxu0 %v4299
      %v4518 = vpop.f32.mrf.mxu0
      %v4519 = vadd.f32 0.0, %v4518
      %v4520 = vpop.f32.mrf.mxu0
      %v4521 = vpop.f32.mrf.mxu0
      %v4522 = vadd.f32 0.0, %v4521
      %v4523 = vpop.f32.mrf.mxu0
      %4524 = vmatprep.mubr.bf16.mxu0 0
      %4525 = vmatmul.mubr.bf16.gmra.mxu0 %v4301
      %v4526 = vpop.f32.mrf.mxu0
      %v4527 = vadd.f32 0.0, %v4526
      %v4528 = vpop.f32.mrf.mxu0
      %v4529 = vpop.f32.mrf.mxu0
      %v4530 = vadd.f32 0.0, %v4529
      %v4531 = vpop.f32.mrf.mxu0
      %4532 = vmatprep.mubr.bf16.mxu0 0
      %4533 = vmatmul.mubr.bf16.gmra.mxu0 %v4303
      %v4534 = vpop.f32.mrf.mxu0
      %v4535 = vadd.f32 0.0, %v4534
      %v4536 = vpop.f32.mrf.mxu0
      %v4537 = vpop.f32.mrf.mxu0
      %v4538 = vadd.f32 0.0, %v4537
      %v4539 = vpop.f32.mrf.mxu0
      %4540 = vmatprep.mubr.bf16.mxu0 0
      %4541 = vmatmul.mubr.bf16.gmra.mxu0 %v4305
      %v4542 = vpop.f32.mrf.mxu0
      %v4543 = vadd.f32 0.0, %v4542
      %v4544 = vpop.f32.mrf.mxu0
      %v4545 = vpop.f32.mrf.mxu0
      %v4546 = vadd.f32 0.0, %v4545
      %v4547 = vpop.f32.mrf.mxu0
      %4548 = vdwg.mxu0
      %v4549 = vadd.f32 %v4211, %v4407
      %v4550 = vadd.f32 %v4212, %v4410
      %v4551 = vadd.f32 %v4213, %v4415
      %v4552 = vadd.f32 %v4214, %v4418
      %v4553 = vadd.f32 %v4215, %v4423
      %v4554 = vadd.f32 %v4216, %v4426
      %v4555 = vadd.f32 %v4217, %v4431
      %v4556 = vadd.f32 %v4218, %v4434
      %v4557 = vadd.f32 %v4219, %v4439
      %v4558 = vadd.f32 %v4220, %v4442
      %v4559 = vadd.f32 %v4221, %v4447
      %v4560 = vadd.f32 %v4222, %v4450
      %v4561 = vadd.f32 %v4223, %v4455
      %v4562 = vadd.f32 %v4224, %v4458
      %v4563 = vadd.f32 %v4225, %v4463
      %v4564 = vadd.f32 %v4226, %v4466
      %v4565 = vadd.f32 %v4227, %v4471
      %v4566 = vadd.f32 %v4228, %v4474
      %v4567 = vadd.f32 %v4229, %v4479
      %v4568 = vadd.f32 %v4230, %v4482
      %v4569 = vadd.f32 %v4231, %v4487
      %v4570 = vadd.f32 %v4232, %v4490
      %v4571 = vadd.f32 %v4233, %v4495
      %v4572 = vadd.f32 %v4234, %v4498
      %v4573 = vadd.f32 %v4235, %v4503
      %v4574 = vadd.f32 %v4236, %v4506
      %v4575 = vadd.f32 %v4237, %v4511
      %v4576 = vadd.f32 %v4238, %v4514
      %v4577 = vadd.f32 %v4239, %v4519
      %v4578 = vadd.f32 %v4240, %v4522
      %v4579 = vadd.f32 %v4241, %v4527
      %v4580 = vadd.f32 %v4242, %v4530
      %v4581 = vadd.f32 %v4243, %v4535
      %v4582 = vadd.f32 %v4244, %v4538
      %v4583 = vadd.f32 %v4245, %v4543
      %v4584 = vadd.f32 %v4246, %v4546
      %v4585 = vld [vmem:[%s5] sm:$0xff]
      %v4586 = vld [vmem:[%s5 + $0x8] sm:$0xff]
      %v4587 = vld [vmem:[%s5 + $0x10] sm:$0xff]
      %v4588 = vld [vmem:[%s5 + $0x18] sm:$0xff]
      %v4589 = vld [vmem:[%s5 + $0x20] sm:$0xff]
      %v4590 = vld [vmem:[%s5 + $0x28] sm:$0xff]
      %v4591 = vld [vmem:[%s5 + $0x30] sm:$0xff]
      %v4592 = vld [vmem:[%s5 + $0x38] sm:$0xff]
      %v4593 = vld [vmem:[%s5 + $0x40] sm:$0xff]
      %v4594 = vld [vmem:[%s5 + $0x48] sm:$0xff]
      %v4595 = vld [vmem:[%s5 + $0x50] sm:$0xff]
      %v4596 = vld [vmem:[%s5 + $0x58] sm:$0xff]
      %v4597 = vld [vmem:[%s5 + $0x60] sm:$0xff]
      %v4598 = vld [vmem:[%s5 + $0x68] sm:$0xff]
      %v4599 = vld [vmem:[%s5 + $0x70] sm:$0xff]
      %v4600 = vld [vmem:[%s5 + $0x78] sm:$0xff]
      %v4601 = vld [vmem:[%s5 + $0x80] sm:$0xff]
      %v4602 = vld [vmem:[%s5 + $0x88] sm:$0xff]
      %v4603 = vld [vmem:[%s5 + $0x90] sm:$0xff]
      %v4604 = vld [vmem:[%s5 + $0x98] sm:$0xff]
      %v4605 = vld [vmem:[%s5 + $0xa0] sm:$0xff]
      %v4606 = vld [vmem:[%s5 + $0xa8] sm:$0xff]
      %v4607 = vld [vmem:[%s5 + $0xb0] sm:$0xff]
      %v4608 = vld [vmem:[%s5 + $0xb8] sm:$0xff]
      %v4609 = vld [vmem:[%s5 + $0xc0] sm:$0xff]
      %v4610 = vld [vmem:[%s5 + $0xc8] sm:$0xff]
      %v4611 = vld [vmem:[%s5 + $0xd0] sm:$0xff]
      %v4612 = vld [vmem:[%s5 + $0xd8] sm:$0xff]
      %v4613 = vld [vmem:[%s5 + $0xe0] sm:$0xff]
      %v4614 = vld [vmem:[%s5 + $0xe8] sm:$0xff]
      %v4615 = vld [vmem:[%s5 + $0xf0] sm:$0xff]
      %v4616 = vld [vmem:[%s5 + $0xf8] sm:$0xff]
      %v4617 = vld [vmem:[%s5 + $0x100] sm:$0xff]
      %v4618 = vld [vmem:[%s5 + $0x108] sm:$0xff]
      %v4619 = vld [vmem:[%s5 + $0x110] sm:$0xff]
      %v4620 = vld [vmem:[%s5 + $0x118] sm:$0x3f]
      %vm4621 = vcmp.gt.f32.partialorder %v4585, 0.5
      %vm4622 = vcmp.gt.f32.partialorder %v4586, 0.5
      %vm4623 = vcmp.gt.f32.partialorder %v4587, 0.5
      %vm4624 = vcmp.gt.f32.partialorder %v4588, 0.5
      %vm4625 = vcmp.gt.f32.partialorder %v4589, 0.5
      %vm4626 = vcmp.gt.f32.partialorder %v4590, 0.5
      %vm4627 = vcmp.gt.f32.partialorder %v4591, 0.5
      %vm4628 = vcmp.gt.f32.partialorder %v4592, 0.5
      %vm4629 = vcmp.gt.f32.partialorder %v4593, 0.5
      %vm4630 = vcmp.gt.f32.partialorder %v4594, 0.5
      %vm4631 = vcmp.gt.f32.partialorder %v4595, 0.5
      %vm4632 = vcmp.gt.f32.partialorder %v4596, 0.5
      %vm4633 = vcmp.gt.f32.partialorder %v4597, 0.5
      %vm4634 = vcmp.gt.f32.partialorder %v4598, 0.5
      %vm4635 = vcmp.gt.f32.partialorder %v4599, 0.5
      %vm4636 = vcmp.gt.f32.partialorder %v4600, 0.5
      %vm4637 = vcmp.gt.f32.partialorder %v4601, 0.5
      %vm4638 = vcmp.gt.f32.partialorder %v4602, 0.5
      %vm4639 = vcmp.gt.f32.partialorder %v4603, 0.5
      %vm4640 = vcmp.gt.f32.partialorder %v4604, 0.5
      %vm4641 = vcmp.gt.f32.partialorder %v4605, 0.5
      %vm4642 = vcmp.gt.f32.partialorder %v4606, 0.5
      %vm4643 = vcmp.gt.f32.partialorder %v4607, 0.5
      %vm4644 = vcmp.gt.f32.partialorder %v4608, 0.5
      %vm4645 = vcmp.gt.f32.partialorder %v4609, 0.5
      %vm4646 = vcmp.gt.f32.partialorder %v4610, 0.5
      %vm4647 = vcmp.gt.f32.partialorder %v4611, 0.5
      %vm4648 = vcmp.gt.f32.partialorder %v4612, 0.5
      %vm4649 = vcmp.gt.f32.partialorder %v4613, 0.5
      %vm4650 = vcmp.gt.f32.partialorder %v4614, 0.5
      %vm4651 = vcmp.gt.f32.partialorder %v4615, 0.5
      %vm4652 = vcmp.gt.f32.partialorder %v4616, 0.5
      %vm4653 = vcmp.gt.f32.partialorder %v4617, 0.5
      %vm4654 = vcmp.gt.f32.partialorder %v4618, 0.5
      %vm4655 = vcmp.gt.f32.partialorder %v4619, 0.5
      %vm4656 = vcmp.gt.f32.partialorder %v4620, 0.5
      %v4657 = vsel %vm4621, 1, 0
      %v4658 = vsel %vm4622, 1, 0
      %v4659 = vsel %vm4623, 1, 0
      %v4660 = vsel %vm4624, 1, 0
      %v4661 = vsel %vm4625, 1, 0
      %v4662 = vsel %vm4626, 1, 0
      %v4663 = vsel %vm4627, 1, 0
      %v4664 = vsel %vm4628, 1, 0
      %v4665 = vsel %vm4629, 1, 0
      %v4666 = vsel %vm4630, 1, 0
      %v4667 = vsel %vm4631, 1, 0
      %v4668 = vsel %vm4632, 1, 0
      %v4669 = vsel %vm4633, 1, 0
      %v4670 = vsel %vm4634, 1, 0
      %v4671 = vsel %vm4635, 1, 0
      %v4672 = vsel %vm4636, 1, 0
      %v4673 = vsel %vm4637, 1, 0
      %v4674 = vsel %vm4638, 1, 0
      %v4675 = vsel %vm4639, 1, 0
      %v4676 = vsel %vm4640, 1, 0
      %v4677 = vsel %vm4641, 1, 0
      %v4678 = vsel %vm4642, 1, 0
      %v4679 = vsel %vm4643, 1, 0
      %v4680 = vsel %vm4644, 1, 0
      %v4681 = vsel %vm4645, 1, 0
      %v4682 = vsel %vm4646, 1, 0
      %v4683 = vsel %vm4647, 1, 0
      %v4684 = vsel %vm4648, 1, 0
      %v4685 = vsel %vm4649, 1, 0
      %v4686 = vsel %vm4650, 1, 0
      %v4687 = vsel %vm4651, 1, 0
      %v4688 = vsel %vm4652, 1, 0
      %v4689 = vsel %vm4653, 1, 0
      %v4690 = vsel %vm4654, 1, 0
      %v4691 = vsel %vm4655, 1, 0
      %v4692 = vsel %vm4656, 1, 0
      %4693 = vset.pattern.permute.xlu0 0
      %4694 = vperm.xlu0 %4693, %v4657
      %v4695 = vpop.permute.xlu0 %4694
      %4696 = vset.pattern.permute.xlu0 0
      %4697 = vperm.xlu0 %4696, %v4658
      %v4698 = vpop.permute.xlu0 %4697
      %4699 = vset.pattern.permute.xlu0 0
      %4700 = vperm.xlu0 %4699, %v4659
      %v4701 = vpop.permute.xlu0 %4700
      %4702 = vset.pattern.permute.xlu0 0
      %4703 = vperm.xlu0 %4702, %v4660
      %v4704 = vpop.permute.xlu0 %4703
      %4705 = vset.pattern.permute.xlu0 0
      %4706 = vperm.xlu0 %4705, %v4661
      %v4707 = vpop.permute.xlu0 %4706
      %4708 = vset.pattern.permute.xlu0 0
      %4709 = vperm.xlu0 %4708, %v4662
      %v4710 = vpop.permute.xlu0 %4709
      %4711 = vset.pattern.permute.xlu0 0
      %4712 = vperm.xlu0 %4711, %v4663
      %v4713 = vpop.permute.xlu0 %4712
      %4714 = vset.pattern.permute.xlu0 0
      %4715 = vperm.xlu0 %4714, %v4664
      %v4716 = vpop.permute.xlu0 %4715
      %4717 = vset.pattern.permute.xlu0 0
      %4718 = vperm.xlu0 %4717, %v4665
      %v4719 = vpop.permute.xlu0 %4718
      %4720 = vset.pattern.permute.xlu0 0
      %4721 = vperm.xlu0 %4720, %v4666
      %v4722 = vpop.permute.xlu0 %4721
      %4723 = vset.pattern.permute.xlu0 0
      %4724 = vperm.xlu0 %4723, %v4667
      %v4725 = vpop.permute.xlu0 %4724
      %4726 = vset.pattern.permute.xlu0 0
      %4727 = vperm.xlu0 %4726, %v4668
      %v4728 = vpop.permute.xlu0 %4727
      %4729 = vset.pattern.permute.xlu0 0
      %4730 = vperm.xlu0 %4729, %v4669
      %v4731 = vpop.permute.xlu0 %4730
      %4732 = vset.pattern.permute.xlu0 0
      %4733 = vperm.xlu0 %4732, %v4670
      %v4734 = vpop.permute.xlu0 %4733
      %4735 = vset.pattern.permute.xlu0 0
      %4736 = vperm.xlu0 %4735, %v4671
      %v4737 = vpop.permute.xlu0 %4736
      %4738 = vset.pattern.permute.xlu0 0
      %4739 = vperm.xlu0 %4738, %v4672
      %v4740 = vpop.permute.xlu0 %4739
      %4741 = vset.pattern.permute.xlu0 0
      %4742 = vperm.xlu0 %4741, %v4673
      %v4743 = vpop.permute.xlu0 %4742
      %4744 = vset.pattern.permute.xlu0 0
      %4745 = vperm.xlu0 %4744, %v4674
      %v4746 = vpop.permute.xlu0 %4745
      %4747 = vset.pattern.permute.xlu0 0
      %4748 = vperm.xlu0 %4747, %v4675
      %v4749 = vpop.permute.xlu0 %4748
      %4750 = vset.pattern.permute.xlu0 0
      %4751 = vperm.xlu0 %4750, %v4676
      %v4752 = vpop.permute.xlu0 %4751
      %4753 = vset.pattern.permute.xlu0 0
      %4754 = vperm.xlu0 %4753, %v4677
      %v4755 = vpop.permute.xlu0 %4754
      %4756 = vset.pattern.permute.xlu0 0
      %4757 = vperm.xlu0 %4756, %v4678
      %v4758 = vpop.permute.xlu0 %4757
      %4759 = vset.pattern.permute.xlu0 0
      %4760 = vperm.xlu0 %4759, %v4679
      %v4761 = vpop.permute.xlu0 %4760
      %4762 = vset.pattern.permute.xlu0 0
      %4763 = vperm.xlu0 %4762, %v4680
      %v4764 = vpop.permute.xlu0 %4763
      %4765 = vset.pattern.permute.xlu0 0
      %4766 = vperm.xlu0 %4765, %v4681
      %v4767 = vpop.permute.xlu0 %4766
      %4768 = vset.pattern.permute.xlu0 0
      %4769 = vperm.xlu0 %4768, %v4682
      %v4770 = vpop.permute.xlu0 %4769
      %4771 = vset.pattern.permute.xlu0 0
      %4772 = vperm.xlu0 %4771, %v4683
      %v4773 = vpop.permute.xlu0 %4772
      %4774 = vset.pattern.permute.xlu0 0
      %4775 = vperm.xlu0 %4774, %v4684
      %v4776 = vpop.permute.xlu0 %4775
      %4777 = vset.pattern.permute.xlu0 0
      %4778 = vperm.xlu0 %4777, %v4685
      %v4779 = vpop.permute.xlu0 %4778
      %4780 = vset.pattern.permute.xlu0 0
      %4781 = vperm.xlu0 %4780, %v4686
      %v4782 = vpop.permute.xlu0 %4781
      %4783 = vset.pattern.permute.xlu0 0
      %4784 = vperm.xlu0 %4783, %v4687
      %v4785 = vpop.permute.xlu0 %4784
      %4786 = vset.pattern.permute.xlu0 0
      %4787 = vperm.xlu0 %4786, %v4688
      %v4788 = vpop.permute.xlu0 %4787
      %4789 = vset.pattern.permute.xlu0 0
      %4790 = vperm.xlu0 %4789, %v4689
      %v4791 = vpop.permute.xlu0 %4790
      %4792 = vset.pattern.permute.xlu0 0
      %4793 = vperm.xlu0 %4792, %v4690
      %v4794 = vpop.permute.xlu0 %4793
      %4795 = vset.pattern.permute.xlu0 0
      %4796 = vperm.xlu0 %4795, %v4691
      %v4797 = vpop.permute.xlu0 %4796
      %4798 = vset.pattern.permute.xlu0 0
      %4799 = vperm.xlu0 %4798, %v4692
      %v4800 = vpop.permute.xlu0 %4799
      %vm4801 = vcmp.eq.s32.totalorder %v4695, 1
      %vm4802 = vcmp.eq.s32.totalorder %v4698, 1
      %vm4803 = vcmp.eq.s32.totalorder %v4701, 1
      %vm4804 = vcmp.eq.s32.totalorder %v4704, 1
      %vm4805 = vcmp.eq.s32.totalorder %v4707, 1
      %vm4806 = vcmp.eq.s32.totalorder %v4710, 1
      %vm4807 = vcmp.eq.s32.totalorder %v4713, 1
      %vm4808 = vcmp.eq.s32.totalorder %v4716, 1
      %vm4809 = vcmp.eq.s32.totalorder %v4719, 1
      %vm4810 = vcmp.eq.s32.totalorder %v4722, 1
      %vm4811 = vcmp.eq.s32.totalorder %v4725, 1
      %vm4812 = vcmp.eq.s32.totalorder %v4728, 1
      %vm4813 = vcmp.eq.s32.totalorder %v4731, 1
      %vm4814 = vcmp.eq.s32.totalorder %v4734, 1
      %vm4815 = vcmp.eq.s32.totalorder %v4737, 1
      %vm4816 = vcmp.eq.s32.totalorder %v4740, 1
      %vm4817 = vcmp.eq.s32.totalorder %v4743, 1
      %vm4818 = vcmp.eq.s32.totalorder %v4746, 1
      %vm4819 = vcmp.eq.s32.totalorder %v4749, 1
      %vm4820 = vcmp.eq.s32.totalorder %v4752, 1
      %vm4821 = vcmp.eq.s32.totalorder %v4755, 1
      %vm4822 = vcmp.eq.s32.totalorder %v4758, 1
      %vm4823 = vcmp.eq.s32.totalorder %v4761, 1
      %vm4824 = vcmp.eq.s32.totalorder %v4764, 1
      %vm4825 = vcmp.eq.s32.totalorder %v4767, 1
      %vm4826 = vcmp.eq.s32.totalorder %v4770, 1
      %vm4827 = vcmp.eq.s32.totalorder %v4773, 1
      %vm4828 = vcmp.eq.s32.totalorder %v4776, 1
      %vm4829 = vcmp.eq.s32.totalorder %v4779, 1
      %vm4830 = vcmp.eq.s32.totalorder %v4782, 1
      %vm4831 = vcmp.eq.s32.totalorder %v4785, 1
      %vm4832 = vcmp.eq.s32.totalorder %v4788, 1
      %vm4833 = vcmp.eq.s32.totalorder %v4791, 1
      %vm4834 = vcmp.eq.s32.totalorder %v4794, 1
      %vm4835 = vcmp.eq.s32.totalorder %v4797, 1
      %vm4836 = vcmp.eq.s32.totalorder %v4800, 1
      %v4837 = vsel %vm4801, %v4549, 0.0
      %v4838 = vsel %vm4802, %v4550, 0.0
      %v4839 = vsel %vm4803, %v4551, 0.0
      %v4840 = vsel %vm4804, %v4552, 0.0
      %v4841 = vsel %vm4805, %v4553, 0.0
      %v4842 = vsel %vm4806, %v4554, 0.0
      %v4843 = vsel %vm4807, %v4555, 0.0
      %v4844 = vsel %vm4808, %v4556, 0.0
      %v4845 = vsel %vm4809, %v4557, 0.0
      %v4846 = vsel %vm4810, %v4558, 0.0
      %v4847 = vsel %vm4811, %v4559, 0.0
      %v4848 = vsel %vm4812, %v4560, 0.0
      %v4849 = vsel %vm4813, %v4561, 0.0
      %v4850 = vsel %vm4814, %v4562, 0.0
      %v4851 = vsel %vm4815, %v4563, 0.0
      %v4852 = vsel %vm4816, %v4564, 0.0
      %v4853 = vsel %vm4817, %v4565, 0.0
      %v4854 = vsel %vm4818, %v4566, 0.0
      %v4855 = vsel %vm4819, %v4567, 0.0
      %v4856 = vsel %vm4820, %v4568, 0.0
      %v4857 = vsel %vm4821, %v4569, 0.0
      %v4858 = vsel %vm4822, %v4570, 0.0
      %v4859 = vsel %vm4823, %v4571, 0.0
      %v4860 = vsel %vm4824, %v4572, 0.0
      %v4861 = vsel %vm4825, %v4573, 0.0
      %v4862 = vsel %vm4826, %v4574, 0.0
      %v4863 = vsel %vm4827, %v4575, 0.0
      %v4864 = vsel %vm4828, %v4576, 0.0
      %v4865 = vsel %vm4829, %v4577, 0.0
      %v4866 = vsel %vm4830, %v4578, 0.0
      %v4867 = vsel %vm4831, %v4579, 0.0
      %v4868 = vsel %vm4832, %v4580, 0.0
      %v4869 = vsel %vm4833, %v4581, 0.0
      %v4870 = vsel %vm4834, %v4582, 0.0
      %v4871 = vsel %vm4835, %v4583, 0.0
      %v4872 = vsel %vm4836, %v4584, 0.0
      %v4873 = vadd.f32 %v4837, %v4838
      %v4874 = vadd.f32 %v4873, %v4839
      %v4875 = vadd.f32 %v4874, %v4840
      %v4876 = vadd.f32 %v4875, %v4841
      %v4877 = vadd.f32 %v4876, %v4842
      %v4878 = vadd.f32 %v4877, %v4843
      %v4879 = vadd.f32 %v4878, %v4844
      %v4880 = vadd.f32 %v4879, %v4845
      %v4881 = vadd.f32 %v4880, %v4846
      %v4882 = vadd.f32 %v4881, %v4847
      %v4883 = vadd.f32 %v4882, %v4848
      %v4884 = vadd.f32 %v4883, %v4849
      %v4885 = vadd.f32 %v4884, %v4850
      %v4886 = vadd.f32 %v4885, %v4851
      %v4887 = vadd.f32 %v4886, %v4852
      %v4888 = vadd.f32 %v4887, %v4853
      %v4889 = vadd.f32 %v4888, %v4854
      %v4890 = vadd.f32 %v4889, %v4855
      %v4891 = vadd.f32 %v4890, %v4856
      %v4892 = vadd.f32 %v4891, %v4857
      %v4893 = vadd.f32 %v4892, %v4858
      %v4894 = vadd.f32 %v4893, %v4859
      %v4895 = vadd.f32 %v4894, %v4860
      %v4896 = vadd.f32 %v4895, %v4861
      %v4897 = vadd.f32 %v4896, %v4862
      %v4898 = vadd.f32 %v4897, %v4863
      %v4899 = vadd.f32 %v4898, %v4864
      %v4900 = vadd.f32 %v4899, %v4865
      %v4901 = vadd.f32 %v4900, %v4866
      %v4902 = vadd.f32 %v4901, %v4867
      %v4903 = vadd.f32 %v4902, %v4868
      %v4904 = vadd.f32 %v4903, %v4869
      %v4905 = vadd.f32 %v4904, %v4870
      %v4906 = vadd.f32 %v4905, %v4871
      %vm4907 = vcmask 1045504
      %v4908 = vsel %vm4907, %v4872, 0.0
      %v4909 = vadd.f32 %v4906, %v4908
      %v4910 = vrot.slane %v4909, 4
      %v4911 = vadd.f32 %v4909, %v4910
      %v4912 = vrot.slane %v4911, 2
      %v4913 = vadd.f32 %v4911, %v4912
      %v4914 = vrot.slane %v4913, 1
      %v4915 = vadd.f32 %v4913, %v4914
      %4916 = vst [vmem:[%s289] sm:$0x1] %v4915
      %v4917 = vmul.f32 %v4837, %v4837
      %v4918 = vmul.f32 %v4838, %v4838
      %v4919 = vmul.f32 %v4839, %v4839
      %v4920 = vmul.f32 %v4840, %v4840
      %v4921 = vmul.f32 %v4841, %v4841
      %v4922 = vmul.f32 %v4842, %v4842
      %v4923 = vmul.f32 %v4843, %v4843
      %v4924 = vmul.f32 %v4844, %v4844
      %v4925 = vmul.f32 %v4845, %v4845
      %v4926 = vmul.f32 %v4846, %v4846
      %v4927 = vmul.f32 %v4847, %v4847
      %v4928 = vmul.f32 %v4848, %v4848
      %v4929 = vmul.f32 %v4849, %v4849
      %v4930 = vmul.f32 %v4850, %v4850
      %v4931 = vmul.f32 %v4851, %v4851
      %v4932 = vmul.f32 %v4852, %v4852
      %v4933 = vmul.f32 %v4853, %v4853
      %v4934 = vmul.f32 %v4854, %v4854
      %v4935 = vmul.f32 %v4855, %v4855
      %v4936 = vmul.f32 %v4856, %v4856
      %v4937 = vmul.f32 %v4857, %v4857
      %v4938 = vmul.f32 %v4858, %v4858
      %v4939 = vmul.f32 %v4859, %v4859
      %v4940 = vmul.f32 %v4860, %v4860
      %v4941 = vmul.f32 %v4861, %v4861
      %v4942 = vmul.f32 %v4862, %v4862
      %v4943 = vmul.f32 %v4863, %v4863
      %v4944 = vmul.f32 %v4864, %v4864
      %v4945 = vmul.f32 %v4865, %v4865
      %v4946 = vmul.f32 %v4866, %v4866
      %v4947 = vmul.f32 %v4867, %v4867
      %v4948 = vmul.f32 %v4868, %v4868
      %v4949 = vmul.f32 %v4869, %v4869
      %v4950 = vmul.f32 %v4870, %v4870
      %v4951 = vmul.f32 %v4871, %v4871
      %v4952 = vmul.f32 %v4872, %v4872
      %v4953 = vadd.f32 %v4917, %v4918
      %v4954 = vadd.f32 %v4953, %v4919
      %v4955 = vadd.f32 %v4954, %v4920
      %v4956 = vadd.f32 %v4955, %v4921
      %v4957 = vadd.f32 %v4956, %v4922
      %v4958 = vadd.f32 %v4957, %v4923
      %v4959 = vadd.f32 %v4958, %v4924
      %v4960 = vadd.f32 %v4959, %v4925
      %v4961 = vadd.f32 %v4960, %v4926
      %v4962 = vadd.f32 %v4961, %v4927
      %v4963 = vadd.f32 %v4962, %v4928
      %v4964 = vadd.f32 %v4963, %v4929
      %v4965 = vadd.f32 %v4964, %v4930
      %v4966 = vadd.f32 %v4965, %v4931
      %v4967 = vadd.f32 %v4966, %v4932
      %v4968 = vadd.f32 %v4967, %v4933
      %v4969 = vadd.f32 %v4968, %v4934
      %v4970 = vadd.f32 %v4969, %v4935
      %v4971 = vadd.f32 %v4970, %v4936
      %v4972 = vadd.f32 %v4971, %v4937
      %v4973 = vadd.f32 %v4972, %v4938
      %v4974 = vadd.f32 %v4973, %v4939
      %v4975 = vadd.f32 %v4974, %v4940
      %v4976 = vadd.f32 %v4975, %v4941
      %v4977 = vadd.f32 %v4976, %v4942
      %v4978 = vadd.f32 %v4977, %v4943
      %v4979 = vadd.f32 %v4978, %v4944
      %v4980 = vadd.f32 %v4979, %v4945
      %v4981 = vadd.f32 %v4980, %v4946
      %v4982 = vadd.f32 %v4981, %v4947
      %v4983 = vadd.f32 %v4982, %v4948
      %v4984 = vadd.f32 %v4983, %v4949
      %v4985 = vadd.f32 %v4984, %v4950
      %v4986 = vadd.f32 %v4985, %v4951
      %v4987 = vsel %vm4907, %v4952, 0.0
      %v4988 = vadd.f32 %v4986, %v4987
      %v4989 = vrot.slane %v4988, 4
      %v4990 = vadd.f32 %v4988, %v4989
      %v4991 = vrot.slane %v4990, 2
      %v4992 = vadd.f32 %v4990, %v4991
      %v4993 = vrot.slane %v4992, 1
      %v4994 = vadd.f32 %v4992, %v4993
      %4995 = vst [vmem:[%s289 + $0x1] sm:$0x1] %v4994
      %v4996 = vsel %vm4801, %v4549, -1e+09
      %v4997 = vsel %vm4802, %v4550, -1e+09
      %v4998 = vsel %vm4803, %v4551, -1e+09
      %v4999 = vsel %vm4804, %v4552, -1e+09
      %v5000 = vsel %vm4805, %v4553, -1e+09
      %v5001 = vsel %vm4806, %v4554, -1e+09
      %v5002 = vsel %vm4807, %v4555, -1e+09
      %v5003 = vsel %vm4808, %v4556, -1e+09
      %v5004 = vsel %vm4809, %v4557, -1e+09
      %v5005 = vsel %vm4810, %v4558, -1e+09
      %v5006 = vsel %vm4811, %v4559, -1e+09
      %v5007 = vsel %vm4812, %v4560, -1e+09
      %v5008 = vsel %vm4813, %v4561, -1e+09
      %v5009 = vsel %vm4814, %v4562, -1e+09
      %v5010 = vsel %vm4815, %v4563, -1e+09
      %v5011 = vsel %vm4816, %v4564, -1e+09
      %v5012 = vsel %vm4817, %v4565, -1e+09
      %v5013 = vsel %vm4818, %v4566, -1e+09
      %v5014 = vsel %vm4819, %v4567, -1e+09
      %v5015 = vsel %vm4820, %v4568, -1e+09
      %v5016 = vsel %vm4821, %v4569, -1e+09
      %v5017 = vsel %vm4822, %v4570, -1e+09
      %v5018 = vsel %vm4823, %v4571, -1e+09
      %v5019 = vsel %vm4824, %v4572, -1e+09
      %v5020 = vsel %vm4825, %v4573, -1e+09
      %v5021 = vsel %vm4826, %v4574, -1e+09
      %v5022 = vsel %vm4827, %v4575, -1e+09
      %v5023 = vsel %vm4828, %v4576, -1e+09
      %v5024 = vsel %vm4829, %v4577, -1e+09
      %v5025 = vsel %vm4830, %v4578, -1e+09
      %v5026 = vsel %vm4831, %v4579, -1e+09
      %v5027 = vsel %vm4832, %v4580, -1e+09
      %v5028 = vsel %vm4833, %v4581, -1e+09
      %v5029 = vsel %vm4834, %v4582, -1e+09
      %v5030 = vsel %vm4835, %v4583, -1e+09
      %v5031 = vsel %vm4836, %v4584, -1e+09
      %v5032 = vpack.c.bf16 %v4997, %v4996
      %v5033 = vpack.c.bf16 %v4999, %v4998
      %v5034 = vpack.c.bf16 %v5001, %v5000
      %v5035 = vpack.c.bf16 %v5003, %v5002
      %v5036 = vpack.c.bf16 %v5005, %v5004
      %v5037 = vpack.c.bf16 %v5007, %v5006
      %v5038 = vpack.c.bf16 %v5009, %v5008
      %v5039 = vpack.c.bf16 %v5011, %v5010
      %v5040 = vpack.c.bf16 %v5013, %v5012
      %v5041 = vpack.c.bf16 %v5015, %v5014
      %v5042 = vpack.c.bf16 %v5017, %v5016
      %v5043 = vpack.c.bf16 %v5019, %v5018
      %v5044 = vpack.c.bf16 %v5021, %v5020
      %v5045 = vpack.c.bf16 %v5023, %v5022
      %v5046 = vpack.c.bf16 %v5025, %v5024
      %v5047 = vpack.c.bf16 %v5027, %v5026
      %v5048 = vpack.c.bf16 %v5029, %v5028
      %v5049 = vpack.c.bf16 %v5031, %v5030
      %v5068 = vunpack.c.l.b16 %v5032
      %v5069 = vunpack.c.h.b16 %v5032
      %v5070 = vunpack.c.l.b16 %v5033
      %v5071 = vunpack.c.h.b16 %v5033
      %v5072 = vunpack.c.l.b16 %v5034
      %v5073 = vunpack.c.h.b16 %v5034
      %v5074 = vunpack.c.l.b16 %v5035
      %v5075 = vunpack.c.h.b16 %v5035
      %v5076 = vunpack.c.l.b16 %v5036
      %v5077 = vunpack.c.h.b16 %v5036
      %v5078 = vunpack.c.l.b16 %v5037
      %v5079 = vunpack.c.h.b16 %v5037
      %v5080 = vunpack.c.l.b16 %v5038
      %v5081 = vunpack.c.h.b16 %v5038
      %v5082 = vunpack.c.l.b16 %v5039
      %v5083 = vunpack.c.h.b16 %v5039
      %v5084 = vunpack.c.l.b16 %v5040
      %v5085 = vunpack.c.h.b16 %v5040
      %v5086 = vunpack.c.l.b16 %v5041
      %v5087 = vunpack.c.h.b16 %v5041
      %v5088 = vunpack.c.l.b16 %v5042
      %v5089 = vunpack.c.h.b16 %v5042
      %v5090 = vunpack.c.l.b16 %v5043
      %v5091 = vunpack.c.h.b16 %v5043
      %v5092 = vunpack.c.l.b16 %v5044
      %v5093 = vunpack.c.h.b16 %v5044
      %v5094 = vunpack.c.l.b16 %v5045
      %v5095 = vunpack.c.h.b16 %v5045
      %v5096 = vunpack.c.l.b16 %v5046
      %v5097 = vunpack.c.h.b16 %v5046
      %v5098 = vunpack.c.l.b16 %v5047
      %v5099 = vunpack.c.h.b16 %v5047
      %v5100 = vunpack.c.l.b16 %v5048
      %v5101 = vunpack.c.h.b16 %v5048
      %v5102 = vunpack.c.l.b16 %v5049
      %v5103 = vunpack.c.h.b16 %v5049
      %v5104 = vpack.c.b16 %v5068, %v5068
      %v5105 = vpack.c.b16 %v5069, %v5069
      %v5106 = vpack.c.b16 %v5070, %v5070
      %v5107 = vpack.c.b16 %v5071, %v5071
      %v5108 = vpack.c.b16 %v5072, %v5072
      %v5109 = vpack.c.b16 %v5073, %v5073
      %v5110 = vpack.c.b16 %v5074, %v5074
      %v5111 = vpack.c.b16 %v5075, %v5075
      %v5112 = vpack.c.b16 %v5076, %v5076
      %v5113 = vpack.c.b16 %v5077, %v5077
      %v5114 = vpack.c.b16 %v5078, %v5078
      %v5115 = vpack.c.b16 %v5079, %v5079
      %v5116 = vpack.c.b16 %v5080, %v5080
      %v5117 = vpack.c.b16 %v5081, %v5081
      %v5118 = vpack.c.b16 %v5082, %v5082
      %v5119 = vpack.c.b16 %v5083, %v5083
      %v5120 = vpack.c.b16 %v5084, %v5084
      %v5121 = vpack.c.b16 %v5085, %v5085
      %v5122 = vpack.c.b16 %v5086, %v5086
      %v5123 = vpack.c.b16 %v5087, %v5087
      %v5124 = vpack.c.b16 %v5088, %v5088
      %v5125 = vpack.c.b16 %v5089, %v5089
      %v5126 = vpack.c.b16 %v5090, %v5090
      %v5127 = vpack.c.b16 %v5091, %v5091
      %v5128 = vpack.c.b16 %v5092, %v5092
      %v5129 = vpack.c.b16 %v5093, %v5093
      %v5130 = vpack.c.b16 %v5094, %v5094
      %v5131 = vpack.c.b16 %v5095, %v5095
      %v5132 = vpack.c.b16 %v5096, %v5096
      %v5133 = vpack.c.b16 %v5097, %v5097
      %v5134 = vpack.c.b16 %v5098, %v5098
      %v5135 = vpack.c.b16 %v5099, %v5099
      %v5136 = vpack.c.b16 %v5100, %v5100
      %v5137 = vpack.c.b16 %v5101, %v5101
      %v5138 = vpack.c.b16 %v5102, %v5102
      %v5139 = vpack.c.b16 %v5103, %v5103
      %vm5140 = vsmask.f32 1280
      %vm5141 = vsmask.f32 5392
      %vm5142 = vmor %vm5140, %vm5141
      %v5144 = vshrl.u32 %v5104, 16
      %v5146 = vrot.slane %v5144, 6
      %v5147 = vshll.u32 %v5104, 16
      %v5149 = vrot.slane %v5147, 7
      %v5150 = vor.u32 %v5146, %v5149
      %v5151 = vrot.slane %v5150, 4
      %v5153 = vshrl.u32 %v5105, 16
      %v5155 = vrot.slane %v5153, 6
      %v5156 = vshll.u32 %v5105, 16
      %v5158 = vrot.slane %v5156, 7
      %v5159 = vor.u32 %v5155, %v5158
      %v5160 = vsel %vm5142, %v5151, %v5159
      %v5161 = vrot.slane %v5159, 4
      %v5163 = vshrl.u32 %v5106, 16
      %v5165 = vrot.slane %v5163, 6
      %v5166 = vshll.u32 %v5106, 16
      %v5168 = vrot.slane %v5166, 7
      %v5169 = vor.u32 %v5165, %v5168
      %v5170 = vsel %vm5142, %v5161, %v5169
      %v5171 = vrot.slane %v5169, 4
      %v5173 = vshrl.u32 %v5107, 16
      %v5175 = vrot.slane %v5173, 6
      %v5176 = vshll.u32 %v5107, 16
      %v5178 = vrot.slane %v5176, 7
      %v5179 = vor.u32 %v5175, %v5178
      %v5180 = vsel %vm5142, %v5171, %v5179
      %v5181 = vrot.slane %v5179, 4
      %v5183 = vshrl.u32 %v5108, 16
      %v5185 = vrot.slane %v5183, 6
      %v5186 = vshll.u32 %v5108, 16
      %v5188 = vrot.slane %v5186, 7
      %v5189 = vor.u32 %v5185, %v5188
      %v5190 = vsel %vm5142, %v5181, %v5189
      %v5191 = vrot.slane %v5189, 4
      %v5193 = vshrl.u32 %v5109, 16
      %v5195 = vrot.slane %v5193, 6
      %v5196 = vshll.u32 %v5109, 16
      %v5198 = vrot.slane %v5196, 7
      %v5199 = vor.u32 %v5195, %v5198
      %v5200 = vsel %vm5142, %v5191, %v5199
      %v5201 = vrot.slane %v5199, 4
      %v5203 = vshrl.u32 %v5110, 16
      %v5205 = vrot.slane %v5203, 6
      %v5206 = vshll.u32 %v5110, 16
      %v5208 = vrot.slane %v5206, 7
      %v5209 = vor.u32 %v5205, %v5208
      %v5210 = vsel %vm5142, %v5201, %v5209
      %v5211 = vrot.slane %v5209, 4
      %v5213 = vshrl.u32 %v5111, 16
      %v5215 = vrot.slane %v5213, 6
      %v5216 = vshll.u32 %v5111, 16
      %v5218 = vrot.slane %v5216, 7
      %v5219 = vor.u32 %v5215, %v5218
      %v5220 = vsel %vm5142, %v5211, %v5219
      %v5221 = vrot.slane %v5219, 4
      %v5223 = vshrl.u32 %v5112, 16
      %v5225 = vrot.slane %v5223, 6
      %v5226 = vshll.u32 %v5112, 16
      %v5228 = vrot.slane %v5226, 7
      %v5229 = vor.u32 %v5225, %v5228
      %v5230 = vsel %vm5142, %v5221, %v5229
      %v5231 = vrot.slane %v5229, 4
      %v5233 = vshrl.u32 %v5113, 16
      %v5235 = vrot.slane %v5233, 6
      %v5236 = vshll.u32 %v5113, 16
      %v5238 = vrot.slane %v5236, 7
      %v5239 = vor.u32 %v5235, %v5238
      %v5240 = vsel %vm5142, %v5231, %v5239
      %v5241 = vrot.slane %v5239, 4
      %v5243 = vshrl.u32 %v5114, 16
      %v5245 = vrot.slane %v5243, 6
      %v5246 = vshll.u32 %v5114, 16
      %v5248 = vrot.slane %v5246, 7
      %v5249 = vor.u32 %v5245, %v5248
      %v5250 = vsel %vm5142, %v5241, %v5249
      %v5251 = vrot.slane %v5249, 4
      %v5253 = vshrl.u32 %v5115, 16
      %v5255 = vrot.slane %v5253, 6
      %v5256 = vshll.u32 %v5115, 16
      %v5258 = vrot.slane %v5256, 7
      %v5259 = vor.u32 %v5255, %v5258
      %v5260 = vsel %vm5142, %v5251, %v5259
      %v5261 = vrot.slane %v5259, 4
      %v5263 = vshrl.u32 %v5116, 16
      %v5265 = vrot.slane %v5263, 6
      %v5266 = vshll.u32 %v5116, 16
      %v5268 = vrot.slane %v5266, 7
      %v5269 = vor.u32 %v5265, %v5268
      %v5270 = vsel %vm5142, %v5261, %v5269
      %v5271 = vrot.slane %v5269, 4
      %v5273 = vshrl.u32 %v5117, 16
      %v5275 = vrot.slane %v5273, 6
      %v5276 = vshll.u32 %v5117, 16
      %v5278 = vrot.slane %v5276, 7
      %v5279 = vor.u32 %v5275, %v5278
      %v5280 = vsel %vm5142, %v5271, %v5279
      %v5281 = vrot.slane %v5279, 4
      %v5283 = vshrl.u32 %v5118, 16
      %v5285 = vrot.slane %v5283, 6
      %v5286 = vshll.u32 %v5118, 16
      %v5288 = vrot.slane %v5286, 7
      %v5289 = vor.u32 %v5285, %v5288
      %v5290 = vsel %vm5142, %v5281, %v5289
      %v5291 = vrot.slane %v5289, 4
      %v5293 = vshrl.u32 %v5119, 16
      %v5295 = vrot.slane %v5293, 6
      %v5296 = vshll.u32 %v5119, 16
      %v5298 = vrot.slane %v5296, 7
      %v5299 = vor.u32 %v5295, %v5298
      %v5300 = vsel %vm5142, %v5291, %v5299
      %v5301 = vrot.slane %v5299, 4
      %v5303 = vshrl.u32 %v5120, 16
      %v5305 = vrot.slane %v5303, 6
      %v5306 = vshll.u32 %v5120, 16
      %v5308 = vrot.slane %v5306, 7
      %v5309 = vor.u32 %v5305, %v5308
      %v5310 = vsel %vm5142, %v5301, %v5309
      %v5311 = vrot.slane %v5309, 4
      %v5313 = vshrl.u32 %v5121, 16
      %v5315 = vrot.slane %v5313, 6
      %v5316 = vshll.u32 %v5121, 16
      %v5318 = vrot.slane %v5316, 7
      %v5319 = vor.u32 %v5315, %v5318
      %v5320 = vsel %vm5142, %v5311, %v5319
      %v5321 = vrot.slane %v5319, 4
      %v5323 = vshrl.u32 %v5122, 16
      %v5325 = vrot.slane %v5323, 6
      %v5326 = vshll.u32 %v5122, 16
      %v5328 = vrot.slane %v5326, 7
      %v5329 = vor.u32 %v5325, %v5328
      %v5330 = vsel %vm5142, %v5321, %v5329
      %v5331 = vrot.slane %v5329, 4
      %v5333 = vshrl.u32 %v5123, 16
      %v5335 = vrot.slane %v5333, 6
      %v5336 = vshll.u32 %v5123, 16
      %v5338 = vrot.slane %v5336, 7
      %v5339 = vor.u32 %v5335, %v5338
      %v5340 = vsel %vm5142, %v5331, %v5339
      %v5341 = vrot.slane %v5339, 4
      %v5343 = vshrl.u32 %v5124, 16
      %v5345 = vrot.slane %v5343, 6
      %v5346 = vshll.u32 %v5124, 16
      %v5348 = vrot.slane %v5346, 7
      %v5349 = vor.u32 %v5345, %v5348
      %v5350 = vsel %vm5142, %v5341, %v5349
      %v5351 = vrot.slane %v5349, 4
      %v5353 = vshrl.u32 %v5125, 16
      %v5355 = vrot.slane %v5353, 6
      %v5356 = vshll.u32 %v5125, 16
      %v5358 = vrot.slane %v5356, 7
      %v5359 = vor.u32 %v5355, %v5358
      %v5360 = vsel %vm5142, %v5351, %v5359
      %v5361 = vrot.slane %v5359, 4
      %v5363 = vshrl.u32 %v5126, 16
      %v5365 = vrot.slane %v5363, 6
      %v5366 = vshll.u32 %v5126, 16
      %v5368 = vrot.slane %v5366, 7
      %v5369 = vor.u32 %v5365, %v5368
      %v5370 = vsel %vm5142, %v5361, %v5369
      %v5371 = vrot.slane %v5369, 4
      %v5373 = vshrl.u32 %v5127, 16
      %v5375 = vrot.slane %v5373, 6
      %v5376 = vshll.u32 %v5127, 16
      %v5378 = vrot.slane %v5376, 7
      %v5379 = vor.u32 %v5375, %v5378
      %v5380 = vsel %vm5142, %v5371, %v5379
      %v5381 = vrot.slane %v5379, 4
      %v5383 = vshrl.u32 %v5128, 16
      %v5385 = vrot.slane %v5383, 6
      %v5386 = vshll.u32 %v5128, 16
      %v5388 = vrot.slane %v5386, 7
      %v5389 = vor.u32 %v5385, %v5388
      %v5390 = vsel %vm5142, %v5381, %v5389
      %v5391 = vrot.slane %v5389, 4
      %v5393 = vshrl.u32 %v5129, 16
      %v5395 = vrot.slane %v5393, 6
      %v5396 = vshll.u32 %v5129, 16
      %v5398 = vrot.slane %v5396, 7
      %v5399 = vor.u32 %v5395, %v5398
      %v5400 = vsel %vm5142, %v5391, %v5399
      %v5401 = vrot.slane %v5399, 4
      %v5403 = vshrl.u32 %v5130, 16
      %v5405 = vrot.slane %v5403, 6
      %v5406 = vshll.u32 %v5130, 16
      %v5408 = vrot.slane %v5406, 7
      %v5409 = vor.u32 %v5405, %v5408
      %v5410 = vsel %vm5142, %v5401, %v5409
      %v5411 = vrot.slane %v5409, 4
      %v5413 = vshrl.u32 %v5131, 16
      %v5415 = vrot.slane %v5413, 6
      %v5416 = vshll.u32 %v5131, 16
      %v5418 = vrot.slane %v5416, 7
      %v5419 = vor.u32 %v5415, %v5418
      %v5420 = vsel %vm5142, %v5411, %v5419
      %v5421 = vrot.slane %v5419, 4
      %v5423 = vshrl.u32 %v5132, 16
      %v5425 = vrot.slane %v5423, 6
      %v5426 = vshll.u32 %v5132, 16
      %v5428 = vrot.slane %v5426, 7
      %v5429 = vor.u32 %v5425, %v5428
      %v5430 = vsel %vm5142, %v5421, %v5429
      %v5431 = vrot.slane %v5429, 4
      %v5433 = vshrl.u32 %v5133, 16
      %v5435 = vrot.slane %v5433, 6
      %v5436 = vshll.u32 %v5133, 16
      %v5438 = vrot.slane %v5436, 7
      %v5439 = vor.u32 %v5435, %v5438
      %v5440 = vsel %vm5142, %v5431, %v5439
      %v5441 = vrot.slane %v5439, 4
      %v5443 = vshrl.u32 %v5134, 16
      %v5445 = vrot.slane %v5443, 6
      %v5446 = vshll.u32 %v5134, 16
      %v5448 = vrot.slane %v5446, 7
      %v5449 = vor.u32 %v5445, %v5448
      %v5450 = vsel %vm5142, %v5441, %v5449
      %v5451 = vrot.slane %v5449, 4
      %v5453 = vshrl.u32 %v5135, 16
      %v5455 = vrot.slane %v5453, 6
      %v5456 = vshll.u32 %v5135, 16
      %v5458 = vrot.slane %v5456, 7
      %v5459 = vor.u32 %v5455, %v5458
      %v5460 = vsel %vm5142, %v5451, %v5459
      %v5461 = vrot.slane %v5459, 4
      %v5463 = vshrl.u32 %v5136, 16
      %v5465 = vrot.slane %v5463, 6
      %v5466 = vshll.u32 %v5136, 16
      %v5468 = vrot.slane %v5466, 7
      %v5469 = vor.u32 %v5465, %v5468
      %v5470 = vsel %vm5142, %v5461, %v5469
      %v5471 = vrot.slane %v5469, 4
      %v5473 = vshrl.u32 %v5137, 16
      %v5475 = vrot.slane %v5473, 6
      %v5476 = vshll.u32 %v5137, 16
      %v5478 = vrot.slane %v5476, 7
      %v5479 = vor.u32 %v5475, %v5478
      %v5480 = vsel %vm5142, %v5471, %v5479
      %v5481 = vrot.slane %v5479, 4
      %v5483 = vshrl.u32 %v5138, 16
      %v5485 = vrot.slane %v5483, 6
      %v5486 = vshll.u32 %v5138, 16
      %v5488 = vrot.slane %v5486, 7
      %v5489 = vor.u32 %v5485, %v5488
      %v5490 = vsel %vm5142, %v5481, %v5489
      %v5491 = vrot.slane %v5489, 4
      %v5493 = vshrl.u32 %v5139, 16
      %v5495 = vrot.slane %v5493, 6
      %v5496 = vshll.u32 %v5139, 16
      %v5498 = vrot.slane %v5496, 7
      %v5499 = vor.u32 %v5495, %v5498
      %v5500 = vsel %vm5142, %v5491, %v5499
      %v5501 = vrot.slane %v5495, 4
      %vm5539 = vcmask 1043457
      %vm5540 = vsmask.f32 7942
      %vm5541 = vmand %vm5539, %vm5540
      %v5542 = vld [vmem:[%s285 + $0x8] sm:$0xe]
      %v5543 = vsel %vm5541, %v5150, %v5542
      %5544 = vst [vmem:[%s285 + $0x8] sm:$0xe] %v5543
      %5545 = vst [vmem:[%s285 + $0xc] sm:$0xf] %v5160
      %5546 = vst [vmem:[%s285 + $0x10] sm:$0xf] %v5170
      %5547 = vst [vmem:[%s285 + $0x14] sm:$0xf] %v5180
      %5548 = vst [vmem:[%s285 + $0x18] sm:$0xf] %v5190
      %5549 = vst [vmem:[%s285 + $0x1c] sm:$0xf] %v5200
      %5550 = vst [vmem:[%s285 + $0x20] sm:$0xf] %v5210
      %5551 = vst [vmem:[%s285 + $0x24] sm:$0xf] %v5220
      %5552 = vst [vmem:[%s285 + $0x28] sm:$0xf] %v5230
      %5553 = vst [vmem:[%s285 + $0x2c] sm:$0xf] %v5240
      %5554 = vst [vmem:[%s285 + $0x30] sm:$0xf] %v5250
      %5555 = vst [vmem:[%s285 + $0x34] sm:$0xf] %v5260
      %5556 = vst [vmem:[%s285 + $0x38] sm:$0xf] %v5270
      %5557 = vst [vmem:[%s285 + $0x3c] sm:$0xf] %v5280
      %5558 = vst [vmem:[%s285 + $0x40] sm:$0xf] %v5290
      %5559 = vst [vmem:[%s285 + $0x44] sm:$0xf] %v5300
      %5560 = vst [vmem:[%s285 + $0x48] sm:$0xf] %v5310
      %5561 = vst [vmem:[%s285 + $0x4c] sm:$0xf] %v5320
      %5562 = vst [vmem:[%s285 + $0x50] sm:$0xf] %v5330
      %5563 = vst [vmem:[%s285 + $0x54] sm:$0xf] %v5340
      %5564 = vst [vmem:[%s285 + $0x58] sm:$0xf] %v5350
      %5565 = vst [vmem:[%s285 + $0x5c] sm:$0xf] %v5360
      %5566 = vst [vmem:[%s285 + $0x60] sm:$0xf] %v5370
      %5567 = vst [vmem:[%s285 + $0x64] sm:$0xf] %v5380
      %5568 = vst [vmem:[%s285 + $0x68] sm:$0xf] %v5390
      %5569 = vst [vmem:[%s285 + $0x6c] sm:$0xf] %v5400
      %5570 = vst [vmem:[%s285 + $0x70] sm:$0xf] %v5410
      %5571 = vst [vmem:[%s285 + $0x74] sm:$0xf] %v5420
      %5572 = vst [vmem:[%s285 + $0x78] sm:$0xf] %v5430
      %5573 = vst [vmem:[%s285 + $0x7c] sm:$0xf] %v5440
      %5574 = vst [vmem:[%s285 + $0x80] sm:$0xf] %v5450
      %5575 = vst [vmem:[%s285 + $0x84] sm:$0xf] %v5460
      %5576 = vst [vmem:[%s285 + $0x88] sm:$0xf] %v5470
      %5577 = vst [vmem:[%s285 + $0x8c] sm:$0xf] %v5480
      %5578 = vst [vmem:[%s285 + $0x90] sm:$0xf] %v5490
      %5579 = vst [vmem:[%s285 + $0x94] sm:$0xf] %v5500
      %vm5580 = vcmask 1040384
      %vm5581 = vsmask.f32 256
      %vm5582 = vmand %vm5580, %vm5581
      %v5583 = vld [vmem:[%s285 + $0x98] sm:$0x1]
      %v5584 = vsel %vm5582, %v5501, %v5583
      %5585 = vst [vmem:[%s285 + $0x98] sm:$0x1] %v5584
      %5586 = vst [vmem:[%s285] sm:$0xf] 3463368302
      %5587 = vst [vmem:[%s285 + $0x4] sm:$0xf] 3463368302
      %vm5588 = vcmask 1041408
      %vm5589 = vmand %vm5588, %vm5140
      %v5590 = vld [vmem:[%s285 + $0x8] sm:$0x3]
      %v5591 = vsel %vm5589, 3463368302, %v5590
      %5592 = vst [vmem:[%s285 + $0x8] sm:$0x3] %v5591
      %vm5593 = vcmask 1043456
      %vm5594 = vsmask.f32 7938
      %vm5595 = vmand %vm5593, %vm5594
      %v5596 = vld [vmem:[%s285 + $0x98] sm:$0xf]
      %v5597 = vsel %vm5595, 3463368302, %v5596
      %5598 = vst [vmem:[%s285 + $0x98] sm:$0xf] %v5597
      %5599 = vst [vmem:[%s285 + $0x9c] sm:$0xf] 3463368302
      %5600 = vst [vmem:[%s285 + $0xa0] sm:$0x3] 3463368302
      %p5601 = scmp.lt.s32.totalorder %s19, 1
      %s5602 = scalar_select %p5601, %s19, 1
      %s5603 = smul.addr %s5602, 41
      %s5604 = smul.addr %s5603, 4
      %s5605 = scalar_lea.vmem %s6, %s5604
      %p5606 = scmp.lt.s32.totalorder %s19, 1
      %s5607 = scalar_select %p5606, %s19, 1
      %s5608 = smul.addr %s5607, 2
      %s5609 = scalar_lea.vmem %s7, %s5608
      // Predicated region
      $region45: #{convolution_block_forward.4} parent=43 // pred_check
        %p5610 = pneg %p168
      $region46: #{convolution_block_forward.4} parent=43 // pred_check_branch
        %5612 = sbr.rel (%p5610) target = $region48
      $region47: #{convolution_block_forward.4} parent=43 // pred_region
        _
      $region48: #{convolution_block_forward.4} parent=43 // pred_fallthru
        _
      // Predicated region
      $region49: #{convolution_block_forward.4} parent=43 // pred_check
        %p5613 = pneg %p194
      $region50: #{convolution_block_forward.4} parent=43 // pred_check_branch
        %5615 = sbr.rel (%p5613) target = $region52
      $region51: #{convolution_block_forward.4} parent=43 // pred_region
        _
      $region52: #{convolution_block_forward.4} parent=43 // pred_fallthru
        _
    $region44: #{convolution_block_forward.4} parent=5 // pred_fallthru
      _
    %p5616 = scmp.le.s32.totalorder 2, %s14
    // Predicated region
    $region53: #{convolution_block_forward.4} parent=5 // pred_check
      %p5617 = pneg %p5616
    $region54: #{convolution_block_forward.4} parent=5 // pred_check_branch
      %5619 = sbr.rel (%p5617) target = $region56
    $region55: #{convolution_block_forward.4} parent=5 // pred_region
      %s5620 = ssub.s32 %s14, 2
      // Predicated region
      $region57: #{convolution_block_forward.4} parent=55 // pred_check
        %p5621 = pneg %p174
      $region58: #{convolution_block_forward.4} parent=55 // pred_check_branch
        %5623 = sbr.rel (%p5621) target = $region60
      $region59: #{convolution_block_forward.4} parent=55 // pred_region
        %p5624 = scmp.lt.s32.totalorder %s20, 1
        %s5625 = scalar_select %p5624, %s20, 1
        %s5626 = smul.addr %s5625, 41
        %s5627 = smul.addr %s5626, 4
        %s5628 = scalar_lea.vmem %s6, %s5627
      $region60: #{convolution_block_forward.4} parent=55 // pred_fallthru
        _
      // Predicated region
      $region61: #{convolution_block_forward.4} parent=55 // pred_check
        %p5629 = pneg %p200
      $region62: #{convolution_block_forward.4} parent=55 // pred_check_branch
        %5631 = sbr.rel (%p5629) target = $region64
      $region63: #{convolution_block_forward.4} parent=55 // pred_region
        %p5632 = scmp.lt.s32.totalorder %s20, 1
        %s5633 = scalar_select %p5632, %s20, 1
        %s5634 = smul.addr %s5633, 2
        %s5635 = scalar_lea.vmem %s7, %s5634
      $region64: #{convolution_block_forward.4} parent=55 // pred_fallthru
        _
    $region56: #{convolution_block_forward.4} parent=5 // pred_fallthru
      _
  $region6: #{convolution_block_forward.4} parent=0 // loop_footer
    %s18 = sadd.s32 1, %s14
  $region7: #{convolution_block_forward.4} parent=0 // loop_footer_branch
    %13 = sbr.rel target = $region3
  $region8: #{convolution_block_forward.4} parent=0 // loop_exit
    _

</llo_original>
